<compile_context>
chip_gen: v6e
topology: v6e:2x2x1
jax: 0.10.0
libtpu: 0.0.40
codegen_flags: <defaults>
</compile_context>

<pallas_src>
import functools

import jax
import jax.numpy as jnp
from jax.experimental import pallas as pl
from jax.experimental.pallas import tpu as pltpu


def _round_up(x, m):
    return (x + m - 1) // m * m


# ---------------------------------------------------------------------------
# Pallas kernel 1: row-tiled matmul + bias + (optional) ReLU.
#   x tile (tm, Kp) bf16, w (Kp, Np) bf16 (VMEM-resident), bias (1, Np) f32.
# ---------------------------------------------------------------------------
def _matmul_bias_act_kernel(x_ref, w_ref, b_ref, o_ref, *, relu):
    acc = jnp.dot(x_ref[...], w_ref[...], preferred_element_type=jnp.float32)
    acc = acc + b_ref[...]
    if relu:
        acc = jnp.maximum(acc, 0.0)
    o_ref[...] = acc.astype(o_ref.dtype)


def matmul_bias_act(x, w, b, *, relu=True, tile_m=512):
    """x: (M, K) f32, w: (K, N) f32, b: (N,) f32 -> (M, N) f32.

    Internally computes in bf16 (MXU inputs) with f32 accumulation.
    """
    M, K = x.shape
    N = w.shape[1]

    Kp = _round_up(K, 128)             # lane-dense K (x last dim / w sublane dim)
    Np = _round_up(N, 128)             # lane-dense N -> unmasked stores
    tm = min(tile_m, _round_up(M, 8))  # row tile (multiple of 8)
    Mp = _round_up(M, tm)

    xp = jnp.zeros((Mp, Kp), jnp.bfloat16).at[:M, :K].set(x.astype(jnp.bfloat16))
    wp = jnp.zeros((Kp, Np), jnp.bfloat16).at[:K, :N].set(w.astype(jnp.bfloat16))
    bp = jnp.zeros((1, Np), jnp.float32).at[0, :N].set(b)

    out = pl.pallas_call(
        functools.partial(_matmul_bias_act_kernel, relu=relu),
        out_shape=jax.ShapeDtypeStruct((Mp, Np), jnp.float32),
        grid_spec=pltpu.PrefetchScalarGridSpec(
            num_scalar_prefetch=0,
            grid=(Mp // tm,),
            in_specs=[
                pl.BlockSpec((tm, Kp), lambda i: (i, 0)),   # rows: pipelined
                pl.BlockSpec((Kp, Np), lambda i: (0, 0)),   # weight: VMEM-resident
                pl.BlockSpec((1, Np), lambda i: (0, 0)),    # bias: VMEM-resident
            ],
            out_specs=pl.BlockSpec((tm, Np), lambda i: (i, 0)),
        ),
        compiler_params=pltpu.CompilerParams(
            dimension_semantics=("parallel",),
        ),
    )(xp, wp, bp)
    return out[:M, :N]


# ---------------------------------------------------------------------------
# Pallas kernel 2: 9-way max (ceil-mode 3x3 / stride-2 max pool).
# ---------------------------------------------------------------------------
def _max9_kernel(p_ref, o_ref):
    r = p_ref[0]
    for k in range(1, 9):
        r = jnp.maximum(r, p_ref[k])
    o_ref[...] = r


def _maxpool_reduce_pallas(stack, *, tile_m=512):
    """stack: (9, M, C) f32 -> (M, C) elementwise max over axis 0."""
    _, M, C = stack.shape
    tm = min(tile_m, _round_up(M, 8))
    Mp = _round_up(M, tm)
    Cp = _round_up(C, 128)
    sp = jnp.full((9, Mp, Cp), -jnp.inf, jnp.float32).at[:, :M, :C].set(stack)

    out = pl.pallas_call(
        _max9_kernel,
        out_shape=jax.ShapeDtypeStruct((Mp, Cp), jnp.float32),
        grid_spec=pltpu.PrefetchScalarGridSpec(
            num_scalar_prefetch=0,
            grid=(Mp // tm,),
            in_specs=[pl.BlockSpec((9, tm, Cp), lambda i: (0, i, 0))],
            out_specs=pl.BlockSpec((tm, Cp), lambda i: (i, 0)),
        ),
        compiler_params=pltpu.CompilerParams(
            dimension_semantics=("parallel",),
        ),
    )(sp)
    return out[:M, :C]


def maxpool_3x3_s2_ceil(x):
    """PyTorch MaxPool2d(kernel_size=3, stride=2, ceil_mode=True) on NHWC f32."""
    B, H, Wx, C = x.shape
    OH = -((H - 3) // -2) + 1   # ceil((H-3)/2) + 1
    OW = -((Wx - 3) // -2) + 1
    Hn = 2 * (OH - 1) + 3
    Wn = 2 * (OW - 1) + 3
    xpad = jnp.pad(x, ((0, 0), (0, Hn - H), (0, Wn - Wx), (0, 0)),
                   constant_values=-jnp.inf)
    windows = []
    for kh in range(3):
        for kw in range(3):
            windows.append(jax.lax.slice(
                xpad, (0, kh, kw, 0),
                (B, kh + 2 * (OH - 1) + 1, kw + 2 * (OW - 1) + 1, C),
                strides=(1, 2, 2, 1)))
    stack = jnp.stack(windows, axis=0).reshape(9, B * OH * OW, C)
    out = _maxpool_reduce_pallas(stack)
    return out.reshape(B, OH, OW, C)


# ---------------------------------------------------------------------------
# Convolution wrappers: im2col (layout glue) + Pallas matmul kernel (hot path).
# ---------------------------------------------------------------------------
def _im2col(x, KH, KW, stride, Cin):
    B, H, Wx, _ = x.shape
    OH = (H - KH) // stride + 1
    OW = (Wx - KW) // stride + 1
    taps = []
    for kh in range(KH):
        for kw in range(KW):
            taps.append(jax.lax.slice(
                x, (0, kh, kw, 0),
                (B, kh + stride * (OH - 1) + 1,
                 kw + stride * (OW - 1) + 1, Cin),
                strides=(1, stride, stride, 1)))
    cols = jnp.concatenate(taps, axis=-1).reshape(B * OH * OW, KH * KW * Cin)
    return cols, OH, OW


def conv2d_bias_relu(x, w, b, *, stride=1, padding=0, relu=True):
    """x: NHWC f32; w: (Cout, Cin, KH, KW) PyTorch layout; b: (Cout,)."""
    Cout, Cin, KH, KW = w.shape
    if padding:
        x = jnp.pad(x, ((0, 0), (padding, padding), (padding, padding), (0, 0)))
    B = x.shape[0]

    if KH == 1 and KW == 1 and stride == 1:
        _, OH, OW, _ = x.shape
        cols = x.reshape(B * OH * OW, Cin)
    else:
        cols, OH, OW = _im2col(x, KH, KW, stride, Cin)

    wm = jnp.transpose(w, (2, 3, 1, 0)).reshape(KH * KW * Cin, Cout)
    out = matmul_bias_act(cols, wm, b, relu=relu)
    return out.reshape(B, OH, OW, Cout)


def fire_expand_fused(s, e1_w, e1_b, e3_w, e3_b):
    """Fused Fire expand: concat([ReLU(conv1x1(s)), ReLU(conv3x3(s, pad=1))], -1).

    Both expands share the squeeze activation `s`; the 1x1 weights are placed
    at the centre tap of the 3x3 im2col weight matrix so a single Pallas
    matmul produces the already-concatenated (e1 | e3) output.
    """
    B, H, Wx, S = s.shape
    e1 = e1_w.shape[0]
    e3 = e3_w.shape[0]

    sp = jnp.pad(s, ((0, 0), (1, 1), (1, 1), (0, 0)))
    cols, OH, OW = _im2col(sp, 3, 3, 1, S)          # (B*H*W, 9*S)

    w3 = jnp.transpose(e3_w, (2, 3, 1, 0)).reshape(9 * S, e3)
    w1 = e1_w.reshape(e1, S).T                      # (S, e1)
    wf = jnp.zeros((9 * S, e1 + e3), jnp.float32)
    wf = wf.at[4 * S:5 * S, :e1].set(w1)            # centre tap (kh=1, kw=1)
    wf = wf.at[:, e1:].set(w3)
    bf = jnp.concatenate([e1_b, e3_b])

    out = matmul_bias_act(cols, wf, bf, relu=True)
    return out.reshape(B, OH, OW, e1 + e3)


# ---------------------------------------------------------------------------
# SqueezeNet 1_0 architecture.
# ---------------------------------------------------------------------------
SQUEEZENET_1_0 = [
    ("conv", dict(cin=3, cout=96, k=7, stride=2, pad=0)),
    ("pool", None),
    ("fire", dict(cin=96, s=16, e1=64, e3=64)),
    ("fire", dict(cin=128, s=16, e1=64, e3=64)),
    ("fire", dict(cin=128, s=32, e1=128, e3=128)),
    ("pool", None),
    ("fire", dict(cin=256, s=32, e1=128, e3=128)),
    ("fire", dict(cin=256, s=48, e1=192, e3=192)),
    ("fire", dict(cin=384, s=48, e1=192, e3=192)),
    ("fire", dict(cin=384, s=64, e1=256, e3=256)),
    ("pool", None),
    ("fire", dict(cin=512, s=64, e1=256, e3=256)),
]
NUM_CLASSES = 10


def _kaiming_uniform(key, cout, cin, kh, kw):
    bound = (6.0 / (cin * kh * kw)) ** 0.5
    return jax.random.uniform(key, (cout, cin, kh, kw), jnp.float32, -bound, bound)


def init_params(key, num_classes=NUM_CLASSES):
    params = []
    for tag, cfg in SQUEEZENET_1_0:
        if tag == "conv":
            key, k1 = jax.random.split(key)
            params.append(dict(
                w=_kaiming_uniform(k1, cfg["cout"], cfg["cin"], cfg["k"], cfg["k"]),
                b=jnp.zeros((cfg["cout"],), jnp.float32)))
        elif tag == "fire":
            key, k1, k2, k3 = jax.random.split(key, 4)
            params.append(dict(
                sq_w=_kaiming_uniform(k1, cfg["s"], cfg["cin"], 1, 1),
                sq_b=jnp.zeros((cfg["s"],), jnp.float32),
                e1_w=_kaiming_uniform(k2, cfg["e1"], cfg["s"], 1, 1),
                e1_b=jnp.zeros((cfg["e1"],), jnp.float32),
                e3_w=_kaiming_uniform(k3, cfg["e3"], cfg["s"], 3, 3),
                e3_b=jnp.zeros((cfg["e3"],), jnp.float32)))
        else:
            params.append(None)
    key, kc = jax.random.split(key)
    cls = dict(w=0.01 * jax.random.normal(kc, (num_classes, 512, 1, 1), jnp.float32),
               b=jnp.zeros((num_classes,), jnp.float32))
    return params, cls


def squeezenet_forward(x_nchw, params, cls_params):
    x = jnp.transpose(x_nchw, (0, 2, 3, 1))  # NCHW -> NHWC (layout glue)
    for (tag, cfg), p in zip(SQUEEZENET_1_0, params):
        if tag == "conv":
            x = conv2d_bias_relu(x, p["w"], p["b"],
                                 stride=cfg["stride"], padding=cfg["pad"], relu=True)
        elif tag == "fire":
            s = conv2d_bias_relu(x, p["sq_w"], p["sq_b"], relu=True)
            x = fire_expand_fused(s, p["e1_w"], p["e1_b"], p["e3_w"], p["e3_b"])
        else:
            x = maxpool_3x3_s2_ceil(x)
    # Classifier: Dropout -> 1x1 conv -> ReLU -> AdaptiveAvgPool((1,1)) -> flatten.
    # TODO(synk): nn.Dropout(p=0.5) treated as inference-mode identity.
    x = conv2d_bias_relu(x, cls_params["w"], cls_params["b"], relu=True)
    return jnp.mean(x, axis=(1, 2))  # global avg pool + flatten -> (B, num_classes)


# ---------------------------------------------------------------------------
# Pure-JAX reference (XLA convs / reduce_window) for the self-test.
# Mirrors the kernel's numerics: bf16 matmul inputs, f32 accumulation.
# ---------------------------------------------------------------------------
def _ref_conv(x, w, b, *, stride=1, padding=0, relu=True):
    out = jax.lax.conv_general_dilated(
        x.astype(jnp.bfloat16),
        jnp.transpose(w, (2, 3, 1, 0)).astype(jnp.bfloat16),
        window_strides=(stride, stride),
        padding=((padding, padding), (padding, padding)),
        dimension_numbers=("NHWC", "HWIO", "NHWC"),
        preferred_element_type=jnp.float32,
        precision=jax.lax.Precision.HIGHEST)
    out = out + b.reshape(1, 1, 1, -1)
    return jnp.maximum(out, 0.0) if relu else out


def _ref_maxpool(x):
    B, H, Wx, C = x.shape
    OH = -((H - 3) // -2) + 1
    OW = -((Wx - 3) // -2) + 1
    Hn = 2 * (OH - 1) + 3
    Wn = 2 * (OW - 1) + 3
    xpad = jnp.pad(x, ((0, 0), (0, Hn - H), (0, Wn - Wx), (0, 0)),
                   constant_values=-jnp.inf)
    return jax.lax.reduce_window(xpad, -jnp.inf, jax.lax.max,
                                 (1, 3, 3, 1), (1, 2, 2, 1), "VALID")


def ref_forward(x_nchw, params, cls_params):
    x = jnp.transpose(x_nchw, (0, 2, 3, 1))
    for (tag, cfg), p in zip(SQUEEZENET_1_0, params):
        if tag == "conv":
            x = _ref_conv(x, p["w"], p["b"], stride=cfg["stride"], padding=cfg["pad"])
        elif tag == "fire":
            s = _ref_conv(x, p["sq_w"], p["sq_b"])
            e1 = _ref_conv(s, p["e1_w"], p["e1_b"])
            e3 = _ref_conv(s, p["e3_w"], p["e3_b"], padding=1)
            x = jnp.concatenate([e1, e3], axis=-1)
        else:
            x = _ref_maxpool(x)
    x = _ref_conv(x, cls_params["w"], cls_params["b"])
    return jnp.mean(x, axis=(1, 2))


if __name__ == "__main__":
    key = jax.random.PRNGKey(0)
    k_params, k_x = jax.random.split(key)

    params, cls_params = init_params(k_params, num_classes=NUM_CLASSES)
    x = jax.random.normal(k_x, (2, 3, 32, 32), dtype=jnp.float32)  # small NCHW input

    out = jax.jit(squeezenet_forward)(x, params, cls_params)
    out = jax.block_until_ready(out)

    ref = jax.jit(ref_forward)(x, params, cls_params)
    ref = jax.block_until_ready(ref)

    assert out.shape == (2, NUM_CLASSES)
    assert bool(jnp.all(jnp.isfinite(out)))
    assert jnp.allclose(out, ref, atol=5e-3, rtol=5e-3), (
        f"max abs diff {float(jnp.max(jnp.abs(out - ref)))}")

    print("KERNEL_OK")
</pallas_src>

<mosaic_0001>
module attributes {stable_mosaic.version = 11 : i64} {
  func.func @_matmul_bias_act_kernel(%arg0: i32, %arg1: memref<344x256xbf16, #tpu.memory_space<vmem>>, %arg2: memref<256x128xbf16, #tpu.memory_space<vmem>>, %arg3: memref<1x128xf32, #tpu.memory_space<vmem>>, %arg4: memref<344x128xf32, #tpu.memory_space<vmem>>) attributes {dimension_semantics = [#tpu.dimension_semantics<parallel>], iteration_bounds = array<i64: 1>, scalar_prefetch = 0 : i64, scratch_operands = 0 : i64, tpu.core_type = #tpu.core_type<tc>, window_params = [{transform_indices = @transform_0, window_bounds = array<i64: 344, 256>}, {pipeline_mode = #tpu.pipeline_mode<synchronous>, transform_indices = @transform_1, window_bounds = array<i64: 256, 128>}, {pipeline_mode = #tpu.pipeline_mode<synchronous>, transform_indices = @transform_2, window_bounds = array<i64: 1, 128>}, {transform_indices = @transform_3, window_bounds = array<i64: 344, 128>}]} {
    %c0 = arith.constant 0 : index
    %c0_0 = arith.constant 0 : index
    %0 = vector.load %arg1[%c0, %c0_0] : memref<344x256xbf16, #tpu.memory_space<vmem>>, vector<344x256xbf16>
    %c0_1 = arith.constant 0 : index
    %c0_2 = arith.constant 0 : index
    %1 = vector.load %arg2[%c0_1, %c0_2] : memref<256x128xbf16, #tpu.memory_space<vmem>>, vector<256x128xbf16>
    %cst = arith.constant dense<0.000000e+00> : vector<344x128xf32>
    %2 = tpu.matmul %0, %1, %cst {dimension_numbers = #tpu.dot_dimension_numbers<[1], [0], [0], [1], [0, 0, 1, 1], [], []>} : vector<344x256xbf16>, vector<256x128xbf16>, vector<344x128xf32> -> vector<344x128xf32>
    %c0_3 = arith.constant 0 : index
    %c0_4 = arith.constant 0 : index
    %3 = vector.load %arg3[%c0_3, %c0_4] : memref<1x128xf32, #tpu.memory_space<vmem>>, vector<1x128xf32>
    %4 = vector.broadcast %3 : vector<1x128xf32> to vector<344x128xf32>
    %5 = arith.addf %2, %4 : vector<344x128xf32>
    %cst_5 = arith.constant 0.000000e+00 : f32
    %6 = vector.broadcast %cst_5 : f32 to vector<344x128xf32>
    %7 = arith.maximumf %5, %6 : vector<344x128xf32>
    %c0_6 = arith.constant 0 : index
    %c0_7 = arith.constant 0 : index
    %8 = vector.load %arg4[%c0_6, %c0_7] : memref<344x128xf32, #tpu.memory_space<vmem>>, vector<344x128xf32>
    tpu.vector_store %arg4[%c0_6, %c0_7], %7 {strides = array<i32>} : memref<344x128xf32, #tpu.memory_space<vmem>>, vector<344x128xf32>,
    return
  }
  func.func @transform_0(%arg0: i32) -> (i32, i32) {
    %c0_i32 = arith.constant 0 : i32
    %c0_i32_0 = arith.constant 0 : i32
    return %arg0, %c0_i32 : i32, i32
  }
  func.func @transform_1(%arg0: i32) -> (i32, i32) {
    %c0_i32 = arith.constant 0 : i32
    %c0_i32_0 = arith.constant 0 : i32
    %c0_i32_1 = arith.constant 0 : i32
    return %c0_i32, %c0_i32_0 : i32, i32
  }
  func.func @transform_2(%arg0: i32) -> (i32, i32) {
    %c0_i32 = arith.constant 0 : i32
    %c0_i32_0 = arith.constant 0 : i32
    %c0_i32_1 = arith.constant 0 : i32
    return %c0_i32, %c0_i32_0 : i32, i32
  }
  func.func @transform_3(%arg0: i32) -> (i32, i32) {
    %c0_i32 = arith.constant 0 : i32
    %c0_i32_0 = arith.constant 0 : i32
    return %arg0, %c0_i32 : i32, i32
  }
}

module attributes {stable_mosaic.version = 11 : i64} {
  func.func @_max9_kernel(%arg0: i32, %arg1: memref<9x72x128xf32, #tpu.memory_space<vmem>>, %arg2: memref<72x128xf32, #tpu.memory_space<vmem>>) attributes {dimension_semantics = [#tpu.dimension_semantics<parallel>], iteration_bounds = array<i64: 1>, scalar_prefetch = 0 : i64, scratch_operands = 0 : i64, tpu.core_type = #tpu.core_type<tc>, window_params = [{transform_indices = @transform_0, window_bounds = array<i64: 9, 72, 128>}, {transform_indices = @transform_1, window_bounds = array<i64: 72, 128>}]} {
    %c0 = arith.constant 0 : index
    %c0_0 = arith.constant 0 : index
    %c0_1 = arith.constant 0 : index
    %0 = vector.load %arg1[%c0, %c0_0, %c0_1] : memref<9x72x128xf32, #tpu.memory_space<vmem>>, vector<1x72x128xf32>
    %1 = vector.shape_cast %0 : vector<1x72x128xf32> to vector<72x128xf32>
    %c1 = arith.constant 1 : index
    %c0_2 = arith.constant 0 : index
    %c0_3 = arith.constant 0 : index
    %2 = vector.load %arg1[%c1, %c0_2, %c0_3] : memref<9x72x128xf32, #tpu.memory_space<vmem>>, vector<1x72x128xf32>
    %3 = vector.shape_cast %2 : vector<1x72x128xf32> to vector<72x128xf32>
    %4 = arith.maximumf %1, %3 : vector<72x128xf32>
    %c2 = arith.constant 2 : index
    %c0_4 = arith.constant 0 : index
    %c0_5 = arith.constant 0 : index
    %5 = vector.load %arg1[%c2, %c0_4, %c0_5] : memref<9x72x128xf32, #tpu.memory_space<vmem>>, vector<1x72x128xf32>
    %6 = vector.shape_cast %5 : vector<1x72x128xf32> to vector<72x128xf32>
    %7 = arith.maximumf %4, %6 : vector<72x128xf32>
    %c3 = arith.constant 3 : index
    %c0_6 = arith.constant 0 : index
    %c0_7 = arith.constant 0 : index
    %8 = vector.load %arg1[%c3, %c0_6, %c0_7] : memref<9x72x128xf32, #tpu.memory_space<vmem>>, vector<1x72x128xf32>
    %9 = vector.shape_cast %8 : vector<1x72x128xf32> to vector<72x128xf32>
    %10 = arith.maximumf %7, %9 : vector<72x128xf32>
    %c4 = arith.constant 4 : index
    %c0_8 = arith.constant 0 : index
    %c0_9 = arith.constant 0 : index
    %11 = vector.load %arg1[%c4, %c0_8, %c0_9] : memref<9x72x128xf32, #tpu.memory_space<vmem>>, vector<1x72x128xf32>
    %12 = vector.shape_cast %11 : vector<1x72x128xf32> to vector<72x128xf32>
    %13 = arith.maximumf %10, %12 : vector<72x128xf32>
    %c5 = arith.constant 5 : index
    %c0_10 = arith.constant 0 : index
    %c0_11 = arith.constant 0 : index
    %14 = vector.load %arg1[%c5, %c0_10, %c0_11] : memref<9x72x128xf32, #tpu.memory_space<vmem>>, vector<1x72x128xf32>
    %15 = vector.shape_cast %14 : vector<1x72x128xf32> to vector<72x128xf32>
    %16 = arith.maximumf %13, %15 : vector<72x128xf32>
    %c6 = arith.constant 6 : index
    %c0_12 = arith.constant 0 : index
    %c0_13 = arith.constant 0 : index
    %17 = vector.load %arg1[%c6, %c0_12, %c0_13] : memref<9x72x128xf32, #tpu.memory_space<vmem>>, vector<1x72x128xf32>
    %18 = vector.shape_cast %17 : vector<1x72x128xf32> to vector<72x128xf32>
    %19 = arith.maximumf %16, %18 : vector<72x128xf32>
    %c7 = arith.constant 7 : index
    %c0_14 = arith.constant 0 : index
    %c0_15 = arith.constant 0 : index
    %20 = vector.load %arg1[%c7, %c0_14, %c0_15] : memref<9x72x128xf32, #tpu.memory_space<vmem>>, vector<1x72x128xf32>
    %21 = vector.shape_cast %20 : vector<1x72x128xf32> to vector<72x128xf32>
    %22 = arith.maximumf %19, %21 : vector<72x128xf32>
    %c8 = arith.constant 8 : index
    %c0_16 = arith.constant 0 : index
    %c0_17 = arith.constant 0 : index
    %23 = vector.load %arg1[%c8, %c0_16, %c0_17] : memref<9x72x128xf32, #tpu.memory_space<vmem>>, vector<1x72x128xf32>
    %24 = vector.shape_cast %23 : vector<1x72x128xf32> to vector<72x128xf32>
    %25 = arith.maximumf %22, %24 : vector<72x128xf32>
    %c0_18 = arith.constant 0 : index
    %c0_19 = arith.constant 0 : index
    %26 = vector.load %arg2[%c0_18, %c0_19] : memref<72x128xf32, #tpu.memory_space<vmem>>, vector<72x128xf32>
    tpu.vector_store %arg2[%c0_18, %c0_19], %25 {strides = array<i32>} : memref<72x128xf32, #tpu.memory_space<vmem>>, vector<72x128xf32>,
    return
  }
  func.func @transform_0(%arg0: i32) -> (i32, i32, i32) {
    %c0_i32 = arith.constant 0 : i32
    %c0_i32_0 = arith.constant 0 : i32
    %c0_i32_1 = arith.constant 0 : i32
    return %c0_i32, %arg0, %c0_i32_0 : i32, i32, i32
  }
  func.func @transform_1(%arg0: i32) -> (i32, i32) {
    %c0_i32 = arith.constant 0 : i32
    %c0_i32_0 = arith.constant 0 : i32
    return %arg0, %c0_i32 : i32, i32
  }
}

module attributes {stable_mosaic.version = 11 : i64} {
  func.func @_matmul_bias_act_kernel(%arg0: i32, %arg1: memref<72x128xbf16, #tpu.memory_space<vmem>>, %arg2: memref<128x128xbf16, #tpu.memory_space<vmem>>, %arg3: memref<1x128xf32, #tpu.memory_space<vmem>>, %arg4: memref<72x128xf32, #tpu.memory_space<vmem>>) attributes {dimension_semantics = [#tpu.dimension_semantics<parallel>], iteration_bounds = array<i64: 1>, scalar_prefetch = 0 : i64, scratch_operands = 0 : i64, tpu.core_type = #tpu.core_type<tc>, window_params = [{transform_indices = @transform_0, window_bounds = array<i64: 72, 128>}, {pipeline_mode = #tpu.pipeline_mode<synchronous>, transform_indices = @transform_1, window_bounds = array<i64: 128, 128>}, {pipeline_mode = #tpu.pipeline_mode<synchronous>, transform_indices = @transform_2, window_bounds = array<i64: 1, 128>}, {transform_indices = @transform_3, window_bounds = array<i64: 72, 128>}]} {
    %c0 = arith.constant 0 : index
    %c0_0 = arith.constant 0 : index
    %0 = vector.load %arg1[%c0, %c0_0] : memref<72x128xbf16, #tpu.memory_space<vmem>>, vector<72x128xbf16>
    %c0_1 = arith.constant 0 : index
    %c0_2 = arith.constant 0 : index
    %1 = vector.load %arg2[%c0_1, %c0_2] : memref<128x128xbf16, #tpu.memory_space<vmem>>, vector<128x128xbf16>
    %cst = arith.constant dense<0.000000e+00> : vector<72x128xf32>
    %2 = tpu.matmul %0, %1, %cst {dimension_numbers = #tpu.dot_dimension_numbers<[1], [0], [0], [1], [0, 0, 1, 1], [], []>} : vector<72x128xbf16>, vector<128x128xbf16>, vector<72x128xf32> -> vector<72x128xf32>
    %c0_3 = arith.constant 0 : index
    %c0_4 = arith.constant 0 : index
    %3 = vector.load %arg3[%c0_3, %c0_4] : memref<1x128xf32, #tpu.memory_space<vmem>>, vector<1x128xf32>
    %4 = vector.broadcast %3 : vector<1x128xf32> to vector<72x128xf32>
    %5 = arith.addf %2, %4 : vector<72x128xf32>
    %cst_5 = arith.constant 0.000000e+00 : f32
    %6 = vector.broadcast %cst_5 : f32 to vector<72x128xf32>
    %7 = arith.maximumf %5, %6 : vector<72x128xf32>
    %c0_6 = arith.constant 0 : index
    %c0_7 = arith.constant 0 : index
    %8 = vector.load %arg4[%c0_6, %c0_7] : memref<72x128xf32, #tpu.memory_space<vmem>>, vector<72x128xf32>
    tpu.vector_store %arg4[%c0_6, %c0_7], %7 {strides = array<i32>} : memref<72x128xf32, #tpu.memory_space<vmem>>, vector<72x128xf32>,
    return
  }
  func.func @transform_0(%arg0: i32) -> (i32, i32) {
    %c0_i32 = arith.constant 0 : i32
    %c0_i32_0 = arith.constant 0 : i32
    return %arg0, %c0_i32 : i32, i32
  }
  func.func @transform_1(%arg0: i32) -> (i32, i32) {
    %c0_i32 = arith.constant 0 : i32
    %c0_i32_0 = arith.constant 0 : i32
    %c0_i32_1 = arith.constant 0 : i32
    return %c0_i32, %c0_i32_0 : i32, i32
  }
  func.func @transform_2(%arg0: i32) -> (i32, i32) {
    %c0_i32 = arith.constant 0 : i32
    %c0_i32_0 = arith.constant 0 : i32
    %c0_i32_1 = arith.constant 0 : i32
    return %c0_i32, %c0_i32_0 : i32, i32
  }
  func.func @transform_3(%arg0: i32) -> (i32, i32) {
    %c0_i32 = arith.constant 0 : i32
    %c0_i32_0 = arith.constant 0 : i32
    return %arg0, %c0_i32 : i32, i32
  }
}

module attributes {stable_mosaic.version = 11 : i64} {
  func.func @_matmul_bias_act_kernel(%arg0: i32, %arg1: memref<72x256xbf16, #tpu.memory_space<vmem>>, %arg2: memref<256x128xbf16, #tpu.memory_space<vmem>>, %arg3: memref<1x128xf32, #tpu.memory_space<vmem>>, %arg4: memref<72x128xf32, #tpu.memory_space<vmem>>) attributes {dimension_semantics = [#tpu.dimension_semantics<parallel>], iteration_bounds = array<i64: 1>, scalar_prefetch = 0 : i64, scratch_operands = 0 : i64, tpu.core_type = #tpu.core_type<tc>, window_params = [{transform_indices = @transform_0, window_bounds = array<i64: 72, 256>}, {pipeline_mode = #tpu.pipeline_mode<synchronous>, transform_indices = @transform_1, window_bounds = array<i64: 256, 128>}, {pipeline_mode = #tpu.pipeline_mode<synchronous>, transform_indices = @transform_2, window_bounds = array<i64: 1, 128>}, {transform_indices = @transform_3, window_bounds = array<i64: 72, 128>}]} {
    %c0 = arith.constant 0 : index
    %c0_0 = arith.constant 0 : index
    %0 = vector.load %arg1[%c0, %c0_0] : memref<72x256xbf16, #tpu.memory_space<vmem>>, vector<72x256xbf16>
    %c0_1 = arith.constant 0 : index
    %c0_2 = arith.constant 0 : index
    %1 = vector.load %arg2[%c0_1, %c0_2] : memref<256x128xbf16, #tpu.memory_space<vmem>>, vector<256x128xbf16>
    %cst = arith.constant dense<0.000000e+00> : vector<72x128xf32>
    %2 = tpu.matmul %0, %1, %cst {dimension_numbers = #tpu.dot_dimension_numbers<[1], [0], [0], [1], [0, 0, 1, 1], [], []>} : vector<72x256xbf16>, vector<256x128xbf16>, vector<72x128xf32> -> vector<72x128xf32>
    %c0_3 = arith.constant 0 : index
    %c0_4 = arith.constant 0 : index
    %3 = vector.load %arg3[%c0_3, %c0_4] : memref<1x128xf32, #tpu.memory_space<vmem>>, vector<1x128xf32>
    %4 = vector.broadcast %3 : vector<1x128xf32> to vector<72x128xf32>
    %5 = arith.addf %2, %4 : vector<72x128xf32>
    %cst_5 = arith.constant 0.000000e+00 : f32
    %6 = vector.broadcast %cst_5 : f32 to vector<72x128xf32>
    %7 = arith.maximumf %5, %6 : vector<72x128xf32>
    %c0_6 = arith.constant 0 : index
    %c0_7 = arith.constant 0 : index
    %8 = vector.load %arg4[%c0_6, %c0_7] : memref<72x128xf32, #tpu.memory_space<vmem>>, vector<72x128xf32>
    tpu.vector_store %arg4[%c0_6, %c0_7], %7 {strides = array<i32>} : memref<72x128xf32, #tpu.memory_space<vmem>>, vector<72x128xf32>,
    return
  }
  func.func @transform_0(%arg0: i32) -> (i32, i32) {
    %c0_i32 = arith.constant 0 : i32
    %c0_i32_0 = arith.constant 0 : i32
    return %arg0, %c0_i32 : i32, i32
  }
  func.func @transform_1(%arg0: i32) -> (i32, i32) {
    %c0_i32 = arith.constant 0 : i32
    %c0_i32_0 = arith.constant 0 : i32
    %c0_i32_1 = arith.constant 0 : i32
    return %c0_i32, %c0_i32_0 : i32, i32
  }
  func.func @transform_2(%arg0: i32) -> (i32, i32) {
    %c0_i32 = arith.constant 0 : i32
    %c0_i32_0 = arith.constant 0 : i32
    %c0_i32_1 = arith.constant 0 : i32
    return %c0_i32, %c0_i32_0 : i32, i32
  }
  func.func @transform_3(%arg0: i32) -> (i32, i32) {
    %c0_i32 = arith.constant 0 : i32
    %c0_i32_0 = arith.constant 0 : i32
    return %arg0, %c0_i32 : i32, i32
  }
}

module attributes {stable_mosaic.version = 11 : i64} {
  func.func @_matmul_bias_act_kernel(%arg0: i32, %arg1: memref<72x384xbf16, #tpu.memory_space<vmem>>, %arg2: memref<384x256xbf16, #tpu.memory_space<vmem>>, %arg3: memref<1x256xf32, #tpu.memory_space<vmem>>, %arg4: memref<72x256xf32, #tpu.memory_space<vmem>>) attributes {dimension_semantics = [#tpu.dimension_semantics<parallel>], iteration_bounds = array<i64: 1>, scalar_prefetch = 0 : i64, scratch_operands = 0 : i64, tpu.core_type = #tpu.core_type<tc>, window_params = [{transform_indices = @transform_0, window_bounds = array<i64: 72, 384>}, {pipeline_mode = #tpu.pipeline_mode<synchronous>, transform_indices = @transform_1, window_bounds = array<i64: 384, 256>}, {pipeline_mode = #tpu.pipeline_mode<synchronous>, transform_indices = @transform_2, window_bounds = array<i64: 1, 256>}, {transform_indices = @transform_3, window_bounds = array<i64: 72, 256>}]} {
    %c0 = arith.constant 0 : index
    %c0_0 = arith.constant 0 : index
    %0 = vector.load %arg1[%c0, %c0_0] : memref<72x384xbf16, #tpu.memory_space<vmem>>, vector<72x384xbf16>
    %c0_1 = arith.constant 0 : index
    %c0_2 = arith.constant 0 : index
    %1 = vector.load %arg2[%c0_1, %c0_2] : memref<384x256xbf16, #tpu.memory_space<vmem>>, vector<384x256xbf16>
    %cst = arith.constant dense<0.000000e+00> : vector<72x256xf32>
    %2 = tpu.matmul %0, %1, %cst {dimension_numbers = #tpu.dot_dimension_numbers<[1], [0], [0], [1], [0, 0, 1, 1], [], []>} : vector<72x384xbf16>, vector<384x256xbf16>, vector<72x256xf32> -> vector<72x256xf32>
    %c0_3 = arith.constant 0 : index
    %c0_4 = arith.constant 0 : index
    %3 = vector.load %arg3[%c0_3, %c0_4] : memref<1x256xf32, #tpu.memory_space<vmem>>, vector<1x256xf32>
    %4 = vector.broadcast %3 : vector<1x256xf32> to vector<72x256xf32>
    %5 = arith.addf %2, %4 : vector<72x256xf32>
    %cst_5 = arith.constant 0.000000e+00 : f32
    %6 = vector.broadcast %cst_5 : f32 to vector<72x256xf32>
    %7 = arith.maximumf %5, %6 : vector<72x256xf32>
    %c0_6 = arith.constant 0 : index
    %c0_7 = arith.constant 0 : index
    %8 = vector.load %arg4[%c0_6, %c0_7] : memref<72x256xf32, #tpu.memory_space<vmem>>, vector<72x256xf32>
    tpu.vector_store %arg4[%c0_6, %c0_7], %7 {strides = array<i32>} : memref<72x256xf32, #tpu.memory_space<vmem>>, vector<72x256xf32>,
    return
  }
  func.func @transform_0(%arg0: i32) -> (i32, i32) {
    %c0_i32 = arith.constant 0 : i32
    %c0_i32_0 = arith.constant 0 : i32
    return %arg0, %c0_i32 : i32, i32
  }
  func.func @transform_1(%arg0: i32) -> (i32, i32) {
    %c0_i32 = arith.constant 0 : i32
    %c0_i32_0 = arith.constant 0 : i32
    %c0_i32_1 = arith.constant 0 : i32
    return %c0_i32, %c0_i32_0 : i32, i32
  }
  func.func @transform_2(%arg0: i32) -> (i32, i32) {
    %c0_i32 = arith.constant 0 : i32
    %c0_i32_0 = arith.constant 0 : i32
    %c0_i32_1 = arith.constant 0 : i32
    return %c0_i32, %c0_i32_0 : i32, i32
  }
  func.func @transform_3(%arg0: i32) -> (i32, i32) {
    %c0_i32 = arith.constant 0 : i32
    %c0_i32_0 = arith.constant 0 : i32
    return %arg0, %c0_i32 : i32, i32
  }
}

module attributes {stable_mosaic.version = 11 : i64} {
  func.func @_max9_kernel(%arg0: i32, %arg1: memref<9x24x256xf32, #tpu.memory_space<vmem>>, %arg2: memref<24x256xf32, #tpu.memory_space<vmem>>) attributes {dimension_semantics = [#tpu.dimension_semantics<parallel>], iteration_bounds = array<i64: 1>, scalar_prefetch = 0 : i64, scratch_operands = 0 : i64, tpu.core_type = #tpu.core_type<tc>, window_params = [{transform_indices = @transform_0, window_bounds = array<i64: 9, 24, 256>}, {transform_indices = @transform_1, window_bounds = array<i64: 24, 256>}]} {
    %c0 = arith.constant 0 : index
    %c0_0 = arith.constant 0 : index
    %c0_1 = arith.constant 0 : index
    %0 = vector.load %arg1[%c0, %c0_0, %c0_1] : memref<9x24x256xf32, #tpu.memory_space<vmem>>, vector<1x24x256xf32>
    %1 = vector.shape_cast %0 : vector<1x24x256xf32> to vector<24x256xf32>
    %c1 = arith.constant 1 : index
    %c0_2 = arith.constant 0 : index
    %c0_3 = arith.constant 0 : index
    %2 = vector.load %arg1[%c1, %c0_2, %c0_3] : memref<9x24x256xf32, #tpu.memory_space<vmem>>, vector<1x24x256xf32>
    %3 = vector.shape_cast %2 : vector<1x24x256xf32> to vector<24x256xf32>
    %4 = arith.maximumf %1, %3 : vector<24x256xf32>
    %c2 = arith.constant 2 : index
    %c0_4 = arith.constant 0 : index
    %c0_5 = arith.constant 0 : index
    %5 = vector.load %arg1[%c2, %c0_4, %c0_5] : memref<9x24x256xf32, #tpu.memory_space<vmem>>, vector<1x24x256xf32>
    %6 = vector.shape_cast %5 : vector<1x24x256xf32> to vector<24x256xf32>
    %7 = arith.maximumf %4, %6 : vector<24x256xf32>
    %c3 = arith.constant 3 : index
    %c0_6 = arith.constant 0 : index
    %c0_7 = arith.constant 0 : index
    %8 = vector.load %arg1[%c3, %c0_6, %c0_7] : memref<9x24x256xf32, #tpu.memory_space<vmem>>, vector<1x24x256xf32>
    %9 = vector.shape_cast %8 : vector<1x24x256xf32> to vector<24x256xf32>
    %10 = arith.maximumf %7, %9 : vector<24x256xf32>
    %c4 = arith.constant 4 : index
    %c0_8 = arith.constant 0 : index
    %c0_9 = arith.constant 0 : index
    %11 = vector.load %arg1[%c4, %c0_8, %c0_9] : memref<9x24x256xf32, #tpu.memory_space<vmem>>, vector<1x24x256xf32>
    %12 = vector.shape_cast %11 : vector<1x24x256xf32> to vector<24x256xf32>
    %13 = arith.maximumf %10, %12 : vector<24x256xf32>
    %c5 = arith.constant 5 : index
    %c0_10 = arith.constant 0 : index
    %c0_11 = arith.constant 0 : index
    %14 = vector.load %arg1[%c5, %c0_10, %c0_11] : memref<9x24x256xf32, #tpu.memory_space<vmem>>, vector<1x24x256xf32>
    %15 = vector.shape_cast %14 : vector<1x24x256xf32> to vector<24x256xf32>
    %16 = arith.maximumf %13, %15 : vector<24x256xf32>
    %c6 = arith.constant 6 : index
    %c0_12 = arith.constant 0 : index
    %c0_13 = arith.constant 0 : index
    %17 = vector.load %arg1[%c6, %c0_12, %c0_13] : memref<9x24x256xf32, #tpu.memory_space<vmem>>, vector<1x24x256xf32>
    %18 = vector.shape_cast %17 : vector<1x24x256xf32> to vector<24x256xf32>
    %19 = arith.maximumf %16, %18 : vector<24x256xf32>
    %c7 = arith.constant 7 : index
    %c0_14 = arith.constant 0 : index
    %c0_15 = arith.constant 0 : index
    %20 = vector.load %arg1[%c7, %c0_14, %c0_15] : memref<9x24x256xf32, #tpu.memory_space<vmem>>, vector<1x24x256xf32>
    %21 = vector.shape_cast %20 : vector<1x24x256xf32> to vector<24x256xf32>
    %22 = arith.maximumf %19, %21 : vector<24x256xf32>
    %c8 = arith.constant 8 : index
    %c0_16 = arith.constant 0 : index
    %c0_17 = arith.constant 0 : index
    %23 = vector.load %arg1[%c8, %c0_16, %c0_17] : memref<9x24x256xf32, #tpu.memory_space<vmem>>, vector<1x24x256xf32>
    %24 = vector.shape_cast %23 : vector<1x24x256xf32> to vector<24x256xf32>
    %25 = arith.maximumf %22, %24 : vector<24x256xf32>
    %c0_18 = arith.constant 0 : index
    %c0_19 = arith.constant 0 : index
    %26 = vector.load %arg2[%c0_18, %c0_19] : memref<24x256xf32, #tpu.memory_space<vmem>>, vector<24x256xf32>
    tpu.vector_store %arg2[%c0_18, %c0_19], %25 {strides = array<i32>} : memref<24x256xf32, #tpu.memory_space<vmem>>, vector<24x256xf32>,
    return
  }
  func.func @transform_0(%arg0: i32) -> (i32, i32, i32) {
    %c0_i32 = arith.constant 0 : i32
    %c0_i32_0 = arith.constant 0 : i32
    %c0_i32_1 = arith.constant 0 : i32
    return %c0_i32, %arg0, %c0_i32_0 : i32, i32, i32
  }
  func.func @transform_1(%arg0: i32) -> (i32, i32) {
    %c0_i32 = arith.constant 0 : i32
    %c0_i32_0 = arith.constant 0 : i32
    return %arg0, %c0_i32 : i32, i32
  }
}

module attributes {stable_mosaic.version = 11 : i64} {
  func.func @_matmul_bias_act_kernel(%arg0: i32, %arg1: memref<24x256xbf16, #tpu.memory_space<vmem>>, %arg2: memref<256x128xbf16, #tpu.memory_space<vmem>>, %arg3: memref<1x128xf32, #tpu.memory_space<vmem>>, %arg4: memref<24x128xf32, #tpu.memory_space<vmem>>) attributes {dimension_semantics = [#tpu.dimension_semantics<parallel>], iteration_bounds = array<i64: 1>, scalar_prefetch = 0 : i64, scratch_operands = 0 : i64, tpu.core_type = #tpu.core_type<tc>, window_params = [{transform_indices = @transform_0, window_bounds = array<i64: 24, 256>}, {pipeline_mode = #tpu.pipeline_mode<synchronous>, transform_indices = @transform_1, window_bounds = array<i64: 256, 128>}, {pipeline_mode = #tpu.pipeline_mode<synchronous>, transform_indices = @transform_2, window_bounds = array<i64: 1, 128>}, {transform_indices = @transform_3, window_bounds = array<i64: 24, 128>}]} {
    %c0 = arith.constant 0 : index
    %c0_0 = arith.constant 0 : index
    %0 = vector.load %arg1[%c0, %c0_0] : memref<24x256xbf16, #tpu.memory_space<vmem>>, vector<24x256xbf16>
    %c0_1 = arith.constant 0 : index
    %c0_2 = arith.constant 0 : index
    %1 = vector.load %arg2[%c0_1, %c0_2] : memref<256x128xbf16, #tpu.memory_space<vmem>>, vector<256x128xbf16>
    %cst = arith.constant dense<0.000000e+00> : vector<24x128xf32>
    %2 = tpu.matmul %0, %1, %cst {dimension_numbers = #tpu.dot_dimension_numbers<[1], [0], [0], [1], [0, 0, 1, 1], [], []>} : vector<24x256xbf16>, vector<256x128xbf16>, vector<24x128xf32> -> vector<24x128xf32>
    %c0_3 = arith.constant 0 : index
    %c0_4 = arith.constant 0 : index
    %3 = vector.load %arg3[%c0_3, %c0_4] : memref<1x128xf32, #tpu.memory_space<vmem>>, vector<1x128xf32>
    %4 = vector.broadcast %3 : vector<1x128xf32> to vector<24x128xf32>
    %5 = arith.addf %2, %4 : vector<24x128xf32>
    %cst_5 = arith.constant 0.000000e+00 : f32
    %6 = vector.broadcast %cst_5 : f32 to vector<24x128xf32>
    %7 = arith.maximumf %5, %6 : vector<24x128xf32>
    %c0_6 = arith.constant 0 : index
    %c0_7 = arith.constant 0 : index
    %8 = vector.load %arg4[%c0_6, %c0_7] : memref<24x128xf32, #tpu.memory_space<vmem>>, vector<24x128xf32>
    tpu.vector_store %arg4[%c0_6, %c0_7], %7 {strides = array<i32>} : memref<24x128xf32, #tpu.memory_space<vmem>>, vector<24x128xf32>,
    return
  }
  func.func @transform_0(%arg0: i32) -> (i32, i32) {
    %c0_i32 = arith.constant 0 : i32
    %c0_i32_0 = arith.constant 0 : i32
    return %arg0, %c0_i32 : i32, i32
  }
  func.func @transform_1(%arg0: i32) -> (i32, i32) {
    %c0_i32 = arith.constant 0 : i32
    %c0_i32_0 = arith.constant 0 : i32
    %c0_i32_1 = arith.constant 0 : i32
    return %c0_i32, %c0_i32_0 : i32, i32
  }
  func.func @transform_2(%arg0: i32) -> (i32, i32) {
    %c0_i32 = arith.constant 0 : i32
    %c0_i32_0 = arith.constant 0 : i32
    %c0_i32_1 = arith.constant 0 : i32
    return %c0_i32, %c0_i32_0 : i32, i32
  }
  func.func @transform_3(%arg0: i32) -> (i32, i32) {
    %c0_i32 = arith.constant 0 : i32
    %c0_i32_0 = arith.constant 0 : i32
    return %arg0, %c0_i32 : i32, i32
  }
}

module attributes {stable_mosaic.version = 11 : i64} {
  func.func @_matmul_bias_act_kernel(%arg0: i32, %arg1: memref<24x384xbf16, #tpu.memory_space<vmem>>, %arg2: memref<384x256xbf16, #tpu.memory_space<vmem>>, %arg3: memref<1x256xf32, #tpu.memory_space<vmem>>, %arg4: memref<24x256xf32, #tpu.memory_space<vmem>>) attributes {dimension_semantics = [#tpu.dimension_semantics<parallel>], iteration_bounds = array<i64: 1>, scalar_prefetch = 0 : i64, scratch_operands = 0 : i64, tpu.core_type = #tpu.core_type<tc>, window_params = [{transform_indices = @transform_0, window_bounds = array<i64: 24, 384>}, {pipeline_mode = #tpu.pipeline_mode<synchronous>, transform_indices = @transform_1, window_bounds = array<i64: 384, 256>}, {pipeline_mode = #tpu.pipeline_mode<synchronous>, transform_indices = @transform_2, window_bounds = array<i64: 1, 256>}, {transform_indices = @transform_3, window_bounds = array<i64: 24, 256>}]} {
    %c0 = arith.constant 0 : index
    %c0_0 = arith.constant 0 : index
    %0 = vector.load %arg1[%c0, %c0_0] : memref<24x384xbf16, #tpu.memory_space<vmem>>, vector<24x384xbf16>
    %c0_1 = arith.constant 0 : index
    %c0_2 = arith.constant 0 : index
    %1 = vector.load %arg2[%c0_1, %c0_2] : memref<384x256xbf16, #tpu.memory_space<vmem>>, vector<384x256xbf16>
    %cst = arith.constant dense<0.000000e+00> : vector<24x256xf32>
    %2 = tpu.matmul %0, %1, %cst {dimension_numbers = #tpu.dot_dimension_numbers<[1], [0], [0], [1], [0, 0, 1, 1], [], []>} : vector<24x384xbf16>, vector<384x256xbf16>, vector<24x256xf32> -> vector<24x256xf32>
    %c0_3 = arith.constant 0 : index
    %c0_4 = arith.constant 0 : index
    %3 = vector.load %arg3[%c0_3, %c0_4] : memref<1x256xf32, #tpu.memory_space<vmem>>, vector<1x256xf32>
    %4 = vector.broadcast %3 : vector<1x256xf32> to vector<24x256xf32>
    %5 = arith.addf %2, %4 : vector<24x256xf32>
    %cst_5 = arith.constant 0.000000e+00 : f32
    %6 = vector.broadcast %cst_5 : f32 to vector<24x256xf32>
    %7 = arith.maximumf %5, %6 : vector<24x256xf32>
    %c0_6 = arith.constant 0 : index
    %c0_7 = arith.constant 0 : index
    %8 = vector.load %arg4[%c0_6, %c0_7] : memref<24x256xf32, #tpu.memory_space<vmem>>, vector<24x256xf32>
    tpu.vector_store %arg4[%c0_6, %c0_7], %7 {strides = array<i32>} : memref<24x256xf32, #tpu.memory_space<vmem>>, vector<24x256xf32>,
    return
  }
  func.func @transform_0(%arg0: i32) -> (i32, i32) {
    %c0_i32 = arith.constant 0 : i32
    %c0_i32_0 = arith.constant 0 : i32
    return %arg0, %c0_i32 : i32, i32
  }
  func.func @transform_1(%arg0: i32) -> (i32, i32) {
    %c0_i32 = arith.constant 0 : i32
    %c0_i32_0 = arith.constant 0 : i32
    %c0_i32_1 = arith.constant 0 : i32
    return %c0_i32, %c0_i32_0 : i32, i32
  }
  func.func @transform_2(%arg0: i32) -> (i32, i32) {
    %c0_i32 = arith.constant 0 : i32
    %c0_i32_0 = arith.constant 0 : i32
    %c0_i32_1 = arith.constant 0 : i32
    return %c0_i32, %c0_i32_0 : i32, i32
  }
  func.func @transform_3(%arg0: i32) -> (i32, i32) {
    %c0_i32 = arith.constant 0 : i32
    %c0_i32_0 = arith.constant 0 : i32
    return %arg0, %c0_i32 : i32, i32
  }
}

module attributes {stable_mosaic.version = 11 : i64} {
  func.func @_matmul_bias_act_kernel(%arg0: i32, %arg1: memref<24x512xbf16, #tpu.memory_space<vmem>>, %arg2: memref<512x384xbf16, #tpu.memory_space<vmem>>, %arg3: memref<1x384xf32, #tpu.memory_space<vmem>>, %arg4: memref<24x384xf32, #tpu.memory_space<vmem>>) attributes {dimension_semantics = [#tpu.dimension_semantics<parallel>], iteration_bounds = array<i64: 1>, scalar_prefetch = 0 : i64, scratch_operands = 0 : i64, tpu.core_type = #tpu.core_type<tc>, window_params = [{transform_indices = @transform_0, window_bounds = array<i64: 24, 512>}, {pipeline_mode = #tpu.pipeline_mode<synchronous>, transform_indices = @transform_1, window_bounds = array<i64: 512, 384>}, {pipeline_mode = #tpu.pipeline_mode<synchronous>, transform_indices = @transform_2, window_bounds = array<i64: 1, 384>}, {transform_indices = @transform_3, window_bounds = array<i64: 24, 384>}]} {
    %c0 = arith.constant 0 : index
    %c0_0 = arith.constant 0 : index
    %0 = vector.load %arg1[%c0, %c0_0] : memref<24x512xbf16, #tpu.memory_space<vmem>>, vector<24x512xbf16>
    %c0_1 = arith.constant 0 : index
    %c0_2 = arith.constant 0 : index
    %1 = vector.load %arg2[%c0_1, %c0_2] : memref<512x384xbf16, #tpu.memory_space<vmem>>, vector<512x384xbf16>
    %cst = arith.constant dense<0.000000e+00> : vector<24x384xf32>
    %2 = tpu.matmul %0, %1, %cst {dimension_numbers = #tpu.dot_dimension_numbers<[1], [0], [0], [1], [0, 0, 1, 1], [], []>} : vector<24x512xbf16>, vector<512x384xbf16>, vector<24x384xf32> -> vector<24x384xf32>
    %c0_3 = arith.constant 0 : index
    %c0_4 = arith.constant 0 : index
    %3 = vector.load %arg3[%c0_3, %c0_4] : memref<1x384xf32, #tpu.memory_space<vmem>>, vector<1x384xf32>
    %4 = vector.broadcast %3 : vector<1x384xf32> to vector<24x384xf32>
    %5 = arith.addf %2, %4 : vector<24x384xf32>
    %cst_5 = arith.constant 0.000000e+00 : f32
    %6 = vector.broadcast %cst_5 : f32 to vector<24x384xf32>
    %7 = arith.maximumf %5, %6 : vector<24x384xf32>
    %c0_6 = arith.constant 0 : index
    %c0_7 = arith.constant 0 : index
    %8 = vector.load %arg4[%c0_6, %c0_7] : memref<24x384xf32, #tpu.memory_space<vmem>>, vector<24x384xf32>
    tpu.vector_store %arg4[%c0_6, %c0_7], %7 {strides = array<i32>} : memref<24x384xf32, #tpu.memory_space<vmem>>, vector<24x384xf32>,
    return
  }
  func.func @transform_0(%arg0: i32) -> (i32, i32) {
    %c0_i32 = arith.constant 0 : i32
    %c0_i32_0 = arith.constant 0 : i32
    return %arg0, %c0_i32 : i32, i32
  }
  func.func @transform_1(%arg0: i32) -> (i32, i32) {
    %c0_i32 = arith.constant 0 : i32
    %c0_i32_0 = arith.constant 0 : i32
    %c0_i32_1 = arith.constant 0 : i32
    return %c0_i32, %c0_i32_0 : i32, i32
  }
  func.func @transform_2(%arg0: i32) -> (i32, i32) {
    %c0_i32 = arith.constant 0 : i32
    %c0_i32_0 = arith.constant 0 : i32
    %c0_i32_1 = arith.constant 0 : i32
    return %c0_i32, %c0_i32_0 : i32, i32
  }
  func.func @transform_3(%arg0: i32) -> (i32, i32) {
    %c0_i32 = arith.constant 0 : i32
    %c0_i32_0 = arith.constant 0 : i32
    return %arg0, %c0_i32 : i32, i32
  }
}

module attributes {stable_mosaic.version = 11 : i64} {
  func.func @_matmul_bias_act_kernel(%arg0: i32, %arg1: memref<24x384xbf16, #tpu.memory_space<vmem>>, %arg2: memref<384x128xbf16, #tpu.memory_space<vmem>>, %arg3: memref<1x128xf32, #tpu.memory_space<vmem>>, %arg4: memref<24x128xf32, #tpu.memory_space<vmem>>) attributes {dimension_semantics = [#tpu.dimension_semantics<parallel>], iteration_bounds = array<i64: 1>, scalar_prefetch = 0 : i64, scratch_operands = 0 : i64, tpu.core_type = #tpu.core_type<tc>, window_params = [{transform_indices = @transform_0, window_bounds = array<i64: 24, 384>}, {pipeline_mode = #tpu.pipeline_mode<synchronous>, transform_indices = @transform_1, window_bounds = array<i64: 384, 128>}, {pipeline_mode = #tpu.pipeline_mode<synchronous>, transform_indices = @transform_2, window_bounds = array<i64: 1, 128>}, {transform_indices = @transform_3, window_bounds = array<i64: 24, 128>}]} {
    %c0 = arith.constant 0 : index
    %c0_0 = arith.constant 0 : index
    %0 = vector.load %arg1[%c0, %c0_0] : memref<24x384xbf16, #tpu.memory_space<vmem>>, vector<24x384xbf16>
    %c0_1 = arith.constant 0 : index
    %c0_2 = arith.constant 0 : index
    %1 = vector.load %arg2[%c0_1, %c0_2] : memref<384x128xbf16, #tpu.memory_space<vmem>>, vector<384x128xbf16>
    %cst = arith.constant dense<0.000000e+00> : vector<24x128xf32>
    %2 = tpu.matmul %0, %1, %cst {dimension_numbers = #tpu.dot_dimension_numbers<[1], [0], [0], [1], [0, 0, 1, 1], [], []>} : vector<24x384xbf16>, vector<384x128xbf16>, vector<24x128xf32> -> vector<24x128xf32>
    %c0_3 = arith.constant 0 : index
    %c0_4 = arith.constant 0 : index
    %3 = vector.load %arg3[%c0_3, %c0_4] : memref<1x128xf32, #tpu.memory_space<vmem>>, vector<1x128xf32>
    %4 = vector.broadcast %3 : vector<1x128xf32> to vector<24x128xf32>
    %5 = arith.addf %2, %4 : vector<24x128xf32>
    %cst_5 = arith.constant 0.000000e+00 : f32
    %6 = vector.broadcast %cst_5 : f32 to vector<24x128xf32>
    %7 = arith.maximumf %5, %6 : vector<24x128xf32>
    %c0_6 = arith.constant 0 : index
    %c0_7 = arith.constant 0 : index
    %8 = vector.load %arg4[%c0_6, %c0_7] : memref<24x128xf32, #tpu.memory_space<vmem>>, vector<24x128xf32>
    tpu.vector_store %arg4[%c0_6, %c0_7], %7 {strides = array<i32>} : memref<24x128xf32, #tpu.memory_space<vmem>>, vector<24x128xf32>,
    return
  }
  func.func @transform_0(%arg0: i32) -> (i32, i32) {
    %c0_i32 = arith.constant 0 : i32
    %c0_i32_0 = arith.constant 0 : i32
    return %arg0, %c0_i32 : i32, i32
  }
  func.func @transform_1(%arg0: i32) -> (i32, i32) {
    %c0_i32 = arith.constant 0 : i32
    %c0_i32_0 = arith.constant 0 : i32
    %c0_i32_1 = arith.constant 0 : i32
    return %c0_i32, %c0_i32_0 : i32, i32
  }
  func.func @transform_2(%arg0: i32) -> (i32, i32) {
    %c0_i32 = arith.constant 0 : i32
    %c0_i32_0 = arith.constant 0 : i32
    %c0_i32_1 = arith.constant 0 : i32
    return %c0_i32, %c0_i32_0 : i32, i32
  }
  func.func @transform_3(%arg0: i32) -> (i32, i32) {
    %c0_i32 = arith.constant 0 : i32
    %c0_i32_0 = arith.constant 0 : i32
    return %arg0, %c0_i32 : i32, i32
  }
}

module attributes {stable_mosaic.version = 11 : i64} {
  func.func @_matmul_bias_act_kernel(%arg0: i32, %arg1: memref<24x640xbf16, #tpu.memory_space<vmem>>, %arg2: memref<640x512xbf16, #tpu.memory_space<vmem>>, %arg3: memref<1x512xf32, #tpu.memory_space<vmem>>, %arg4: memref<24x512xf32, #tpu.memory_space<vmem>>) attributes {dimension_semantics = [#tpu.dimension_semantics<parallel>], iteration_bounds = array<i64: 1>, scalar_prefetch = 0 : i64, scratch_operands = 0 : i64, tpu.core_type = #tpu.core_type<tc>, window_params = [{transform_indices = @transform_0, window_bounds = array<i64: 24, 640>}, {pipeline_mode = #tpu.pipeline_mode<synchronous>, transform_indices = @transform_1, window_bounds = array<i64: 640, 512>}, {pipeline_mode = #tpu.pipeline_mode<synchronous>, transform_indices = @transform_2, window_bounds = array<i64: 1, 512>}, {transform_indices = @transform_3, window_bounds = array<i64: 24, 512>}]} {
    %c0 = arith.constant 0 : index
    %c0_0 = arith.constant 0 : index
    %0 = vector.load %arg1[%c0, %c0_0] : memref<24x640xbf16, #tpu.memory_space<vmem>>, vector<24x640xbf16>
    %c0_1 = arith.constant 0 : index
    %c0_2 = arith.constant 0 : index
    %1 = vector.load %arg2[%c0_1, %c0_2] : memref<640x512xbf16, #tpu.memory_space<vmem>>, vector<640x512xbf16>
    %cst = arith.constant dense<0.000000e+00> : vector<24x512xf32>
    %2 = tpu.matmul %0, %1, %cst {dimension_numbers = #tpu.dot_dimension_numbers<[1], [0], [0], [1], [0, 0, 1, 1], [], []>} : vector<24x640xbf16>, vector<640x512xbf16>, vector<24x512xf32> -> vector<24x512xf32>
    %c0_3 = arith.constant 0 : index
    %c0_4 = arith.constant 0 : index
    %3 = vector.load %arg3[%c0_3, %c0_4] : memref<1x512xf32, #tpu.memory_space<vmem>>, vector<1x512xf32>
    %4 = vector.broadcast %3 : vector<1x512xf32> to vector<24x512xf32>
    %5 = arith.addf %2, %4 : vector<24x512xf32>
    %cst_5 = arith.constant 0.000000e+00 : f32
    %6 = vector.broadcast %cst_5 : f32 to vector<24x512xf32>
    %7 = arith.maximumf %5, %6 : vector<24x512xf32>
    %c0_6 = arith.constant 0 : index
    %c0_7 = arith.constant 0 : index
    %8 = vector.load %arg4[%c0_6, %c0_7] : memref<24x512xf32, #tpu.memory_space<vmem>>, vector<24x512xf32>
    tpu.vector_store %arg4[%c0_6, %c0_7], %7 {strides = array<i32>} : memref<24x512xf32, #tpu.memory_space<vmem>>, vector<24x512xf32>,
    return
  }
  func.func @transform_0(%arg0: i32) -> (i32, i32) {
    %c0_i32 = arith.constant 0 : i32
    %c0_i32_0 = arith.constant 0 : i32
    return %arg0, %c0_i32 : i32, i32
  }
  func.func @transform_1(%arg0: i32) -> (i32, i32) {
    %c0_i32 = arith.constant 0 : i32
    %c0_i32_0 = arith.constant 0 : i32
    %c0_i32_1 = arith.constant 0 : i32
    return %c0_i32, %c0_i32_0 : i32, i32
  }
  func.func @transform_2(%arg0: i32) -> (i32, i32) {
    %c0_i32 = arith.constant 0 : i32
    %c0_i32_0 = arith.constant 0 : i32
    %c0_i32_1 = arith.constant 0 : i32
    return %c0_i32, %c0_i32_0 : i32, i32
  }
  func.func @transform_3(%arg0: i32) -> (i32, i32) {
    %c0_i32 = arith.constant 0 : i32
    %c0_i32_0 = arith.constant 0 : i32
    return %arg0, %c0_i32 : i32, i32
  }
}

module attributes {stable_mosaic.version = 11 : i64} {
  func.func @_max9_kernel(%arg0: i32, %arg1: memref<9x8x512xf32, #tpu.memory_space<vmem>>, %arg2: memref<8x512xf32, #tpu.memory_space<vmem>>) attributes {dimension_semantics = [#tpu.dimension_semantics<parallel>], iteration_bounds = array<i64: 1>, scalar_prefetch = 0 : i64, scratch_operands = 0 : i64, tpu.core_type = #tpu.core_type<tc>, window_params = [{transform_indices = @transform_0, window_bounds = array<i64: 9, 8, 512>}, {transform_indices = @transform_1, window_bounds = array<i64: 8, 512>}]} {
    %c0 = arith.constant 0 : index
    %c0_0 = arith.constant 0 : index
    %c0_1 = arith.constant 0 : index
    %0 = vector.load %arg1[%c0, %c0_0, %c0_1] : memref<9x8x512xf32, #tpu.memory_space<vmem>>, vector<1x8x512xf32>
    %1 = vector.shape_cast %0 : vector<1x8x512xf32> to vector<8x512xf32>
    %c1 = arith.constant 1 : index
    %c0_2 = arith.constant 0 : index
    %c0_3 = arith.constant 0 : index
    %2 = vector.load %arg1[%c1, %c0_2, %c0_3] : memref<9x8x512xf32, #tpu.memory_space<vmem>>, vector<1x8x512xf32>
    %3 = vector.shape_cast %2 : vector<1x8x512xf32> to vector<8x512xf32>
    %4 = arith.maximumf %1, %3 : vector<8x512xf32>
    %c2 = arith.constant 2 : index
    %c0_4 = arith.constant 0 : index
    %c0_5 = arith.constant 0 : index
    %5 = vector.load %arg1[%c2, %c0_4, %c0_5] : memref<9x8x512xf32, #tpu.memory_space<vmem>>, vector<1x8x512xf32>
    %6 = vector.shape_cast %5 : vector<1x8x512xf32> to vector<8x512xf32>
    %7 = arith.maximumf %4, %6 : vector<8x512xf32>
    %c3 = arith.constant 3 : index
    %c0_6 = arith.constant 0 : index
    %c0_7 = arith.constant 0 : index
    %8 = vector.load %arg1[%c3, %c0_6, %c0_7] : memref<9x8x512xf32, #tpu.memory_space<vmem>>, vector<1x8x512xf32>
    %9 = vector.shape_cast %8 : vector<1x8x512xf32> to vector<8x512xf32>
    %10 = arith.maximumf %7, %9 : vector<8x512xf32>
    %c4 = arith.constant 4 : index
    %c0_8 = arith.constant 0 : index
    %c0_9 = arith.constant 0 : index
    %11 = vector.load %arg1[%c4, %c0_8, %c0_9] : memref<9x8x512xf32, #tpu.memory_space<vmem>>, vector<1x8x512xf32>
    %12 = vector.shape_cast %11 : vector<1x8x512xf32> to vector<8x512xf32>
    %13 = arith.maximumf %10, %12 : vector<8x512xf32>
    %c5 = arith.constant 5 : index
    %c0_10 = arith.constant 0 : index
    %c0_11 = arith.constant 0 : index
    %14 = vector.load %arg1[%c5, %c0_10, %c0_11] : memref<9x8x512xf32, #tpu.memory_space<vmem>>, vector<1x8x512xf32>
    %15 = vector.shape_cast %14 : vector<1x8x512xf32> to vector<8x512xf32>
    %16 = arith.maximumf %13, %15 : vector<8x512xf32>
    %c6 = arith.constant 6 : index
    %c0_12 = arith.constant 0 : index
    %c0_13 = arith.constant 0 : index
    %17 = vector.load %arg1[%c6, %c0_12, %c0_13] : memref<9x8x512xf32, #tpu.memory_space<vmem>>, vector<1x8x512xf32>
    %18 = vector.shape_cast %17 : vector<1x8x512xf32> to vector<8x512xf32>
    %19 = arith.maximumf %16, %18 : vector<8x512xf32>
    %c7 = arith.constant 7 : index
    %c0_14 = arith.constant 0 : index
    %c0_15 = arith.constant 0 : index
    %20 = vector.load %arg1[%c7, %c0_14, %c0_15] : memref<9x8x512xf32, #tpu.memory_space<vmem>>, vector<1x8x512xf32>
    %21 = vector.shape_cast %20 : vector<1x8x512xf32> to vector<8x512xf32>
    %22 = arith.maximumf %19, %21 : vector<8x512xf32>
    %c8 = arith.constant 8 : index
    %c0_16 = arith.constant 0 : index
    %c0_17 = arith.constant 0 : index
    %23 = vector.load %arg1[%c8, %c0_16, %c0_17] : memref<9x8x512xf32, #tpu.memory_space<vmem>>, vector<1x8x512xf32>
    %24 = vector.shape_cast %23 : vector<1x8x512xf32> to vector<8x512xf32>
    %25 = arith.maximumf %22, %24 : vector<8x512xf32>
    %c0_18 = arith.constant 0 : index
    %c0_19 = arith.constant 0 : index
    %26 = vector.load %arg2[%c0_18, %c0_19] : memref<8x512xf32, #tpu.memory_space<vmem>>, vector<8x512xf32>
    tpu.vector_store %arg2[%c0_18, %c0_19], %25 {strides = array<i32>} : memref<8x512xf32, #tpu.memory_space<vmem>>, vector<8x512xf32>,
    return
  }
  func.func @transform_0(%arg0: i32) -> (i32, i32, i32) {
    %c0_i32 = arith.constant 0 : i32
    %c0_i32_0 = arith.constant 0 : i32
    %c0_i32_1 = arith.constant 0 : i32
    return %c0_i32, %arg0, %c0_i32_0 : i32, i32, i32
  }
  func.func @transform_1(%arg0: i32) -> (i32, i32) {
    %c0_i32 = arith.constant 0 : i32
    %c0_i32_0 = arith.constant 0 : i32
    return %arg0, %c0_i32 : i32, i32
  }
}

module attributes {stable_mosaic.version = 11 : i64} {
  func.func @_matmul_bias_act_kernel(%arg0: i32, %arg1: memref<8x640xbf16, #tpu.memory_space<vmem>>, %arg2: memref<640x512xbf16, #tpu.memory_space<vmem>>, %arg3: memref<1x512xf32, #tpu.memory_space<vmem>>, %arg4: memref<8x512xf32, #tpu.memory_space<vmem>>) attributes {dimension_semantics = [#tpu.dimension_semantics<parallel>], iteration_bounds = array<i64: 1>, scalar_prefetch = 0 : i64, scratch_operands = 0 : i64, tpu.core_type = #tpu.core_type<tc>, window_params = [{transform_indices = @transform_0, window_bounds = array<i64: 8, 640>}, {pipeline_mode = #tpu.pipeline_mode<synchronous>, transform_indices = @transform_1, window_bounds = array<i64: 640, 512>}, {pipeline_mode = #tpu.pipeline_mode<synchronous>, transform_indices = @transform_2, window_bounds = array<i64: 1, 512>}, {transform_indices = @transform_3, window_bounds = array<i64: 8, 512>}]} {
    %c0 = arith.constant 0 : index
    %c0_0 = arith.constant 0 : index
    %0 = vector.load %arg1[%c0, %c0_0] : memref<8x640xbf16, #tpu.memory_space<vmem>>, vector<8x640xbf16>
    %c0_1 = arith.constant 0 : index
    %c0_2 = arith.constant 0 : index
    %1 = vector.load %arg2[%c0_1, %c0_2] : memref<640x512xbf16, #tpu.memory_space<vmem>>, vector<640x512xbf16>
    %cst = arith.constant dense<0.000000e+00> : vector<8x512xf32>
    %2 = tpu.matmul %0, %1, %cst {dimension_numbers = #tpu.dot_dimension_numbers<[1], [0], [0], [1], [0, 0, 1, 1], [], []>} : vector<8x640xbf16>, vector<640x512xbf16>, vector<8x512xf32> -> vector<8x512xf32>
    %c0_3 = arith.constant 0 : index
    %c0_4 = arith.constant 0 : index
    %3 = vector.load %arg3[%c0_3, %c0_4] : memref<1x512xf32, #tpu.memory_space<vmem>>, vector<1x512xf32>
    %4 = vector.broadcast %3 : vector<1x512xf32> to vector<8x512xf32>
    %5 = arith.addf %2, %4 : vector<8x512xf32>
    %cst_5 = arith.constant 0.000000e+00 : f32
    %6 = vector.broadcast %cst_5 : f32 to vector<8x512xf32>
    %7 = arith.maximumf %5, %6 : vector<8x512xf32>
    %c0_6 = arith.constant 0 : index
    %c0_7 = arith.constant 0 : index
    %8 = vector.load %arg4[%c0_6, %c0_7] : memref<8x512xf32, #tpu.memory_space<vmem>>, vector<8x512xf32>
    tpu.vector_store %arg4[%c0_6, %c0_7], %7 {strides = array<i32>} : memref<8x512xf32, #tpu.memory_space<vmem>>, vector<8x512xf32>,
    return
  }
  func.func @transform_0(%arg0: i32) -> (i32, i32) {
    %c0_i32 = arith.constant 0 : i32
    %c0_i32_0 = arith.constant 0 : i32
    return %arg0, %c0_i32 : i32, i32
  }
  func.func @transform_1(%arg0: i32) -> (i32, i32) {
    %c0_i32 = arith.constant 0 : i32
    %c0_i32_0 = arith.constant 0 : i32
    %c0_i32_1 = arith.constant 0 : i32
    return %c0_i32, %c0_i32_0 : i32, i32
  }
  func.func @transform_2(%arg0: i32) -> (i32, i32) {
    %c0_i32 = arith.constant 0 : i32
    %c0_i32_0 = arith.constant 0 : i32
    %c0_i32_1 = arith.constant 0 : i32
    return %c0_i32, %c0_i32_0 : i32, i32
  }
  func.func @transform_3(%arg0: i32) -> (i32, i32) {
    %c0_i32 = arith.constant 0 : i32
    %c0_i32_0 = arith.constant 0 : i32
    return %arg0, %c0_i32 : i32, i32
  }
}

module attributes {stable_mosaic.version = 11 : i64} {
  func.func @_matmul_bias_act_kernel(%arg0: i32, %arg1: memref<8x512xbf16, #tpu.memory_space<vmem>>, %arg2: memref<512x128xbf16, #tpu.memory_space<vmem>>, %arg3: memref<1x128xf32, #tpu.memory_space<vmem>>, %arg4: memref<8x128xf32, #tpu.memory_space<vmem>>) attributes {dimension_semantics = [#tpu.dimension_semantics<parallel>], iteration_bounds = array<i64: 1>, scalar_prefetch = 0 : i64, scratch_operands = 0 : i64, tpu.core_type = #tpu.core_type<tc>, window_params = [{transform_indices = @transform_0, window_bounds = array<i64: 8, 512>}, {pipeline_mode = #tpu.pipeline_mode<synchronous>, transform_indices = @transform_1, window_bounds = array<i64: 512, 128>}, {pipeline_mode = #tpu.pipeline_mode<synchronous>, transform_indices = @transform_2, window_bounds = array<i64: 1, 128>}, {transform_indices = @transform_3, window_bounds = array<i64: 8, 128>}]} {
    %c0 = arith.constant 0 : index
    %c0_0 = arith.constant 0 : index
    %0 = vector.load %arg1[%c0, %c0_0] : memref<8x512xbf16, #tpu.memory_space<vmem>>, vector<8x512xbf16>
    %c0_1 = arith.constant 0 : index
    %c0_2 = arith.constant 0 : index
    %1 = vector.load %arg2[%c0_1, %c0_2] : memref<512x128xbf16, #tpu.memory_space<vmem>>, vector<512x128xbf16>
    %cst = arith.constant dense<0.000000e+00> : vector<8x128xf32>
    %2 = tpu.matmul %0, %1, %cst {dimension_numbers = #tpu.dot_dimension_numbers<[1], [0], [0], [1], [0, 0, 1, 1], [], []>} : vector<8x512xbf16>, vector<512x128xbf16>, vector<8x128xf32> -> vector<8x128xf32>
    %c0_3 = arith.constant 0 : index
    %c0_4 = arith.constant 0 : index
    %3 = vector.load %arg3[%c0_3, %c0_4] : memref<1x128xf32, #tpu.memory_space<vmem>>, vector<1x128xf32>
    %4 = vector.broadcast %3 : vector<1x128xf32> to vector<8x128xf32>
    %5 = arith.addf %2, %4 : vector<8x128xf32>
    %cst_5 = arith.constant 0.000000e+00 : f32
    %6 = vector.broadcast %cst_5 : f32 to vector<8x128xf32>
    %7 = arith.maximumf %5, %6 : vector<8x128xf32>
    %c0_6 = arith.constant 0 : index
    %c0_7 = arith.constant 0 : index
    %8 = vector.load %arg4[%c0_6, %c0_7] : memref<8x128xf32, #tpu.memory_space<vmem>>, vector<8x128xf32>
    tpu.vector_store %arg4[%c0_6, %c0_7], %7 {strides = array<i32>} : memref<8x128xf32, #tpu.memory_space<vmem>>, vector<8x128xf32>,
    return
  }
  func.func @transform_0(%arg0: i32) -> (i32, i32) {
    %c0_i32 = arith.constant 0 : i32
    %c0_i32_0 = arith.constant 0 : i32
    return %arg0, %c0_i32 : i32, i32
  }
  func.func @transform_1(%arg0: i32) -> (i32, i32) {
    %c0_i32 = arith.constant 0 : i32
    %c0_i32_0 = arith.constant 0 : i32
    %c0_i32_1 = arith.constant 0 : i32
    return %c0_i32, %c0_i32_0 : i32, i32
  }
  func.func @transform_2(%arg0: i32) -> (i32, i32) {
    %c0_i32 = arith.constant 0 : i32
    %c0_i32_0 = arith.constant 0 : i32
    %c0_i32_1 = arith.constant 0 : i32
    return %c0_i32, %c0_i32_0 : i32, i32
  }
  func.func @transform_3(%arg0: i32) -> (i32, i32) {
    %c0_i32 = arith.constant 0 : i32
    %c0_i32_0 = arith.constant 0 : i32
    return %arg0, %c0_i32 : i32, i32
  }
}

</mosaic_0001>

<llo_original>
// kernel: squeezenet_forward.21
$region0: #{squeezenet_forward.21}
  #allocation0 [shape = 'u32[]', space=smem, size = 0x4, offset = 0x4, fixed_abs, tag = 'smem constant byte address 0x4 - core index']
  #allocation1 [shape = 'u32[144,128]{1,0:T(1,128)}', space=vmem, size = 0x12000, scoped, tag = 'internal scratch']
  %s0 = inlined_call_operand.vmem [shape: bf16[344,256], index: 0, kind: input, shape index: {}]
  %s1 = inlined_call_operand.vmem [shape: bf16[256,128], index: 1, kind: input, shape index: {}]
  %s2 = inlined_call_operand.vmem [shape: f32[1,128], index: 2, kind: input, shape index: {}]
  %s3 = inlined_call_operand.vmem [shape: f32[344,128], index: 3, kind: output, shape index: {}]
  %s4 = sld [smem:[#allocation0]]
  $region22: #{squeezenet_forward.21} parent=0
    _
  %s6 = ssub.s32 1, %s4
  %s7 = scalar_select 0, %s6, %s4
  // Predicated region
  $region2: #{squeezenet_forward.21} parent=0 // pred_check
    _
  $region3: #{squeezenet_forward.21} parent=0 // pred_check_branch
    %9 = sbr.rel (0) target = $region5
  $region4: #{squeezenet_forward.21} parent=0 // pred_region
    _
  $region5: #{squeezenet_forward.21} parent=0 // pred_fallthru
    _
  // Predicated region
  $region6: #{squeezenet_forward.21} parent=0 // pred_check
    _
  $region7: #{squeezenet_forward.21} parent=0 // pred_check_branch
    %11 = sbr.rel (0) target = $region9
  $region8: #{squeezenet_forward.21} parent=0 // pred_region
    _
  $region9: #{squeezenet_forward.21} parent=0 // pred_fallthru
    _
  // Predicated region
  $region10: #{squeezenet_forward.21} parent=0 // pred_check
    _
  $region11: #{squeezenet_forward.21} parent=0 // pred_check_branch
    %13 = sbr.rel (0) target = $region13
  $region12: #{squeezenet_forward.21} parent=0 // pred_region
    _
  $region13: #{squeezenet_forward.21} parent=0 // pred_fallthru
    _
  %v15 = vld [vmem:[%s0] sm:$0xff]
  %v16 = vld [vmem:[%s0 + $0x8] sm:$0xff]
  %v17 = vld [vmem:[%s0 + $0x10] sm:$0xff]
  %v18 = vld [vmem:[%s0 + $0x18] sm:$0xff]
  %v19 = vld [vmem:[%s0 + $0x20] sm:$0xff]
  %v20 = vld [vmem:[%s0 + $0x28] sm:$0xff]
  %v21 = vld [vmem:[%s0 + $0x30] sm:$0xff]
  %v22 = vld [vmem:[%s0 + $0x38] sm:$0xff]
  %v23 = vld [vmem:[%s0 + $0x40] sm:$0xff]
  %v24 = vld [vmem:[%s0 + $0x48] sm:$0xff]
  %v25 = vld [vmem:[%s0 + $0x50] sm:$0xff]
  %v26 = vld [vmem:[%s0 + $0x58] sm:$0xff]
  %v27 = vld [vmem:[%s0 + $0x60] sm:$0xff]
  %v28 = vld [vmem:[%s0 + $0x68] sm:$0xff]
  %v29 = vld [vmem:[%s0 + $0x70] sm:$0xff]
  %v30 = vld [vmem:[%s0 + $0x78] sm:$0xff]
  %v31 = vld [vmem:[%s0 + $0x80] sm:$0xff]
  %v32 = vld [vmem:[%s0 + $0x88] sm:$0xff]
  %v33 = vld [vmem:[%s0 + $0x90] sm:$0xff]
  %v34 = vld [vmem:[%s0 + $0x98] sm:$0xff]
  %v35 = vld [vmem:[%s0 + $0xa0] sm:$0xff]
  %v36 = vld [vmem:[%s0 + $0xa8] sm:$0xff]
  %v37 = vld [vmem:[%s0 + $0xb0] sm:$0xff]
  %v38 = vld [vmem:[%s0 + $0xb8] sm:$0xff]
  %v39 = vld [vmem:[%s0 + $0xc0] sm:$0xff]
  %v40 = vld [vmem:[%s0 + $0xc8] sm:$0xff]
  %v41 = vld [vmem:[%s0 + $0xd0] sm:$0xff]
  %v42 = vld [vmem:[%s0 + $0xd8] sm:$0xff]
  %v43 = vld [vmem:[%s0 + $0xe0] sm:$0xff]
  %v44 = vld [vmem:[%s0 + $0xe8] sm:$0xff]
  %v45 = vld [vmem:[%s0 + $0xf0] sm:$0xff]
  %v46 = vld [vmem:[%s0 + $0xf8] sm:$0xff]
  %v47 = vld [vmem:[%s0 + $0x100] sm:$0xff]
  %v48 = vld [vmem:[%s0 + $0x108] sm:$0xff]
  %v49 = vld [vmem:[%s0 + $0x110] sm:$0xff]
  %v50 = vld [vmem:[%s0 + $0x118] sm:$0xff]
  %v51 = vld [vmem:[%s0 + $0x120] sm:$0xff]
  %v52 = vld [vmem:[%s0 + $0x128] sm:$0xff]
  %v53 = vld [vmem:[%s0 + $0x130] sm:$0xff]
  %v54 = vld [vmem:[%s0 + $0x138] sm:$0xff]
  %v55 = vld [vmem:[%s0 + $0x140] sm:$0xff]
  %v56 = vld [vmem:[%s0 + $0x148] sm:$0xff]
  %v57 = vld [vmem:[%s0 + $0x150] sm:$0xff]
  %v58 = vld [vmem:[%s1] sm:$0xf]
  %v59 = vld [vmem:[%s1 + $0x4] sm:$0xf]
  %v60 = vld [vmem:[%s1 + $0x8] sm:$0xf]
  %v61 = vld [vmem:[%s1 + $0xc] sm:$0xf]
  %v62 = vld [vmem:[%s1 + $0x10] sm:$0xf]
  %v63 = vld [vmem:[%s1 + $0x14] sm:$0xf]
  %v64 = vld [vmem:[%s1 + $0x18] sm:$0xf]
  %v65 = vld [vmem:[%s1 + $0x1c] sm:$0xf]
  %v66 = vld [vmem:[%s1 + $0x20] sm:$0xf]
  %v67 = vld [vmem:[%s1 + $0x24] sm:$0xf]
  %v68 = vld [vmem:[%s1 + $0x28] sm:$0xf]
  %v69 = vld [vmem:[%s1 + $0x2c] sm:$0xf]
  %v70 = vld [vmem:[%s1 + $0x30] sm:$0xf]
  %v71 = vld [vmem:[%s1 + $0x34] sm:$0xf]
  %v72 = vld [vmem:[%s1 + $0x38] sm:$0xf]
  %v73 = vld [vmem:[%s1 + $0x3c] sm:$0xf]
  %v74 = vld [vmem:[%s1 + $0x40] sm:$0xf]
  %v75 = vld [vmem:[%s1 + $0x44] sm:$0xf]
  %v76 = vld [vmem:[%s1 + $0x48] sm:$0xf]
  %v77 = vld [vmem:[%s1 + $0x4c] sm:$0xf]
  %v78 = vld [vmem:[%s1 + $0x50] sm:$0xf]
  %v79 = vld [vmem:[%s1 + $0x54] sm:$0xf]
  %v80 = vld [vmem:[%s1 + $0x58] sm:$0xf]
  %v81 = vld [vmem:[%s1 + $0x5c] sm:$0xf]
  %v82 = vld [vmem:[%s1 + $0x60] sm:$0xf]
  %v83 = vld [vmem:[%s1 + $0x64] sm:$0xf]
  %v84 = vld [vmem:[%s1 + $0x68] sm:$0xf]
  %v85 = vld [vmem:[%s1 + $0x6c] sm:$0xf]
  %v86 = vld [vmem:[%s1 + $0x70] sm:$0xf]
  %v87 = vld [vmem:[%s1 + $0x74] sm:$0xf]
  %v88 = vld [vmem:[%s1 + $0x78] sm:$0xf]
  %v89 = vld [vmem:[%s1 + $0x7c] sm:$0xf]
  %v90 = vld [vmem:[%s2] sm:$0x1]
  %v92 = vlaneseq
  %v93 = vshrl.u32 %v92, 7
  %v94 = vsub.s32 0, %v93
  %v95 = vrot.slane %v90, %v94
  %v140 = vunpack.c.l.b16 %v15
  %v141 = vunpack.c.h.b16 %v15
  %v142 = vunpack.c.l.b16 %v16
  %v143 = vunpack.c.h.b16 %v16
  %v144 = vunpack.c.l.b16 %v17
  %v145 = vunpack.c.h.b16 %v17
  %v146 = vunpack.c.l.b16 %v18
  %v147 = vunpack.c.h.b16 %v18
  %v148 = vunpack.c.l.b16 %v19
  %v149 = vunpack.c.h.b16 %v19
  %v150 = vunpack.c.l.b16 %v20
  %v151 = vunpack.c.h.b16 %v20
  %v152 = vunpack.c.l.b16 %v21
  %v153 = vunpack.c.h.b16 %v21
  %v154 = vunpack.c.l.b16 %v22
  %v155 = vunpack.c.h.b16 %v22
  %v156 = vunpack.c.l.b16 %v23
  %v157 = vunpack.c.h.b16 %v23
  %v158 = vunpack.c.l.b16 %v24
  %v159 = vunpack.c.h.b16 %v24
  %v160 = vunpack.c.l.b16 %v25
  %v161 = vunpack.c.h.b16 %v25
  %v162 = vunpack.c.l.b16 %v26
  %v163 = vunpack.c.h.b16 %v26
  %v164 = vunpack.c.l.b16 %v27
  %v165 = vunpack.c.h.b16 %v27
  %v166 = vunpack.c.l.b16 %v28
  %v167 = vunpack.c.h.b16 %v28
  %v168 = vunpack.c.l.b16 %v29
  %v169 = vunpack.c.h.b16 %v29
  %v170 = vunpack.c.l.b16 %v30
  %v171 = vunpack.c.h.b16 %v30
  %v172 = vunpack.c.l.b16 %v31
  %v173 = vunpack.c.h.b16 %v31
  %v174 = vunpack.c.l.b16 %v32
  %v175 = vunpack.c.h.b16 %v32
  %v176 = vunpack.c.l.b16 %v33
  %v177 = vunpack.c.h.b16 %v33
  %v178 = vunpack.c.l.b16 %v34
  %v179 = vunpack.c.h.b16 %v34
  %v180 = vunpack.c.l.b16 %v35
  %v181 = vunpack.c.h.b16 %v35
  %v182 = vunpack.c.l.b16 %v36
  %v183 = vunpack.c.h.b16 %v36
  %v184 = vunpack.c.l.b16 %v37
  %v185 = vunpack.c.h.b16 %v37
  %v186 = vunpack.c.l.b16 %v38
  %v187 = vunpack.c.h.b16 %v38
  %v188 = vunpack.c.l.b16 %v39
  %v189 = vunpack.c.h.b16 %v39
  %v190 = vunpack.c.l.b16 %v40
  %v191 = vunpack.c.h.b16 %v40
  %v192 = vunpack.c.l.b16 %v41
  %v193 = vunpack.c.h.b16 %v41
  %v194 = vunpack.c.l.b16 %v42
  %v195 = vunpack.c.h.b16 %v42
  %v196 = vunpack.c.l.b16 %v43
  %v197 = vunpack.c.h.b16 %v43
  %v198 = vunpack.c.l.b16 %v44
  %v199 = vunpack.c.h.b16 %v44
  %v200 = vunpack.c.l.b16 %v45
  %v201 = vunpack.c.h.b16 %v45
  %v202 = vunpack.c.l.b16 %v46
  %v203 = vunpack.c.h.b16 %v46
  %v204 = vunpack.c.l.b16 %v47
  %v205 = vunpack.c.h.b16 %v47
  %v206 = vunpack.c.l.b16 %v48
  %v207 = vunpack.c.h.b16 %v48
  %v208 = vunpack.c.l.b16 %v49
  %v209 = vunpack.c.h.b16 %v49
  %v210 = vunpack.c.l.b16 %v50
  %v211 = vunpack.c.h.b16 %v50
  %v212 = vunpack.c.l.b16 %v51
  %v213 = vunpack.c.h.b16 %v51
  %v214 = vunpack.c.l.b16 %v52
  %v215 = vunpack.c.h.b16 %v52
  %v216 = vunpack.c.l.b16 %v53
  %v217 = vunpack.c.h.b16 %v53
  %v218 = vunpack.c.l.b16 %v54
  %v219 = vunpack.c.h.b16 %v54
  %v220 = vunpack.c.l.b16 %v55
  %v221 = vunpack.c.h.b16 %v55
  %v222 = vunpack.c.l.b16 %v56
  %v223 = vunpack.c.h.b16 %v56
  %v224 = vunpack.c.l.b16 %v57
  %v225 = vunpack.c.h.b16 %v57
  %v226 = vpack.c.b16 %v142, %v140
  %v227 = vpack.c.b16 %v143, %v141
  %v228 = vpack.c.b16 %v146, %v144
  %v229 = vpack.c.b16 %v147, %v145
  %v230 = vpack.c.b16 %v150, %v148
  %v231 = vpack.c.b16 %v151, %v149
  %v232 = vpack.c.b16 %v154, %v152
  %v233 = vpack.c.b16 %v155, %v153
  %v234 = vpack.c.b16 %v158, %v156
  %v235 = vpack.c.b16 %v159, %v157
  %v236 = vpack.c.b16 %v162, %v160
  %v237 = vpack.c.b16 %v163, %v161
  %v238 = vpack.c.b16 %v166, %v164
  %v239 = vpack.c.b16 %v167, %v165
  %v240 = vpack.c.b16 %v170, %v168
  %v241 = vpack.c.b16 %v171, %v169
  %v242 = vpack.c.b16 %v174, %v172
  %v243 = vpack.c.b16 %v175, %v173
  %v244 = vpack.c.b16 %v178, %v176
  %v245 = vpack.c.b16 %v179, %v177
  %v246 = vpack.c.b16 %v182, %v180
  %v247 = vpack.c.b16 %v183, %v181
  %v248 = vpack.c.b16 %v186, %v184
  %v249 = vpack.c.b16 %v187, %v185
  %v250 = vpack.c.b16 %v190, %v188
  %v251 = vpack.c.b16 %v191, %v189
  %v252 = vpack.c.b16 %v194, %v192
  %v253 = vpack.c.b16 %v195, %v193
  %v254 = vpack.c.b16 %v198, %v196
  %v255 = vpack.c.b16 %v199, %v197
  %v256 = vpack.c.b16 %v202, %v200
  %v257 = vpack.c.b16 %v203, %v201
  %v258 = vpack.c.b16 %v206, %v204
  %v259 = vpack.c.b16 %v207, %v205
  %v260 = vpack.c.b16 %v210, %v208
  %v261 = vpack.c.b16 %v211, %v209
  %v262 = vpack.c.b16 %v214, %v212
  %v263 = vpack.c.b16 %v215, %v213
  %v264 = vpack.c.b16 %v218, %v216
  %v265 = vpack.c.b16 %v219, %v217
  %v266 = vpack.c.b16 %v222, %v220
  %v267 = vpack.c.b16 %v223, %v221
  %v268 = vpack.c.b16 %v224, %v224
  %v269 = vpack.c.b16 %v225, %v225
  %v346 = vunpack.c.l.b16 %v58
  %v347 = vunpack.c.l.b16 %v59
  %v348 = vunpack.c.l.b16 %v60
  %v349 = vunpack.c.l.b16 %v61
  %v350 = vunpack.c.l.b16 %v62
  %v351 = vunpack.c.l.b16 %v63
  %v352 = vunpack.c.l.b16 %v64
  %v353 = vunpack.c.l.b16 %v65
  %v354 = vunpack.c.l.b16 %v66
  %v355 = vunpack.c.l.b16 %v67
  %v356 = vunpack.c.l.b16 %v68
  %v357 = vunpack.c.l.b16 %v69
  %v358 = vunpack.c.l.b16 %v70
  %v359 = vunpack.c.l.b16 %v71
  %v360 = vunpack.c.l.b16 %v72
  %v361 = vunpack.c.l.b16 %v73
  %v362 = vunpack.c.l.b16 %v74
  %v363 = vunpack.c.l.b16 %v75
  %v364 = vunpack.c.l.b16 %v76
  %v365 = vunpack.c.l.b16 %v77
  %v366 = vunpack.c.l.b16 %v78
  %v367 = vunpack.c.l.b16 %v79
  %v368 = vunpack.c.l.b16 %v80
  %v369 = vunpack.c.l.b16 %v81
  %v370 = vunpack.c.l.b16 %v82
  %v371 = vunpack.c.l.b16 %v83
  %v372 = vunpack.c.l.b16 %v84
  %v373 = vunpack.c.l.b16 %v85
  %v374 = vunpack.c.l.b16 %v86
  %v375 = vunpack.c.l.b16 %v87
  %v376 = vunpack.c.l.b16 %v88
  %v377 = vunpack.c.l.b16 %v89
  %v378 = vpack.c.b16 %v347, %v346
  %v379 = vpack.c.b16 %v349, %v348
  %v380 = vpack.c.b16 %v351, %v350
  %v381 = vpack.c.b16 %v353, %v352
  %v382 = vpack.c.b16 %v355, %v354
  %v383 = vpack.c.b16 %v357, %v356
  %v384 = vpack.c.b16 %v359, %v358
  %v385 = vpack.c.b16 %v361, %v360
  %v386 = vpack.c.b16 %v363, %v362
  %v387 = vpack.c.b16 %v365, %v364
  %v388 = vpack.c.b16 %v367, %v366
  %v389 = vpack.c.b16 %v369, %v368
  %v390 = vpack.c.b16 %v371, %v370
  %v391 = vpack.c.b16 %v373, %v372
  %v392 = vpack.c.b16 %v375, %v374
  %v393 = vpack.c.b16 %v377, %v376
  %410 = vmatprep.subr.bf16.mxu0 0
  %411 = vmatpush1.bf16.msra.mxu0 %v385
  %412 = vmatprep.subr.bf16.mxu0 0
  %413 = vmatpush1.bf16.msra.mxu0 %v384
  %414 = vmatprep.subr.bf16.mxu0 0
  %415 = vmatpush1.bf16.msra.mxu0 %v383
  %416 = vmatprep.subr.bf16.mxu0 0
  %417 = vmatpush1.bf16.msra.mxu0 %v382
  %418 = vmatprep.subr.bf16.mxu0 0
  %419 = vmatpush1.bf16.msra.mxu0 %v381
  %420 = vmatprep.subr.bf16.mxu0 0
  %421 = vmatpush1.bf16.msra.mxu0 %v380
  %422 = vmatprep.subr.bf16.mxu0 0
  %423 = vmatpush1.bf16.msra.mxu0 %v379
  %424 = vmatprep.subr.bf16.mxu0 0
  %425 = vmatpush1.bf16.msra.mxu0 %v378
  %426 = vmatprep.subr.bf16.mxu0 0
  %427 = vmatpush2.bf16.msra.mxu0 %v393
  %428 = vmatprep.subr.bf16.mxu0 0
  %429 = vmatpush2.bf16.msra.mxu0 %v392
  %430 = vmatprep.subr.bf16.mxu0 0
  %431 = vmatpush2.bf16.msra.mxu0 %v391
  %432 = vmatprep.subr.bf16.mxu0 0
  %433 = vmatpush2.bf16.msra.mxu0 %v390
  %434 = vmatprep.subr.bf16.mxu0 0
  %435 = vmatpush2.bf16.msra.mxu0 %v389
  %436 = vmatprep.subr.bf16.mxu0 0
  %437 = vmatpush2.bf16.msra.mxu0 %v388
  %438 = vmatprep.subr.bf16.mxu0 0
  %439 = vmatpush2.bf16.msra.mxu0 %v387
  %440 = vmatprep.subr.bf16.mxu0 0
  %441 = vmatpush2.bf16.msra.mxu0 %v386
  %442 = vmatprep.mubr.bf16.mxu0 %v227
  %443 = vmatmul.mubr.bf16.gmra.mxu0 %v226
  %v444 = vpop.f32.mrf.mxu0
  %v445 = vadd.f32 %v95, %v444
  %v446 = vpop.f32.mrf.mxu0
  %v447 = vpop.f32.mrf.mxu0
  %v448 = vadd.f32 %v95, %v447
  %v449 = vpop.f32.mrf.mxu0
  %450 = vmatprep.mubr.bf16.mxu0 %v229
  %451 = vmatmul.mubr.bf16.gmra.mxu0 %v228
  %v452 = vpop.f32.mrf.mxu0
  %v453 = vadd.f32 %v95, %v452
  %v454 = vpop.f32.mrf.mxu0
  %v455 = vpop.f32.mrf.mxu0
  %v456 = vadd.f32 %v95, %v455
  %v457 = vpop.f32.mrf.mxu0
  %458 = vmatprep.mubr.bf16.mxu0 %v231
  %459 = vmatmul.mubr.bf16.gmra.mxu0 %v230
  %v460 = vpop.f32.mrf.mxu0
  %v461 = vadd.f32 %v95, %v460
  %v462 = vpop.f32.mrf.mxu0
  %v463 = vpop.f32.mrf.mxu0
  %v464 = vadd.f32 %v95, %v463
  %v465 = vpop.f32.mrf.mxu0
  %466 = vmatprep.mubr.bf16.mxu0 %v233
  %467 = vmatmul.mubr.bf16.gmra.mxu0 %v232
  %v468 = vpop.f32.mrf.mxu0
  %v469 = vadd.f32 %v95, %v468
  %v470 = vpop.f32.mrf.mxu0
  %v471 = vpop.f32.mrf.mxu0
  %v472 = vadd.f32 %v95, %v471
  %v473 = vpop.f32.mrf.mxu0
  %474 = vmatprep.mubr.bf16.mxu0 %v235
  %475 = vmatmul.mubr.bf16.gmra.mxu0 %v234
  %v476 = vpop.f32.mrf.mxu0
  %v477 = vadd.f32 %v95, %v476
  %v478 = vpop.f32.mrf.mxu0
  %v479 = vpop.f32.mrf.mxu0
  %v480 = vadd.f32 %v95, %v479
  %v481 = vpop.f32.mrf.mxu0
  %482 = vmatprep.mubr.bf16.mxu0 %v237
  %483 = vmatmul.mubr.bf16.gmra.mxu0 %v236
  %v484 = vpop.f32.mrf.mxu0
  %v485 = vadd.f32 %v95, %v484
  %v486 = vpop.f32.mrf.mxu0
  %v487 = vpop.f32.mrf.mxu0
  %v488 = vadd.f32 %v95, %v487
  %v489 = vpop.f32.mrf.mxu0
  %490 = vmatprep.mubr.bf16.mxu0 %v239
  %491 = vmatmul.mubr.bf16.gmra.mxu0 %v238
  %v492 = vpop.f32.mrf.mxu0
  %v493 = vadd.f32 %v95, %v492
  %v494 = vpop.f32.mrf.mxu0
  %v495 = vpop.f32.mrf.mxu0
  %v496 = vadd.f32 %v95, %v495
  %v497 = vpop.f32.mrf.mxu0
  %498 = vmatprep.mubr.bf16.mxu0 %v241
  %499 = vmatmul.mubr.bf16.gmra.mxu0 %v240
  %v500 = vpop.f32.mrf.mxu0
  %v501 = vadd.f32 %v95, %v500
  %v502 = vpop.f32.mrf.mxu0
  %v503 = vpop.f32.mrf.mxu0
  %v504 = vadd.f32 %v95, %v503
  %v505 = vpop.f32.mrf.mxu0
  %506 = vmatprep.mubr.bf16.mxu0 %v243
  %507 = vmatmul.mubr.bf16.gmra.mxu0 %v242
  %v508 = vpop.f32.mrf.mxu0
  %v509 = vadd.f32 %v95, %v508
  %v510 = vpop.f32.mrf.mxu0
  %v511 = vpop.f32.mrf.mxu0
  %v512 = vadd.f32 %v95, %v511
  %v513 = vpop.f32.mrf.mxu0
  %514 = vmatprep.mubr.bf16.mxu0 %v245
  %515 = vmatmul.mubr.bf16.gmra.mxu0 %v244
  %v516 = vpop.f32.mrf.mxu0
  %v517 = vadd.f32 %v95, %v516
  %v518 = vpop.f32.mrf.mxu0
  %v519 = vpop.f32.mrf.mxu0
  %v520 = vadd.f32 %v95, %v519
  %v521 = vpop.f32.mrf.mxu0
  %522 = vmatprep.mubr.bf16.mxu0 %v247
  %523 = vmatmul.mubr.bf16.gmra.mxu0 %v246
  %v524 = vpop.f32.mrf.mxu0
  %v525 = vadd.f32 %v95, %v524
  %v526 = vpop.f32.mrf.mxu0
  %v527 = vpop.f32.mrf.mxu0
  %v528 = vadd.f32 %v95, %v527
  %v529 = vpop.f32.mrf.mxu0
  %530 = vmatprep.mubr.bf16.mxu0 %v249
  %531 = vmatmul.mubr.bf16.gmra.mxu0 %v248
  %v532 = vpop.f32.mrf.mxu0
  %v533 = vadd.f32 %v95, %v532
  %v534 = vpop.f32.mrf.mxu0
  %v535 = vpop.f32.mrf.mxu0
  %v536 = vadd.f32 %v95, %v535
  %v537 = vpop.f32.mrf.mxu0
  %538 = vmatprep.mubr.bf16.mxu0 %v251
  %539 = vmatmul.mubr.bf16.gmra.mxu0 %v250
  %v540 = vpop.f32.mrf.mxu0
  %v541 = vadd.f32 %v95, %v540
  %v542 = vpop.f32.mrf.mxu0
  %v543 = vpop.f32.mrf.mxu0
  %v544 = vadd.f32 %v95, %v543
  %v545 = vpop.f32.mrf.mxu0
  %546 = vmatprep.mubr.bf16.mxu0 %v253
  %547 = vmatmul.mubr.bf16.gmra.mxu0 %v252
  %v548 = vpop.f32.mrf.mxu0
  %v549 = vadd.f32 %v95, %v548
  %v550 = vpop.f32.mrf.mxu0
  %v551 = vpop.f32.mrf.mxu0
  %v552 = vadd.f32 %v95, %v551
  %v553 = vpop.f32.mrf.mxu0
  %554 = vmatprep.mubr.bf16.mxu0 %v255
  %555 = vmatmul.mubr.bf16.gmra.mxu0 %v254
  %v556 = vpop.f32.mrf.mxu0
  %v557 = vadd.f32 %v95, %v556
  %v558 = vpop.f32.mrf.mxu0
  %v559 = vpop.f32.mrf.mxu0
  %v560 = vadd.f32 %v95, %v559
  %v561 = vpop.f32.mrf.mxu0
  %562 = vmatprep.mubr.bf16.mxu0 %v257
  %563 = vmatmul.mubr.bf16.gmra.mxu0 %v256
  %v564 = vpop.f32.mrf.mxu0
  %v565 = vadd.f32 %v95, %v564
  %v566 = vpop.f32.mrf.mxu0
  %v567 = vpop.f32.mrf.mxu0
  %v568 = vadd.f32 %v95, %v567
  %v569 = vpop.f32.mrf.mxu0
  %570 = vmatprep.mubr.bf16.mxu0 %v259
  %571 = vmatmul.mubr.bf16.gmra.mxu0 %v258
  %v572 = vpop.f32.mrf.mxu0
  %v573 = vadd.f32 %v95, %v572
  %v574 = vpop.f32.mrf.mxu0
  %v575 = vpop.f32.mrf.mxu0
  %v576 = vadd.f32 %v95, %v575
  %v577 = vpop.f32.mrf.mxu0
  %578 = vmatprep.mubr.bf16.mxu0 %v261
  %579 = vmatmul.mubr.bf16.gmra.mxu0 %v260
  %v580 = vpop.f32.mrf.mxu0
  %v581 = vadd.f32 %v95, %v580
  %v582 = vpop.f32.mrf.mxu0
  %v583 = vpop.f32.mrf.mxu0
  %v584 = vadd.f32 %v95, %v583
  %v585 = vpop.f32.mrf.mxu0
  %586 = vmatprep.mubr.bf16.mxu0 %v263
  %587 = vmatmul.mubr.bf16.gmra.mxu0 %v262
  %v588 = vpop.f32.mrf.mxu0
  %v589 = vadd.f32 %v95, %v588
  %v590 = vpop.f32.mrf.mxu0
  %v591 = vpop.f32.mrf.mxu0
  %v592 = vadd.f32 %v95, %v591
  %v593 = vpop.f32.mrf.mxu0
  %594 = vmatprep.mubr.bf16.mxu0 %v265
  %595 = vmatmul.mubr.bf16.gmra.mxu0 %v264
  %v596 = vpop.f32.mrf.mxu0
  %v597 = vadd.f32 %v95, %v596
  %v598 = vpop.f32.mrf.mxu0
  %v599 = vpop.f32.mrf.mxu0
  %v600 = vadd.f32 %v95, %v599
  %v601 = vpop.f32.mrf.mxu0
  %602 = vmatprep.mubr.bf16.mxu0 %v267
  %603 = vmatmul.mubr.bf16.gmra.mxu0 %v266
  %v604 = vpop.f32.mrf.mxu0
  %v605 = vadd.f32 %v95, %v604
  %v606 = vpop.f32.mrf.mxu0
  %v607 = vpop.f32.mrf.mxu0
  %v608 = vadd.f32 %v95, %v607
  %v609 = vpop.f32.mrf.mxu0
  %610 = vmatprep.mubr.bf16.mxu0 %v269
  %611 = vmatmul.mubr.bf16.gmra.mxu0 %v268
  %v612 = vpop.f32.mrf.mxu0
  %v613 = vadd.f32 %v95, %v612
  %v614 = vpop.f32.mrf.mxu0
  %v615 = vpop.f32.mrf.mxu0
  %v616 = vpop.f32.mrf.mxu0
  %617 = vdwg.mxu0
  %v618 = vmax.f32 %v445, 0.0
  %v619 = vmax.f32 %v448, 0.0
  %v620 = vmax.f32 %v453, 0.0
  %v621 = vmax.f32 %v456, 0.0
  %v622 = vmax.f32 %v461, 0.0
  %v623 = vmax.f32 %v464, 0.0
  %v624 = vmax.f32 %v469, 0.0
  %v625 = vmax.f32 %v472, 0.0
  %v626 = vmax.f32 %v477, 0.0
  %v627 = vmax.f32 %v480, 0.0
  %v628 = vmax.f32 %v485, 0.0
  %v629 = vmax.f32 %v488, 0.0
  %v630 = vmax.f32 %v493, 0.0
  %v631 = vmax.f32 %v496, 0.0
  %v632 = vmax.f32 %v501, 0.0
  %v633 = vmax.f32 %v504, 0.0
  %v634 = vmax.f32 %v509, 0.0
  %v635 = vmax.f32 %v512, 0.0
  %v636 = vmax.f32 %v517, 0.0
  %v637 = vmax.f32 %v520, 0.0
  %v638 = vmax.f32 %v525, 0.0
  %v639 = vmax.f32 %v528, 0.0
  %v640 = vmax.f32 %v533, 0.0
  %v641 = vmax.f32 %v536, 0.0
  %v642 = vmax.f32 %v541, 0.0
  %v643 = vmax.f32 %v544, 0.0
  %v644 = vmax.f32 %v549, 0.0
  %v645 = vmax.f32 %v552, 0.0
  %v646 = vmax.f32 %v557, 0.0
  %v647 = vmax.f32 %v560, 0.0
  %v648 = vmax.f32 %v565, 0.0
  %v649 = vmax.f32 %v568, 0.0
  %v650 = vmax.f32 %v573, 0.0
  %v651 = vmax.f32 %v576, 0.0
  %v652 = vmax.f32 %v581, 0.0
  %v653 = vmax.f32 %v584, 0.0
  %v654 = vmax.f32 %v589, 0.0
  %v655 = vmax.f32 %v592, 0.0
  %v656 = vmax.f32 %v597, 0.0
  %v657 = vmax.f32 %v600, 0.0
  %v658 = vmax.f32 %v605, 0.0
  %v659 = vmax.f32 %v608, 0.0
  %v660 = vmax.f32 %v613, 0.0
  %661 = vst [vmem:[%s3] sm:$0xff] %v618
  %662 = vst [vmem:[%s3 + $0x8] sm:$0xff] %v619
  %663 = vst [vmem:[%s3 + $0x10] sm:$0xff] %v620
  %664 = vst [vmem:[%s3 + $0x18] sm:$0xff] %v621
  %665 = vst [vmem:[%s3 + $0x20] sm:$0xff] %v622
  %666 = vst [vmem:[%s3 + $0x28] sm:$0xff] %v623
  %667 = vst [vmem:[%s3 + $0x30] sm:$0xff] %v624
  %668 = vst [vmem:[%s3 + $0x38] sm:$0xff] %v625
  %669 = vst [vmem:[%s3 + $0x40] sm:$0xff] %v626
  %670 = vst [vmem:[%s3 + $0x48] sm:$0xff] %v627
  %671 = vst [vmem:[%s3 + $0x50] sm:$0xff] %v628
  %672 = vst [vmem:[%s3 + $0x58] sm:$0xff] %v629
  %673 = vst [vmem:[%s3 + $0x60] sm:$0xff] %v630
  %674 = vst [vmem:[%s3 + $0x68] sm:$0xff] %v631
  %675 = vst [vmem:[%s3 + $0x70] sm:$0xff] %v632
  %676 = vst [vmem:[%s3 + $0x78] sm:$0xff] %v633
  %677 = vst [vmem:[%s3 + $0x80] sm:$0xff] %v634
  %678 = vst [vmem:[%s3 + $0x88] sm:$0xff] %v635
  %679 = vst [vmem:[%s3 + $0x90] sm:$0xff] %v636
  %680 = vst [vmem:[%s3 + $0x98] sm:$0xff] %v637
  %681 = vst [vmem:[%s3 + $0xa0] sm:$0xff] %v638
  %682 = vst [vmem:[%s3 + $0xa8] sm:$0xff] %v639
  %683 = vst [vmem:[%s3 + $0xb0] sm:$0xff] %v640
  %684 = vst [vmem:[%s3 + $0xb8] sm:$0xff] %v641
  %685 = vst [vmem:[%s3 + $0xc0] sm:$0xff] %v642
  %686 = vst [vmem:[%s3 + $0xc8] sm:$0xff] %v643
  %687 = vst [vmem:[%s3 + $0xd0] sm:$0xff] %v644
  %688 = vst [vmem:[%s3 + $0xd8] sm:$0xff] %v645
  %689 = vst [vmem:[%s3 + $0xe0] sm:$0xff] %v646
  %690 = vst [vmem:[%s3 + $0xe8] sm:$0xff] %v647
  %691 = vst [vmem:[%s3 + $0xf0] sm:$0xff] %v648
  %692 = vst [vmem:[%s3 + $0xf8] sm:$0xff] %v649
  %693 = vst [vmem:[%s3 + $0x100] sm:$0xff] %v650
  %694 = vst [vmem:[%s3 + $0x108] sm:$0xff] %v651
  %695 = vst [vmem:[%s3 + $0x110] sm:$0xff] %v652
  %696 = vst [vmem:[%s3 + $0x118] sm:$0xff] %v653
  %697 = vst [vmem:[%s3 + $0x120] sm:$0xff] %v654
  %698 = vst [vmem:[%s3 + $0x128] sm:$0xff] %v655
  %699 = vst [vmem:[%s3 + $0x130] sm:$0xff] %v656
  %700 = vst [vmem:[%s3 + $0x138] sm:$0xff] %v657
  %701 = vst [vmem:[%s3 + $0x140] sm:$0xff] %v658
  %702 = vst [vmem:[%s3 + $0x148] sm:$0xff] %v659
  %703 = vst [vmem:[%s3 + $0x150] sm:$0xff] %v660
  // Predicated region
  $region14: #{squeezenet_forward.21} parent=0 // pred_check
    _
  $region15: #{squeezenet_forward.21} parent=0 // pred_check_branch
    %705 = sbr.rel (0) target = $region17
  $region16: #{squeezenet_forward.21} parent=0 // pred_region
    _
  $region17: #{squeezenet_forward.21} parent=0 // pred_fallthru
    _
  // Predicated region
  $region18: #{squeezenet_forward.21} parent=0 // pred_check
    _
  $region19: #{squeezenet_forward.21} parent=0 // pred_check_branch
    %707 = sbr.rel (0) target = $region21
  $region20: #{squeezenet_forward.21} parent=0 // pred_region
    _
  $region21: #{squeezenet_forward.21} parent=0 // pred_fallthru
    _

// kernel: squeezenet_forward.22
$region0: #{squeezenet_forward.22}
  #allocation0 [shape = 'u32[]', space=smem, size = 0x4, offset = 0x4, fixed_abs, tag = 'smem constant byte address 0x4 - core index']
  #allocation1 [shape = 'u32[144,128]{1,0:T(1,128)}', space=vmem, size = 0x12000, scoped, tag = 'internal scratch']
  %s0 = inlined_call_operand.vmem [shape: f32[9,72,128], index: 0, kind: input, shape index: {}]
  %s1 = inlined_call_operand.vmem [shape: f32[72,128], index: 1, kind: output, shape index: {}]
  %s2 = sld [smem:[#allocation0]]
  $region14: #{squeezenet_forward.22} parent=0
    _
  %s4 = ssub.s32 1, %s2
  %s5 = scalar_select 0, %s4, %s2
  // Predicated region
  $region2: #{squeezenet_forward.22} parent=0 // pred_check
    _
  $region3: #{squeezenet_forward.22} parent=0 // pred_check_branch
    %7 = sbr.rel (0) target = $region5
  $region4: #{squeezenet_forward.22} parent=0 // pred_region
    _
  $region5: #{squeezenet_forward.22} parent=0 // pred_fallthru
    _
  %v8 = vld [vmem:[%s0] sm:$0xff]
  %v9 = vld [vmem:[%s0 + $0x8] sm:$0xff]
  %v10 = vld [vmem:[%s0 + $0x10] sm:$0xff]
  %v11 = vld [vmem:[%s0 + $0x18] sm:$0xff]
  %v12 = vld [vmem:[%s0 + $0x20] sm:$0xff]
  %v13 = vld [vmem:[%s0 + $0x28] sm:$0xff]
  %v14 = vld [vmem:[%s0 + $0x30] sm:$0xff]
  %v15 = vld [vmem:[%s0 + $0x38] sm:$0xff]
  %v16 = vld [vmem:[%s0 + $0x40] sm:$0xff]
  %s17 = scalar_lea.vmem %s0, 72
  %v18 = vld [vmem:[%s17] sm:$0xff]
  %v19 = vld [vmem:[%s17 + $0x8] sm:$0xff]
  %v20 = vld [vmem:[%s17 + $0x10] sm:$0xff]
  %v21 = vld [vmem:[%s17 + $0x18] sm:$0xff]
  %v22 = vld [vmem:[%s17 + $0x20] sm:$0xff]
  %v23 = vld [vmem:[%s17 + $0x28] sm:$0xff]
  %v24 = vld [vmem:[%s17 + $0x30] sm:$0xff]
  %v25 = vld [vmem:[%s17 + $0x38] sm:$0xff]
  %v26 = vld [vmem:[%s17 + $0x40] sm:$0xff]
  %v27 = vmax.f32 %v8, %v18
  %v28 = vmax.f32 %v9, %v19
  %v29 = vmax.f32 %v10, %v20
  %v30 = vmax.f32 %v11, %v21
  %v31 = vmax.f32 %v12, %v22
  %v32 = vmax.f32 %v13, %v23
  %v33 = vmax.f32 %v14, %v24
  %v34 = vmax.f32 %v15, %v25
  %v35 = vmax.f32 %v16, %v26
  %s36 = scalar_lea.vmem %s0, 144
  %v37 = vld [vmem:[%s36] sm:$0xff]
  %v38 = vld [vmem:[%s36 + $0x8] sm:$0xff]
  %v39 = vld [vmem:[%s36 + $0x10] sm:$0xff]
  %v40 = vld [vmem:[%s36 + $0x18] sm:$0xff]
  %v41 = vld [vmem:[%s36 + $0x20] sm:$0xff]
  %v42 = vld [vmem:[%s36 + $0x28] sm:$0xff]
  %v43 = vld [vmem:[%s36 + $0x30] sm:$0xff]
  %v44 = vld [vmem:[%s36 + $0x38] sm:$0xff]
  %v45 = vld [vmem:[%s36 + $0x40] sm:$0xff]
  %v46 = vmax.f32 %v27, %v37
  %v47 = vmax.f32 %v28, %v38
  %v48 = vmax.f32 %v29, %v39
  %v49 = vmax.f32 %v30, %v40
  %v50 = vmax.f32 %v31, %v41
  %v51 = vmax.f32 %v32, %v42
  %v52 = vmax.f32 %v33, %v43
  %v53 = vmax.f32 %v34, %v44
  %v54 = vmax.f32 %v35, %v45
  %s55 = scalar_lea.vmem %s0, 216
  %v56 = vld [vmem:[%s55] sm:$0xff]
  %v57 = vld [vmem:[%s55 + $0x8] sm:$0xff]
  %v58 = vld [vmem:[%s55 + $0x10] sm:$0xff]
  %v59 = vld [vmem:[%s55 + $0x18] sm:$0xff]
  %v60 = vld [vmem:[%s55 + $0x20] sm:$0xff]
  %v61 = vld [vmem:[%s55 + $0x28] sm:$0xff]
  %v62 = vld [vmem:[%s55 + $0x30] sm:$0xff]
  %v63 = vld [vmem:[%s55 + $0x38] sm:$0xff]
  %v64 = vld [vmem:[%s55 + $0x40] sm:$0xff]
  %v65 = vmax.f32 %v46, %v56
  %v66 = vmax.f32 %v47, %v57
  %v67 = vmax.f32 %v48, %v58
  %v68 = vmax.f32 %v49, %v59
  %v69 = vmax.f32 %v50, %v60
  %v70 = vmax.f32 %v51, %v61
  %v71 = vmax.f32 %v52, %v62
  %v72 = vmax.f32 %v53, %v63
  %v73 = vmax.f32 %v54, %v64
  %s74 = scalar_lea.vmem %s0, 288
  %v75 = vld [vmem:[%s74] sm:$0xff]
  %v76 = vld [vmem:[%s74 + $0x8] sm:$0xff]
  %v77 = vld [vmem:[%s74 + $0x10] sm:$0xff]
  %v78 = vld [vmem:[%s74 + $0x18] sm:$0xff]
  %v79 = vld [vmem:[%s74 + $0x20] sm:$0xff]
  %v80 = vld [vmem:[%s74 + $0x28] sm:$0xff]
  %v81 = vld [vmem:[%s74 + $0x30] sm:$0xff]
  %v82 = vld [vmem:[%s74 + $0x38] sm:$0xff]
  %v83 = vld [vmem:[%s74 + $0x40] sm:$0xff]
  %v84 = vmax.f32 %v65, %v75
  %v85 = vmax.f32 %v66, %v76
  %v86 = vmax.f32 %v67, %v77
  %v87 = vmax.f32 %v68, %v78
  %v88 = vmax.f32 %v69, %v79
  %v89 = vmax.f32 %v70, %v80
  %v90 = vmax.f32 %v71, %v81
  %v91 = vmax.f32 %v72, %v82
  %v92 = vmax.f32 %v73, %v83
  %s93 = scalar_lea.vmem %s0, 360
  %v94 = vld [vmem:[%s93] sm:$0xff]
  %v95 = vld [vmem:[%s93 + $0x8] sm:$0xff]
  %v96 = vld [vmem:[%s93 + $0x10] sm:$0xff]
  %v97 = vld [vmem:[%s93 + $0x18] sm:$0xff]
  %v98 = vld [vmem:[%s93 + $0x20] sm:$0xff]
  %v99 = vld [vmem:[%s93 + $0x28] sm:$0xff]
  %v100 = vld [vmem:[%s93 + $0x30] sm:$0xff]
  %v101 = vld [vmem:[%s93 + $0x38] sm:$0xff]
  %v102 = vld [vmem:[%s93 + $0x40] sm:$0xff]
  %v103 = vmax.f32 %v84, %v94
  %v104 = vmax.f32 %v85, %v95
  %v105 = vmax.f32 %v86, %v96
  %v106 = vmax.f32 %v87, %v97
  %v107 = vmax.f32 %v88, %v98
  %v108 = vmax.f32 %v89, %v99
  %v109 = vmax.f32 %v90, %v100
  %v110 = vmax.f32 %v91, %v101
  %v111 = vmax.f32 %v92, %v102
  %s112 = scalar_lea.vmem %s0, 432
  %v113 = vld [vmem:[%s112] sm:$0xff]
  %v114 = vld [vmem:[%s112 + $0x8] sm:$0xff]
  %v115 = vld [vmem:[%s112 + $0x10] sm:$0xff]
  %v116 = vld [vmem:[%s112 + $0x18] sm:$0xff]
  %v117 = vld [vmem:[%s112 + $0x20] sm:$0xff]
  %v118 = vld [vmem:[%s112 + $0x28] sm:$0xff]
  %v119 = vld [vmem:[%s112 + $0x30] sm:$0xff]
  %v120 = vld [vmem:[%s112 + $0x38] sm:$0xff]
  %v121 = vld [vmem:[%s112 + $0x40] sm:$0xff]
  %v122 = vmax.f32 %v103, %v113
  %v123 = vmax.f32 %v104, %v114
  %v124 = vmax.f32 %v105, %v115
  %v125 = vmax.f32 %v106, %v116
  %v126 = vmax.f32 %v107, %v117
  %v127 = vmax.f32 %v108, %v118
  %v128 = vmax.f32 %v109, %v119
  %v129 = vmax.f32 %v110, %v120
  %v130 = vmax.f32 %v111, %v121
  %s131 = scalar_lea.vmem %s0, 504
  %v132 = vld [vmem:[%s131] sm:$0xff]
  %v133 = vld [vmem:[%s131 + $0x8] sm:$0xff]
  %v134 = vld [vmem:[%s131 + $0x10] sm:$0xff]
  %v135 = vld [vmem:[%s131 + $0x18] sm:$0xff]
  %v136 = vld [vmem:[%s131 + $0x20] sm:$0xff]
  %v137 = vld [vmem:[%s131 + $0x28] sm:$0xff]
  %v138 = vld [vmem:[%s131 + $0x30] sm:$0xff]
  %v139 = vld [vmem:[%s131 + $0x38] sm:$0xff]
  %v140 = vld [vmem:[%s131 + $0x40] sm:$0xff]
  %v141 = vmax.f32 %v122, %v132
  %v142 = vmax.f32 %v123, %v133
  %v143 = vmax.f32 %v124, %v134
  %v144 = vmax.f32 %v125, %v135
  %v145 = vmax.f32 %v126, %v136
  %v146 = vmax.f32 %v127, %v137
  %v147 = vmax.f32 %v128, %v138
  %v148 = vmax.f32 %v129, %v139
  %v149 = vmax.f32 %v130, %v140
  %s150 = scalar_lea.vmem %s0, 576
  %v151 = vld [vmem:[%s150] sm:$0xff]
  %v152 = vld [vmem:[%s150 + $0x8] sm:$0xff]
  %v153 = vld [vmem:[%s150 + $0x10] sm:$0xff]
  %v154 = vld [vmem:[%s150 + $0x18] sm:$0xff]
  %v155 = vld [vmem:[%s150 + $0x20] sm:$0xff]
  %v156 = vld [vmem:[%s150 + $0x28] sm:$0xff]
  %v157 = vld [vmem:[%s150 + $0x30] sm:$0xff]
  %v158 = vld [vmem:[%s150 + $0x38] sm:$0xff]
  %v159 = vld [vmem:[%s150 + $0x40] sm:$0xff]
  %v160 = vmax.f32 %v141, %v151
  %v161 = vmax.f32 %v142, %v152
  %v162 = vmax.f32 %v143, %v153
  %v163 = vmax.f32 %v144, %v154
  %v164 = vmax.f32 %v145, %v155
  %v165 = vmax.f32 %v146, %v156
  %v166 = vmax.f32 %v147, %v157
  %v167 = vmax.f32 %v148, %v158
  %v168 = vmax.f32 %v149, %v159
  %169 = vst [vmem:[%s1] sm:$0xff] %v160
  %170 = vst [vmem:[%s1 + $0x8] sm:$0xff] %v161
  %171 = vst [vmem:[%s1 + $0x10] sm:$0xff] %v162
  %172 = vst [vmem:[%s1 + $0x18] sm:$0xff] %v163
  %173 = vst [vmem:[%s1 + $0x20] sm:$0xff] %v164
  %174 = vst [vmem:[%s1 + $0x28] sm:$0xff] %v165
  %175 = vst [vmem:[%s1 + $0x30] sm:$0xff] %v166
  %176 = vst [vmem:[%s1 + $0x38] sm:$0xff] %v167
  %177 = vst [vmem:[%s1 + $0x40] sm:$0xff] %v168
  // Predicated region
  $region6: #{squeezenet_forward.22} parent=0 // pred_check
    _
  $region7: #{squeezenet_forward.22} parent=0 // pred_check_branch
    %179 = sbr.rel (0) target = $region9
  $region8: #{squeezenet_forward.22} parent=0 // pred_region
    _
  $region9: #{squeezenet_forward.22} parent=0 // pred_fallthru
    _
  // Predicated region
  $region10: #{squeezenet_forward.22} parent=0 // pred_check
    _
  $region11: #{squeezenet_forward.22} parent=0 // pred_check_branch
    %181 = sbr.rel (0) target = $region13
  $region12: #{squeezenet_forward.22} parent=0 // pred_region
    _
  $region13: #{squeezenet_forward.22} parent=0 // pred_fallthru
    _

// kernel: squeezenet_forward.23
$region0: #{squeezenet_forward.23}
  #allocation0 [shape = 'u32[]', space=smem, size = 0x4, offset = 0x4, fixed_abs, tag = 'smem constant byte address 0x4 - core index']
  #allocation1 [shape = 'u32[144,128]{1,0:T(1,128)}', space=vmem, size = 0x12000, scoped, tag = 'internal scratch']
  %s0 = inlined_call_operand.vmem [shape: bf16[72,128], index: 0, kind: input, shape index: {}]
  %s1 = inlined_call_operand.vmem [shape: bf16[128,128], index: 1, kind: input, shape index: {}]
  %s2 = inlined_call_operand.vmem [shape: f32[1,128], index: 2, kind: input, shape index: {}]
  %s3 = inlined_call_operand.vmem [shape: f32[72,128], index: 3, kind: output, shape index: {}]
  %s4 = sld [smem:[#allocation0]]
  $region22: #{squeezenet_forward.23} parent=0
    _
  %s6 = ssub.s32 1, %s4
  %s7 = scalar_select 0, %s6, %s4
  // Predicated region
  $region2: #{squeezenet_forward.23} parent=0 // pred_check
    _
  $region3: #{squeezenet_forward.23} parent=0 // pred_check_branch
    %9 = sbr.rel (0) target = $region5
  $region4: #{squeezenet_forward.23} parent=0 // pred_region
    _
  $region5: #{squeezenet_forward.23} parent=0 // pred_fallthru
    _
  // Predicated region
  $region6: #{squeezenet_forward.23} parent=0 // pred_check
    _
  $region7: #{squeezenet_forward.23} parent=0 // pred_check_branch
    %11 = sbr.rel (0) target = $region9
  $region8: #{squeezenet_forward.23} parent=0 // pred_region
    _
  $region9: #{squeezenet_forward.23} parent=0 // pred_fallthru
    _
  // Predicated region
  $region10: #{squeezenet_forward.23} parent=0 // pred_check
    _
  $region11: #{squeezenet_forward.23} parent=0 // pred_check_branch
    %13 = sbr.rel (0) target = $region13
  $region12: #{squeezenet_forward.23} parent=0 // pred_region
    _
  $region13: #{squeezenet_forward.23} parent=0 // pred_fallthru
    _
  %v15 = vld [vmem:[%s0] sm:$0xf]
  %v16 = vld [vmem:[%s0 + $0x4] sm:$0xf]
  %v17 = vld [vmem:[%s0 + $0x8] sm:$0xf]
  %v18 = vld [vmem:[%s0 + $0xc] sm:$0xf]
  %v19 = vld [vmem:[%s0 + $0x10] sm:$0xf]
  %v20 = vld [vmem:[%s0 + $0x14] sm:$0xf]
  %v21 = vld [vmem:[%s0 + $0x18] sm:$0xf]
  %v22 = vld [vmem:[%s0 + $0x1c] sm:$0xf]
  %v23 = vld [vmem:[%s0 + $0x20] sm:$0xf]
  %v24 = vld [vmem:[%s1] sm:$0xf]
  %v25 = vld [vmem:[%s1 + $0x4] sm:$0xf]
  %v26 = vld [vmem:[%s1 + $0x8] sm:$0xf]
  %v27 = vld [vmem:[%s1 + $0xc] sm:$0xf]
  %v28 = vld [vmem:[%s1 + $0x10] sm:$0xf]
  %v29 = vld [vmem:[%s1 + $0x14] sm:$0xf]
  %v30 = vld [vmem:[%s1 + $0x18] sm:$0xf]
  %v31 = vld [vmem:[%s1 + $0x1c] sm:$0xf]
  %v32 = vld [vmem:[%s1 + $0x20] sm:$0xf]
  %v33 = vld [vmem:[%s1 + $0x24] sm:$0xf]
  %v34 = vld [vmem:[%s1 + $0x28] sm:$0xf]
  %v35 = vld [vmem:[%s1 + $0x2c] sm:$0xf]
  %v36 = vld [vmem:[%s1 + $0x30] sm:$0xf]
  %v37 = vld [vmem:[%s1 + $0x34] sm:$0xf]
  %v38 = vld [vmem:[%s1 + $0x38] sm:$0xf]
  %v39 = vld [vmem:[%s1 + $0x3c] sm:$0xf]
  %v40 = vld [vmem:[%s2] sm:$0x1]
  %v42 = vlaneseq
  %v43 = vshrl.u32 %v42, 7
  %v44 = vsub.s32 0, %v43
  %v45 = vrot.slane %v40, %v44
  %v56 = vunpack.c.l.b16 %v15
  %v57 = vunpack.c.l.b16 %v16
  %v58 = vunpack.c.l.b16 %v17
  %v59 = vunpack.c.l.b16 %v18
  %v60 = vunpack.c.l.b16 %v19
  %v61 = vunpack.c.l.b16 %v20
  %v62 = vunpack.c.l.b16 %v21
  %v63 = vunpack.c.l.b16 %v22
  %v64 = vunpack.c.l.b16 %v23
  %v65 = vpack.c.b16 %v57, %v56
  %v66 = vpack.c.b16 %v59, %v58
  %v67 = vpack.c.b16 %v61, %v60
  %v68 = vpack.c.b16 %v63, %v62
  %v69 = vpack.c.b16 %v64, %v64
  %v91 = vunpack.c.l.b16 %v24
  %v92 = vunpack.c.l.b16 %v25
  %v93 = vunpack.c.l.b16 %v26
  %v94 = vunpack.c.l.b16 %v27
  %v95 = vunpack.c.l.b16 %v28
  %v96 = vunpack.c.l.b16 %v29
  %v97 = vunpack.c.l.b16 %v30
  %v98 = vunpack.c.l.b16 %v31
  %v99 = vunpack.c.l.b16 %v32
  %v100 = vunpack.c.l.b16 %v33
  %v101 = vunpack.c.l.b16 %v34
  %v102 = vunpack.c.l.b16 %v35
  %v103 = vunpack.c.l.b16 %v36
  %v104 = vunpack.c.l.b16 %v37
  %v105 = vunpack.c.l.b16 %v38
  %v106 = vunpack.c.l.b16 %v39
  %v107 = vpack.c.b16 %v92, %v91
  %v108 = vpack.c.b16 %v94, %v93
  %v109 = vpack.c.b16 %v96, %v95
  %v110 = vpack.c.b16 %v98, %v97
  %v111 = vpack.c.b16 %v100, %v99
  %v112 = vpack.c.b16 %v102, %v101
  %v113 = vpack.c.b16 %v104, %v103
  %v114 = vpack.c.b16 %v106, %v105
  %123 = vmatprep.subr.bf16.mxu0 0
  %124 = vmatpush1.bf16.msra.mxu0 %v114
  %125 = vmatprep.subr.bf16.mxu0 0
  %126 = vmatpush1.bf16.msra.mxu0 %v113
  %127 = vmatprep.subr.bf16.mxu0 0
  %128 = vmatpush1.bf16.msra.mxu0 %v112
  %129 = vmatprep.subr.bf16.mxu0 0
  %130 = vmatpush1.bf16.msra.mxu0 %v111
  %131 = vmatprep.subr.bf16.mxu0 0
  %132 = vmatpush1.bf16.msra.mxu0 %v110
  %133 = vmatprep.subr.bf16.mxu0 0
  %134 = vmatpush1.bf16.msra.mxu0 %v109
  %135 = vmatprep.subr.bf16.mxu0 0
  %136 = vmatpush1.bf16.msra.mxu0 %v108
  %137 = vmatprep.subr.bf16.mxu0 0
  %138 = vmatpush1.bf16.msra.mxu0 %v107
  %139 = vmatprep.subr.bf16.mxu0 0
  %140 = vmatpush2.bf16.msra.mxu0 0
  %141 = vmatprep.subr.bf16.mxu0 0
  %142 = vmatpush2.bf16.msra.mxu0 0
  %143 = vmatprep.subr.bf16.mxu0 0
  %144 = vmatpush2.bf16.msra.mxu0 0
  %145 = vmatprep.subr.bf16.mxu0 0
  %146 = vmatpush2.bf16.msra.mxu0 0
  %147 = vmatprep.subr.bf16.mxu0 0
  %148 = vmatpush2.bf16.msra.mxu0 0
  %149 = vmatprep.subr.bf16.mxu0 0
  %150 = vmatpush2.bf16.msra.mxu0 0
  %151 = vmatprep.subr.bf16.mxu0 0
  %152 = vmatpush2.bf16.msra.mxu0 0
  %153 = vmatprep.subr.bf16.mxu0 0
  %154 = vmatpush2.bf16.msra.mxu0 0
  %155 = vmatprep.mubr.bf16.mxu0 0
  %156 = vmatmul.mubr.bf16.gmra.mxu0 %v65
  %v157 = vpop.f32.mrf.mxu0
  %v158 = vadd.f32 %v45, %v157
  %v159 = vpop.f32.mrf.mxu0
  %v160 = vpop.f32.mrf.mxu0
  %v161 = vadd.f32 %v45, %v160
  %v162 = vpop.f32.mrf.mxu0
  %163 = vmatprep.mubr.bf16.mxu0 0
  %164 = vmatmul.mubr.bf16.gmra.mxu0 %v66
  %v165 = vpop.f32.mrf.mxu0
  %v166 = vadd.f32 %v45, %v165
  %v167 = vpop.f32.mrf.mxu0
  %v168 = vpop.f32.mrf.mxu0
  %v169 = vadd.f32 %v45, %v168
  %v170 = vpop.f32.mrf.mxu0
  %171 = vmatprep.mubr.bf16.mxu0 0
  %172 = vmatmul.mubr.bf16.gmra.mxu0 %v67
  %v173 = vpop.f32.mrf.mxu0
  %v174 = vadd.f32 %v45, %v173
  %v175 = vpop.f32.mrf.mxu0
  %v176 = vpop.f32.mrf.mxu0
  %v177 = vadd.f32 %v45, %v176
  %v178 = vpop.f32.mrf.mxu0
  %179 = vmatprep.mubr.bf16.mxu0 0
  %180 = vmatmul.mubr.bf16.gmra.mxu0 %v68
  %v181 = vpop.f32.mrf.mxu0
  %v182 = vadd.f32 %v45, %v181
  %v183 = vpop.f32.mrf.mxu0
  %v184 = vpop.f32.mrf.mxu0
  %v185 = vadd.f32 %v45, %v184
  %v186 = vpop.f32.mrf.mxu0
  %187 = vmatprep.mubr.bf16.mxu0 0
  %188 = vmatmul.mubr.bf16.gmra.mxu0 %v69
  %v189 = vpop.f32.mrf.mxu0
  %v190 = vadd.f32 %v45, %v189
  %v191 = vpop.f32.mrf.mxu0
  %v192 = vpop.f32.mrf.mxu0
  %v193 = vpop.f32.mrf.mxu0
  %194 = vdwg.mxu0
  %v195 = vmax.f32 %v158, 0.0
  %v196 = vmax.f32 %v161, 0.0
  %v197 = vmax.f32 %v166, 0.0
  %v198 = vmax.f32 %v169, 0.0
  %v199 = vmax.f32 %v174, 0.0
  %v200 = vmax.f32 %v177, 0.0
  %v201 = vmax.f32 %v182, 0.0
  %v202 = vmax.f32 %v185, 0.0
  %v203 = vmax.f32 %v190, 0.0
  %204 = vst [vmem:[%s3] sm:$0xff] %v195
  %205 = vst [vmem:[%s3 + $0x8] sm:$0xff] %v196
  %206 = vst [vmem:[%s3 + $0x10] sm:$0xff] %v197
  %207 = vst [vmem:[%s3 + $0x18] sm:$0xff] %v198
  %208 = vst [vmem:[%s3 + $0x20] sm:$0xff] %v199
  %209 = vst [vmem:[%s3 + $0x28] sm:$0xff] %v200
  %210 = vst [vmem:[%s3 + $0x30] sm:$0xff] %v201
  %211 = vst [vmem:[%s3 + $0x38] sm:$0xff] %v202
  %212 = vst [vmem:[%s3 + $0x40] sm:$0xff] %v203
  // Predicated region
  $region14: #{squeezenet_forward.23} parent=0 // pred_check
    _
  $region15: #{squeezenet_forward.23} parent=0 // pred_check_branch
    %214 = sbr.rel (0) target = $region17
  $region16: #{squeezenet_forward.23} parent=0 // pred_region
    _
  $region17: #{squeezenet_forward.23} parent=0 // pred_fallthru
    _
  // Predicated region
  $region18: #{squeezenet_forward.23} parent=0 // pred_check
    _
  $region19: #{squeezenet_forward.23} parent=0 // pred_check_branch
    %216 = sbr.rel (0) target = $region21
  $region20: #{squeezenet_forward.23} parent=0 // pred_region
    _
  $region21: #{squeezenet_forward.23} parent=0 // pred_fallthru
    _

// kernel: squeezenet_forward.24
$region0: #{squeezenet_forward.24}
  #allocation0 [shape = 'u32[]', space=smem, size = 0x4, offset = 0x4, fixed_abs, tag = 'smem constant byte address 0x4 - core index']
  #allocation1 [shape = 'u32[144,128]{1,0:T(1,128)}', space=vmem, size = 0x12000, scoped, tag = 'internal scratch']
  %s0 = inlined_call_operand.vmem [shape: bf16[72,256], index: 0, kind: input, shape index: {}]
  %s1 = inlined_call_operand.vmem [shape: bf16[256,128], index: 1, kind: input, shape index: {}]
  %s2 = inlined_call_operand.vmem [shape: f32[1,128], index: 2, kind: input, shape index: {}]
  %s3 = inlined_call_operand.vmem [shape: f32[72,128], index: 3, kind: output, shape index: {}]
  %s4 = sld [smem:[#allocation0]]
  $region22: #{squeezenet_forward.24} parent=0
    _
  %s6 = ssub.s32 1, %s4
  %s7 = scalar_select 0, %s6, %s4
  // Predicated region
  $region2: #{squeezenet_forward.24} parent=0 // pred_check
    _
  $region3: #{squeezenet_forward.24} parent=0 // pred_check_branch
    %9 = sbr.rel (0) target = $region5
  $region4: #{squeezenet_forward.24} parent=0 // pred_region
    _
  $region5: #{squeezenet_forward.24} parent=0 // pred_fallthru
    _
  // Predicated region
  $region6: #{squeezenet_forward.24} parent=0 // pred_check
    _
  $region7: #{squeezenet_forward.24} parent=0 // pred_check_branch
    %11 = sbr.rel (0) target = $region9
  $region8: #{squeezenet_forward.24} parent=0 // pred_region
    _
  $region9: #{squeezenet_forward.24} parent=0 // pred_fallthru
    _
  // Predicated region
  $region10: #{squeezenet_forward.24} parent=0 // pred_check
    _
  $region11: #{squeezenet_forward.24} parent=0 // pred_check_branch
    %13 = sbr.rel (0) target = $region13
  $region12: #{squeezenet_forward.24} parent=0 // pred_region
    _
  $region13: #{squeezenet_forward.24} parent=0 // pred_fallthru
    _
  %v15 = vld [vmem:[%s0] sm:$0xff]
  %v16 = vld [vmem:[%s0 + $0x8] sm:$0xff]
  %v17 = vld [vmem:[%s0 + $0x10] sm:$0xff]
  %v18 = vld [vmem:[%s0 + $0x18] sm:$0xff]
  %v19 = vld [vmem:[%s0 + $0x20] sm:$0xff]
  %v20 = vld [vmem:[%s0 + $0x28] sm:$0xff]
  %v21 = vld [vmem:[%s0 + $0x30] sm:$0xff]
  %v22 = vld [vmem:[%s0 + $0x38] sm:$0xff]
  %v23 = vld [vmem:[%s0 + $0x40] sm:$0xff]
  %v24 = vld [vmem:[%s1] sm:$0xf]
  %v25 = vld [vmem:[%s1 + $0x4] sm:$0xf]
  %v26 = vld [vmem:[%s1 + $0x8] sm:$0xf]
  %v27 = vld [vmem:[%s1 + $0xc] sm:$0xf]
  %v28 = vld [vmem:[%s1 + $0x10] sm:$0xf]
  %v29 = vld [vmem:[%s1 + $0x14] sm:$0xf]
  %v30 = vld [vmem:[%s1 + $0x18] sm:$0xf]
  %v31 = vld [vmem:[%s1 + $0x1c] sm:$0xf]
  %v32 = vld [vmem:[%s1 + $0x20] sm:$0xf]
  %v33 = vld [vmem:[%s1 + $0x24] sm:$0xf]
  %v34 = vld [vmem:[%s1 + $0x28] sm:$0xf]
  %v35 = vld [vmem:[%s1 + $0x2c] sm:$0xf]
  %v36 = vld [vmem:[%s1 + $0x30] sm:$0xf]
  %v37 = vld [vmem:[%s1 + $0x34] sm:$0xf]
  %v38 = vld [vmem:[%s1 + $0x38] sm:$0xf]
  %v39 = vld [vmem:[%s1 + $0x3c] sm:$0xf]
  %v40 = vld [vmem:[%s1 + $0x40] sm:$0xf]
  %v41 = vld [vmem:[%s1 + $0x44] sm:$0xf]
  %v42 = vld [vmem:[%s1 + $0x48] sm:$0xf]
  %v43 = vld [vmem:[%s1 + $0x4c] sm:$0xf]
  %v44 = vld [vmem:[%s1 + $0x50] sm:$0xf]
  %v45 = vld [vmem:[%s1 + $0x54] sm:$0xf]
  %v46 = vld [vmem:[%s1 + $0x58] sm:$0xf]
  %v47 = vld [vmem:[%s1 + $0x5c] sm:$0xf]
  %v48 = vld [vmem:[%s1 + $0x60] sm:$0xf]
  %v49 = vld [vmem:[%s1 + $0x64] sm:$0xf]
  %v50 = vld [vmem:[%s1 + $0x68] sm:$0xf]
  %v51 = vld [vmem:[%s1 + $0x6c] sm:$0xf]
  %v52 = vld [vmem:[%s1 + $0x70] sm:$0xf]
  %v53 = vld [vmem:[%s1 + $0x74] sm:$0xf]
  %v54 = vld [vmem:[%s1 + $0x78] sm:$0xf]
  %v55 = vld [vmem:[%s1 + $0x7c] sm:$0xf]
  %v56 = vld [vmem:[%s2] sm:$0x1]
  %v58 = vlaneseq
  %v59 = vshrl.u32 %v58, 7
  %v60 = vsub.s32 0, %v59
  %v61 = vrot.slane %v56, %v60
  %v72 = vunpack.c.l.b16 %v15
  %v73 = vunpack.c.h.b16 %v15
  %v74 = vunpack.c.l.b16 %v16
  %v75 = vunpack.c.h.b16 %v16
  %v76 = vunpack.c.l.b16 %v17
  %v77 = vunpack.c.h.b16 %v17
  %v78 = vunpack.c.l.b16 %v18
  %v79 = vunpack.c.h.b16 %v18
  %v80 = vunpack.c.l.b16 %v19
  %v81 = vunpack.c.h.b16 %v19
  %v82 = vunpack.c.l.b16 %v20
  %v83 = vunpack.c.h.b16 %v20
  %v84 = vunpack.c.l.b16 %v21
  %v85 = vunpack.c.h.b16 %v21
  %v86 = vunpack.c.l.b16 %v22
  %v87 = vunpack.c.h.b16 %v22
  %v88 = vunpack.c.l.b16 %v23
  %v89 = vunpack.c.h.b16 %v23
  %v90 = vpack.c.b16 %v74, %v72
  %v91 = vpack.c.b16 %v75, %v73
  %v92 = vpack.c.b16 %v78, %v76
  %v93 = vpack.c.b16 %v79, %v77
  %v94 = vpack.c.b16 %v82, %v80
  %v95 = vpack.c.b16 %v83, %v81
  %v96 = vpack.c.b16 %v86, %v84
  %v97 = vpack.c.b16 %v87, %v85
  %v98 = vpack.c.b16 %v88, %v88
  %v99 = vpack.c.b16 %v89, %v89
  %v142 = vunpack.c.l.b16 %v24
  %v143 = vunpack.c.l.b16 %v25
  %v144 = vunpack.c.l.b16 %v26
  %v145 = vunpack.c.l.b16 %v27
  %v146 = vunpack.c.l.b16 %v28
  %v147 = vunpack.c.l.b16 %v29
  %v148 = vunpack.c.l.b16 %v30
  %v149 = vunpack.c.l.b16 %v31
  %v150 = vunpack.c.l.b16 %v32
  %v151 = vunpack.c.l.b16 %v33
  %v152 = vunpack.c.l.b16 %v34
  %v153 = vunpack.c.l.b16 %v35
  %v154 = vunpack.c.l.b16 %v36
  %v155 = vunpack.c.l.b16 %v37
  %v156 = vunpack.c.l.b16 %v38
  %v157 = vunpack.c.l.b16 %v39
  %v158 = vunpack.c.l.b16 %v40
  %v159 = vunpack.c.l.b16 %v41
  %v160 = vunpack.c.l.b16 %v42
  %v161 = vunpack.c.l.b16 %v43
  %v162 = vunpack.c.l.b16 %v44
  %v163 = vunpack.c.l.b16 %v45
  %v164 = vunpack.c.l.b16 %v46
  %v165 = vunpack.c.l.b16 %v47
  %v166 = vunpack.c.l.b16 %v48
  %v167 = vunpack.c.l.b16 %v49
  %v168 = vunpack.c.l.b16 %v50
  %v169 = vunpack.c.l.b16 %v51
  %v170 = vunpack.c.l.b16 %v52
  %v171 = vunpack.c.l.b16 %v53
  %v172 = vunpack.c.l.b16 %v54
  %v173 = vunpack.c.l.b16 %v55
  %v174 = vpack.c.b16 %v143, %v142
  %v175 = vpack.c.b16 %v145, %v144
  %v176 = vpack.c.b16 %v147, %v146
  %v177 = vpack.c.b16 %v149, %v148
  %v178 = vpack.c.b16 %v151, %v150
  %v179 = vpack.c.b16 %v153, %v152
  %v180 = vpack.c.b16 %v155, %v154
  %v181 = vpack.c.b16 %v157, %v156
  %v182 = vpack.c.b16 %v159, %v158
  %v183 = vpack.c.b16 %v161, %v160
  %v184 = vpack.c.b16 %v163, %v162
  %v185 = vpack.c.b16 %v165, %v164
  %v186 = vpack.c.b16 %v167, %v166
  %v187 = vpack.c.b16 %v169, %v168
  %v188 = vpack.c.b16 %v171, %v170
  %v189 = vpack.c.b16 %v173, %v172
  %206 = vmatprep.subr.bf16.mxu0 0
  %207 = vmatpush1.bf16.msra.mxu0 %v181
  %208 = vmatprep.subr.bf16.mxu0 0
  %209 = vmatpush1.bf16.msra.mxu0 %v180
  %210 = vmatprep.subr.bf16.mxu0 0
  %211 = vmatpush1.bf16.msra.mxu0 %v179
  %212 = vmatprep.subr.bf16.mxu0 0
  %213 = vmatpush1.bf16.msra.mxu0 %v178
  %214 = vmatprep.subr.bf16.mxu0 0
  %215 = vmatpush1.bf16.msra.mxu0 %v177
  %216 = vmatprep.subr.bf16.mxu0 0
  %217 = vmatpush1.bf16.msra.mxu0 %v176
  %218 = vmatprep.subr.bf16.mxu0 0
  %219 = vmatpush1.bf16.msra.mxu0 %v175
  %220 = vmatprep.subr.bf16.mxu0 0
  %221 = vmatpush1.bf16.msra.mxu0 %v174
  %222 = vmatprep.subr.bf16.mxu0 0
  %223 = vmatpush2.bf16.msra.mxu0 %v189
  %224 = vmatprep.subr.bf16.mxu0 0
  %225 = vmatpush2.bf16.msra.mxu0 %v188
  %226 = vmatprep.subr.bf16.mxu0 0
  %227 = vmatpush2.bf16.msra.mxu0 %v187
  %228 = vmatprep.subr.bf16.mxu0 0
  %229 = vmatpush2.bf16.msra.mxu0 %v186
  %230 = vmatprep.subr.bf16.mxu0 0
  %231 = vmatpush2.bf16.msra.mxu0 %v185
  %232 = vmatprep.subr.bf16.mxu0 0
  %233 = vmatpush2.bf16.msra.mxu0 %v184
  %234 = vmatprep.subr.bf16.mxu0 0
  %235 = vmatpush2.bf16.msra.mxu0 %v183
  %236 = vmatprep.subr.bf16.mxu0 0
  %237 = vmatpush2.bf16.msra.mxu0 %v182
  %238 = vmatprep.mubr.bf16.mxu0 %v91
  %239 = vmatmul.mubr.bf16.gmra.mxu0 %v90
  %v240 = vpop.f32.mrf.mxu0
  %v241 = vadd.f32 %v61, %v240
  %v242 = vpop.f32.mrf.mxu0
  %v243 = vpop.f32.mrf.mxu0
  %v244 = vadd.f32 %v61, %v243
  %v245 = vpop.f32.mrf.mxu0
  %246 = vmatprep.mubr.bf16.mxu0 %v93
  %247 = vmatmul.mubr.bf16.gmra.mxu0 %v92
  %v248 = vpop.f32.mrf.mxu0
  %v249 = vadd.f32 %v61, %v248
  %v250 = vpop.f32.mrf.mxu0
  %v251 = vpop.f32.mrf.mxu0
  %v252 = vadd.f32 %v61, %v251
  %v253 = vpop.f32.mrf.mxu0
  %254 = vmatprep.mubr.bf16.mxu0 %v95
  %255 = vmatmul.mubr.bf16.gmra.mxu0 %v94
  %v256 = vpop.f32.mrf.mxu0
  %v257 = vadd.f32 %v61, %v256
  %v258 = vpop.f32.mrf.mxu0
  %v259 = vpop.f32.mrf.mxu0
  %v260 = vadd.f32 %v61, %v259
  %v261 = vpop.f32.mrf.mxu0
  %262 = vmatprep.mubr.bf16.mxu0 %v97
  %263 = vmatmul.mubr.bf16.gmra.mxu0 %v96
  %v264 = vpop.f32.mrf.mxu0
  %v265 = vadd.f32 %v61, %v264
  %v266 = vpop.f32.mrf.mxu0
  %v267 = vpop.f32.mrf.mxu0
  %v268 = vadd.f32 %v61, %v267
  %v269 = vpop.f32.mrf.mxu0
  %270 = vmatprep.mubr.bf16.mxu0 %v99
  %271 = vmatmul.mubr.bf16.gmra.mxu0 %v98
  %v272 = vpop.f32.mrf.mxu0
  %v273 = vadd.f32 %v61, %v272
  %v274 = vpop.f32.mrf.mxu0
  %v275 = vpop.f32.mrf.mxu0
  %v276 = vpop.f32.mrf.mxu0
  %277 = vdwg.mxu0
  %v278 = vmax.f32 %v241, 0.0
  %v279 = vmax.f32 %v244, 0.0
  %v280 = vmax.f32 %v249, 0.0
  %v281 = vmax.f32 %v252, 0.0
  %v282 = vmax.f32 %v257, 0.0
  %v283 = vmax.f32 %v260, 0.0
  %v284 = vmax.f32 %v265, 0.0
  %v285 = vmax.f32 %v268, 0.0
  %v286 = vmax.f32 %v273, 0.0
  %287 = vst [vmem:[%s3] sm:$0xff] %v278
  %288 = vst [vmem:[%s3 + $0x8] sm:$0xff] %v279
  %289 = vst [vmem:[%s3 + $0x10] sm:$0xff] %v280
  %290 = vst [vmem:[%s3 + $0x18] sm:$0xff] %v281
  %291 = vst [vmem:[%s3 + $0x20] sm:$0xff] %v282
  %292 = vst [vmem:[%s3 + $0x28] sm:$0xff] %v283
  %293 = vst [vmem:[%s3 + $0x30] sm:$0xff] %v284
  %294 = vst [vmem:[%s3 + $0x38] sm:$0xff] %v285
  %295 = vst [vmem:[%s3 + $0x40] sm:$0xff] %v286
  // Predicated region
  $region14: #{squeezenet_forward.24} parent=0 // pred_check
    _
  $region15: #{squeezenet_forward.24} parent=0 // pred_check_branch
    %297 = sbr.rel (0) target = $region17
  $region16: #{squeezenet_forward.24} parent=0 // pred_region
    _
  $region17: #{squeezenet_forward.24} parent=0 // pred_fallthru
    _
  // Predicated region
  $region18: #{squeezenet_forward.24} parent=0 // pred_check
    _
  $region19: #{squeezenet_forward.24} parent=0 // pred_check_branch
    %299 = sbr.rel (0) target = $region21
  $region20: #{squeezenet_forward.24} parent=0 // pred_region
    _
  $region21: #{squeezenet_forward.24} parent=0 // pred_fallthru
    _

// kernel: squeezenet_forward.28
$region0: #{squeezenet_forward.28}
  #allocation0 [shape = 'u32[]', space=smem, size = 0x4, offset = 0x4, fixed_abs, tag = 'smem constant byte address 0x4 - core index']
  #allocation1 [shape = 'u32[144,128]{1,0:T(1,128)}', space=vmem, size = 0x12000, scoped, tag = 'internal scratch']
  %s0 = inlined_call_operand.vmem [shape: bf16[72,384], index: 0, kind: input, shape index: {}]
  %s1 = inlined_call_operand.vmem [shape: bf16[384,256], index: 1, kind: input, shape index: {}]
  %s2 = inlined_call_operand.vmem [shape: f32[1,256], index: 2, kind: input, shape index: {}]
  %s3 = inlined_call_operand.vmem [shape: f32[72,256], index: 3, kind: output, shape index: {}]
  %s4 = sld [smem:[#allocation0]]
  $region22: #{squeezenet_forward.28} parent=0
    _
  %s6 = ssub.s32 1, %s4
  %s7 = scalar_select 0, %s6, %s4
  // Predicated region
  $region2: #{squeezenet_forward.28} parent=0 // pred_check
    _
  $region3: #{squeezenet_forward.28} parent=0 // pred_check_branch
    %9 = sbr.rel (0) target = $region5
  $region4: #{squeezenet_forward.28} parent=0 // pred_region
    _
  $region5: #{squeezenet_forward.28} parent=0 // pred_fallthru
    _
  // Predicated region
  $region6: #{squeezenet_forward.28} parent=0 // pred_check
    _
  $region7: #{squeezenet_forward.28} parent=0 // pred_check_branch
    %11 = sbr.rel (0) target = $region9
  $region8: #{squeezenet_forward.28} parent=0 // pred_region
    _
  $region9: #{squeezenet_forward.28} parent=0 // pred_fallthru
    _
  // Predicated region
  $region10: #{squeezenet_forward.28} parent=0 // pred_check
    _
  $region11: #{squeezenet_forward.28} parent=0 // pred_check_branch
    %13 = sbr.rel (0) target = $region13
  $region12: #{squeezenet_forward.28} parent=0 // pred_region
    _
  $region13: #{squeezenet_forward.28} parent=0 // pred_fallthru
    _
  %v15 = vld [vmem:[%s0] sm:$0xff]
  %v16 = vld [vmem:[%s0 + $0x8] sm:$0xf]
  %v17 = vld [vmem:[%s0 + $0xc] sm:$0xff]
  %v18 = vld [vmem:[%s0 + $0x14] sm:$0xf]
  %v19 = vld [vmem:[%s0 + $0x18] sm:$0xff]
  %v20 = vld [vmem:[%s0 + $0x20] sm:$0xf]
  %v21 = vld [vmem:[%s0 + $0x24] sm:$0xff]
  %v22 = vld [vmem:[%s0 + $0x2c] sm:$0xf]
  %v23 = vld [vmem:[%s0 + $0x30] sm:$0xff]
  %v24 = vld [vmem:[%s0 + $0x38] sm:$0xf]
  %v25 = vld [vmem:[%s0 + $0x3c] sm:$0xff]
  %v26 = vld [vmem:[%s0 + $0x44] sm:$0xf]
  %v27 = vld [vmem:[%s0 + $0x48] sm:$0xff]
  %v28 = vld [vmem:[%s0 + $0x50] sm:$0xf]
  %v29 = vld [vmem:[%s0 + $0x54] sm:$0xff]
  %v30 = vld [vmem:[%s0 + $0x5c] sm:$0xf]
  %v31 = vld [vmem:[%s0 + $0x60] sm:$0xff]
  %v32 = vld [vmem:[%s0 + $0x68] sm:$0xf]
  %v33 = vld [vmem:[%s1] sm:$0xff]
  %v34 = vld [vmem:[%s1 + $0x8] sm:$0xff]
  %v35 = vld [vmem:[%s1 + $0x10] sm:$0xff]
  %v36 = vld [vmem:[%s1 + $0x18] sm:$0xff]
  %v37 = vld [vmem:[%s1 + $0x20] sm:$0xff]
  %v38 = vld [vmem:[%s1 + $0x28] sm:$0xff]
  %v39 = vld [vmem:[%s1 + $0x30] sm:$0xff]
  %v40 = vld [vmem:[%s1 + $0x38] sm:$0xff]
  %v41 = vld [vmem:[%s1 + $0x40] sm:$0xff]
  %v42 = vld [vmem:[%s1 + $0x48] sm:$0xff]
  %v43 = vld [vmem:[%s1 + $0x50] sm:$0xff]
  %v44 = vld [vmem:[%s1 + $0x58] sm:$0xff]
  %v45 = vld [vmem:[%s1 + $0x60] sm:$0xff]
  %v46 = vld [vmem:[%s1 + $0x68] sm:$0xff]
  %v47 = vld [vmem:[%s1 + $0x70] sm:$0xff]
  %v48 = vld [vmem:[%s1 + $0x78] sm:$0xff]
  %v49 = vld [vmem:[%s1 + $0x80] sm:$0xff]
  %v50 = vld [vmem:[%s1 + $0x88] sm:$0xff]
  %v51 = vld [vmem:[%s1 + $0x90] sm:$0xff]
  %v52 = vld [vmem:[%s1 + $0x98] sm:$0xff]
  %v53 = vld [vmem:[%s1 + $0xa0] sm:$0xff]
  %v54 = vld [vmem:[%s1 + $0xa8] sm:$0xff]
  %v55 = vld [vmem:[%s1 + $0xb0] sm:$0xff]
  %v56 = vld [vmem:[%s1 + $0xb8] sm:$0xff]
  %v57 = vld [vmem:[%s1 + $0xc0] sm:$0xff]
  %v58 = vld [vmem:[%s1 + $0xc8] sm:$0xff]
  %v59 = vld [vmem:[%s1 + $0xd0] sm:$0xff]
  %v60 = vld [vmem:[%s1 + $0xd8] sm:$0xff]
  %v61 = vld [vmem:[%s1 + $0xe0] sm:$0xff]
  %v62 = vld [vmem:[%s1 + $0xe8] sm:$0xff]
  %v63 = vld [vmem:[%s1 + $0xf0] sm:$0xff]
  %v64 = vld [vmem:[%s1 + $0xf8] sm:$0xff]
  %v65 = vld [vmem:[%s1 + $0x100] sm:$0xff]
  %v66 = vld [vmem:[%s1 + $0x108] sm:$0xff]
  %v67 = vld [vmem:[%s1 + $0x110] sm:$0xff]
  %v68 = vld [vmem:[%s1 + $0x118] sm:$0xff]
  %v69 = vld [vmem:[%s1 + $0x120] sm:$0xff]
  %v70 = vld [vmem:[%s1 + $0x128] sm:$0xff]
  %v71 = vld [vmem:[%s1 + $0x130] sm:$0xff]
  %v72 = vld [vmem:[%s1 + $0x138] sm:$0xff]
  %v73 = vld [vmem:[%s1 + $0x140] sm:$0xff]
  %v74 = vld [vmem:[%s1 + $0x148] sm:$0xff]
  %v75 = vld [vmem:[%s1 + $0x150] sm:$0xff]
  %v76 = vld [vmem:[%s1 + $0x158] sm:$0xff]
  %v77 = vld [vmem:[%s1 + $0x160] sm:$0xff]
  %v78 = vld [vmem:[%s1 + $0x168] sm:$0xff]
  %v79 = vld [vmem:[%s1 + $0x170] sm:$0xff]
  %v80 = vld [vmem:[%s1 + $0x178] sm:$0xff]
  %v81 = vld [vmem:[%s2] sm:$0x3]
  %v83 = vlaneseq
  %v84 = vshrl.u32 %v83, 7
  %v85 = vsub.s32 0, %v84
  %v86 = vrot.slane %v81, %v85
  %v87 = vlaneseq
  %v88 = vshrl.u32 %v87, 7
  %v89 = vsub.s32 1, %v88
  %v90 = vrot.slane %v81, %v89
  %v111 = vunpack.c.l.b16 %v15
  %v112 = vunpack.c.h.b16 %v15
  %v113 = vunpack.c.l.b16 %v16
  %v114 = vunpack.c.l.b16 %v17
  %v115 = vunpack.c.h.b16 %v17
  %v116 = vunpack.c.l.b16 %v18
  %v117 = vunpack.c.l.b16 %v19
  %v118 = vunpack.c.h.b16 %v19
  %v119 = vunpack.c.l.b16 %v20
  %v120 = vunpack.c.l.b16 %v21
  %v121 = vunpack.c.h.b16 %v21
  %v122 = vunpack.c.l.b16 %v22
  %v123 = vunpack.c.l.b16 %v23
  %v124 = vunpack.c.h.b16 %v23
  %v125 = vunpack.c.l.b16 %v24
  %v126 = vunpack.c.l.b16 %v25
  %v127 = vunpack.c.h.b16 %v25
  %v128 = vunpack.c.l.b16 %v26
  %v129 = vunpack.c.l.b16 %v27
  %v130 = vunpack.c.h.b16 %v27
  %v131 = vunpack.c.l.b16 %v28
  %v132 = vunpack.c.l.b16 %v29
  %v133 = vunpack.c.h.b16 %v29
  %v134 = vunpack.c.l.b16 %v30
  %v135 = vunpack.c.l.b16 %v31
  %v136 = vunpack.c.h.b16 %v31
  %v137 = vunpack.c.l.b16 %v32
  %v138 = vpack.c.b16 %v114, %v111
  %v139 = vpack.c.b16 %v115, %v112
  %v140 = vpack.c.b16 %v116, %v113
  %v141 = vpack.c.b16 %v120, %v117
  %v142 = vpack.c.b16 %v121, %v118
  %v143 = vpack.c.b16 %v122, %v119
  %v144 = vpack.c.b16 %v126, %v123
  %v145 = vpack.c.b16 %v127, %v124
  %v146 = vpack.c.b16 %v128, %v125
  %v147 = vpack.c.b16 %v132, %v129
  %v148 = vpack.c.b16 %v133, %v130
  %v149 = vpack.c.b16 %v134, %v131
  %v150 = vpack.c.b16 %v135, %v135
  %v151 = vpack.c.b16 %v136, %v136
  %v152 = vpack.c.b16 %v137, %v137
  %v216 = vunpack.c.l.b16 %v33
  %v217 = vunpack.c.h.b16 %v33
  %v218 = vunpack.c.l.b16 %v34
  %v219 = vunpack.c.h.b16 %v34
  %v220 = vunpack.c.l.b16 %v35
  %v221 = vunpack.c.h.b16 %v35
  %v222 = vunpack.c.l.b16 %v36
  %v223 = vunpack.c.h.b16 %v36
  %v224 = vunpack.c.l.b16 %v37
  %v225 = vunpack.c.h.b16 %v37
  %v226 = vunpack.c.l.b16 %v38
  %v227 = vunpack.c.h.b16 %v38
  %v228 = vunpack.c.l.b16 %v39
  %v229 = vunpack.c.h.b16 %v39
  %v230 = vunpack.c.l.b16 %v40
  %v231 = vunpack.c.h.b16 %v40
  %v232 = vunpack.c.l.b16 %v41
  %v233 = vunpack.c.h.b16 %v41
  %v234 = vunpack.c.l.b16 %v42
  %v235 = vunpack.c.h.b16 %v42
  %v236 = vunpack.c.l.b16 %v43
  %v237 = vunpack.c.h.b16 %v43
  %v238 = vunpack.c.l.b16 %v44
  %v239 = vunpack.c.h.b16 %v44
  %v240 = vunpack.c.l.b16 %v45
  %v241 = vunpack.c.h.b16 %v45
  %v242 = vunpack.c.l.b16 %v46
  %v243 = vunpack.c.h.b16 %v46
  %v244 = vunpack.c.l.b16 %v47
  %v245 = vunpack.c.h.b16 %v47
  %v246 = vunpack.c.l.b16 %v48
  %v247 = vunpack.c.h.b16 %v48
  %v248 = vunpack.c.l.b16 %v49
  %v249 = vunpack.c.h.b16 %v49
  %v250 = vunpack.c.l.b16 %v50
  %v251 = vunpack.c.h.b16 %v50
  %v252 = vunpack.c.l.b16 %v51
  %v253 = vunpack.c.h.b16 %v51
  %v254 = vunpack.c.l.b16 %v52
  %v255 = vunpack.c.h.b16 %v52
  %v256 = vunpack.c.l.b16 %v53
  %v257 = vunpack.c.h.b16 %v53
  %v258 = vunpack.c.l.b16 %v54
  %v259 = vunpack.c.h.b16 %v54
  %v260 = vunpack.c.l.b16 %v55
  %v261 = vunpack.c.h.b16 %v55
  %v262 = vunpack.c.l.b16 %v56
  %v263 = vunpack.c.h.b16 %v56
  %v264 = vunpack.c.l.b16 %v57
  %v265 = vunpack.c.h.b16 %v57
  %v266 = vunpack.c.l.b16 %v58
  %v267 = vunpack.c.h.b16 %v58
  %v268 = vunpack.c.l.b16 %v59
  %v269 = vunpack.c.h.b16 %v59
  %v270 = vunpack.c.l.b16 %v60
  %v271 = vunpack.c.h.b16 %v60
  %v272 = vunpack.c.l.b16 %v61
  %v273 = vunpack.c.h.b16 %v61
  %v274 = vunpack.c.l.b16 %v62
  %v275 = vunpack.c.h.b16 %v62
  %v276 = vunpack.c.l.b16 %v63
  %v277 = vunpack.c.h.b16 %v63
  %v278 = vunpack.c.l.b16 %v64
  %v279 = vunpack.c.h.b16 %v64
  %v280 = vunpack.c.l.b16 %v65
  %v281 = vunpack.c.h.b16 %v65
  %v282 = vunpack.c.l.b16 %v66
  %v283 = vunpack.c.h.b16 %v66
  %v284 = vunpack.c.l.b16 %v67
  %v285 = vunpack.c.h.b16 %v67
  %v286 = vunpack.c.l.b16 %v68
  %v287 = vunpack.c.h.b16 %v68
  %v288 = vunpack.c.l.b16 %v69
  %v289 = vunpack.c.h.b16 %v69
  %v290 = vunpack.c.l.b16 %v70
  %v291 = vunpack.c.h.b16 %v70
  %v292 = vunpack.c.l.b16 %v71
  %v293 = vunpack.c.h.b16 %v71
  %v294 = vunpack.c.l.b16 %v72
  %v295 = vunpack.c.h.b16 %v72
  %v296 = vunpack.c.l.b16 %v73
  %v297 = vunpack.c.h.b16 %v73
  %v298 = vunpack.c.l.b16 %v74
  %v299 = vunpack.c.h.b16 %v74
  %v300 = vunpack.c.l.b16 %v75
  %v301 = vunpack.c.h.b16 %v75
  %v302 = vunpack.c.l.b16 %v76
  %v303 = vunpack.c.h.b16 %v76
  %v304 = vunpack.c.l.b16 %v77
  %v305 = vunpack.c.h.b16 %v77
  %v306 = vunpack.c.l.b16 %v78
  %v307 = vunpack.c.h.b16 %v78
  %v308 = vunpack.c.l.b16 %v79
  %v309 = vunpack.c.h.b16 %v79
  %v310 = vunpack.c.l.b16 %v80
  %v311 = vunpack.c.h.b16 %v80
  %v312 = vpack.c.b16 %v218, %v216
  %v313 = vpack.c.b16 %v219, %v217
  %v314 = vpack.c.b16 %v222, %v220
  %v315 = vpack.c.b16 %v223, %v221
  %v316 = vpack.c.b16 %v226, %v224
  %v317 = vpack.c.b16 %v227, %v225
  %v318 = vpack.c.b16 %v230, %v228
  %v319 = vpack.c.b16 %v231, %v229
  %v320 = vpack.c.b16 %v234, %v232
  %v321 = vpack.c.b16 %v235, %v233
  %v322 = vpack.c.b16 %v238, %v236
  %v323 = vpack.c.b16 %v239, %v237
  %v324 = vpack.c.b16 %v242, %v240
  %v325 = vpack.c.b16 %v243, %v241
  %v326 = vpack.c.b16 %v246, %v244
  %v327 = vpack.c.b16 %v247, %v245
  %v328 = vpack.c.b16 %v250, %v248
  %v329 = vpack.c.b16 %v251, %v249
  %v330 = vpack.c.b16 %v254, %v252
  %v331 = vpack.c.b16 %v255, %v253
  %v332 = vpack.c.b16 %v258, %v256
  %v333 = vpack.c.b16 %v259, %v257
  %v334 = vpack.c.b16 %v262, %v260
  %v335 = vpack.c.b16 %v263, %v261
  %v336 = vpack.c.b16 %v266, %v264
  %v337 = vpack.c.b16 %v267, %v265
  %v338 = vpack.c.b16 %v270, %v268
  %v339 = vpack.c.b16 %v271, %v269
  %v340 = vpack.c.b16 %v274, %v272
  %v341 = vpack.c.b16 %v275, %v273
  %v342 = vpack.c.b16 %v278, %v276
  %v343 = vpack.c.b16 %v279, %v277
  %v344 = vpack.c.b16 %v282, %v280
  %v345 = vpack.c.b16 %v283, %v281
  %v346 = vpack.c.b16 %v286, %v284
  %v347 = vpack.c.b16 %v287, %v285
  %v348 = vpack.c.b16 %v290, %v288
  %v349 = vpack.c.b16 %v291, %v289
  %v350 = vpack.c.b16 %v294, %v292
  %v351 = vpack.c.b16 %v295, %v293
  %v352 = vpack.c.b16 %v298, %v296
  %v353 = vpack.c.b16 %v299, %v297
  %v354 = vpack.c.b16 %v302, %v300
  %v355 = vpack.c.b16 %v303, %v301
  %v356 = vpack.c.b16 %v306, %v304
  %v357 = vpack.c.b16 %v307, %v305
  %v358 = vpack.c.b16 %v310, %v308
  %v359 = vpack.c.b16 %v311, %v309
  %408 = vmatprep.subr.bf16.mxu0 %v327
  %409 = vmatpush1.bf16.msra.mxu0 %v326
  %410 = vmatprep.subr.bf16.mxu0 %v325
  %411 = vmatpush1.bf16.msra.mxu0 %v324
  %412 = vmatprep.subr.bf16.mxu0 %v323
  %413 = vmatpush1.bf16.msra.mxu0 %v322
  %414 = vmatprep.subr.bf16.mxu0 %v321
  %415 = vmatpush1.bf16.msra.mxu0 %v320
  %416 = vmatprep.subr.bf16.mxu0 %v319
  %417 = vmatpush1.bf16.msra.mxu0 %v318
  %418 = vmatprep.subr.bf16.mxu0 %v317
  %419 = vmatpush1.bf16.msra.mxu0 %v316
  %420 = vmatprep.subr.bf16.mxu0 %v315
  %421 = vmatpush1.bf16.msra.mxu0 %v314
  %422 = vmatprep.subr.bf16.mxu0 %v313
  %423 = vmatpush1.bf16.msra.mxu0 %v312
  %424 = vmatprep.subr.bf16.mxu0 %v343
  %425 = vmatpush2.bf16.msra.mxu0 %v342
  %426 = vmatprep.subr.bf16.mxu0 %v341
  %427 = vmatpush2.bf16.msra.mxu0 %v340
  %428 = vmatprep.subr.bf16.mxu0 %v339
  %429 = vmatpush2.bf16.msra.mxu0 %v338
  %430 = vmatprep.subr.bf16.mxu0 %v337
  %431 = vmatpush2.bf16.msra.mxu0 %v336
  %432 = vmatprep.subr.bf16.mxu0 %v335
  %433 = vmatpush2.bf16.msra.mxu0 %v334
  %434 = vmatprep.subr.bf16.mxu0 %v333
  %435 = vmatpush2.bf16.msra.mxu0 %v332
  %436 = vmatprep.subr.bf16.mxu0 %v331
  %437 = vmatpush2.bf16.msra.mxu0 %v330
  %438 = vmatprep.subr.bf16.mxu0 %v329
  %439 = vmatpush2.bf16.msra.mxu0 %v328
  %440 = vmatprep.mubr.bf16.mxu0 %v139
  %441 = vmatmul.mubr.bf16.gmra.mxu0 %v138
  %v442 = vpop.f32.mrf.mxu0
  %v443 = vadd.f32 %v86, %v442
  %v444 = vpop.f32.mrf.mxu0
  %v445 = vadd.f32 %v90, %v444
  %v446 = vpop.f32.mrf.mxu0
  %v447 = vadd.f32 %v86, %v446
  %v448 = vpop.f32.mrf.mxu0
  %v449 = vadd.f32 %v90, %v448
  %450 = vmatprep.mubr.bf16.mxu0 %v142
  %451 = vmatmul.mubr.bf16.gmra.mxu0 %v141
  %v452 = vpop.f32.mrf.mxu0
  %v453 = vadd.f32 %v86, %v452
  %v454 = vpop.f32.mrf.mxu0
  %v455 = vadd.f32 %v90, %v454
  %v456 = vpop.f32.mrf.mxu0
  %v457 = vadd.f32 %v86, %v456
  %v458 = vpop.f32.mrf.mxu0
  %v459 = vadd.f32 %v90, %v458
  %460 = vmatprep.mubr.bf16.mxu0 %v145
  %461 = vmatmul.mubr.bf16.gmra.mxu0 %v144
  %v462 = vpop.f32.mrf.mxu0
  %v463 = vadd.f32 %v86, %v462
  %v464 = vpop.f32.mrf.mxu0
  %v465 = vadd.f32 %v90, %v464
  %v466 = vpop.f32.mrf.mxu0
  %v467 = vadd.f32 %v86, %v466
  %v468 = vpop.f32.mrf.mxu0
  %v469 = vadd.f32 %v90, %v468
  %470 = vmatprep.mubr.bf16.mxu0 %v148
  %471 = vmatmul.mubr.bf16.gmra.mxu0 %v147
  %v472 = vpop.f32.mrf.mxu0
  %v473 = vadd.f32 %v86, %v472
  %v474 = vpop.f32.mrf.mxu0
  %v475 = vadd.f32 %v90, %v474
  %v476 = vpop.f32.mrf.mxu0
  %v477 = vadd.f32 %v86, %v476
  %v478 = vpop.f32.mrf.mxu0
  %v479 = vadd.f32 %v90, %v478
  %480 = vmatprep.mubr.bf16.mxu0 %v151
  %481 = vmatmul.mubr.bf16.gmra.mxu0 %v150
  %v482 = vpop.f32.mrf.mxu0
  %v483 = vadd.f32 %v86, %v482
  %v484 = vpop.f32.mrf.mxu0
  %v485 = vadd.f32 %v90, %v484
  %v486 = vpop.f32.mrf.mxu0
  %v487 = vpop.f32.mrf.mxu0
  %488 = vdwg.mxu0
  %489 = vmatprep.subr.bf16.mxu0 %v359
  %490 = vmatpush1.bf16.msra.mxu0 %v358
  %491 = vmatprep.subr.bf16.mxu0 %v357
  %492 = vmatpush1.bf16.msra.mxu0 %v356
  %493 = vmatprep.subr.bf16.mxu0 %v355
  %494 = vmatpush1.bf16.msra.mxu0 %v354
  %495 = vmatprep.subr.bf16.mxu0 %v353
  %496 = vmatpush1.bf16.msra.mxu0 %v352
  %497 = vmatprep.subr.bf16.mxu0 %v351
  %498 = vmatpush1.bf16.msra.mxu0 %v350
  %499 = vmatprep.subr.bf16.mxu0 %v349
  %500 = vmatpush1.bf16.msra.mxu0 %v348
  %501 = vmatprep.subr.bf16.mxu0 %v347
  %502 = vmatpush1.bf16.msra.mxu0 %v346
  %503 = vmatprep.subr.bf16.mxu0 %v345
  %504 = vmatpush1.bf16.msra.mxu0 %v344
  %505 = vmatprep.subr.bf16.mxu0 0
  %506 = vmatpush2.bf16.msra.mxu0 0
  %507 = vmatprep.subr.bf16.mxu0 0
  %508 = vmatpush2.bf16.msra.mxu0 0
  %509 = vmatprep.subr.bf16.mxu0 0
  %510 = vmatpush2.bf16.msra.mxu0 0
  %511 = vmatprep.subr.bf16.mxu0 0
  %512 = vmatpush2.bf16.msra.mxu0 0
  %513 = vmatprep.subr.bf16.mxu0 0
  %514 = vmatpush2.bf16.msra.mxu0 0
  %515 = vmatprep.subr.bf16.mxu0 0
  %516 = vmatpush2.bf16.msra.mxu0 0
  %517 = vmatprep.subr.bf16.mxu0 0
  %518 = vmatpush2.bf16.msra.mxu0 0
  %519 = vmatprep.subr.bf16.mxu0 0
  %520 = vmatpush2.bf16.msra.mxu0 0
  %521 = vmatprep.mubr.bf16.mxu0 0
  %522 = vmatmul.mubr.bf16.gmra.mxu0 %v140
  %v523 = vpop.f32.mrf.mxu0
  %v524 = vadd.f32 %v443, %v523
  %v525 = vpop.f32.mrf.mxu0
  %v526 = vadd.f32 %v445, %v525
  %v527 = vpop.f32.mrf.mxu0
  %v528 = vadd.f32 %v447, %v527
  %v529 = vpop.f32.mrf.mxu0
  %v530 = vadd.f32 %v449, %v529
  %531 = vmatprep.mubr.bf16.mxu0 0
  %532 = vmatmul.mubr.bf16.gmra.mxu0 %v143
  %v533 = vpop.f32.mrf.mxu0
  %v534 = vadd.f32 %v453, %v533
  %v535 = vpop.f32.mrf.mxu0
  %v536 = vadd.f32 %v455, %v535
  %v537 = vpop.f32.mrf.mxu0
  %v538 = vadd.f32 %v457, %v537
  %v539 = vpop.f32.mrf.mxu0
  %v540 = vadd.f32 %v459, %v539
  %541 = vmatprep.mubr.bf16.mxu0 0
  %542 = vmatmul.mubr.bf16.gmra.mxu0 %v146
  %v543 = vpop.f32.mrf.mxu0
  %v544 = vadd.f32 %v463, %v543
  %v545 = vpop.f32.mrf.mxu0
  %v546 = vadd.f32 %v465, %v545
  %v547 = vpop.f32.mrf.mxu0
  %v548 = vadd.f32 %v467, %v547
  %v549 = vpop.f32.mrf.mxu0
  %v550 = vadd.f32 %v469, %v549
  %551 = vmatprep.mubr.bf16.mxu0 0
  %552 = vmatmul.mubr.bf16.gmra.mxu0 %v149
  %v553 = vpop.f32.mrf.mxu0
  %v554 = vadd.f32 %v473, %v553
  %v555 = vpop.f32.mrf.mxu0
  %v556 = vadd.f32 %v475, %v555
  %v557 = vpop.f32.mrf.mxu0
  %v558 = vadd.f32 %v477, %v557
  %v559 = vpop.f32.mrf.mxu0
  %v560 = vadd.f32 %v479, %v559
  %561 = vmatprep.mubr.bf16.mxu0 0
  %562 = vmatmul.mubr.bf16.gmra.mxu0 %v152
  %v563 = vpop.f32.mrf.mxu0
  %v564 = vadd.f32 %v483, %v563
  %v565 = vpop.f32.mrf.mxu0
  %v566 = vadd.f32 %v485, %v565
  %v567 = vpop.f32.mrf.mxu0
  %v568 = vpop.f32.mrf.mxu0
  %569 = vdwg.mxu0
  %v570 = vmax.f32 %v524, 0.0
  %v571 = vmax.f32 %v526, 0.0
  %v572 = vmax.f32 %v528, 0.0
  %v573 = vmax.f32 %v530, 0.0
  %v574 = vmax.f32 %v534, 0.0
  %v575 = vmax.f32 %v536, 0.0
  %v576 = vmax.f32 %v538, 0.0
  %v577 = vmax.f32 %v540, 0.0
  %v578 = vmax.f32 %v544, 0.0
  %v579 = vmax.f32 %v546, 0.0
  %v580 = vmax.f32 %v548, 0.0
  %v581 = vmax.f32 %v550, 0.0
  %v582 = vmax.f32 %v554, 0.0
  %v583 = vmax.f32 %v556, 0.0
  %v584 = vmax.f32 %v558, 0.0
  %v585 = vmax.f32 %v560, 0.0
  %v586 = vmax.f32 %v564, 0.0
  %v587 = vmax.f32 %v566, 0.0
  %588 = vst [vmem:[%s3] sm:$0xff] %v570
  %589 = vst [vmem:[%s3 + $0x8] sm:$0xff] %v571
  %590 = vst [vmem:[%s3 + $0x10] sm:$0xff] %v572
  %591 = vst [vmem:[%s3 + $0x18] sm:$0xff] %v573
  %592 = vst [vmem:[%s3 + $0x20] sm:$0xff] %v574
  %593 = vst [vmem:[%s3 + $0x28] sm:$0xff] %v575
  %594 = vst [vmem:[%s3 + $0x30] sm:$0xff] %v576
  %595 = vst [vmem:[%s3 + $0x38] sm:$0xff] %v577
  %596 = vst [vmem:[%s3 + $0x40] sm:$0xff] %v578
  %597 = vst [vmem:[%s3 + $0x48] sm:$0xff] %v579
  %598 = vst [vmem:[%s3 + $0x50] sm:$0xff] %v580
  %599 = vst [vmem:[%s3 + $0x58] sm:$0xff] %v581
  %600 = vst [vmem:[%s3 + $0x60] sm:$0xff] %v582
  %601 = vst [vmem:[%s3 + $0x68] sm:$0xff] %v583
  %602 = vst [vmem:[%s3 + $0x70] sm:$0xff] %v584
  %603 = vst [vmem:[%s3 + $0x78] sm:$0xff] %v585
  %604 = vst [vmem:[%s3 + $0x80] sm:$0xff] %v586
  %605 = vst [vmem:[%s3 + $0x88] sm:$0xff] %v587
  // Predicated region
  $region14: #{squeezenet_forward.28} parent=0 // pred_check
    _
  $region15: #{squeezenet_forward.28} parent=0 // pred_check_branch
    %607 = sbr.rel (0) target = $region17
  $region16: #{squeezenet_forward.28} parent=0 // pred_region
    _
  $region17: #{squeezenet_forward.28} parent=0 // pred_fallthru
    _
  // Predicated region
  $region18: #{squeezenet_forward.28} parent=0 // pred_check
    _
  $region19: #{squeezenet_forward.28} parent=0 // pred_check_branch
    %609 = sbr.rel (0) target = $region21
  $region20: #{squeezenet_forward.28} parent=0 // pred_region
    _
  $region21: #{squeezenet_forward.28} parent=0 // pred_fallthru
    _

// kernel: squeezenet_forward.29
$region0: #{squeezenet_forward.29}
  #allocation0 [shape = 'u32[]', space=smem, size = 0x4, offset = 0x4, fixed_abs, tag = 'smem constant byte address 0x4 - core index']
  #allocation1 [shape = 'u32[144,128]{1,0:T(1,128)}', space=vmem, size = 0x12000, scoped, tag = 'internal scratch']
  %s0 = inlined_call_operand.vmem [shape: f32[9,24,256], index: 0, kind: input, shape index: {}]
  %s1 = inlined_call_operand.vmem [shape: f32[24,256], index: 1, kind: output, shape index: {}]
  %s2 = sld [smem:[#allocation0]]
  $region14: #{squeezenet_forward.29} parent=0
    _
  %s4 = ssub.s32 1, %s2
  %s5 = scalar_select 0, %s4, %s2
  // Predicated region
  $region2: #{squeezenet_forward.29} parent=0 // pred_check
    _
  $region3: #{squeezenet_forward.29} parent=0 // pred_check_branch
    %7 = sbr.rel (0) target = $region5
  $region4: #{squeezenet_forward.29} parent=0 // pred_region
    _
  $region5: #{squeezenet_forward.29} parent=0 // pred_fallthru
    _
  %v8 = vld [vmem:[%s0] sm:$0xff]
  %v9 = vld [vmem:[%s0 + $0x8] sm:$0xff]
  %v10 = vld [vmem:[%s0 + $0x10] sm:$0xff]
  %v11 = vld [vmem:[%s0 + $0x18] sm:$0xff]
  %v12 = vld [vmem:[%s0 + $0x20] sm:$0xff]
  %v13 = vld [vmem:[%s0 + $0x28] sm:$0xff]
  %s14 = scalar_lea.vmem %s0, 48
  %v15 = vld [vmem:[%s14] sm:$0xff]
  %v16 = vld [vmem:[%s14 + $0x8] sm:$0xff]
  %v17 = vld [vmem:[%s14 + $0x10] sm:$0xff]
  %v18 = vld [vmem:[%s14 + $0x18] sm:$0xff]
  %v19 = vld [vmem:[%s14 + $0x20] sm:$0xff]
  %v20 = vld [vmem:[%s14 + $0x28] sm:$0xff]
  %v21 = vmax.f32 %v8, %v15
  %v22 = vmax.f32 %v9, %v16
  %v23 = vmax.f32 %v10, %v17
  %v24 = vmax.f32 %v11, %v18
  %v25 = vmax.f32 %v12, %v19
  %v26 = vmax.f32 %v13, %v20
  %s27 = scalar_lea.vmem %s0, 96
  %v28 = vld [vmem:[%s27] sm:$0xff]
  %v29 = vld [vmem:[%s27 + $0x8] sm:$0xff]
  %v30 = vld [vmem:[%s27 + $0x10] sm:$0xff]
  %v31 = vld [vmem:[%s27 + $0x18] sm:$0xff]
  %v32 = vld [vmem:[%s27 + $0x20] sm:$0xff]
  %v33 = vld [vmem:[%s27 + $0x28] sm:$0xff]
  %v34 = vmax.f32 %v21, %v28
  %v35 = vmax.f32 %v22, %v29
  %v36 = vmax.f32 %v23, %v30
  %v37 = vmax.f32 %v24, %v31
  %v38 = vmax.f32 %v25, %v32
  %v39 = vmax.f32 %v26, %v33
  %s40 = scalar_lea.vmem %s0, 144
  %v41 = vld [vmem:[%s40] sm:$0xff]
  %v42 = vld [vmem:[%s40 + $0x8] sm:$0xff]
  %v43 = vld [vmem:[%s40 + $0x10] sm:$0xff]
  %v44 = vld [vmem:[%s40 + $0x18] sm:$0xff]
  %v45 = vld [vmem:[%s40 + $0x20] sm:$0xff]
  %v46 = vld [vmem:[%s40 + $0x28] sm:$0xff]
  %v47 = vmax.f32 %v34, %v41
  %v48 = vmax.f32 %v35, %v42
  %v49 = vmax.f32 %v36, %v43
  %v50 = vmax.f32 %v37, %v44
  %v51 = vmax.f32 %v38, %v45
  %v52 = vmax.f32 %v39, %v46
  %s53 = scalar_lea.vmem %s0, 192
  %v54 = vld [vmem:[%s53] sm:$0xff]
  %v55 = vld [vmem:[%s53 + $0x8] sm:$0xff]
  %v56 = vld [vmem:[%s53 + $0x10] sm:$0xff]
  %v57 = vld [vmem:[%s53 + $0x18] sm:$0xff]
  %v58 = vld [vmem:[%s53 + $0x20] sm:$0xff]
  %v59 = vld [vmem:[%s53 + $0x28] sm:$0xff]
  %v60 = vmax.f32 %v47, %v54
  %v61 = vmax.f32 %v48, %v55
  %v62 = vmax.f32 %v49, %v56
  %v63 = vmax.f32 %v50, %v57
  %v64 = vmax.f32 %v51, %v58
  %v65 = vmax.f32 %v52, %v59
  %s66 = scalar_lea.vmem %s0, 240
  %v67 = vld [vmem:[%s66] sm:$0xff]
  %v68 = vld [vmem:[%s66 + $0x8] sm:$0xff]
  %v69 = vld [vmem:[%s66 + $0x10] sm:$0xff]
  %v70 = vld [vmem:[%s66 + $0x18] sm:$0xff]
  %v71 = vld [vmem:[%s66 + $0x20] sm:$0xff]
  %v72 = vld [vmem:[%s66 + $0x28] sm:$0xff]
  %v73 = vmax.f32 %v60, %v67
  %v74 = vmax.f32 %v61, %v68
  %v75 = vmax.f32 %v62, %v69
  %v76 = vmax.f32 %v63, %v70
  %v77 = vmax.f32 %v64, %v71
  %v78 = vmax.f32 %v65, %v72
  %s79 = scalar_lea.vmem %s0, 288
  %v80 = vld [vmem:[%s79] sm:$0xff]
  %v81 = vld [vmem:[%s79 + $0x8] sm:$0xff]
  %v82 = vld [vmem:[%s79 + $0x10] sm:$0xff]
  %v83 = vld [vmem:[%s79 + $0x18] sm:$0xff]
  %v84 = vld [vmem:[%s79 + $0x20] sm:$0xff]
  %v85 = vld [vmem:[%s79 + $0x28] sm:$0xff]
  %v86 = vmax.f32 %v73, %v80
  %v87 = vmax.f32 %v74, %v81
  %v88 = vmax.f32 %v75, %v82
  %v89 = vmax.f32 %v76, %v83
  %v90 = vmax.f32 %v77, %v84
  %v91 = vmax.f32 %v78, %v85
  %s92 = scalar_lea.vmem %s0, 336
  %v93 = vld [vmem:[%s92] sm:$0xff]
  %v94 = vld [vmem:[%s92 + $0x8] sm:$0xff]
  %v95 = vld [vmem:[%s92 + $0x10] sm:$0xff]
  %v96 = vld [vmem:[%s92 + $0x18] sm:$0xff]
  %v97 = vld [vmem:[%s92 + $0x20] sm:$0xff]
  %v98 = vld [vmem:[%s92 + $0x28] sm:$0xff]
  %v99 = vmax.f32 %v86, %v93
  %v100 = vmax.f32 %v87, %v94
  %v101 = vmax.f32 %v88, %v95
  %v102 = vmax.f32 %v89, %v96
  %v103 = vmax.f32 %v90, %v97
  %v104 = vmax.f32 %v91, %v98
  %s105 = scalar_lea.vmem %s0, 384
  %v106 = vld [vmem:[%s105] sm:$0xff]
  %v107 = vld [vmem:[%s105 + $0x8] sm:$0xff]
  %v108 = vld [vmem:[%s105 + $0x10] sm:$0xff]
  %v109 = vld [vmem:[%s105 + $0x18] sm:$0xff]
  %v110 = vld [vmem:[%s105 + $0x20] sm:$0xff]
  %v111 = vld [vmem:[%s105 + $0x28] sm:$0xff]
  %v112 = vmax.f32 %v99, %v106
  %v113 = vmax.f32 %v100, %v107
  %v114 = vmax.f32 %v101, %v108
  %v115 = vmax.f32 %v102, %v109
  %v116 = vmax.f32 %v103, %v110
  %v117 = vmax.f32 %v104, %v111
  %118 = vst [vmem:[%s1] sm:$0xff] %v112
  %119 = vst [vmem:[%s1 + $0x8] sm:$0xff] %v113
  %120 = vst [vmem:[%s1 + $0x10] sm:$0xff] %v114
  %121 = vst [vmem:[%s1 + $0x18] sm:$0xff] %v115
  %122 = vst [vmem:[%s1 + $0x20] sm:$0xff] %v116
  %123 = vst [vmem:[%s1 + $0x28] sm:$0xff] %v117
  // Predicated region
  $region6: #{squeezenet_forward.29} parent=0 // pred_check
    _
  $region7: #{squeezenet_forward.29} parent=0 // pred_check_branch
    %125 = sbr.rel (0) target = $region9
  $region8: #{squeezenet_forward.29} parent=0 // pred_region
    _
  $region9: #{squeezenet_forward.29} parent=0 // pred_fallthru
    _
  // Predicated region
  $region10: #{squeezenet_forward.29} parent=0 // pred_check
    _
  $region11: #{squeezenet_forward.29} parent=0 // pred_check_branch
    %127 = sbr.rel (0) target = $region13
  $region12: #{squeezenet_forward.29} parent=0 // pred_region
    _
  $region13: #{squeezenet_forward.29} parent=0 // pred_fallthru
    _

// kernel: squeezenet_forward.30
$region0: #{squeezenet_forward.30}
  #allocation0 [shape = 'u32[]', space=smem, size = 0x4, offset = 0x4, fixed_abs, tag = 'smem constant byte address 0x4 - core index']
  #allocation1 [shape = 'u32[144,128]{1,0:T(1,128)}', space=vmem, size = 0x12000, scoped, tag = 'internal scratch']
  %s0 = inlined_call_operand.vmem [shape: bf16[24,256], index: 0, kind: input, shape index: {}]
  %s1 = inlined_call_operand.vmem [shape: bf16[256,128], index: 1, kind: input, shape index: {}]
  %s2 = inlined_call_operand.vmem [shape: f32[1,128], index: 2, kind: input, shape index: {}]
  %s3 = inlined_call_operand.vmem [shape: f32[24,128], index: 3, kind: output, shape index: {}]
  %s4 = sld [smem:[#allocation0]]
  $region22: #{squeezenet_forward.30} parent=0
    _
  %s6 = ssub.s32 1, %s4
  %s7 = scalar_select 0, %s6, %s4
  // Predicated region
  $region2: #{squeezenet_forward.30} parent=0 // pred_check
    _
  $region3: #{squeezenet_forward.30} parent=0 // pred_check_branch
    %9 = sbr.rel (0) target = $region5
  $region4: #{squeezenet_forward.30} parent=0 // pred_region
    _
  $region5: #{squeezenet_forward.30} parent=0 // pred_fallthru
    _
  // Predicated region
  $region6: #{squeezenet_forward.30} parent=0 // pred_check
    _
  $region7: #{squeezenet_forward.30} parent=0 // pred_check_branch
    %11 = sbr.rel (0) target = $region9
  $region8: #{squeezenet_forward.30} parent=0 // pred_region
    _
  $region9: #{squeezenet_forward.30} parent=0 // pred_fallthru
    _
  // Predicated region
  $region10: #{squeezenet_forward.30} parent=0 // pred_check
    _
  $region11: #{squeezenet_forward.30} parent=0 // pred_check_branch
    %13 = sbr.rel (0) target = $region13
  $region12: #{squeezenet_forward.30} parent=0 // pred_region
    _
  $region13: #{squeezenet_forward.30} parent=0 // pred_fallthru
    _
  %v15 = vld [vmem:[%s0] sm:$0xff]
  %v16 = vld [vmem:[%s0 + $0x8] sm:$0xff]
  %v17 = vld [vmem:[%s0 + $0x10] sm:$0xff]
  %v18 = vld [vmem:[%s1] sm:$0xf]
  %v19 = vld [vmem:[%s1 + $0x4] sm:$0xf]
  %v20 = vld [vmem:[%s1 + $0x8] sm:$0xf]
  %v21 = vld [vmem:[%s1 + $0xc] sm:$0xf]
  %v22 = vld [vmem:[%s1 + $0x10] sm:$0xf]
  %v23 = vld [vmem:[%s1 + $0x14] sm:$0xf]
  %v24 = vld [vmem:[%s1 + $0x18] sm:$0xf]
  %v25 = vld [vmem:[%s1 + $0x1c] sm:$0xf]
  %v26 = vld [vmem:[%s1 + $0x20] sm:$0xf]
  %v27 = vld [vmem:[%s1 + $0x24] sm:$0xf]
  %v28 = vld [vmem:[%s1 + $0x28] sm:$0xf]
  %v29 = vld [vmem:[%s1 + $0x2c] sm:$0xf]
  %v30 = vld [vmem:[%s1 + $0x30] sm:$0xf]
  %v31 = vld [vmem:[%s1 + $0x34] sm:$0xf]
  %v32 = vld [vmem:[%s1 + $0x38] sm:$0xf]
  %v33 = vld [vmem:[%s1 + $0x3c] sm:$0xf]
  %v34 = vld [vmem:[%s1 + $0x40] sm:$0xf]
  %v35 = vld [vmem:[%s1 + $0x44] sm:$0xf]
  %v36 = vld [vmem:[%s1 + $0x48] sm:$0xf]
  %v37 = vld [vmem:[%s1 + $0x4c] sm:$0xf]
  %v38 = vld [vmem:[%s1 + $0x50] sm:$0xf]
  %v39 = vld [vmem:[%s1 + $0x54] sm:$0xf]
  %v40 = vld [vmem:[%s1 + $0x58] sm:$0xf]
  %v41 = vld [vmem:[%s1 + $0x5c] sm:$0xf]
  %v42 = vld [vmem:[%s1 + $0x60] sm:$0xf]
  %v43 = vld [vmem:[%s1 + $0x64] sm:$0xf]
  %v44 = vld [vmem:[%s1 + $0x68] sm:$0xf]
  %v45 = vld [vmem:[%s1 + $0x6c] sm:$0xf]
  %v46 = vld [vmem:[%s1 + $0x70] sm:$0xf]
  %v47 = vld [vmem:[%s1 + $0x74] sm:$0xf]
  %v48 = vld [vmem:[%s1 + $0x78] sm:$0xf]
  %v49 = vld [vmem:[%s1 + $0x7c] sm:$0xf]
  %v50 = vld [vmem:[%s2] sm:$0x1]
  %v52 = vlaneseq
  %v53 = vshrl.u32 %v52, 7
  %v54 = vsub.s32 0, %v53
  %v55 = vrot.slane %v50, %v54
  %v60 = vunpack.c.l.b16 %v15
  %v61 = vunpack.c.h.b16 %v15
  %v62 = vunpack.c.l.b16 %v16
  %v63 = vunpack.c.h.b16 %v16
  %v64 = vunpack.c.l.b16 %v17
  %v65 = vunpack.c.h.b16 %v17
  %v66 = vpack.c.b16 %v62, %v60
  %v67 = vpack.c.b16 %v63, %v61
  %v68 = vpack.c.b16 %v64, %v64
  %v69 = vpack.c.b16 %v65, %v65
  %v106 = vunpack.c.l.b16 %v18
  %v107 = vunpack.c.l.b16 %v19
  %v108 = vunpack.c.l.b16 %v20
  %v109 = vunpack.c.l.b16 %v21
  %v110 = vunpack.c.l.b16 %v22
  %v111 = vunpack.c.l.b16 %v23
  %v112 = vunpack.c.l.b16 %v24
  %v113 = vunpack.c.l.b16 %v25
  %v114 = vunpack.c.l.b16 %v26
  %v115 = vunpack.c.l.b16 %v27
  %v116 = vunpack.c.l.b16 %v28
  %v117 = vunpack.c.l.b16 %v29
  %v118 = vunpack.c.l.b16 %v30
  %v119 = vunpack.c.l.b16 %v31
  %v120 = vunpack.c.l.b16 %v32
  %v121 = vunpack.c.l.b16 %v33
  %v122 = vunpack.c.l.b16 %v34
  %v123 = vunpack.c.l.b16 %v35
  %v124 = vunpack.c.l.b16 %v36
  %v125 = vunpack.c.l.b16 %v37
  %v126 = vunpack.c.l.b16 %v38
  %v127 = vunpack.c.l.b16 %v39
  %v128 = vunpack.c.l.b16 %v40
  %v129 = vunpack.c.l.b16 %v41
  %v130 = vunpack.c.l.b16 %v42
  %v131 = vunpack.c.l.b16 %v43
  %v132 = vunpack.c.l.b16 %v44
  %v133 = vunpack.c.l.b16 %v45
  %v134 = vunpack.c.l.b16 %v46
  %v135 = vunpack.c.l.b16 %v47
  %v136 = vunpack.c.l.b16 %v48
  %v137 = vunpack.c.l.b16 %v49
  %v138 = vpack.c.b16 %v107, %v106
  %v139 = vpack.c.b16 %v109, %v108
  %v140 = vpack.c.b16 %v111, %v110
  %v141 = vpack.c.b16 %v113, %v112
  %v142 = vpack.c.b16 %v115, %v114
  %v143 = vpack.c.b16 %v117, %v116
  %v144 = vpack.c.b16 %v119, %v118
  %v145 = vpack.c.b16 %v121, %v120
  %v146 = vpack.c.b16 %v123, %v122
  %v147 = vpack.c.b16 %v125, %v124
  %v148 = vpack.c.b16 %v127, %v126
  %v149 = vpack.c.b16 %v129, %v128
  %v150 = vpack.c.b16 %v131, %v130
  %v151 = vpack.c.b16 %v133, %v132
  %v152 = vpack.c.b16 %v135, %v134
  %v153 = vpack.c.b16 %v137, %v136
  %170 = vmatprep.subr.bf16.mxu0 0
  %171 = vmatpush1.bf16.msra.mxu0 %v145
  %172 = vmatprep.subr.bf16.mxu0 0
  %173 = vmatpush1.bf16.msra.mxu0 %v144
  %174 = vmatprep.subr.bf16.mxu0 0
  %175 = vmatpush1.bf16.msra.mxu0 %v143
  %176 = vmatprep.subr.bf16.mxu0 0
  %177 = vmatpush1.bf16.msra.mxu0 %v142
  %178 = vmatprep.subr.bf16.mxu0 0
  %179 = vmatpush1.bf16.msra.mxu0 %v141
  %180 = vmatprep.subr.bf16.mxu0 0
  %181 = vmatpush1.bf16.msra.mxu0 %v140
  %182 = vmatprep.subr.bf16.mxu0 0
  %183 = vmatpush1.bf16.msra.mxu0 %v139
  %184 = vmatprep.subr.bf16.mxu0 0
  %185 = vmatpush1.bf16.msra.mxu0 %v138
  %186 = vmatprep.subr.bf16.mxu0 0
  %187 = vmatpush2.bf16.msra.mxu0 %v153
  %188 = vmatprep.subr.bf16.mxu0 0
  %189 = vmatpush2.bf16.msra.mxu0 %v152
  %190 = vmatprep.subr.bf16.mxu0 0
  %191 = vmatpush2.bf16.msra.mxu0 %v151
  %192 = vmatprep.subr.bf16.mxu0 0
  %193 = vmatpush2.bf16.msra.mxu0 %v150
  %194 = vmatprep.subr.bf16.mxu0 0
  %195 = vmatpush2.bf16.msra.mxu0 %v149
  %196 = vmatprep.subr.bf16.mxu0 0
  %197 = vmatpush2.bf16.msra.mxu0 %v148
  %198 = vmatprep.subr.bf16.mxu0 0
  %199 = vmatpush2.bf16.msra.mxu0 %v147
  %200 = vmatprep.subr.bf16.mxu0 0
  %201 = vmatpush2.bf16.msra.mxu0 %v146
  %202 = vmatprep.mubr.bf16.mxu0 %v67
  %203 = vmatmul.mubr.bf16.gmra.mxu0 %v66
  %v204 = vpop.f32.mrf.mxu0
  %v205 = vadd.f32 %v55, %v204
  %v206 = vpop.f32.mrf.mxu0
  %v207 = vpop.f32.mrf.mxu0
  %v208 = vadd.f32 %v55, %v207
  %v209 = vpop.f32.mrf.mxu0
  %210 = vmatprep.mubr.bf16.mxu0 %v69
  %211 = vmatmul.mubr.bf16.gmra.mxu0 %v68
  %v212 = vpop.f32.mrf.mxu0
  %v213 = vadd.f32 %v55, %v212
  %v214 = vpop.f32.mrf.mxu0
  %v215 = vpop.f32.mrf.mxu0
  %v216 = vpop.f32.mrf.mxu0
  %217 = vdwg.mxu0
  %v218 = vmax.f32 %v205, 0.0
  %v219 = vmax.f32 %v208, 0.0
  %v220 = vmax.f32 %v213, 0.0
  %221 = vst [vmem:[%s3] sm:$0xff] %v218
  %222 = vst [vmem:[%s3 + $0x8] sm:$0xff] %v219
  %223 = vst [vmem:[%s3 + $0x10] sm:$0xff] %v220
  // Predicated region
  $region14: #{squeezenet_forward.30} parent=0 // pred_check
    _
  $region15: #{squeezenet_forward.30} parent=0 // pred_check_branch
    %225 = sbr.rel (0) target = $region17
  $region16: #{squeezenet_forward.30} parent=0 // pred_region
    _
  $region17: #{squeezenet_forward.30} parent=0 // pred_fallthru
    _
  // Predicated region
  $region18: #{squeezenet_forward.30} parent=0 // pred_check
    _
  $region19: #{squeezenet_forward.30} parent=0 // pred_check_branch
    %227 = sbr.rel (0) target = $region21
  $region20: #{squeezenet_forward.30} parent=0 // pred_region
    _
  $region21: #{squeezenet_forward.30} parent=0 // pred_fallthru
    _

// kernel: squeezenet_forward.31
$region0: #{squeezenet_forward.31}
  #allocation0 [shape = 'u32[]', space=smem, size = 0x4, offset = 0x4, fixed_abs, tag = 'smem constant byte address 0x4 - core index']
  #allocation1 [shape = 'u32[144,128]{1,0:T(1,128)}', space=vmem, size = 0x12000, scoped, tag = 'internal scratch']
  %s0 = inlined_call_operand.vmem [shape: bf16[24,384], index: 0, kind: input, shape index: {}]
  %s1 = inlined_call_operand.vmem [shape: bf16[384,256], index: 1, kind: input, shape index: {}]
  %s2 = inlined_call_operand.vmem [shape: f32[1,256], index: 2, kind: input, shape index: {}]
  %s3 = inlined_call_operand.vmem [shape: f32[24,256], index: 3, kind: output, shape index: {}]
  %s4 = sld [smem:[#allocation0]]
  $region22: #{squeezenet_forward.31} parent=0
    _
  %s6 = ssub.s32 1, %s4
  %s7 = scalar_select 0, %s6, %s4
  // Predicated region
  $region2: #{squeezenet_forward.31} parent=0 // pred_check
    _
  $region3: #{squeezenet_forward.31} parent=0 // pred_check_branch
    %9 = sbr.rel (0) target = $region5
  $region4: #{squeezenet_forward.31} parent=0 // pred_region
    _
  $region5: #{squeezenet_forward.31} parent=0 // pred_fallthru
    _
  // Predicated region
  $region6: #{squeezenet_forward.31} parent=0 // pred_check
    _
  $region7: #{squeezenet_forward.31} parent=0 // pred_check_branch
    %11 = sbr.rel (0) target = $region9
  $region8: #{squeezenet_forward.31} parent=0 // pred_region
    _
  $region9: #{squeezenet_forward.31} parent=0 // pred_fallthru
    _
  // Predicated region
  $region10: #{squeezenet_forward.31} parent=0 // pred_check
    _
  $region11: #{squeezenet_forward.31} parent=0 // pred_check_branch
    %13 = sbr.rel (0) target = $region13
  $region12: #{squeezenet_forward.31} parent=0 // pred_region
    _
  $region13: #{squeezenet_forward.31} parent=0 // pred_fallthru
    _
  %v15 = vld [vmem:[%s0] sm:$0xff]
  %v16 = vld [vmem:[%s0 + $0x8] sm:$0xf]
  %v17 = vld [vmem:[%s0 + $0xc] sm:$0xff]
  %v18 = vld [vmem:[%s0 + $0x14] sm:$0xf]
  %v19 = vld [vmem:[%s0 + $0x18] sm:$0xff]
  %v20 = vld [vmem:[%s0 + $0x20] sm:$0xf]
  %v21 = vld [vmem:[%s1] sm:$0xff]
  %v22 = vld [vmem:[%s1 + $0x8] sm:$0xff]
  %v23 = vld [vmem:[%s1 + $0x10] sm:$0xff]
  %v24 = vld [vmem:[%s1 + $0x18] sm:$0xff]
  %v25 = vld [vmem:[%s1 + $0x20] sm:$0xff]
  %v26 = vld [vmem:[%s1 + $0x28] sm:$0xff]
  %v27 = vld [vmem:[%s1 + $0x30] sm:$0xff]
  %v28 = vld [vmem:[%s1 + $0x38] sm:$0xff]
  %v29 = vld [vmem:[%s1 + $0x40] sm:$0xff]
  %v30 = vld [vmem:[%s1 + $0x48] sm:$0xff]
  %v31 = vld [vmem:[%s1 + $0x50] sm:$0xff]
  %v32 = vld [vmem:[%s1 + $0x58] sm:$0xff]
  %v33 = vld [vmem:[%s1 + $0x60] sm:$0xff]
  %v34 = vld [vmem:[%s1 + $0x68] sm:$0xff]
  %v35 = vld [vmem:[%s1 + $0x70] sm:$0xff]
  %v36 = vld [vmem:[%s1 + $0x78] sm:$0xff]
  %v37 = vld [vmem:[%s1 + $0x80] sm:$0xff]
  %v38 = vld [vmem:[%s1 + $0x88] sm:$0xff]
  %v39 = vld [vmem:[%s1 + $0x90] sm:$0xff]
  %v40 = vld [vmem:[%s1 + $0x98] sm:$0xff]
  %v41 = vld [vmem:[%s1 + $0xa0] sm:$0xff]
  %v42 = vld [vmem:[%s1 + $0xa8] sm:$0xff]
  %v43 = vld [vmem:[%s1 + $0xb0] sm:$0xff]
  %v44 = vld [vmem:[%s1 + $0xb8] sm:$0xff]
  %v45 = vld [vmem:[%s1 + $0xc0] sm:$0xff]
  %v46 = vld [vmem:[%s1 + $0xc8] sm:$0xff]
  %v47 = vld [vmem:[%s1 + $0xd0] sm:$0xff]
  %v48 = vld [vmem:[%s1 + $0xd8] sm:$0xff]
  %v49 = vld [vmem:[%s1 + $0xe0] sm:$0xff]
  %v50 = vld [vmem:[%s1 + $0xe8] sm:$0xff]
  %v51 = vld [vmem:[%s1 + $0xf0] sm:$0xff]
  %v52 = vld [vmem:[%s1 + $0xf8] sm:$0xff]
  %v53 = vld [vmem:[%s1 + $0x100] sm:$0xff]
  %v54 = vld [vmem:[%s1 + $0x108] sm:$0xff]
  %v55 = vld [vmem:[%s1 + $0x110] sm:$0xff]
  %v56 = vld [vmem:[%s1 + $0x118] sm:$0xff]
  %v57 = vld [vmem:[%s1 + $0x120] sm:$0xff]
  %v58 = vld [vmem:[%s1 + $0x128] sm:$0xff]
  %v59 = vld [vmem:[%s1 + $0x130] sm:$0xff]
  %v60 = vld [vmem:[%s1 + $0x138] sm:$0xff]
  %v61 = vld [vmem:[%s1 + $0x140] sm:$0xff]
  %v62 = vld [vmem:[%s1 + $0x148] sm:$0xff]
  %v63 = vld [vmem:[%s1 + $0x150] sm:$0xff]
  %v64 = vld [vmem:[%s1 + $0x158] sm:$0xff]
  %v65 = vld [vmem:[%s1 + $0x160] sm:$0xff]
  %v66 = vld [vmem:[%s1 + $0x168] sm:$0xff]
  %v67 = vld [vmem:[%s1 + $0x170] sm:$0xff]
  %v68 = vld [vmem:[%s1 + $0x178] sm:$0xff]
  %v69 = vld [vmem:[%s2] sm:$0x3]
  %v71 = vlaneseq
  %v72 = vshrl.u32 %v71, 7
  %v73 = vsub.s32 0, %v72
  %v74 = vrot.slane %v69, %v73
  %v75 = vlaneseq
  %v76 = vshrl.u32 %v75, 7
  %v77 = vsub.s32 1, %v76
  %v78 = vrot.slane %v69, %v77
  %v87 = vunpack.c.l.b16 %v15
  %v88 = vunpack.c.h.b16 %v15
  %v89 = vunpack.c.l.b16 %v16
  %v90 = vunpack.c.l.b16 %v17
  %v91 = vunpack.c.h.b16 %v17
  %v92 = vunpack.c.l.b16 %v18
  %v93 = vunpack.c.l.b16 %v19
  %v94 = vunpack.c.h.b16 %v19
  %v95 = vunpack.c.l.b16 %v20
  %v96 = vpack.c.b16 %v90, %v87
  %v97 = vpack.c.b16 %v91, %v88
  %v98 = vpack.c.b16 %v92, %v89
  %v99 = vpack.c.b16 %v93, %v93
  %v100 = vpack.c.b16 %v94, %v94
  %v101 = vpack.c.b16 %v95, %v95
  %v156 = vunpack.c.l.b16 %v21
  %v157 = vunpack.c.h.b16 %v21
  %v158 = vunpack.c.l.b16 %v22
  %v159 = vunpack.c.h.b16 %v22
  %v160 = vunpack.c.l.b16 %v23
  %v161 = vunpack.c.h.b16 %v23
  %v162 = vunpack.c.l.b16 %v24
  %v163 = vunpack.c.h.b16 %v24
  %v164 = vunpack.c.l.b16 %v25
  %v165 = vunpack.c.h.b16 %v25
  %v166 = vunpack.c.l.b16 %v26
  %v167 = vunpack.c.h.b16 %v26
  %v168 = vunpack.c.l.b16 %v27
  %v169 = vunpack.c.h.b16 %v27
  %v170 = vunpack.c.l.b16 %v28
  %v171 = vunpack.c.h.b16 %v28
  %v172 = vunpack.c.l.b16 %v29
  %v173 = vunpack.c.h.b16 %v29
  %v174 = vunpack.c.l.b16 %v30
  %v175 = vunpack.c.h.b16 %v30
  %v176 = vunpack.c.l.b16 %v31
  %v177 = vunpack.c.h.b16 %v31
  %v178 = vunpack.c.l.b16 %v32
  %v179 = vunpack.c.h.b16 %v32
  %v180 = vunpack.c.l.b16 %v33
  %v181 = vunpack.c.h.b16 %v33
  %v182 = vunpack.c.l.b16 %v34
  %v183 = vunpack.c.h.b16 %v34
  %v184 = vunpack.c.l.b16 %v35
  %v185 = vunpack.c.h.b16 %v35
  %v186 = vunpack.c.l.b16 %v36
  %v187 = vunpack.c.h.b16 %v36
  %v188 = vunpack.c.l.b16 %v37
  %v189 = vunpack.c.h.b16 %v37
  %v190 = vunpack.c.l.b16 %v38
  %v191 = vunpack.c.h.b16 %v38
  %v192 = vunpack.c.l.b16 %v39
  %v193 = vunpack.c.h.b16 %v39
  %v194 = vunpack.c.l.b16 %v40
  %v195 = vunpack.c.h.b16 %v40
  %v196 = vunpack.c.l.b16 %v41
  %v197 = vunpack.c.h.b16 %v41
  %v198 = vunpack.c.l.b16 %v42
  %v199 = vunpack.c.h.b16 %v42
  %v200 = vunpack.c.l.b16 %v43
  %v201 = vunpack.c.h.b16 %v43
  %v202 = vunpack.c.l.b16 %v44
  %v203 = vunpack.c.h.b16 %v44
  %v204 = vunpack.c.l.b16 %v45
  %v205 = vunpack.c.h.b16 %v45
  %v206 = vunpack.c.l.b16 %v46
  %v207 = vunpack.c.h.b16 %v46
  %v208 = vunpack.c.l.b16 %v47
  %v209 = vunpack.c.h.b16 %v47
  %v210 = vunpack.c.l.b16 %v48
  %v211 = vunpack.c.h.b16 %v48
  %v212 = vunpack.c.l.b16 %v49
  %v213 = vunpack.c.h.b16 %v49
  %v214 = vunpack.c.l.b16 %v50
  %v215 = vunpack.c.h.b16 %v50
  %v216 = vunpack.c.l.b16 %v51
  %v217 = vunpack.c.h.b16 %v51
  %v218 = vunpack.c.l.b16 %v52
  %v219 = vunpack.c.h.b16 %v52
  %v220 = vunpack.c.l.b16 %v53
  %v221 = vunpack.c.h.b16 %v53
  %v222 = vunpack.c.l.b16 %v54
  %v223 = vunpack.c.h.b16 %v54
  %v224 = vunpack.c.l.b16 %v55
  %v225 = vunpack.c.h.b16 %v55
  %v226 = vunpack.c.l.b16 %v56
  %v227 = vunpack.c.h.b16 %v56
  %v228 = vunpack.c.l.b16 %v57
  %v229 = vunpack.c.h.b16 %v57
  %v230 = vunpack.c.l.b16 %v58
  %v231 = vunpack.c.h.b16 %v58
  %v232 = vunpack.c.l.b16 %v59
  %v233 = vunpack.c.h.b16 %v59
  %v234 = vunpack.c.l.b16 %v60
  %v235 = vunpack.c.h.b16 %v60
  %v236 = vunpack.c.l.b16 %v61
  %v237 = vunpack.c.h.b16 %v61
  %v238 = vunpack.c.l.b16 %v62
  %v239 = vunpack.c.h.b16 %v62
  %v240 = vunpack.c.l.b16 %v63
  %v241 = vunpack.c.h.b16 %v63
  %v242 = vunpack.c.l.b16 %v64
  %v243 = vunpack.c.h.b16 %v64
  %v244 = vunpack.c.l.b16 %v65
  %v245 = vunpack.c.h.b16 %v65
  %v246 = vunpack.c.l.b16 %v66
  %v247 = vunpack.c.h.b16 %v66
  %v248 = vunpack.c.l.b16 %v67
  %v249 = vunpack.c.h.b16 %v67
  %v250 = vunpack.c.l.b16 %v68
  %v251 = vunpack.c.h.b16 %v68
  %v252 = vpack.c.b16 %v158, %v156
  %v253 = vpack.c.b16 %v159, %v157
  %v254 = vpack.c.b16 %v162, %v160
  %v255 = vpack.c.b16 %v163, %v161
  %v256 = vpack.c.b16 %v166, %v164
  %v257 = vpack.c.b16 %v167, %v165
  %v258 = vpack.c.b16 %v170, %v168
  %v259 = vpack.c.b16 %v171, %v169
  %v260 = vpack.c.b16 %v174, %v172
  %v261 = vpack.c.b16 %v175, %v173
  %v262 = vpack.c.b16 %v178, %v176
  %v263 = vpack.c.b16 %v179, %v177
  %v264 = vpack.c.b16 %v182, %v180
  %v265 = vpack.c.b16 %v183, %v181
  %v266 = vpack.c.b16 %v186, %v184
  %v267 = vpack.c.b16 %v187, %v185
  %v268 = vpack.c.b16 %v190, %v188
  %v269 = vpack.c.b16 %v191, %v189
  %v270 = vpack.c.b16 %v194, %v192
  %v271 = vpack.c.b16 %v195, %v193
  %v272 = vpack.c.b16 %v198, %v196
  %v273 = vpack.c.b16 %v199, %v197
  %v274 = vpack.c.b16 %v202, %v200
  %v275 = vpack.c.b16 %v203, %v201
  %v276 = vpack.c.b16 %v206, %v204
  %v277 = vpack.c.b16 %v207, %v205
  %v278 = vpack.c.b16 %v210, %v208
  %v279 = vpack.c.b16 %v211, %v209
  %v280 = vpack.c.b16 %v214, %v212
  %v281 = vpack.c.b16 %v215, %v213
  %v282 = vpack.c.b16 %v218, %v216
  %v283 = vpack.c.b16 %v219, %v217
  %v284 = vpack.c.b16 %v222, %v220
  %v285 = vpack.c.b16 %v223, %v221
  %v286 = vpack.c.b16 %v226, %v224
  %v287 = vpack.c.b16 %v227, %v225
  %v288 = vpack.c.b16 %v230, %v228
  %v289 = vpack.c.b16 %v231, %v229
  %v290 = vpack.c.b16 %v234, %v232
  %v291 = vpack.c.b16 %v235, %v233
  %v292 = vpack.c.b16 %v238, %v236
  %v293 = vpack.c.b16 %v239, %v237
  %v294 = vpack.c.b16 %v242, %v240
  %v295 = vpack.c.b16 %v243, %v241
  %v296 = vpack.c.b16 %v246, %v244
  %v297 = vpack.c.b16 %v247, %v245
  %v298 = vpack.c.b16 %v250, %v248
  %v299 = vpack.c.b16 %v251, %v249
  %348 = vmatprep.subr.bf16.mxu0 %v267
  %349 = vmatpush1.bf16.msra.mxu0 %v266
  %350 = vmatprep.subr.bf16.mxu0 %v265
  %351 = vmatpush1.bf16.msra.mxu0 %v264
  %352 = vmatprep.subr.bf16.mxu0 %v263
  %353 = vmatpush1.bf16.msra.mxu0 %v262
  %354 = vmatprep.subr.bf16.mxu0 %v261
  %355 = vmatpush1.bf16.msra.mxu0 %v260
  %356 = vmatprep.subr.bf16.mxu0 %v259
  %357 = vmatpush1.bf16.msra.mxu0 %v258
  %358 = vmatprep.subr.bf16.mxu0 %v257
  %359 = vmatpush1.bf16.msra.mxu0 %v256
  %360 = vmatprep.subr.bf16.mxu0 %v255
  %361 = vmatpush1.bf16.msra.mxu0 %v254
  %362 = vmatprep.subr.bf16.mxu0 %v253
  %363 = vmatpush1.bf16.msra.mxu0 %v252
  %364 = vmatprep.subr.bf16.mxu0 %v283
  %365 = vmatpush2.bf16.msra.mxu0 %v282
  %366 = vmatprep.subr.bf16.mxu0 %v281
  %367 = vmatpush2.bf16.msra.mxu0 %v280
  %368 = vmatprep.subr.bf16.mxu0 %v279
  %369 = vmatpush2.bf16.msra.mxu0 %v278
  %370 = vmatprep.subr.bf16.mxu0 %v277
  %371 = vmatpush2.bf16.msra.mxu0 %v276
  %372 = vmatprep.subr.bf16.mxu0 %v275
  %373 = vmatpush2.bf16.msra.mxu0 %v274
  %374 = vmatprep.subr.bf16.mxu0 %v273
  %375 = vmatpush2.bf16.msra.mxu0 %v272
  %376 = vmatprep.subr.bf16.mxu0 %v271
  %377 = vmatpush2.bf16.msra.mxu0 %v270
  %378 = vmatprep.subr.bf16.mxu0 %v269
  %379 = vmatpush2.bf16.msra.mxu0 %v268
  %380 = vmatprep.mubr.bf16.mxu0 %v97
  %381 = vmatmul.mubr.bf16.gmra.mxu0 %v96
  %v382 = vpop.f32.mrf.mxu0
  %v383 = vadd.f32 %v74, %v382
  %v384 = vpop.f32.mrf.mxu0
  %v385 = vadd.f32 %v78, %v384
  %v386 = vpop.f32.mrf.mxu0
  %v387 = vadd.f32 %v74, %v386
  %v388 = vpop.f32.mrf.mxu0
  %v389 = vadd.f32 %v78, %v388
  %390 = vmatprep.mubr.bf16.mxu0 %v100
  %391 = vmatmul.mubr.bf16.gmra.mxu0 %v99
  %v392 = vpop.f32.mrf.mxu0
  %v393 = vadd.f32 %v74, %v392
  %v394 = vpop.f32.mrf.mxu0
  %v395 = vadd.f32 %v78, %v394
  %v396 = vpop.f32.mrf.mxu0
  %v397 = vpop.f32.mrf.mxu0
  %398 = vdwg.mxu0
  %399 = vmatprep.subr.bf16.mxu0 %v299
  %400 = vmatpush1.bf16.msra.mxu0 %v298
  %401 = vmatprep.subr.bf16.mxu0 %v297
  %402 = vmatpush1.bf16.msra.mxu0 %v296
  %403 = vmatprep.subr.bf16.mxu0 %v295
  %404 = vmatpush1.bf16.msra.mxu0 %v294
  %405 = vmatprep.subr.bf16.mxu0 %v293
  %406 = vmatpush1.bf16.msra.mxu0 %v292
  %407 = vmatprep.subr.bf16.mxu0 %v291
  %408 = vmatpush1.bf16.msra.mxu0 %v290
  %409 = vmatprep.subr.bf16.mxu0 %v289
  %410 = vmatpush1.bf16.msra.mxu0 %v288
  %411 = vmatprep.subr.bf16.mxu0 %v287
  %412 = vmatpush1.bf16.msra.mxu0 %v286
  %413 = vmatprep.subr.bf16.mxu0 %v285
  %414 = vmatpush1.bf16.msra.mxu0 %v284
  %415 = vmatprep.subr.bf16.mxu0 0
  %416 = vmatpush2.bf16.msra.mxu0 0
  %417 = vmatprep.subr.bf16.mxu0 0
  %418 = vmatpush2.bf16.msra.mxu0 0
  %419 = vmatprep.subr.bf16.mxu0 0
  %420 = vmatpush2.bf16.msra.mxu0 0
  %421 = vmatprep.subr.bf16.mxu0 0
  %422 = vmatpush2.bf16.msra.mxu0 0
  %423 = vmatprep.subr.bf16.mxu0 0
  %424 = vmatpush2.bf16.msra.mxu0 0
  %425 = vmatprep.subr.bf16.mxu0 0
  %426 = vmatpush2.bf16.msra.mxu0 0
  %427 = vmatprep.subr.bf16.mxu0 0
  %428 = vmatpush2.bf16.msra.mxu0 0
  %429 = vmatprep.subr.bf16.mxu0 0
  %430 = vmatpush2.bf16.msra.mxu0 0
  %431 = vmatprep.mubr.bf16.mxu0 0
  %432 = vmatmul.mubr.bf16.gmra.mxu0 %v98
  %v433 = vpop.f32.mrf.mxu0
  %v434 = vadd.f32 %v383, %v433
  %v435 = vpop.f32.mrf.mxu0
  %v436 = vadd.f32 %v385, %v435
  %v437 = vpop.f32.mrf.mxu0
  %v438 = vadd.f32 %v387, %v437
  %v439 = vpop.f32.mrf.mxu0
  %v440 = vadd.f32 %v389, %v439
  %441 = vmatprep.mubr.bf16.mxu0 0
  %442 = vmatmul.mubr.bf16.gmra.mxu0 %v101
  %v443 = vpop.f32.mrf.mxu0
  %v444 = vadd.f32 %v393, %v443
  %v445 = vpop.f32.mrf.mxu0
  %v446 = vadd.f32 %v395, %v445
  %v447 = vpop.f32.mrf.mxu0
  %v448 = vpop.f32.mrf.mxu0
  %449 = vdwg.mxu0
  %v450 = vmax.f32 %v434, 0.0
  %v451 = vmax.f32 %v436, 0.0
  %v452 = vmax.f32 %v438, 0.0
  %v453 = vmax.f32 %v440, 0.0
  %v454 = vmax.f32 %v444, 0.0
  %v455 = vmax.f32 %v446, 0.0
  %456 = vst [vmem:[%s3] sm:$0xff] %v450
  %457 = vst [vmem:[%s3 + $0x8] sm:$0xff] %v451
  %458 = vst [vmem:[%s3 + $0x10] sm:$0xff] %v452
  %459 = vst [vmem:[%s3 + $0x18] sm:$0xff] %v453
  %460 = vst [vmem:[%s3 + $0x20] sm:$0xff] %v454
  %461 = vst [vmem:[%s3 + $0x28] sm:$0xff] %v455
  // Predicated region
  $region14: #{squeezenet_forward.31} parent=0 // pred_check
    _
  $region15: #{squeezenet_forward.31} parent=0 // pred_check_branch
    %463 = sbr.rel (0) target = $region17
  $region16: #{squeezenet_forward.31} parent=0 // pred_region
    _
  $region17: #{squeezenet_forward.31} parent=0 // pred_fallthru
    _
  // Predicated region
  $region18: #{squeezenet_forward.31} parent=0 // pred_check
    _
  $region19: #{squeezenet_forward.31} parent=0 // pred_check_branch
    %465 = sbr.rel (0) target = $region21
  $region20: #{squeezenet_forward.31} parent=0 // pred_region
    _
  $region21: #{squeezenet_forward.31} parent=0 // pred_fallthru
    _

// kernel: squeezenet_forward.33
$region0: #{squeezenet_forward.33}
  #allocation0 [shape = 'u32[]', space=smem, size = 0x4, offset = 0x4, fixed_abs, tag = 'smem constant byte address 0x4 - core index']
  #allocation1 [shape = 'u32[144,128]{1,0:T(1,128)}', space=vmem, size = 0x12000, scoped, tag = 'internal scratch']
  %s0 = inlined_call_operand.vmem [shape: bf16[24,512], index: 0, kind: input, shape index: {}]
  %s1 = inlined_call_operand.vmem [shape: bf16[512,384], index: 1, kind: input, shape index: {}]
  %s2 = inlined_call_operand.vmem [shape: f32[1,384], index: 2, kind: input, shape index: {}]
  %s3 = inlined_call_operand.vmem [shape: f32[24,384], index: 3, kind: output, shape index: {}]
  %s4 = sld [smem:[#allocation0]]
  $region22: #{squeezenet_forward.33} parent=0
    _
  %s6 = ssub.s32 1, %s4
  %s7 = scalar_select 0, %s6, %s4
  // Predicated region
  $region2: #{squeezenet_forward.33} parent=0 // pred_check
    _
  $region3: #{squeezenet_forward.33} parent=0 // pred_check_branch
    %9 = sbr.rel (0) target = $region5
  $region4: #{squeezenet_forward.33} parent=0 // pred_region
    _
  $region5: #{squeezenet_forward.33} parent=0 // pred_fallthru
    _
  // Predicated region
  $region6: #{squeezenet_forward.33} parent=0 // pred_check
    _
  $region7: #{squeezenet_forward.33} parent=0 // pred_check_branch
    %11 = sbr.rel (0) target = $region9
  $region8: #{squeezenet_forward.33} parent=0 // pred_region
    _
  $region9: #{squeezenet_forward.33} parent=0 // pred_fallthru
    _
  // Predicated region
  $region10: #{squeezenet_forward.33} parent=0 // pred_check
    _
  $region11: #{squeezenet_forward.33} parent=0 // pred_check_branch
    %13 = sbr.rel (0) target = $region13
  $region12: #{squeezenet_forward.33} parent=0 // pred_region
    _
  $region13: #{squeezenet_forward.33} parent=0 // pred_fallthru
    _
  %v15 = vld [vmem:[%s0] sm:$0xff]
  %v16 = vld [vmem:[%s0 + $0x8] sm:$0xff]
  %v17 = vld [vmem:[%s0 + $0x10] sm:$0xff]
  %v18 = vld [vmem:[%s0 + $0x18] sm:$0xff]
  %v19 = vld [vmem:[%s0 + $0x20] sm:$0xff]
  %v20 = vld [vmem:[%s0 + $0x28] sm:$0xff]
  %v21 = vld [vmem:[%s1] sm:$0xff]
  %v22 = vld [vmem:[%s1 + $0x8] sm:$0xf]
  %v23 = vld [vmem:[%s1 + $0xc] sm:$0xff]
  %v24 = vld [vmem:[%s1 + $0x14] sm:$0xf]
  %v25 = vld [vmem:[%s1 + $0x18] sm:$0xff]
  %v26 = vld [vmem:[%s1 + $0x20] sm:$0xf]
  %v27 = vld [vmem:[%s1 + $0x24] sm:$0xff]
  %v28 = vld [vmem:[%s1 + $0x2c] sm:$0xf]
  %v29 = vld [vmem:[%s1 + $0x30] sm:$0xff]
  %v30 = vld [vmem:[%s1 + $0x38] sm:$0xf]
  %v31 = vld [vmem:[%s1 + $0x3c] sm:$0xff]
  %v32 = vld [vmem:[%s1 + $0x44] sm:$0xf]
  %v33 = vld [vmem:[%s1 + $0x48] sm:$0xff]
  %v34 = vld [vmem:[%s1 + $0x50] sm:$0xf]
  %v35 = vld [vmem:[%s1 + $0x54] sm:$0xff]
  %v36 = vld [vmem:[%s1 + $0x5c] sm:$0xf]
  %v37 = vld [vmem:[%s1 + $0x60] sm:$0xff]
  %v38 = vld [vmem:[%s1 + $0x68] sm:$0xf]
  %v39 = vld [vmem:[%s1 + $0x6c] sm:$0xff]
  %v40 = vld [vmem:[%s1 + $0x74] sm:$0xf]
  %v41 = vld [vmem:[%s1 + $0x78] sm:$0xff]
  %v42 = vld [vmem:[%s1 + $0x80] sm:$0xf]
  %v43 = vld [vmem:[%s1 + $0x84] sm:$0xff]
  %v44 = vld [vmem:[%s1 + $0x8c] sm:$0xf]
  %v45 = vld [vmem:[%s1 + $0x90] sm:$0xff]
  %v46 = vld [vmem:[%s1 + $0x98] sm:$0xf]
  %v47 = vld [vmem:[%s1 + $0x9c] sm:$0xff]
  %v48 = vld [vmem:[%s1 + $0xa4] sm:$0xf]
  %v49 = vld [vmem:[%s1 + $0xa8] sm:$0xff]
  %v50 = vld [vmem:[%s1 + $0xb0] sm:$0xf]
  %v51 = vld [vmem:[%s1 + $0xb4] sm:$0xff]
  %v52 = vld [vmem:[%s1 + $0xbc] sm:$0xf]
  %v53 = vld [vmem:[%s1 + $0xc0] sm:$0xff]
  %v54 = vld [vmem:[%s1 + $0xc8] sm:$0xf]
  %v55 = vld [vmem:[%s1 + $0xcc] sm:$0xff]
  %v56 = vld [vmem:[%s1 + $0xd4] sm:$0xf]
  %v57 = vld [vmem:[%s1 + $0xd8] sm:$0xff]
  %v58 = vld [vmem:[%s1 + $0xe0] sm:$0xf]
  %v59 = vld [vmem:[%s1 + $0xe4] sm:$0xff]
  %v60 = vld [vmem:[%s1 + $0xec] sm:$0xf]
  %v61 = vld [vmem:[%s1 + $0xf0] sm:$0xff]
  %v62 = vld [vmem:[%s1 + $0xf8] sm:$0xf]
  %v63 = vld [vmem:[%s1 + $0xfc] sm:$0xff]
  %v64 = vld [vmem:[%s1 + $0x104] sm:$0xf]
  %v65 = vld [vmem:[%s1 + $0x108] sm:$0xff]
  %v66 = vld [vmem:[%s1 + $0x110] sm:$0xf]
  %v67 = vld [vmem:[%s1 + $0x114] sm:$0xff]
  %v68 = vld [vmem:[%s1 + $0x11c] sm:$0xf]
  %v69 = vld [vmem:[%s1 + $0x120] sm:$0xff]
  %v70 = vld [vmem:[%s1 + $0x128] sm:$0xf]
  %v71 = vld [vmem:[%s1 + $0x12c] sm:$0xff]
  %v72 = vld [vmem:[%s1 + $0x134] sm:$0xf]
  %v73 = vld [vmem:[%s1 + $0x138] sm:$0xff]
  %v74 = vld [vmem:[%s1 + $0x140] sm:$0xf]
  %v75 = vld [vmem:[%s1 + $0x144] sm:$0xff]
  %v76 = vld [vmem:[%s1 + $0x14c] sm:$0xf]
  %v77 = vld [vmem:[%s1 + $0x150] sm:$0xff]
  %v78 = vld [vmem:[%s1 + $0x158] sm:$0xf]
  %v79 = vld [vmem:[%s1 + $0x15c] sm:$0xff]
  %v80 = vld [vmem:[%s1 + $0x164] sm:$0xf]
  %v81 = vld [vmem:[%s1 + $0x168] sm:$0xff]
  %v82 = vld [vmem:[%s1 + $0x170] sm:$0xf]
  %v83 = vld [vmem:[%s1 + $0x174] sm:$0xff]
  %v84 = vld [vmem:[%s1 + $0x17c] sm:$0xf]
  %v85 = vld [vmem:[%s1 + $0x180] sm:$0xff]
  %v86 = vld [vmem:[%s1 + $0x188] sm:$0xf]
  %v87 = vld [vmem:[%s1 + $0x18c] sm:$0xff]
  %v88 = vld [vmem:[%s1 + $0x194] sm:$0xf]
  %v89 = vld [vmem:[%s1 + $0x198] sm:$0xff]
  %v90 = vld [vmem:[%s1 + $0x1a0] sm:$0xf]
  %v91 = vld [vmem:[%s1 + $0x1a4] sm:$0xff]
  %v92 = vld [vmem:[%s1 + $0x1ac] sm:$0xf]
  %v93 = vld [vmem:[%s1 + $0x1b0] sm:$0xff]
  %v94 = vld [vmem:[%s1 + $0x1b8] sm:$0xf]
  %v95 = vld [vmem:[%s1 + $0x1bc] sm:$0xff]
  %v96 = vld [vmem:[%s1 + $0x1c4] sm:$0xf]
  %v97 = vld [vmem:[%s1 + $0x1c8] sm:$0xff]
  %v98 = vld [vmem:[%s1 + $0x1d0] sm:$0xf]
  %v99 = vld [vmem:[%s1 + $0x1d4] sm:$0xff]
  %v100 = vld [vmem:[%s1 + $0x1dc] sm:$0xf]
  %v101 = vld [vmem:[%s1 + $0x1e0] sm:$0xff]
  %v102 = vld [vmem:[%s1 + $0x1e8] sm:$0xf]
  %v103 = vld [vmem:[%s1 + $0x1ec] sm:$0xff]
  %v104 = vld [vmem:[%s1 + $0x1f4] sm:$0xf]
  %v105 = vld [vmem:[%s1 + $0x1f8] sm:$0xff]
  %v106 = vld [vmem:[%s1 + $0x200] sm:$0xf]
  %v107 = vld [vmem:[%s1 + $0x204] sm:$0xff]
  %v108 = vld [vmem:[%s1 + $0x20c] sm:$0xf]
  %v109 = vld [vmem:[%s1 + $0x210] sm:$0xff]
  %v110 = vld [vmem:[%s1 + $0x218] sm:$0xf]
  %v111 = vld [vmem:[%s1 + $0x21c] sm:$0xff]
  %v112 = vld [vmem:[%s1 + $0x224] sm:$0xf]
  %v113 = vld [vmem:[%s1 + $0x228] sm:$0xff]
  %v114 = vld [vmem:[%s1 + $0x230] sm:$0xf]
  %v115 = vld [vmem:[%s1 + $0x234] sm:$0xff]
  %v116 = vld [vmem:[%s1 + $0x23c] sm:$0xf]
  %v117 = vld [vmem:[%s1 + $0x240] sm:$0xff]
  %v118 = vld [vmem:[%s1 + $0x248] sm:$0xf]
  %v119 = vld [vmem:[%s1 + $0x24c] sm:$0xff]
  %v120 = vld [vmem:[%s1 + $0x254] sm:$0xf]
  %v121 = vld [vmem:[%s1 + $0x258] sm:$0xff]
  %v122 = vld [vmem:[%s1 + $0x260] sm:$0xf]
  %v123 = vld [vmem:[%s1 + $0x264] sm:$0xff]
  %v124 = vld [vmem:[%s1 + $0x26c] sm:$0xf]
  %v125 = vld [vmem:[%s1 + $0x270] sm:$0xff]
  %v126 = vld [vmem:[%s1 + $0x278] sm:$0xf]
  %v127 = vld [vmem:[%s1 + $0x27c] sm:$0xff]
  %v128 = vld [vmem:[%s1 + $0x284] sm:$0xf]
  %v129 = vld [vmem:[%s1 + $0x288] sm:$0xff]
  %v130 = vld [vmem:[%s1 + $0x290] sm:$0xf]
  %v131 = vld [vmem:[%s1 + $0x294] sm:$0xff]
  %v132 = vld [vmem:[%s1 + $0x29c] sm:$0xf]
  %v133 = vld [vmem:[%s1 + $0x2a0] sm:$0xff]
  %v134 = vld [vmem:[%s1 + $0x2a8] sm:$0xf]
  %v135 = vld [vmem:[%s1 + $0x2ac] sm:$0xff]
  %v136 = vld [vmem:[%s1 + $0x2b4] sm:$0xf]
  %v137 = vld [vmem:[%s1 + $0x2b8] sm:$0xff]
  %v138 = vld [vmem:[%s1 + $0x2c0] sm:$0xf]
  %v139 = vld [vmem:[%s1 + $0x2c4] sm:$0xff]
  %v140 = vld [vmem:[%s1 + $0x2cc] sm:$0xf]
  %v141 = vld [vmem:[%s1 + $0x2d0] sm:$0xff]
  %v142 = vld [vmem:[%s1 + $0x2d8] sm:$0xf]
  %v143 = vld [vmem:[%s1 + $0x2dc] sm:$0xff]
  %v144 = vld [vmem:[%s1 + $0x2e4] sm:$0xf]
  %v145 = vld [vmem:[%s1 + $0x2e8] sm:$0xff]
  %v146 = vld [vmem:[%s1 + $0x2f0] sm:$0xf]
  %v147 = vld [vmem:[%s1 + $0x2f4] sm:$0xff]
  %v148 = vld [vmem:[%s1 + $0x2fc] sm:$0xf]
  %v149 = vld [vmem:[%s2] sm:$0x7]
  %v151 = vlaneseq
  %v152 = vshrl.u32 %v151, 7
  %v153 = vsub.s32 0, %v152
  %v154 = vrot.slane %v149, %v153
  %v155 = vlaneseq
  %v156 = vshrl.u32 %v155, 7
  %v157 = vsub.s32 1, %v156
  %v158 = vrot.slane %v149, %v157
  %v159 = vlaneseq
  %v160 = vshrl.u32 %v159, 7
  %v161 = vsub.s32 2, %v160
  %v162 = vrot.slane %v149, %v161
  %v172 = vunpack.c.l.b16 %v15
  %v173 = vunpack.c.h.b16 %v15
  %v174 = vunpack.c.l.b16 %v16
  %v175 = vunpack.c.h.b16 %v16
  %v176 = vunpack.c.l.b16 %v17
  %v177 = vunpack.c.h.b16 %v17
  %v178 = vunpack.c.l.b16 %v18
  %v179 = vunpack.c.h.b16 %v18
  %v180 = vunpack.c.l.b16 %v19
  %v181 = vunpack.c.h.b16 %v19
  %v182 = vunpack.c.l.b16 %v20
  %v183 = vunpack.c.h.b16 %v20
  %v184 = vpack.c.b16 %v176, %v172
  %v185 = vpack.c.b16 %v177, %v173
  %v186 = vpack.c.b16 %v178, %v174
  %v187 = vpack.c.b16 %v179, %v175
  %v188 = vpack.c.b16 %v180, %v180
  %v189 = vpack.c.b16 %v181, %v181
  %v190 = vpack.c.b16 %v182, %v182
  %v191 = vpack.c.b16 %v183, %v183
  %v328 = vunpack.c.l.b16 %v21
  %v329 = vunpack.c.h.b16 %v21
  %v330 = vunpack.c.l.b16 %v22
  %v331 = vunpack.c.l.b16 %v23
  %v332 = vunpack.c.h.b16 %v23
  %v333 = vunpack.c.l.b16 %v24
  %v334 = vunpack.c.l.b16 %v25
  %v335 = vunpack.c.h.b16 %v25
  %v336 = vunpack.c.l.b16 %v26
  %v337 = vunpack.c.l.b16 %v27
  %v338 = vunpack.c.h.b16 %v27
  %v339 = vunpack.c.l.b16 %v28
  %v340 = vunpack.c.l.b16 %v29
  %v341 = vunpack.c.h.b16 %v29
  %v342 = vunpack.c.l.b16 %v30
  %v343 = vunpack.c.l.b16 %v31
  %v344 = vunpack.c.h.b16 %v31
  %v345 = vunpack.c.l.b16 %v32
  %v346 = vunpack.c.l.b16 %v33
  %v347 = vunpack.c.h.b16 %v33
  %v348 = vunpack.c.l.b16 %v34
  %v349 = vunpack.c.l.b16 %v35
  %v350 = vunpack.c.h.b16 %v35
  %v351 = vunpack.c.l.b16 %v36
  %v352 = vunpack.c.l.b16 %v37
  %v353 = vunpack.c.h.b16 %v37
  %v354 = vunpack.c.l.b16 %v38
  %v355 = vunpack.c.l.b16 %v39
  %v356 = vunpack.c.h.b16 %v39
  %v357 = vunpack.c.l.b16 %v40
  %v358 = vunpack.c.l.b16 %v41
  %v359 = vunpack.c.h.b16 %v41
  %v360 = vunpack.c.l.b16 %v42
  %v361 = vunpack.c.l.b16 %v43
  %v362 = vunpack.c.h.b16 %v43
  %v363 = vunpack.c.l.b16 %v44
  %v364 = vunpack.c.l.b16 %v45
  %v365 = vunpack.c.h.b16 %v45
  %v366 = vunpack.c.l.b16 %v46
  %v367 = vunpack.c.l.b16 %v47
  %v368 = vunpack.c.h.b16 %v47
  %v369 = vunpack.c.l.b16 %v48
  %v370 = vunpack.c.l.b16 %v49
  %v371 = vunpack.c.h.b16 %v49
  %v372 = vunpack.c.l.b16 %v50
  %v373 = vunpack.c.l.b16 %v51
  %v374 = vunpack.c.h.b16 %v51
  %v375 = vunpack.c.l.b16 %v52
  %v376 = vunpack.c.l.b16 %v53
  %v377 = vunpack.c.h.b16 %v53
  %v378 = vunpack.c.l.b16 %v54
  %v379 = vunpack.c.l.b16 %v55
  %v380 = vunpack.c.h.b16 %v55
  %v381 = vunpack.c.l.b16 %v56
  %v382 = vunpack.c.l.b16 %v57
  %v383 = vunpack.c.h.b16 %v57
  %v384 = vunpack.c.l.b16 %v58
  %v385 = vunpack.c.l.b16 %v59
  %v386 = vunpack.c.h.b16 %v59
  %v387 = vunpack.c.l.b16 %v60
  %v388 = vunpack.c.l.b16 %v61
  %v389 = vunpack.c.h.b16 %v61
  %v390 = vunpack.c.l.b16 %v62
  %v391 = vunpack.c.l.b16 %v63
  %v392 = vunpack.c.h.b16 %v63
  %v393 = vunpack.c.l.b16 %v64
  %v394 = vunpack.c.l.b16 %v65
  %v395 = vunpack.c.h.b16 %v65
  %v396 = vunpack.c.l.b16 %v66
  %v397 = vunpack.c.l.b16 %v67
  %v398 = vunpack.c.h.b16 %v67
  %v399 = vunpack.c.l.b16 %v68
  %v400 = vunpack.c.l.b16 %v69
  %v401 = vunpack.c.h.b16 %v69
  %v402 = vunpack.c.l.b16 %v70
  %v403 = vunpack.c.l.b16 %v71
  %v404 = vunpack.c.h.b16 %v71
  %v405 = vunpack.c.l.b16 %v72
  %v406 = vunpack.c.l.b16 %v73
  %v407 = vunpack.c.h.b16 %v73
  %v408 = vunpack.c.l.b16 %v74
  %v409 = vunpack.c.l.b16 %v75
  %v410 = vunpack.c.h.b16 %v75
  %v411 = vunpack.c.l.b16 %v76
  %v412 = vunpack.c.l.b16 %v77
  %v413 = vunpack.c.h.b16 %v77
  %v414 = vunpack.c.l.b16 %v78
  %v415 = vunpack.c.l.b16 %v79
  %v416 = vunpack.c.h.b16 %v79
  %v417 = vunpack.c.l.b16 %v80
  %v418 = vunpack.c.l.b16 %v81
  %v419 = vunpack.c.h.b16 %v81
  %v420 = vunpack.c.l.b16 %v82
  %v421 = vunpack.c.l.b16 %v83
  %v422 = vunpack.c.h.b16 %v83
  %v423 = vunpack.c.l.b16 %v84
  %v424 = vunpack.c.l.b16 %v85
  %v425 = vunpack.c.h.b16 %v85
  %v426 = vunpack.c.l.b16 %v86
  %v427 = vunpack.c.l.b16 %v87
  %v428 = vunpack.c.h.b16 %v87
  %v429 = vunpack.c.l.b16 %v88
  %v430 = vunpack.c.l.b16 %v89
  %v431 = vunpack.c.h.b16 %v89
  %v432 = vunpack.c.l.b16 %v90
  %v433 = vunpack.c.l.b16 %v91
  %v434 = vunpack.c.h.b16 %v91
  %v435 = vunpack.c.l.b16 %v92
  %v436 = vunpack.c.l.b16 %v93
  %v437 = vunpack.c.h.b16 %v93
  %v438 = vunpack.c.l.b16 %v94
  %v439 = vunpack.c.l.b16 %v95
  %v440 = vunpack.c.h.b16 %v95
  %v441 = vunpack.c.l.b16 %v96
  %v442 = vunpack.c.l.b16 %v97
  %v443 = vunpack.c.h.b16 %v97
  %v444 = vunpack.c.l.b16 %v98
  %v445 = vunpack.c.l.b16 %v99
  %v446 = vunpack.c.h.b16 %v99
  %v447 = vunpack.c.l.b16 %v100
  %v448 = vunpack.c.l.b16 %v101
  %v449 = vunpack.c.h.b16 %v101
  %v450 = vunpack.c.l.b16 %v102
  %v451 = vunpack.c.l.b16 %v103
  %v452 = vunpack.c.h.b16 %v103
  %v453 = vunpack.c.l.b16 %v104
  %v454 = vunpack.c.l.b16 %v105
  %v455 = vunpack.c.h.b16 %v105
  %v456 = vunpack.c.l.b16 %v106
  %v457 = vunpack.c.l.b16 %v107
  %v458 = vunpack.c.h.b16 %v107
  %v459 = vunpack.c.l.b16 %v108
  %v460 = vunpack.c.l.b16 %v109
  %v461 = vunpack.c.h.b16 %v109
  %v462 = vunpack.c.l.b16 %v110
  %v463 = vunpack.c.l.b16 %v111
  %v464 = vunpack.c.h.b16 %v111
  %v465 = vunpack.c.l.b16 %v112
  %v466 = vunpack.c.l.b16 %v113
  %v467 = vunpack.c.h.b16 %v113
  %v468 = vunpack.c.l.b16 %v114
  %v469 = vunpack.c.l.b16 %v115
  %v470 = vunpack.c.h.b16 %v115
  %v471 = vunpack.c.l.b16 %v116
  %v472 = vunpack.c.l.b16 %v117
  %v473 = vunpack.c.h.b16 %v117
  %v474 = vunpack.c.l.b16 %v118
  %v475 = vunpack.c.l.b16 %v119
  %v476 = vunpack.c.h.b16 %v119
  %v477 = vunpack.c.l.b16 %v120
  %v478 = vunpack.c.l.b16 %v121
  %v479 = vunpack.c.h.b16 %v121
  %v480 = vunpack.c.l.b16 %v122
  %v481 = vunpack.c.l.b16 %v123
  %v482 = vunpack.c.h.b16 %v123
  %v483 = vunpack.c.l.b16 %v124
  %v484 = vunpack.c.l.b16 %v125
  %v485 = vunpack.c.h.b16 %v125
  %v486 = vunpack.c.l.b16 %v126
  %v487 = vunpack.c.l.b16 %v127
  %v488 = vunpack.c.h.b16 %v127
  %v489 = vunpack.c.l.b16 %v128
  %v490 = vunpack.c.l.b16 %v129
  %v491 = vunpack.c.h.b16 %v129
  %v492 = vunpack.c.l.b16 %v130
  %v493 = vunpack.c.l.b16 %v131
  %v494 = vunpack.c.h.b16 %v131
  %v495 = vunpack.c.l.b16 %v132
  %v496 = vunpack.c.l.b16 %v133
  %v497 = vunpack.c.h.b16 %v133
  %v498 = vunpack.c.l.b16 %v134
  %v499 = vunpack.c.l.b16 %v135
  %v500 = vunpack.c.h.b16 %v135
  %v501 = vunpack.c.l.b16 %v136
  %v502 = vunpack.c.l.b16 %v137
  %v503 = vunpack.c.h.b16 %v137
  %v504 = vunpack.c.l.b16 %v138
  %v505 = vunpack.c.l.b16 %v139
  %v506 = vunpack.c.h.b16 %v139
  %v507 = vunpack.c.l.b16 %v140
  %v508 = vunpack.c.l.b16 %v141
  %v509 = vunpack.c.h.b16 %v141
  %v510 = vunpack.c.l.b16 %v142
  %v511 = vunpack.c.l.b16 %v143
  %v512 = vunpack.c.h.b16 %v143
  %v513 = vunpack.c.l.b16 %v144
  %v514 = vunpack.c.l.b16 %v145
  %v515 = vunpack.c.h.b16 %v145
  %v516 = vunpack.c.l.b16 %v146
  %v517 = vunpack.c.l.b16 %v147
  %v518 = vunpack.c.h.b16 %v147
  %v519 = vunpack.c.l.b16 %v148
  %v520 = vpack.c.b16 %v331, %v328
  %v521 = vpack.c.b16 %v332, %v329
  %v522 = vpack.c.b16 %v333, %v330
  %v523 = vpack.c.b16 %v337, %v334
  %v524 = vpack.c.b16 %v338, %v335
  %v525 = vpack.c.b16 %v339, %v336
  %v526 = vpack.c.b16 %v343, %v340
  %v527 = vpack.c.b16 %v344, %v341
  %v528 = vpack.c.b16 %v345, %v342
  %v529 = vpack.c.b16 %v349, %v346
  %v530 = vpack.c.b16 %v350, %v347
  %v531 = vpack.c.b16 %v351, %v348
  %v532 = vpack.c.b16 %v355, %v352
  %v533 = vpack.c.b16 %v356, %v353
  %v534 = vpack.c.b16 %v357, %v354
  %v535 = vpack.c.b16 %v361, %v358
  %v536 = vpack.c.b16 %v362, %v359
  %v537 = vpack.c.b16 %v363, %v360
  %v538 = vpack.c.b16 %v367, %v364
  %v539 = vpack.c.b16 %v368, %v365
  %v540 = vpack.c.b16 %v369, %v366
  %v541 = vpack.c.b16 %v373, %v370
  %v542 = vpack.c.b16 %v374, %v371
  %v543 = vpack.c.b16 %v375, %v372
  %v544 = vpack.c.b16 %v379, %v376
  %v545 = vpack.c.b16 %v380, %v377
  %v546 = vpack.c.b16 %v381, %v378
  %v547 = vpack.c.b16 %v385, %v382
  %v548 = vpack.c.b16 %v386, %v383
  %v549 = vpack.c.b16 %v387, %v384
  %v550 = vpack.c.b16 %v391, %v388
  %v551 = vpack.c.b16 %v392, %v389
  %v552 = vpack.c.b16 %v393, %v390
  %v553 = vpack.c.b16 %v397, %v394
  %v554 = vpack.c.b16 %v398, %v395
  %v555 = vpack.c.b16 %v399, %v396
  %v556 = vpack.c.b16 %v403, %v400
  %v557 = vpack.c.b16 %v404, %v401
  %v558 = vpack.c.b16 %v405, %v402
  %v559 = vpack.c.b16 %v409, %v406
  %v560 = vpack.c.b16 %v410, %v407
  %v561 = vpack.c.b16 %v411, %v408
  %v562 = vpack.c.b16 %v415, %v412
  %v563 = vpack.c.b16 %v416, %v413
  %v564 = vpack.c.b16 %v417, %v414
  %v565 = vpack.c.b16 %v421, %v418
  %v566 = vpack.c.b16 %v422, %v419
  %v567 = vpack.c.b16 %v423, %v420
  %v568 = vpack.c.b16 %v427, %v424
  %v569 = vpack.c.b16 %v428, %v425
  %v570 = vpack.c.b16 %v429, %v426
  %v571 = vpack.c.b16 %v433, %v430
  %v572 = vpack.c.b16 %v434, %v431
  %v573 = vpack.c.b16 %v435, %v432
  %v574 = vpack.c.b16 %v439, %v436
  %v575 = vpack.c.b16 %v440, %v437
  %v576 = vpack.c.b16 %v441, %v438
  %v577 = vpack.c.b16 %v445, %v442
  %v578 = vpack.c.b16 %v446, %v443
  %v579 = vpack.c.b16 %v447, %v444
  %v580 = vpack.c.b16 %v451, %v448
  %v581 = vpack.c.b16 %v452, %v449
  %v582 = vpack.c.b16 %v453, %v450
  %v583 = vpack.c.b16 %v457, %v454
  %v584 = vpack.c.b16 %v458, %v455
  %v585 = vpack.c.b16 %v459, %v456
  %v586 = vpack.c.b16 %v463, %v460
  %v587 = vpack.c.b16 %v464, %v461
  %v588 = vpack.c.b16 %v465, %v462
  %v589 = vpack.c.b16 %v469, %v466
  %v590 = vpack.c.b16 %v470, %v467
  %v591 = vpack.c.b16 %v471, %v468
  %v592 = vpack.c.b16 %v475, %v472
  %v593 = vpack.c.b16 %v476, %v473
  %v594 = vpack.c.b16 %v477, %v474
  %v595 = vpack.c.b16 %v481, %v478
  %v596 = vpack.c.b16 %v482, %v479
  %v597 = vpack.c.b16 %v483, %v480
  %v598 = vpack.c.b16 %v487, %v484
  %v599 = vpack.c.b16 %v488, %v485
  %v600 = vpack.c.b16 %v489, %v486
  %v601 = vpack.c.b16 %v493, %v490
  %v602 = vpack.c.b16 %v494, %v491
  %v603 = vpack.c.b16 %v495, %v492
  %v604 = vpack.c.b16 %v499, %v496
  %v605 = vpack.c.b16 %v500, %v497
  %v606 = vpack.c.b16 %v501, %v498
  %v607 = vpack.c.b16 %v505, %v502
  %v608 = vpack.c.b16 %v506, %v503
  %v609 = vpack.c.b16 %v507, %v504
  %v610 = vpack.c.b16 %v511, %v508
  %v611 = vpack.c.b16 %v512, %v509
  %v612 = vpack.c.b16 %v513, %v510
  %v613 = vpack.c.b16 %v517, %v514
  %v614 = vpack.c.b16 %v518, %v515
  %v615 = vpack.c.b16 %v519, %v516
  %712 = vmatprep.subr.bf16.mxu0 %v542
  %713 = vmatpush1.bf16.msra.mxu0 %v541
  %714 = vmatprep.subr.bf16.mxu0 %v539
  %715 = vmatpush1.bf16.msra.mxu0 %v538
  %716 = vmatprep.subr.bf16.mxu0 %v536
  %717 = vmatpush1.bf16.msra.mxu0 %v535
  %718 = vmatprep.subr.bf16.mxu0 %v533
  %719 = vmatpush1.bf16.msra.mxu0 %v532
  %720 = vmatprep.subr.bf16.mxu0 %v530
  %721 = vmatpush1.bf16.msra.mxu0 %v529
  %722 = vmatprep.subr.bf16.mxu0 %v527
  %723 = vmatpush1.bf16.msra.mxu0 %v526
  %724 = vmatprep.subr.bf16.mxu0 %v524
  %725 = vmatpush1.bf16.msra.mxu0 %v523
  %726 = vmatprep.subr.bf16.mxu0 %v521
  %727 = vmatpush1.bf16.msra.mxu0 %v520
  %728 = vmatprep.subr.bf16.mxu0 %v566
  %729 = vmatpush2.bf16.msra.mxu0 %v565
  %730 = vmatprep.subr.bf16.mxu0 %v563
  %731 = vmatpush2.bf16.msra.mxu0 %v562
  %732 = vmatprep.subr.bf16.mxu0 %v560
  %733 = vmatpush2.bf16.msra.mxu0 %v559
  %734 = vmatprep.subr.bf16.mxu0 %v557
  %735 = vmatpush2.bf16.msra.mxu0 %v556
  %736 = vmatprep.subr.bf16.mxu0 %v554
  %737 = vmatpush2.bf16.msra.mxu0 %v553
  %738 = vmatprep.subr.bf16.mxu0 %v551
  %739 = vmatpush2.bf16.msra.mxu0 %v550
  %740 = vmatprep.subr.bf16.mxu0 %v548
  %741 = vmatpush2.bf16.msra.mxu0 %v547
  %742 = vmatprep.subr.bf16.mxu0 %v545
  %743 = vmatpush2.bf16.msra.mxu0 %v544
  %744 = vmatprep.mubr.bf16.mxu0 %v185
  %745 = vmatmul.mubr.bf16.gmra.mxu0 %v184
  %v746 = vpop.f32.mrf.mxu0
  %v747 = vadd.f32 %v154, %v746
  %v748 = vpop.f32.mrf.mxu0
  %v749 = vadd.f32 %v158, %v748
  %v750 = vpop.f32.mrf.mxu0
  %v751 = vadd.f32 %v154, %v750
  %v752 = vpop.f32.mrf.mxu0
  %v753 = vadd.f32 %v158, %v752
  %754 = vmatprep.mubr.bf16.mxu0 %v189
  %755 = vmatmul.mubr.bf16.gmra.mxu0 %v188
  %v756 = vpop.f32.mrf.mxu0
  %v757 = vadd.f32 %v154, %v756
  %v758 = vpop.f32.mrf.mxu0
  %v759 = vadd.f32 %v158, %v758
  %v760 = vpop.f32.mrf.mxu0
  %v761 = vpop.f32.mrf.mxu0
  %762 = vdwg.mxu0
  %763 = vmatprep.subr.bf16.mxu0 %v590
  %764 = vmatpush1.bf16.msra.mxu0 %v589
  %765 = vmatprep.subr.bf16.mxu0 %v587
  %766 = vmatpush1.bf16.msra.mxu0 %v586
  %767 = vmatprep.subr.bf16.mxu0 %v584
  %768 = vmatpush1.bf16.msra.mxu0 %v583
  %769 = vmatprep.subr.bf16.mxu0 %v581
  %770 = vmatpush1.bf16.msra.mxu0 %v580
  %771 = vmatprep.subr.bf16.mxu0 %v578
  %772 = vmatpush1.bf16.msra.mxu0 %v577
  %773 = vmatprep.subr.bf16.mxu0 %v575
  %774 = vmatpush1.bf16.msra.mxu0 %v574
  %775 = vmatprep.subr.bf16.mxu0 %v572
  %776 = vmatpush1.bf16.msra.mxu0 %v571
  %777 = vmatprep.subr.bf16.mxu0 %v569
  %778 = vmatpush1.bf16.msra.mxu0 %v568
  %779 = vmatprep.subr.bf16.mxu0 %v614
  %780 = vmatpush2.bf16.msra.mxu0 %v613
  %781 = vmatprep.subr.bf16.mxu0 %v611
  %782 = vmatpush2.bf16.msra.mxu0 %v610
  %783 = vmatprep.subr.bf16.mxu0 %v608
  %784 = vmatpush2.bf16.msra.mxu0 %v607
  %785 = vmatprep.subr.bf16.mxu0 %v605
  %786 = vmatpush2.bf16.msra.mxu0 %v604
  %787 = vmatprep.subr.bf16.mxu0 %v602
  %788 = vmatpush2.bf16.msra.mxu0 %v601
  %789 = vmatprep.subr.bf16.mxu0 %v599
  %790 = vmatpush2.bf16.msra.mxu0 %v598
  %791 = vmatprep.subr.bf16.mxu0 %v596
  %792 = vmatpush2.bf16.msra.mxu0 %v595
  %793 = vmatprep.subr.bf16.mxu0 %v593
  %794 = vmatpush2.bf16.msra.mxu0 %v592
  %795 = vmatprep.mubr.bf16.mxu0 %v187
  %796 = vmatmul.mubr.bf16.gmra.mxu0 %v186
  %v797 = vpop.f32.mrf.mxu0
  %v798 = vadd.f32 %v747, %v797
  %v799 = vpop.f32.mrf.mxu0
  %v800 = vadd.f32 %v749, %v799
  %v801 = vpop.f32.mrf.mxu0
  %v802 = vadd.f32 %v751, %v801
  %v803 = vpop.f32.mrf.mxu0
  %v804 = vadd.f32 %v753, %v803
  %805 = vmatprep.mubr.bf16.mxu0 %v191
  %806 = vmatmul.mubr.bf16.gmra.mxu0 %v190
  %v807 = vpop.f32.mrf.mxu0
  %v808 = vadd.f32 %v757, %v807
  %v809 = vpop.f32.mrf.mxu0
  %v810 = vadd.f32 %v759, %v809
  %v811 = vpop.f32.mrf.mxu0
  %v812 = vpop.f32.mrf.mxu0
  %813 = vdwg.mxu0
  %814 = vmatprep.subr.bf16.mxu0 0
  %815 = vmatpush1.bf16.msra.mxu0 %v543
  %816 = vmatprep.subr.bf16.mxu0 0
  %817 = vmatpush1.bf16.msra.mxu0 %v540
  %818 = vmatprep.subr.bf16.mxu0 0
  %819 = vmatpush1.bf16.msra.mxu0 %v537
  %820 = vmatprep.subr.bf16.mxu0 0
  %821 = vmatpush1.bf16.msra.mxu0 %v534
  %822 = vmatprep.subr.bf16.mxu0 0
  %823 = vmatpush1.bf16.msra.mxu0 %v531
  %824 = vmatprep.subr.bf16.mxu0 0
  %825 = vmatpush1.bf16.msra.mxu0 %v528
  %826 = vmatprep.subr.bf16.mxu0 0
  %827 = vmatpush1.bf16.msra.mxu0 %v525
  %828 = vmatprep.subr.bf16.mxu0 0
  %829 = vmatpush1.bf16.msra.mxu0 %v522
  %830 = vmatprep.subr.bf16.mxu0 0
  %831 = vmatpush2.bf16.msra.mxu0 %v567
  %832 = vmatprep.subr.bf16.mxu0 0
  %833 = vmatpush2.bf16.msra.mxu0 %v564
  %834 = vmatprep.subr.bf16.mxu0 0
  %835 = vmatpush2.bf16.msra.mxu0 %v561
  %836 = vmatprep.subr.bf16.mxu0 0
  %837 = vmatpush2.bf16.msra.mxu0 %v558
  %838 = vmatprep.subr.bf16.mxu0 0
  %839 = vmatpush2.bf16.msra.mxu0 %v555
  %840 = vmatprep.subr.bf16.mxu0 0
  %841 = vmatpush2.bf16.msra.mxu0 %v552
  %842 = vmatprep.subr.bf16.mxu0 0
  %843 = vmatpush2.bf16.msra.mxu0 %v549
  %844 = vmatprep.subr.bf16.mxu0 0
  %845 = vmatpush2.bf16.msra.mxu0 %v546
  %846 = vmatprep.mubr.bf16.mxu0 %v185
  %847 = vmatmul.mubr.bf16.gmra.mxu0 %v184
  %v848 = vpop.f32.mrf.mxu0
  %v849 = vadd.f32 %v162, %v848
  %v850 = vpop.f32.mrf.mxu0
  %v851 = vpop.f32.mrf.mxu0
  %v852 = vadd.f32 %v162, %v851
  %v853 = vpop.f32.mrf.mxu0
  %854 = vmatprep.mubr.bf16.mxu0 %v189
  %855 = vmatmul.mubr.bf16.gmra.mxu0 %v188
  %v856 = vpop.f32.mrf.mxu0
  %v857 = vadd.f32 %v162, %v856
  %v858 = vpop.f32.mrf.mxu0
  %v859 = vpop.f32.mrf.mxu0
  %v860 = vpop.f32.mrf.mxu0
  %861 = vdwg.mxu0
  %862 = vmatprep.subr.bf16.mxu0 0
  %863 = vmatpush1.bf16.msra.mxu0 %v591
  %864 = vmatprep.subr.bf16.mxu0 0
  %865 = vmatpush1.bf16.msra.mxu0 %v588
  %866 = vmatprep.subr.bf16.mxu0 0
  %867 = vmatpush1.bf16.msra.mxu0 %v585
  %868 = vmatprep.subr.bf16.mxu0 0
  %869 = vmatpush1.bf16.msra.mxu0 %v582
  %870 = vmatprep.subr.bf16.mxu0 0
  %871 = vmatpush1.bf16.msra.mxu0 %v579
  %872 = vmatprep.subr.bf16.mxu0 0
  %873 = vmatpush1.bf16.msra.mxu0 %v576
  %874 = vmatprep.subr.bf16.mxu0 0
  %875 = vmatpush1.bf16.msra.mxu0 %v573
  %876 = vmatprep.subr.bf16.mxu0 0
  %877 = vmatpush1.bf16.msra.mxu0 %v570
  %878 = vmatprep.subr.bf16.mxu0 0
  %879 = vmatpush2.bf16.msra.mxu0 %v615
  %880 = vmatprep.subr.bf16.mxu0 0
  %881 = vmatpush2.bf16.msra.mxu0 %v612
  %882 = vmatprep.subr.bf16.mxu0 0
  %883 = vmatpush2.bf16.msra.mxu0 %v609
  %884 = vmatprep.subr.bf16.mxu0 0
  %885 = vmatpush2.bf16.msra.mxu0 %v606
  %886 = vmatprep.subr.bf16.mxu0 0
  %887 = vmatpush2.bf16.msra.mxu0 %v603
  %888 = vmatprep.subr.bf16.mxu0 0
  %889 = vmatpush2.bf16.msra.mxu0 %v600
  %890 = vmatprep.subr.bf16.mxu0 0
  %891 = vmatpush2.bf16.msra.mxu0 %v597
  %892 = vmatprep.subr.bf16.mxu0 0
  %893 = vmatpush2.bf16.msra.mxu0 %v594
  %894 = vmatprep.mubr.bf16.mxu0 %v187
  %895 = vmatmul.mubr.bf16.gmra.mxu0 %v186
  %v896 = vpop.f32.mrf.mxu0
  %v897 = vadd.f32 %v849, %v896
  %v898 = vpop.f32.mrf.mxu0
  %v899 = vpop.f32.mrf.mxu0
  %v900 = vadd.f32 %v852, %v899
  %v901 = vpop.f32.mrf.mxu0
  %902 = vmatprep.mubr.bf16.mxu0 %v191
  %903 = vmatmul.mubr.bf16.gmra.mxu0 %v190
  %v904 = vpop.f32.mrf.mxu0
  %v905 = vadd.f32 %v857, %v904
  %v906 = vpop.f32.mrf.mxu0
  %v907 = vpop.f32.mrf.mxu0
  %v908 = vpop.f32.mrf.mxu0
  %909 = vdwg.mxu0
  %v910 = vmax.f32 %v798, 0.0
  %v911 = vmax.f32 %v800, 0.0
  %v912 = vmax.f32 %v897, 0.0
  %v913 = vmax.f32 %v802, 0.0
  %v914 = vmax.f32 %v804, 0.0
  %v915 = vmax.f32 %v900, 0.0
  %v916 = vmax.f32 %v808, 0.0
  %v917 = vmax.f32 %v810, 0.0
  %v918 = vmax.f32 %v905, 0.0
  %919 = vst [vmem:[%s3] sm:$0xff] %v910
  %920 = vst [vmem:[%s3 + $0x8] sm:$0xff] %v911
  %921 = vst [vmem:[%s3 + $0x10] sm:$0xff] %v912
  %922 = vst [vmem:[%s3 + $0x18] sm:$0xff] %v913
  %923 = vst [vmem:[%s3 + $0x20] sm:$0xff] %v914
  %924 = vst [vmem:[%s3 + $0x28] sm:$0xff] %v915
  %925 = vst [vmem:[%s3 + $0x30] sm:$0xff] %v916
  %926 = vst [vmem:[%s3 + $0x38] sm:$0xff] %v917
  %927 = vst [vmem:[%s3 + $0x40] sm:$0xff] %v918
  // Predicated region
  $region14: #{squeezenet_forward.33} parent=0 // pred_check
    _
  $region15: #{squeezenet_forward.33} parent=0 // pred_check_branch
    %929 = sbr.rel (0) target = $region17
  $region16: #{squeezenet_forward.33} parent=0 // pred_region
    _
  $region17: #{squeezenet_forward.33} parent=0 // pred_fallthru
    _
  // Predicated region
  $region18: #{squeezenet_forward.33} parent=0 // pred_check
    _
  $region19: #{squeezenet_forward.33} parent=0 // pred_check_branch
    %931 = sbr.rel (0) target = $region21
  $region20: #{squeezenet_forward.33} parent=0 // pred_region
    _
  $region21: #{squeezenet_forward.33} parent=0 // pred_fallthru
    _

// kernel: squeezenet_forward.34
$region0: #{squeezenet_forward.34}
  #allocation0 [shape = 'u32[]', space=smem, size = 0x4, offset = 0x4, fixed_abs, tag = 'smem constant byte address 0x4 - core index']
  #allocation1 [shape = 'u32[144,128]{1,0:T(1,128)}', space=vmem, size = 0x12000, scoped, tag = 'internal scratch']
  %s0 = inlined_call_operand.vmem [shape: bf16[24,384], index: 0, kind: input, shape index: {}]
  %s1 = inlined_call_operand.vmem [shape: bf16[384,128], index: 1, kind: input, shape index: {}]
  %s2 = inlined_call_operand.vmem [shape: f32[1,128], index: 2, kind: input, shape index: {}]
  %s3 = inlined_call_operand.vmem [shape: f32[24,128], index: 3, kind: output, shape index: {}]
  %s4 = sld [smem:[#allocation0]]
  $region22: #{squeezenet_forward.34} parent=0
    _
  %s6 = ssub.s32 1, %s4
  %s7 = scalar_select 0, %s6, %s4
  // Predicated region
  $region2: #{squeezenet_forward.34} parent=0 // pred_check
    _
  $region3: #{squeezenet_forward.34} parent=0 // pred_check_branch
    %9 = sbr.rel (0) target = $region5
  $region4: #{squeezenet_forward.34} parent=0 // pred_region
    _
  $region5: #{squeezenet_forward.34} parent=0 // pred_fallthru
    _
  // Predicated region
  $region6: #{squeezenet_forward.34} parent=0 // pred_check
    _
  $region7: #{squeezenet_forward.34} parent=0 // pred_check_branch
    %11 = sbr.rel (0) target = $region9
  $region8: #{squeezenet_forward.34} parent=0 // pred_region
    _
  $region9: #{squeezenet_forward.34} parent=0 // pred_fallthru
    _
  // Predicated region
  $region10: #{squeezenet_forward.34} parent=0 // pred_check
    _
  $region11: #{squeezenet_forward.34} parent=0 // pred_check_branch
    %13 = sbr.rel (0) target = $region13
  $region12: #{squeezenet_forward.34} parent=0 // pred_region
    _
  $region13: #{squeezenet_forward.34} parent=0 // pred_fallthru
    _
  %v15 = vld [vmem:[%s0] sm:$0xff]
  %v16 = vld [vmem:[%s0 + $0x8] sm:$0xf]
  %v17 = vld [vmem:[%s0 + $0xc] sm:$0xff]
  %v18 = vld [vmem:[%s0 + $0x14] sm:$0xf]
  %v19 = vld [vmem:[%s0 + $0x18] sm:$0xff]
  %v20 = vld [vmem:[%s0 + $0x20] sm:$0xf]
  %v21 = vld [vmem:[%s1] sm:$0xf]
  %v22 = vld [vmem:[%s1 + $0x4] sm:$0xf]
  %v23 = vld [vmem:[%s1 + $0x8] sm:$0xf]
  %v24 = vld [vmem:[%s1 + $0xc] sm:$0xf]
  %v25 = vld [vmem:[%s1 + $0x10] sm:$0xf]
  %v26 = vld [vmem:[%s1 + $0x14] sm:$0xf]
  %v27 = vld [vmem:[%s1 + $0x18] sm:$0xf]
  %v28 = vld [vmem:[%s1 + $0x1c] sm:$0xf]
  %v29 = vld [vmem:[%s1 + $0x20] sm:$0xf]
  %v30 = vld [vmem:[%s1 + $0x24] sm:$0xf]
  %v31 = vld [vmem:[%s1 + $0x28] sm:$0xf]
  %v32 = vld [vmem:[%s1 + $0x2c] sm:$0xf]
  %v33 = vld [vmem:[%s1 + $0x30] sm:$0xf]
  %v34 = vld [vmem:[%s1 + $0x34] sm:$0xf]
  %v35 = vld [vmem:[%s1 + $0x38] sm:$0xf]
  %v36 = vld [vmem:[%s1 + $0x3c] sm:$0xf]
  %v37 = vld [vmem:[%s1 + $0x40] sm:$0xf]
  %v38 = vld [vmem:[%s1 + $0x44] sm:$0xf]
  %v39 = vld [vmem:[%s1 + $0x48] sm:$0xf]
  %v40 = vld [vmem:[%s1 + $0x4c] sm:$0xf]
  %v41 = vld [vmem:[%s1 + $0x50] sm:$0xf]
  %v42 = vld [vmem:[%s1 + $0x54] sm:$0xf]
  %v43 = vld [vmem:[%s1 + $0x58] sm:$0xf]
  %v44 = vld [vmem:[%s1 + $0x5c] sm:$0xf]
  %v45 = vld [vmem:[%s1 + $0x60] sm:$0xf]
  %v46 = vld [vmem:[%s1 + $0x64] sm:$0xf]
  %v47 = vld [vmem:[%s1 + $0x68] sm:$0xf]
  %v48 = vld [vmem:[%s1 + $0x6c] sm:$0xf]
  %v49 = vld [vmem:[%s1 + $0x70] sm:$0xf]
  %v50 = vld [vmem:[%s1 + $0x74] sm:$0xf]
  %v51 = vld [vmem:[%s1 + $0x78] sm:$0xf]
  %v52 = vld [vmem:[%s1 + $0x7c] sm:$0xf]
  %v53 = vld [vmem:[%s1 + $0x80] sm:$0xf]
  %v54 = vld [vmem:[%s1 + $0x84] sm:$0xf]
  %v55 = vld [vmem:[%s1 + $0x88] sm:$0xf]
  %v56 = vld [vmem:[%s1 + $0x8c] sm:$0xf]
  %v57 = vld [vmem:[%s1 + $0x90] sm:$0xf]
  %v58 = vld [vmem:[%s1 + $0x94] sm:$0xf]
  %v59 = vld [vmem:[%s1 + $0x98] sm:$0xf]
  %v60 = vld [vmem:[%s1 + $0x9c] sm:$0xf]
  %v61 = vld [vmem:[%s1 + $0xa0] sm:$0xf]
  %v62 = vld [vmem:[%s1 + $0xa4] sm:$0xf]
  %v63 = vld [vmem:[%s1 + $0xa8] sm:$0xf]
  %v64 = vld [vmem:[%s1 + $0xac] sm:$0xf]
  %v65 = vld [vmem:[%s1 + $0xb0] sm:$0xf]
  %v66 = vld [vmem:[%s1 + $0xb4] sm:$0xf]
  %v67 = vld [vmem:[%s1 + $0xb8] sm:$0xf]
  %v68 = vld [vmem:[%s1 + $0xbc] sm:$0xf]
  %v69 = vld [vmem:[%s2] sm:$0x1]
  %v71 = vlaneseq
  %v72 = vshrl.u32 %v71, 7
  %v73 = vsub.s32 0, %v72
  %v74 = vrot.slane %v69, %v73
  %v82 = vunpack.c.l.b16 %v15
  %v83 = vunpack.c.h.b16 %v15
  %v84 = vunpack.c.l.b16 %v16
  %v85 = vunpack.c.l.b16 %v17
  %v86 = vunpack.c.h.b16 %v17
  %v87 = vunpack.c.l.b16 %v18
  %v88 = vunpack.c.l.b16 %v19
  %v89 = vunpack.c.h.b16 %v19
  %v90 = vunpack.c.l.b16 %v20
  %v91 = vpack.c.b16 %v85, %v82
  %v92 = vpack.c.b16 %v86, %v83
  %v93 = vpack.c.b16 %v87, %v84
  %v94 = vpack.c.b16 %v88, %v88
  %v95 = vpack.c.b16 %v89, %v89
  %v96 = vpack.c.b16 %v90, %v90
  %v151 = vunpack.c.l.b16 %v21
  %v152 = vunpack.c.l.b16 %v22
  %v153 = vunpack.c.l.b16 %v23
  %v154 = vunpack.c.l.b16 %v24
  %v155 = vunpack.c.l.b16 %v25
  %v156 = vunpack.c.l.b16 %v26
  %v157 = vunpack.c.l.b16 %v27
  %v158 = vunpack.c.l.b16 %v28
  %v159 = vunpack.c.l.b16 %v29
  %v160 = vunpack.c.l.b16 %v30
  %v161 = vunpack.c.l.b16 %v31
  %v162 = vunpack.c.l.b16 %v32
  %v163 = vunpack.c.l.b16 %v33
  %v164 = vunpack.c.l.b16 %v34
  %v165 = vunpack.c.l.b16 %v35
  %v166 = vunpack.c.l.b16 %v36
  %v167 = vunpack.c.l.b16 %v37
  %v168 = vunpack.c.l.b16 %v38
  %v169 = vunpack.c.l.b16 %v39
  %v170 = vunpack.c.l.b16 %v40
  %v171 = vunpack.c.l.b16 %v41
  %v172 = vunpack.c.l.b16 %v42
  %v173 = vunpack.c.l.b16 %v43
  %v174 = vunpack.c.l.b16 %v44
  %v175 = vunpack.c.l.b16 %v45
  %v176 = vunpack.c.l.b16 %v46
  %v177 = vunpack.c.l.b16 %v47
  %v178 = vunpack.c.l.b16 %v48
  %v179 = vunpack.c.l.b16 %v49
  %v180 = vunpack.c.l.b16 %v50
  %v181 = vunpack.c.l.b16 %v51
  %v182 = vunpack.c.l.b16 %v52
  %v183 = vunpack.c.l.b16 %v53
  %v184 = vunpack.c.l.b16 %v54
  %v185 = vunpack.c.l.b16 %v55
  %v186 = vunpack.c.l.b16 %v56
  %v187 = vunpack.c.l.b16 %v57
  %v188 = vunpack.c.l.b16 %v58
  %v189 = vunpack.c.l.b16 %v59
  %v190 = vunpack.c.l.b16 %v60
  %v191 = vunpack.c.l.b16 %v61
  %v192 = vunpack.c.l.b16 %v62
  %v193 = vunpack.c.l.b16 %v63
  %v194 = vunpack.c.l.b16 %v64
  %v195 = vunpack.c.l.b16 %v65
  %v196 = vunpack.c.l.b16 %v66
  %v197 = vunpack.c.l.b16 %v67
  %v198 = vunpack.c.l.b16 %v68
  %v199 = vpack.c.b16 %v152, %v151
  %v200 = vpack.c.b16 %v154, %v153
  %v201 = vpack.c.b16 %v156, %v155
  %v202 = vpack.c.b16 %v158, %v157
  %v203 = vpack.c.b16 %v160, %v159
  %v204 = vpack.c.b16 %v162, %v161
  %v205 = vpack.c.b16 %v164, %v163
  %v206 = vpack.c.b16 %v166, %v165
  %v207 = vpack.c.b16 %v168, %v167
  %v208 = vpack.c.b16 %v170, %v169
  %v209 = vpack.c.b16 %v172, %v171
  %v210 = vpack.c.b16 %v174, %v173
  %v211 = vpack.c.b16 %v176, %v175
  %v212 = vpack.c.b16 %v178, %v177
  %v213 = vpack.c.b16 %v180, %v179
  %v214 = vpack.c.b16 %v182, %v181
  %v215 = vpack.c.b16 %v184, %v183
  %v216 = vpack.c.b16 %v186, %v185
  %v217 = vpack.c.b16 %v188, %v187
  %v218 = vpack.c.b16 %v190, %v189
  %v219 = vpack.c.b16 %v192, %v191
  %v220 = vpack.c.b16 %v194, %v193
  %v221 = vpack.c.b16 %v196, %v195
  %v222 = vpack.c.b16 %v198, %v197
  %247 = vmatprep.subr.bf16.mxu0 0
  %248 = vmatpush1.bf16.msra.mxu0 %v206
  %249 = vmatprep.subr.bf16.mxu0 0
  %250 = vmatpush1.bf16.msra.mxu0 %v205
  %251 = vmatprep.subr.bf16.mxu0 0
  %252 = vmatpush1.bf16.msra.mxu0 %v204
  %253 = vmatprep.subr.bf16.mxu0 0
  %254 = vmatpush1.bf16.msra.mxu0 %v203
  %255 = vmatprep.subr.bf16.mxu0 0
  %256 = vmatpush1.bf16.msra.mxu0 %v202
  %257 = vmatprep.subr.bf16.mxu0 0
  %258 = vmatpush1.bf16.msra.mxu0 %v201
  %259 = vmatprep.subr.bf16.mxu0 0
  %260 = vmatpush1.bf16.msra.mxu0 %v200
  %261 = vmatprep.subr.bf16.mxu0 0
  %262 = vmatpush1.bf16.msra.mxu0 %v199
  %263 = vmatprep.subr.bf16.mxu0 0
  %264 = vmatpush2.bf16.msra.mxu0 %v214
  %265 = vmatprep.subr.bf16.mxu0 0
  %266 = vmatpush2.bf16.msra.mxu0 %v213
  %267 = vmatprep.subr.bf16.mxu0 0
  %268 = vmatpush2.bf16.msra.mxu0 %v212
  %269 = vmatprep.subr.bf16.mxu0 0
  %270 = vmatpush2.bf16.msra.mxu0 %v211
  %271 = vmatprep.subr.bf16.mxu0 0
  %272 = vmatpush2.bf16.msra.mxu0 %v210
  %273 = vmatprep.subr.bf16.mxu0 0
  %274 = vmatpush2.bf16.msra.mxu0 %v209
  %275 = vmatprep.subr.bf16.mxu0 0
  %276 = vmatpush2.bf16.msra.mxu0 %v208
  %277 = vmatprep.subr.bf16.mxu0 0
  %278 = vmatpush2.bf16.msra.mxu0 %v207
  %279 = vmatprep.mubr.bf16.mxu0 %v92
  %280 = vmatmul.mubr.bf16.gmra.mxu0 %v91
  %v281 = vpop.f32.mrf.mxu0
  %v282 = vadd.f32 %v74, %v281
  %v283 = vpop.f32.mrf.mxu0
  %v284 = vpop.f32.mrf.mxu0
  %v285 = vadd.f32 %v74, %v284
  %v286 = vpop.f32.mrf.mxu0
  %287 = vmatprep.mubr.bf16.mxu0 %v95
  %288 = vmatmul.mubr.bf16.gmra.mxu0 %v94
  %v289 = vpop.f32.mrf.mxu0
  %v290 = vadd.f32 %v74, %v289
  %v291 = vpop.f32.mrf.mxu0
  %v292 = vpop.f32.mrf.mxu0
  %v293 = vpop.f32.mrf.mxu0
  %294 = vdwg.mxu0
  %295 = vmatprep.subr.bf16.mxu0 0
  %296 = vmatpush1.bf16.msra.mxu0 %v222
  %297 = vmatprep.subr.bf16.mxu0 0
  %298 = vmatpush1.bf16.msra.mxu0 %v221
  %299 = vmatprep.subr.bf16.mxu0 0
  %300 = vmatpush1.bf16.msra.mxu0 %v220
  %301 = vmatprep.subr.bf16.mxu0 0
  %302 = vmatpush1.bf16.msra.mxu0 %v219
  %303 = vmatprep.subr.bf16.mxu0 0
  %304 = vmatpush1.bf16.msra.mxu0 %v218
  %305 = vmatprep.subr.bf16.mxu0 0
  %306 = vmatpush1.bf16.msra.mxu0 %v217
  %307 = vmatprep.subr.bf16.mxu0 0
  %308 = vmatpush1.bf16.msra.mxu0 %v216
  %309 = vmatprep.subr.bf16.mxu0 0
  %310 = vmatpush1.bf16.msra.mxu0 %v215
  %311 = vmatprep.subr.bf16.mxu0 0
  %312 = vmatpush2.bf16.msra.mxu0 0
  %313 = vmatprep.subr.bf16.mxu0 0
  %314 = vmatpush2.bf16.msra.mxu0 0
  %315 = vmatprep.subr.bf16.mxu0 0
  %316 = vmatpush2.bf16.msra.mxu0 0
  %317 = vmatprep.subr.bf16.mxu0 0
  %318 = vmatpush2.bf16.msra.mxu0 0
  %319 = vmatprep.subr.bf16.mxu0 0
  %320 = vmatpush2.bf16.msra.mxu0 0
  %321 = vmatprep.subr.bf16.mxu0 0
  %322 = vmatpush2.bf16.msra.mxu0 0
  %323 = vmatprep.subr.bf16.mxu0 0
  %324 = vmatpush2.bf16.msra.mxu0 0
  %325 = vmatprep.subr.bf16.mxu0 0
  %326 = vmatpush2.bf16.msra.mxu0 0
  %327 = vmatprep.mubr.bf16.mxu0 0
  %328 = vmatmul.mubr.bf16.gmra.mxu0 %v93
  %v329 = vpop.f32.mrf.mxu0
  %v330 = vadd.f32 %v282, %v329
  %v331 = vpop.f32.mrf.mxu0
  %v332 = vpop.f32.mrf.mxu0
  %v333 = vadd.f32 %v285, %v332
  %v334 = vpop.f32.mrf.mxu0
  %335 = vmatprep.mubr.bf16.mxu0 0
  %336 = vmatmul.mubr.bf16.gmra.mxu0 %v96
  %v337 = vpop.f32.mrf.mxu0
  %v338 = vadd.f32 %v290, %v337
  %v339 = vpop.f32.mrf.mxu0
  %v340 = vpop.f32.mrf.mxu0
  %v341 = vpop.f32.mrf.mxu0
  %342 = vdwg.mxu0
  %v343 = vmax.f32 %v330, 0.0
  %v344 = vmax.f32 %v333, 0.0
  %v345 = vmax.f32 %v338, 0.0
  %346 = vst [vmem:[%s3] sm:$0xff] %v343
  %347 = vst [vmem:[%s3 + $0x8] sm:$0xff] %v344
  %348 = vst [vmem:[%s3 + $0x10] sm:$0xff] %v345
  // Predicated region
  $region14: #{squeezenet_forward.34} parent=0 // pred_check
    _
  $region15: #{squeezenet_forward.34} parent=0 // pred_check_branch
    %350 = sbr.rel (0) target = $region17
  $region16: #{squeezenet_forward.34} parent=0 // pred_region
    _
  $region17: #{squeezenet_forward.34} parent=0 // pred_fallthru
    _
  // Predicated region
  $region18: #{squeezenet_forward.34} parent=0 // pred_check
    _
  $region19: #{squeezenet_forward.34} parent=0 // pred_check_branch
    %352 = sbr.rel (0) target = $region21
  $region20: #{squeezenet_forward.34} parent=0 // pred_region
    _
  $region21: #{squeezenet_forward.34} parent=0 // pred_fallthru
    _

// kernel: squeezenet_forward.38
$region0: #{squeezenet_forward.38}
  #allocation0 [shape = 'u32[]', space=smem, size = 0x4, offset = 0x4, fixed_abs, tag = 'smem constant byte address 0x4 - core index']
  #allocation1 [shape = 'u32[144,128]{1,0:T(1,128)}', space=vmem, size = 0x12000, scoped, tag = 'internal scratch']
  %s0 = inlined_call_operand.vmem [shape: f32[9,8,512], index: 0, kind: input, shape index: {}]
  %s1 = inlined_call_operand.vmem [shape: f32[8,512], index: 1, kind: output, shape index: {}]
  %s2 = sld [smem:[#allocation0]]
  $region14: #{squeezenet_forward.38} parent=0
    _
  %s4 = ssub.s32 1, %s2
  %s5 = scalar_select 0, %s4, %s2
  // Predicated region
  $region2: #{squeezenet_forward.38} parent=0 // pred_check
    _
  $region3: #{squeezenet_forward.38} parent=0 // pred_check_branch
    %7 = sbr.rel (0) target = $region5
  $region4: #{squeezenet_forward.38} parent=0 // pred_region
    _
  $region5: #{squeezenet_forward.38} parent=0 // pred_fallthru
    _
  %v8 = vld [vmem:[%s0] sm:$0xff]
  %v9 = vld [vmem:[%s0 + $0x8] sm:$0xff]
  %v10 = vld [vmem:[%s0 + $0x10] sm:$0xff]
  %v11 = vld [vmem:[%s0 + $0x18] sm:$0xff]
  %s12 = scalar_lea.vmem %s0, 32
  %v13 = vld [vmem:[%s12] sm:$0xff]
  %v14 = vld [vmem:[%s12 + $0x8] sm:$0xff]
  %v15 = vld [vmem:[%s12 + $0x10] sm:$0xff]
  %v16 = vld [vmem:[%s12 + $0x18] sm:$0xff]
  %v17 = vmax.f32 %v8, %v13
  %v18 = vmax.f32 %v9, %v14
  %v19 = vmax.f32 %v10, %v15
  %v20 = vmax.f32 %v11, %v16
  %s21 = scalar_lea.vmem %s0, 64
  %v22 = vld [vmem:[%s21] sm:$0xff]
  %v23 = vld [vmem:[%s21 + $0x8] sm:$0xff]
  %v24 = vld [vmem:[%s21 + $0x10] sm:$0xff]
  %v25 = vld [vmem:[%s21 + $0x18] sm:$0xff]
  %v26 = vmax.f32 %v17, %v22
  %v27 = vmax.f32 %v18, %v23
  %v28 = vmax.f32 %v19, %v24
  %v29 = vmax.f32 %v20, %v25
  %s30 = scalar_lea.vmem %s0, 96
  %v31 = vld [vmem:[%s30] sm:$0xff]
  %v32 = vld [vmem:[%s30 + $0x8] sm:$0xff]
  %v33 = vld [vmem:[%s30 + $0x10] sm:$0xff]
  %v34 = vld [vmem:[%s30 + $0x18] sm:$0xff]
  %v35 = vmax.f32 %v26, %v31
  %v36 = vmax.f32 %v27, %v32
  %v37 = vmax.f32 %v28, %v33
  %v38 = vmax.f32 %v29, %v34
  %s39 = scalar_lea.vmem %s0, 128
  %v40 = vld [vmem:[%s39] sm:$0xff]
  %v41 = vld [vmem:[%s39 + $0x8] sm:$0xff]
  %v42 = vld [vmem:[%s39 + $0x10] sm:$0xff]
  %v43 = vld [vmem:[%s39 + $0x18] sm:$0xff]
  %v44 = vmax.f32 %v35, %v40
  %v45 = vmax.f32 %v36, %v41
  %v46 = vmax.f32 %v37, %v42
  %v47 = vmax.f32 %v38, %v43
  %s48 = scalar_lea.vmem %s0, 160
  %v49 = vld [vmem:[%s48] sm:$0xff]
  %v50 = vld [vmem:[%s48 + $0x8] sm:$0xff]
  %v51 = vld [vmem:[%s48 + $0x10] sm:$0xff]
  %v52 = vld [vmem:[%s48 + $0x18] sm:$0xff]
  %v53 = vmax.f32 %v44, %v49
  %v54 = vmax.f32 %v45, %v50
  %v55 = vmax.f32 %v46, %v51
  %v56 = vmax.f32 %v47, %v52
  %s57 = scalar_lea.vmem %s0, 192
  %v58 = vld [vmem:[%s57] sm:$0xff]
  %v59 = vld [vmem:[%s57 + $0x8] sm:$0xff]
  %v60 = vld [vmem:[%s57 + $0x10] sm:$0xff]
  %v61 = vld [vmem:[%s57 + $0x18] sm:$0xff]
  %v62 = vmax.f32 %v53, %v58
  %v63 = vmax.f32 %v54, %v59
  %v64 = vmax.f32 %v55, %v60
  %v65 = vmax.f32 %v56, %v61
  %s66 = scalar_lea.vmem %s0, 224
  %v67 = vld [vmem:[%s66] sm:$0xff]
  %v68 = vld [vmem:[%s66 + $0x8] sm:$0xff]
  %v69 = vld [vmem:[%s66 + $0x10] sm:$0xff]
  %v70 = vld [vmem:[%s66 + $0x18] sm:$0xff]
  %v71 = vmax.f32 %v62, %v67
  %v72 = vmax.f32 %v63, %v68
  %v73 = vmax.f32 %v64, %v69
  %v74 = vmax.f32 %v65, %v70
  %s75 = scalar_lea.vmem %s0, 256
  %v76 = vld [vmem:[%s75] sm:$0xff]
  %v77 = vld [vmem:[%s75 + $0x8] sm:$0xff]
  %v78 = vld [vmem:[%s75 + $0x10] sm:$0xff]
  %v79 = vld [vmem:[%s75 + $0x18] sm:$0xff]
  %v80 = vmax.f32 %v71, %v76
  %v81 = vmax.f32 %v72, %v77
  %v82 = vmax.f32 %v73, %v78
  %v83 = vmax.f32 %v74, %v79
  %84 = vst [vmem:[%s1] sm:$0xff] %v80
  %85 = vst [vmem:[%s1 + $0x8] sm:$0xff] %v81
  %86 = vst [vmem:[%s1 + $0x10] sm:$0xff] %v82
  %87 = vst [vmem:[%s1 + $0x18] sm:$0xff] %v83
  // Predicated region
  $region6: #{squeezenet_forward.38} parent=0 // pred_check
    _
  $region7: #{squeezenet_forward.38} parent=0 // pred_check_branch
    %89 = sbr.rel (0) target = $region9
  $region8: #{squeezenet_forward.38} parent=0 // pred_region
    _
  $region9: #{squeezenet_forward.38} parent=0 // pred_fallthru
    _
  // Predicated region
  $region10: #{squeezenet_forward.38} parent=0 // pred_check
    _
  $region11: #{squeezenet_forward.38} parent=0 // pred_check_branch
    %91 = sbr.rel (0) target = $region13
  $region12: #{squeezenet_forward.38} parent=0 // pred_region
    _
  $region13: #{squeezenet_forward.38} parent=0 // pred_fallthru
    _

// kernel: squeezenet_forward.37
$region0: #{squeezenet_forward.37}
  #allocation0 [shape = 'u32[]', space=smem, size = 0x4, offset = 0x4, fixed_abs, tag = 'smem constant byte address 0x4 - core index']
  #allocation1 [shape = 'u32[144,128]{1,0:T(1,128)}', space=vmem, size = 0x12000, scoped, tag = 'internal scratch']
  %s0 = inlined_call_operand.vmem [shape: bf16[24,640], index: 0, kind: input, shape index: {}]
  %s1 = inlined_call_operand.vmem [shape: bf16[640,512], index: 1, kind: input, shape index: {}]
  %s2 = inlined_call_operand.vmem [shape: f32[1,512], index: 2, kind: input, shape index: {}]
  %s3 = inlined_call_operand.vmem [shape: f32[24,512], index: 3, kind: output, shape index: {}]
  %s4 = sld [smem:[#allocation0]]
  $region22: #{squeezenet_forward.37} parent=0
    _
  %s6 = ssub.s32 1, %s4
  %s7 = scalar_select 0, %s6, %s4
  // Predicated region
  $region2: #{squeezenet_forward.37} parent=0 // pred_check
    _
  $region3: #{squeezenet_forward.37} parent=0 // pred_check_branch
    %9 = sbr.rel (0) target = $region5
  $region4: #{squeezenet_forward.37} parent=0 // pred_region
    _
  $region5: #{squeezenet_forward.37} parent=0 // pred_fallthru
    _
  // Predicated region
  $region6: #{squeezenet_forward.37} parent=0 // pred_check
    _
  $region7: #{squeezenet_forward.37} parent=0 // pred_check_branch
    %11 = sbr.rel (0) target = $region9
  $region8: #{squeezenet_forward.37} parent=0 // pred_region
    _
  $region9: #{squeezenet_forward.37} parent=0 // pred_fallthru
    _
  // Predicated region
  $region10: #{squeezenet_forward.37} parent=0 // pred_check
    _
  $region11: #{squeezenet_forward.37} parent=0 // pred_check_branch
    %13 = sbr.rel (0) target = $region13
  $region12: #{squeezenet_forward.37} parent=0 // pred_region
    _
  $region13: #{squeezenet_forward.37} parent=0 // pred_fallthru
    _
  %v15 = vld [vmem:[%s0] sm:$0xff]
  %v16 = vld [vmem:[%s0 + $0x8] sm:$0xff]
  %v17 = vld [vmem:[%s0 + $0x10] sm:$0xf]
  %v18 = vld [vmem:[%s0 + $0x14] sm:$0xff]
  %v19 = vld [vmem:[%s0 + $0x1c] sm:$0xff]
  %v20 = vld [vmem:[%s0 + $0x24] sm:$0xf]
  %v21 = vld [vmem:[%s0 + $0x28] sm:$0xff]
  %v22 = vld [vmem:[%s0 + $0x30] sm:$0xff]
  %v23 = vld [vmem:[%s0 + $0x38] sm:$0xf]
  %v24 = vld [vmem:[%s1] sm:$0xff]
  %v25 = vld [vmem:[%s1 + $0x8] sm:$0xff]
  %v26 = vld [vmem:[%s1 + $0x10] sm:$0xff]
  %v27 = vld [vmem:[%s1 + $0x18] sm:$0xff]
  %v28 = vld [vmem:[%s1 + $0x20] sm:$0xff]
  %v29 = vld [vmem:[%s1 + $0x28] sm:$0xff]
  %v30 = vld [vmem:[%s1 + $0x30] sm:$0xff]
  %v31 = vld [vmem:[%s1 + $0x38] sm:$0xff]
  %v32 = vld [vmem:[%s1 + $0x40] sm:$0xff]
  %v33 = vld [vmem:[%s1 + $0x48] sm:$0xff]
  %v34 = vld [vmem:[%s1 + $0x50] sm:$0xff]
  %v35 = vld [vmem:[%s1 + $0x58] sm:$0xff]
  %v36 = vld [vmem:[%s1 + $0x60] sm:$0xff]
  %v37 = vld [vmem:[%s1 + $0x68] sm:$0xff]
  %v38 = vld [vmem:[%s1 + $0x70] sm:$0xff]
  %v39 = vld [vmem:[%s1 + $0x78] sm:$0xff]
  %v40 = vld [vmem:[%s1 + $0x80] sm:$0xff]
  %v41 = vld [vmem:[%s1 + $0x88] sm:$0xff]
  %v42 = vld [vmem:[%s1 + $0x90] sm:$0xff]
  %v43 = vld [vmem:[%s1 + $0x98] sm:$0xff]
  %v44 = vld [vmem:[%s1 + $0xa0] sm:$0xff]
  %v45 = vld [vmem:[%s1 + $0xa8] sm:$0xff]
  %v46 = vld [vmem:[%s1 + $0xb0] sm:$0xff]
  %v47 = vld [vmem:[%s1 + $0xb8] sm:$0xff]
  %v48 = vld [vmem:[%s1 + $0xc0] sm:$0xff]
  %v49 = vld [vmem:[%s1 + $0xc8] sm:$0xff]
  %v50 = vld [vmem:[%s1 + $0xd0] sm:$0xff]
  %v51 = vld [vmem:[%s1 + $0xd8] sm:$0xff]
  %v52 = vld [vmem:[%s1 + $0xe0] sm:$0xff]
  %v53 = vld [vmem:[%s1 + $0xe8] sm:$0xff]
  %v54 = vld [vmem:[%s1 + $0xf0] sm:$0xff]
  %v55 = vld [vmem:[%s1 + $0xf8] sm:$0xff]
  %v56 = vld [vmem:[%s1 + $0x100] sm:$0xff]
  %v57 = vld [vmem:[%s1 + $0x108] sm:$0xff]
  %v58 = vld [vmem:[%s1 + $0x110] sm:$0xff]
  %v59 = vld [vmem:[%s1 + $0x118] sm:$0xff]
  %v60 = vld [vmem:[%s1 + $0x120] sm:$0xff]
  %v61 = vld [vmem:[%s1 + $0x128] sm:$0xff]
  %v62 = vld [vmem:[%s1 + $0x130] sm:$0xff]
  %v63 = vld [vmem:[%s1 + $0x138] sm:$0xff]
  %v64 = vld [vmem:[%s1 + $0x140] sm:$0xff]
  %v65 = vld [vmem:[%s1 + $0x148] sm:$0xff]
  %v66 = vld [vmem:[%s1 + $0x150] sm:$0xff]
  %v67 = vld [vmem:[%s1 + $0x158] sm:$0xff]
  %v68 = vld [vmem:[%s1 + $0x160] sm:$0xff]
  %v69 = vld [vmem:[%s1 + $0x168] sm:$0xff]
  %v70 = vld [vmem:[%s1 + $0x170] sm:$0xff]
  %v71 = vld [vmem:[%s1 + $0x178] sm:$0xff]
  %v72 = vld [vmem:[%s1 + $0x180] sm:$0xff]
  %v73 = vld [vmem:[%s1 + $0x188] sm:$0xff]
  %v74 = vld [vmem:[%s1 + $0x190] sm:$0xff]
  %v75 = vld [vmem:[%s1 + $0x198] sm:$0xff]
  %v76 = vld [vmem:[%s1 + $0x1a0] sm:$0xff]
  %v77 = vld [vmem:[%s1 + $0x1a8] sm:$0xff]
  %v78 = vld [vmem:[%s1 + $0x1b0] sm:$0xff]
  %v79 = vld [vmem:[%s1 + $0x1b8] sm:$0xff]
  %v80 = vld [vmem:[%s1 + $0x1c0] sm:$0xff]
  %v81 = vld [vmem:[%s1 + $0x1c8] sm:$0xff]
  %v82 = vld [vmem:[%s1 + $0x1d0] sm:$0xff]
  %v83 = vld [vmem:[%s1 + $0x1d8] sm:$0xff]
  %v84 = vld [vmem:[%s1 + $0x1e0] sm:$0xff]
  %v85 = vld [vmem:[%s1 + $0x1e8] sm:$0xff]
  %v86 = vld [vmem:[%s1 + $0x1f0] sm:$0xff]
  %v87 = vld [vmem:[%s1 + $0x1f8] sm:$0xff]
  %v88 = vld [vmem:[%s1 + $0x200] sm:$0xff]
  %v89 = vld [vmem:[%s1 + $0x208] sm:$0xff]
  %v90 = vld [vmem:[%s1 + $0x210] sm:$0xff]
  %v91 = vld [vmem:[%s1 + $0x218] sm:$0xff]
  %v92 = vld [vmem:[%s1 + $0x220] sm:$0xff]
  %v93 = vld [vmem:[%s1 + $0x228] sm:$0xff]
  %v94 = vld [vmem:[%s1 + $0x230] sm:$0xff]
  %v95 = vld [vmem:[%s1 + $0x238] sm:$0xff]
  %v96 = vld [vmem:[%s1 + $0x240] sm:$0xff]
  %v97 = vld [vmem:[%s1 + $0x248] sm:$0xff]
  %v98 = vld [vmem:[%s1 + $0x250] sm:$0xff]
  %v99 = vld [vmem:[%s1 + $0x258] sm:$0xff]
  %v100 = vld [vmem:[%s1 + $0x260] sm:$0xff]
  %v101 = vld [vmem:[%s1 + $0x268] sm:$0xff]
  %v102 = vld [vmem:[%s1 + $0x270] sm:$0xff]
  %v103 = vld [vmem:[%s1 + $0x278] sm:$0xff]
  %v104 = vld [vmem:[%s1 + $0x280] sm:$0xff]
  %v105 = vld [vmem:[%s1 + $0x288] sm:$0xff]
  %v106 = vld [vmem:[%s1 + $0x290] sm:$0xff]
  %v107 = vld [vmem:[%s1 + $0x298] sm:$0xff]
  %v108 = vld [vmem:[%s1 + $0x2a0] sm:$0xff]
  %v109 = vld [vmem:[%s1 + $0x2a8] sm:$0xff]
  %v110 = vld [vmem:[%s1 + $0x2b0] sm:$0xff]
  %v111 = vld [vmem:[%s1 + $0x2b8] sm:$0xff]
  %v112 = vld [vmem:[%s1 + $0x2c0] sm:$0xff]
  %v113 = vld [vmem:[%s1 + $0x2c8] sm:$0xff]
  %v114 = vld [vmem:[%s1 + $0x2d0] sm:$0xff]
  %v115 = vld [vmem:[%s1 + $0x2d8] sm:$0xff]
  %v116 = vld [vmem:[%s1 + $0x2e0] sm:$0xff]
  %v117 = vld [vmem:[%s1 + $0x2e8] sm:$0xff]
  %v118 = vld [vmem:[%s1 + $0x2f0] sm:$0xff]
  %v119 = vld [vmem:[%s1 + $0x2f8] sm:$0xff]
  %v120 = vld [vmem:[%s1 + $0x300] sm:$0xff]
  %v121 = vld [vmem:[%s1 + $0x308] sm:$0xff]
  %v122 = vld [vmem:[%s1 + $0x310] sm:$0xff]
  %v123 = vld [vmem:[%s1 + $0x318] sm:$0xff]
  %v124 = vld [vmem:[%s1 + $0x320] sm:$0xff]
  %v125 = vld [vmem:[%s1 + $0x328] sm:$0xff]
  %v126 = vld [vmem:[%s1 + $0x330] sm:$0xff]
  %v127 = vld [vmem:[%s1 + $0x338] sm:$0xff]
  %v128 = vld [vmem:[%s1 + $0x340] sm:$0xff]
  %v129 = vld [vmem:[%s1 + $0x348] sm:$0xff]
  %v130 = vld [vmem:[%s1 + $0x350] sm:$0xff]
  %v131 = vld [vmem:[%s1 + $0x358] sm:$0xff]
  %v132 = vld [vmem:[%s1 + $0x360] sm:$0xff]
  %v133 = vld [vmem:[%s1 + $0x368] sm:$0xff]
  %v134 = vld [vmem:[%s1 + $0x370] sm:$0xff]
  %v135 = vld [vmem:[%s1 + $0x378] sm:$0xff]
  %v136 = vld [vmem:[%s1 + $0x380] sm:$0xff]
  %v137 = vld [vmem:[%s1 + $0x388] sm:$0xff]
  %v138 = vld [vmem:[%s1 + $0x390] sm:$0xff]
  %v139 = vld [vmem:[%s1 + $0x398] sm:$0xff]
  %v140 = vld [vmem:[%s1 + $0x3a0] sm:$0xff]
  %v141 = vld [vmem:[%s1 + $0x3a8] sm:$0xff]
  %v142 = vld [vmem:[%s1 + $0x3b0] sm:$0xff]
  %v143 = vld [vmem:[%s1 + $0x3b8] sm:$0xff]
  %v144 = vld [vmem:[%s1 + $0x3c0] sm:$0xff]
  %v145 = vld [vmem:[%s1 + $0x3c8] sm:$0xff]
  %v146 = vld [vmem:[%s1 + $0x3d0] sm:$0xff]
  %v147 = vld [vmem:[%s1 + $0x3d8] sm:$0xff]
  %v148 = vld [vmem:[%s1 + $0x3e0] sm:$0xff]
  %v149 = vld [vmem:[%s1 + $0x3e8] sm:$0xff]
  %v150 = vld [vmem:[%s1 + $0x3f0] sm:$0xff]
  %v151 = vld [vmem:[%s1 + $0x3f8] sm:$0xff]
  %v152 = vld [vmem:[%s1 + $0x400] sm:$0xff]
  %v153 = vld [vmem:[%s1 + $0x408] sm:$0xff]
  %v154 = vld [vmem:[%s1 + $0x410] sm:$0xff]
  %v155 = vld [vmem:[%s1 + $0x418] sm:$0xff]
  %v156 = vld [vmem:[%s1 + $0x420] sm:$0xff]
  %v157 = vld [vmem:[%s1 + $0x428] sm:$0xff]
  %v158 = vld [vmem:[%s1 + $0x430] sm:$0xff]
  %v159 = vld [vmem:[%s1 + $0x438] sm:$0xff]
  %v160 = vld [vmem:[%s1 + $0x440] sm:$0xff]
  %v161 = vld [vmem:[%s1 + $0x448] sm:$0xff]
  %v162 = vld [vmem:[%s1 + $0x450] sm:$0xff]
  %v163 = vld [vmem:[%s1 + $0x458] sm:$0xff]
  %v164 = vld [vmem:[%s1 + $0x460] sm:$0xff]
  %v165 = vld [vmem:[%s1 + $0x468] sm:$0xff]
  %v166 = vld [vmem:[%s1 + $0x470] sm:$0xff]
  %v167 = vld [vmem:[%s1 + $0x478] sm:$0xff]
  %v168 = vld [vmem:[%s1 + $0x480] sm:$0xff]
  %v169 = vld [vmem:[%s1 + $0x488] sm:$0xff]
  %v170 = vld [vmem:[%s1 + $0x490] sm:$0xff]
  %v171 = vld [vmem:[%s1 + $0x498] sm:$0xff]
  %v172 = vld [vmem:[%s1 + $0x4a0] sm:$0xff]
  %v173 = vld [vmem:[%s1 + $0x4a8] sm:$0xff]
  %v174 = vld [vmem:[%s1 + $0x4b0] sm:$0xff]
  %v175 = vld [vmem:[%s1 + $0x4b8] sm:$0xff]
  %v176 = vld [vmem:[%s1 + $0x4c0] sm:$0xff]
  %v177 = vld [vmem:[%s1 + $0x4c8] sm:$0xff]
  %v178 = vld [vmem:[%s1 + $0x4d0] sm:$0xff]
  %v179 = vld [vmem:[%s1 + $0x4d8] sm:$0xff]
  %v180 = vld [vmem:[%s1 + $0x4e0] sm:$0xff]
  %v181 = vld [vmem:[%s1 + $0x4e8] sm:$0xff]
  %v182 = vld [vmem:[%s1 + $0x4f0] sm:$0xff]
  %v183 = vld [vmem:[%s1 + $0x4f8] sm:$0xff]
  %v184 = vld [vmem:[%s2] sm:$0xf]
  %v186 = vlaneseq
  %v187 = vshrl.u32 %v186, 7
  %v188 = vsub.s32 0, %v187
  %v189 = vrot.slane %v184, %v188
  %v190 = vlaneseq
  %v191 = vshrl.u32 %v190, 7
  %v192 = vsub.s32 1, %v191
  %v193 = vrot.slane %v184, %v192
  %v194 = vlaneseq
  %v195 = vshrl.u32 %v194, 7
  %v196 = vsub.s32 2, %v195
  %v197 = vrot.slane %v184, %v196
  %v198 = vlaneseq
  %v199 = vshrl.u32 %v198, 7
  %v200 = vsub.s32 3, %v199
  %v201 = vrot.slane %v184, %v200
  %v215 = vunpack.c.l.b16 %v15
  %v216 = vunpack.c.h.b16 %v15
  %v217 = vunpack.c.l.b16 %v16
  %v218 = vunpack.c.h.b16 %v16
  %v219 = vunpack.c.l.b16 %v17
  %v220 = vunpack.c.l.b16 %v18
  %v221 = vunpack.c.h.b16 %v18
  %v222 = vunpack.c.l.b16 %v19
  %v223 = vunpack.c.h.b16 %v19
  %v224 = vunpack.c.l.b16 %v20
  %v225 = vunpack.c.l.b16 %v21
  %v226 = vunpack.c.h.b16 %v21
  %v227 = vunpack.c.l.b16 %v22
  %v228 = vunpack.c.h.b16 %v22
  %v229 = vunpack.c.l.b16 %v23
  %v230 = vpack.c.b16 %v220, %v215
  %v231 = vpack.c.b16 %v221, %v216
  %v232 = vpack.c.b16 %v222, %v217
  %v233 = vpack.c.b16 %v223, %v218
  %v234 = vpack.c.b16 %v224, %v219
  %v235 = vpack.c.b16 %v225, %v225
  %v236 = vpack.c.b16 %v226, %v226
  %v237 = vpack.c.b16 %v227, %v227
  %v238 = vpack.c.b16 %v228, %v228
  %v239 = vpack.c.b16 %v229, %v229
  %v410 = vunpack.c.l.b16 %v24
  %v411 = vunpack.c.h.b16 %v24
  %v412 = vunpack.c.l.b16 %v25
  %v413 = vunpack.c.h.b16 %v25
  %v414 = vunpack.c.l.b16 %v26
  %v415 = vunpack.c.h.b16 %v26
  %v416 = vunpack.c.l.b16 %v27
  %v417 = vunpack.c.h.b16 %v27
  %v418 = vunpack.c.l.b16 %v28
  %v419 = vunpack.c.h.b16 %v28
  %v420 = vunpack.c.l.b16 %v29
  %v421 = vunpack.c.h.b16 %v29
  %v422 = vunpack.c.l.b16 %v30
  %v423 = vunpack.c.h.b16 %v30
  %v424 = vunpack.c.l.b16 %v31
  %v425 = vunpack.c.h.b16 %v31
  %v426 = vunpack.c.l.b16 %v32
  %v427 = vunpack.c.h.b16 %v32
  %v428 = vunpack.c.l.b16 %v33
  %v429 = vunpack.c.h.b16 %v33
  %v430 = vunpack.c.l.b16 %v34
  %v431 = vunpack.c.h.b16 %v34
  %v432 = vunpack.c.l.b16 %v35
  %v433 = vunpack.c.h.b16 %v35
  %v434 = vunpack.c.l.b16 %v36
  %v435 = vunpack.c.h.b16 %v36
  %v436 = vunpack.c.l.b16 %v37
  %v437 = vunpack.c.h.b16 %v37
  %v438 = vunpack.c.l.b16 %v38
  %v439 = vunpack.c.h.b16 %v38
  %v440 = vunpack.c.l.b16 %v39
  %v441 = vunpack.c.h.b16 %v39
  %v442 = vunpack.c.l.b16 %v40
  %v443 = vunpack.c.h.b16 %v40
  %v444 = vunpack.c.l.b16 %v41
  %v445 = vunpack.c.h.b16 %v41
  %v446 = vunpack.c.l.b16 %v42
  %v447 = vunpack.c.h.b16 %v42
  %v448 = vunpack.c.l.b16 %v43
  %v449 = vunpack.c.h.b16 %v43
  %v450 = vunpack.c.l.b16 %v44
  %v451 = vunpack.c.h.b16 %v44
  %v452 = vunpack.c.l.b16 %v45
  %v453 = vunpack.c.h.b16 %v45
  %v454 = vunpack.c.l.b16 %v46
  %v455 = vunpack.c.h.b16 %v46
  %v456 = vunpack.c.l.b16 %v47
  %v457 = vunpack.c.h.b16 %v47
  %v458 = vunpack.c.l.b16 %v48
  %v459 = vunpack.c.h.b16 %v48
  %v460 = vunpack.c.l.b16 %v49
  %v461 = vunpack.c.h.b16 %v49
  %v462 = vunpack.c.l.b16 %v50
  %v463 = vunpack.c.h.b16 %v50
  %v464 = vunpack.c.l.b16 %v51
  %v465 = vunpack.c.h.b16 %v51
  %v466 = vunpack.c.l.b16 %v52
  %v467 = vunpack.c.h.b16 %v52
  %v468 = vunpack.c.l.b16 %v53
  %v469 = vunpack.c.h.b16 %v53
  %v470 = vunpack.c.l.b16 %v54
  %v471 = vunpack.c.h.b16 %v54
  %v472 = vunpack.c.l.b16 %v55
  %v473 = vunpack.c.h.b16 %v55
  %v474 = vunpack.c.l.b16 %v56
  %v475 = vunpack.c.h.b16 %v56
  %v476 = vunpack.c.l.b16 %v57
  %v477 = vunpack.c.h.b16 %v57
  %v478 = vunpack.c.l.b16 %v58
  %v479 = vunpack.c.h.b16 %v58
  %v480 = vunpack.c.l.b16 %v59
  %v481 = vunpack.c.h.b16 %v59
  %v482 = vunpack.c.l.b16 %v60
  %v483 = vunpack.c.h.b16 %v60
  %v484 = vunpack.c.l.b16 %v61
  %v485 = vunpack.c.h.b16 %v61
  %v486 = vunpack.c.l.b16 %v62
  %v487 = vunpack.c.h.b16 %v62
  %v488 = vunpack.c.l.b16 %v63
  %v489 = vunpack.c.h.b16 %v63
  %v490 = vunpack.c.l.b16 %v64
  %v491 = vunpack.c.h.b16 %v64
  %v492 = vunpack.c.l.b16 %v65
  %v493 = vunpack.c.h.b16 %v65
  %v494 = vunpack.c.l.b16 %v66
  %v495 = vunpack.c.h.b16 %v66
  %v496 = vunpack.c.l.b16 %v67
  %v497 = vunpack.c.h.b16 %v67
  %v498 = vunpack.c.l.b16 %v68
  %v499 = vunpack.c.h.b16 %v68
  %v500 = vunpack.c.l.b16 %v69
  %v501 = vunpack.c.h.b16 %v69
  %v502 = vunpack.c.l.b16 %v70
  %v503 = vunpack.c.h.b16 %v70
  %v504 = vunpack.c.l.b16 %v71
  %v505 = vunpack.c.h.b16 %v71
  %v506 = vunpack.c.l.b16 %v72
  %v507 = vunpack.c.h.b16 %v72
  %v508 = vunpack.c.l.b16 %v73
  %v509 = vunpack.c.h.b16 %v73
  %v510 = vunpack.c.l.b16 %v74
  %v511 = vunpack.c.h.b16 %v74
  %v512 = vunpack.c.l.b16 %v75
  %v513 = vunpack.c.h.b16 %v75
  %v514 = vunpack.c.l.b16 %v76
  %v515 = vunpack.c.h.b16 %v76
  %v516 = vunpack.c.l.b16 %v77
  %v517 = vunpack.c.h.b16 %v77
  %v518 = vunpack.c.l.b16 %v78
  %v519 = vunpack.c.h.b16 %v78
  %v520 = vunpack.c.l.b16 %v79
  %v521 = vunpack.c.h.b16 %v79
  %v522 = vunpack.c.l.b16 %v80
  %v523 = vunpack.c.h.b16 %v80
  %v524 = vunpack.c.l.b16 %v81
  %v525 = vunpack.c.h.b16 %v81
  %v526 = vunpack.c.l.b16 %v82
  %v527 = vunpack.c.h.b16 %v82
  %v528 = vunpack.c.l.b16 %v83
  %v529 = vunpack.c.h.b16 %v83
  %v530 = vunpack.c.l.b16 %v84
  %v531 = vunpack.c.h.b16 %v84
  %v532 = vunpack.c.l.b16 %v85
  %v533 = vunpack.c.h.b16 %v85
  %v534 = vunpack.c.l.b16 %v86
  %v535 = vunpack.c.h.b16 %v86
  %v536 = vunpack.c.l.b16 %v87
  %v537 = vunpack.c.h.b16 %v87
  %v538 = vunpack.c.l.b16 %v88
  %v539 = vunpack.c.h.b16 %v88
  %v540 = vunpack.c.l.b16 %v89
  %v541 = vunpack.c.h.b16 %v89
  %v542 = vunpack.c.l.b16 %v90
  %v543 = vunpack.c.h.b16 %v90
  %v544 = vunpack.c.l.b16 %v91
  %v545 = vunpack.c.h.b16 %v91
  %v546 = vunpack.c.l.b16 %v92
  %v547 = vunpack.c.h.b16 %v92
  %v548 = vunpack.c.l.b16 %v93
  %v549 = vunpack.c.h.b16 %v93
  %v550 = vunpack.c.l.b16 %v94
  %v551 = vunpack.c.h.b16 %v94
  %v552 = vunpack.c.l.b16 %v95
  %v553 = vunpack.c.h.b16 %v95
  %v554 = vunpack.c.l.b16 %v96
  %v555 = vunpack.c.h.b16 %v96
  %v556 = vunpack.c.l.b16 %v97
  %v557 = vunpack.c.h.b16 %v97
  %v558 = vunpack.c.l.b16 %v98
  %v559 = vunpack.c.h.b16 %v98
  %v560 = vunpack.c.l.b16 %v99
  %v561 = vunpack.c.h.b16 %v99
  %v562 = vunpack.c.l.b16 %v100
  %v563 = vunpack.c.h.b16 %v100
  %v564 = vunpack.c.l.b16 %v101
  %v565 = vunpack.c.h.b16 %v101
  %v566 = vunpack.c.l.b16 %v102
  %v567 = vunpack.c.h.b16 %v102
  %v568 = vunpack.c.l.b16 %v103
  %v569 = vunpack.c.h.b16 %v103
  %v570 = vunpack.c.l.b16 %v104
  %v571 = vunpack.c.h.b16 %v104
  %v572 = vunpack.c.l.b16 %v105
  %v573 = vunpack.c.h.b16 %v105
  %v574 = vunpack.c.l.b16 %v106
  %v575 = vunpack.c.h.b16 %v106
  %v576 = vunpack.c.l.b16 %v107
  %v577 = vunpack.c.h.b16 %v107
  %v578 = vunpack.c.l.b16 %v108
  %v579 = vunpack.c.h.b16 %v108
  %v580 = vunpack.c.l.b16 %v109
  %v581 = vunpack.c.h.b16 %v109
  %v582 = vunpack.c.l.b16 %v110
  %v583 = vunpack.c.h.b16 %v110
  %v584 = vunpack.c.l.b16 %v111
  %v585 = vunpack.c.h.b16 %v111
  %v586 = vunpack.c.l.b16 %v112
  %v587 = vunpack.c.h.b16 %v112
  %v588 = vunpack.c.l.b16 %v113
  %v589 = vunpack.c.h.b16 %v113
  %v590 = vunpack.c.l.b16 %v114
  %v591 = vunpack.c.h.b16 %v114
  %v592 = vunpack.c.l.b16 %v115
  %v593 = vunpack.c.h.b16 %v115
  %v594 = vunpack.c.l.b16 %v116
  %v595 = vunpack.c.h.b16 %v116
  %v596 = vunpack.c.l.b16 %v117
  %v597 = vunpack.c.h.b16 %v117
  %v598 = vunpack.c.l.b16 %v118
  %v599 = vunpack.c.h.b16 %v118
  %v600 = vunpack.c.l.b16 %v119
  %v601 = vunpack.c.h.b16 %v119
  %v602 = vunpack.c.l.b16 %v120
  %v603 = vunpack.c.h.b16 %v120
  %v604 = vunpack.c.l.b16 %v121
  %v605 = vunpack.c.h.b16 %v121
  %v606 = vunpack.c.l.b16 %v122
  %v607 = vunpack.c.h.b16 %v122
  %v608 = vunpack.c.l.b16 %v123
  %v609 = vunpack.c.h.b16 %v123
  %v610 = vunpack.c.l.b16 %v124
  %v611 = vunpack.c.h.b16 %v124
  %v612 = vunpack.c.l.b16 %v125
  %v613 = vunpack.c.h.b16 %v125
  %v614 = vunpack.c.l.b16 %v126
  %v615 = vunpack.c.h.b16 %v126
  %v616 = vunpack.c.l.b16 %v127
  %v617 = vunpack.c.h.b16 %v127
  %v618 = vunpack.c.l.b16 %v128
  %v619 = vunpack.c.h.b16 %v128
  %v620 = vunpack.c.l.b16 %v129
  %v621 = vunpack.c.h.b16 %v129
  %v622 = vunpack.c.l.b16 %v130
  %v623 = vunpack.c.h.b16 %v130
  %v624 = vunpack.c.l.b16 %v131
  %v625 = vunpack.c.h.b16 %v131
  %v626 = vunpack.c.l.b16 %v132
  %v627 = vunpack.c.h.b16 %v132
  %v628 = vunpack.c.l.b16 %v133
  %v629 = vunpack.c.h.b16 %v133
  %v630 = vunpack.c.l.b16 %v134
  %v631 = vunpack.c.h.b16 %v134
  %v632 = vunpack.c.l.b16 %v135
  %v633 = vunpack.c.h.b16 %v135
  %v634 = vunpack.c.l.b16 %v136
  %v635 = vunpack.c.h.b16 %v136
  %v636 = vunpack.c.l.b16 %v137
  %v637 = vunpack.c.h.b16 %v137
  %v638 = vunpack.c.l.b16 %v138
  %v639 = vunpack.c.h.b16 %v138
  %v640 = vunpack.c.l.b16 %v139
  %v641 = vunpack.c.h.b16 %v139
  %v642 = vunpack.c.l.b16 %v140
  %v643 = vunpack.c.h.b16 %v140
  %v644 = vunpack.c.l.b16 %v141
  %v645 = vunpack.c.h.b16 %v141
  %v646 = vunpack.c.l.b16 %v142
  %v647 = vunpack.c.h.b16 %v142
  %v648 = vunpack.c.l.b16 %v143
  %v649 = vunpack.c.h.b16 %v143
  %v650 = vunpack.c.l.b16 %v144
  %v651 = vunpack.c.h.b16 %v144
  %v652 = vunpack.c.l.b16 %v145
  %v653 = vunpack.c.h.b16 %v145
  %v654 = vunpack.c.l.b16 %v146
  %v655 = vunpack.c.h.b16 %v146
  %v656 = vunpack.c.l.b16 %v147
  %v657 = vunpack.c.h.b16 %v147
  %v658 = vunpack.c.l.b16 %v148
  %v659 = vunpack.c.h.b16 %v148
  %v660 = vunpack.c.l.b16 %v149
  %v661 = vunpack.c.h.b16 %v149
  %v662 = vunpack.c.l.b16 %v150
  %v663 = vunpack.c.h.b16 %v150
  %v664 = vunpack.c.l.b16 %v151
  %v665 = vunpack.c.h.b16 %v151
  %v666 = vunpack.c.l.b16 %v152
  %v667 = vunpack.c.h.b16 %v152
  %v668 = vunpack.c.l.b16 %v153
  %v669 = vunpack.c.h.b16 %v153
  %v670 = vunpack.c.l.b16 %v154
  %v671 = vunpack.c.h.b16 %v154
  %v672 = vunpack.c.l.b16 %v155
  %v673 = vunpack.c.h.b16 %v155
  %v674 = vunpack.c.l.b16 %v156
  %v675 = vunpack.c.h.b16 %v156
  %v676 = vunpack.c.l.b16 %v157
  %v677 = vunpack.c.h.b16 %v157
  %v678 = vunpack.c.l.b16 %v158
  %v679 = vunpack.c.h.b16 %v158
  %v680 = vunpack.c.l.b16 %v159
  %v681 = vunpack.c.h.b16 %v159
  %v682 = vunpack.c.l.b16 %v160
  %v683 = vunpack.c.h.b16 %v160
  %v684 = vunpack.c.l.b16 %v161
  %v685 = vunpack.c.h.b16 %v161
  %v686 = vunpack.c.l.b16 %v162
  %v687 = vunpack.c.h.b16 %v162
  %v688 = vunpack.c.l.b16 %v163
  %v689 = vunpack.c.h.b16 %v163
  %v690 = vunpack.c.l.b16 %v164
  %v691 = vunpack.c.h.b16 %v164
  %v692 = vunpack.c.l.b16 %v165
  %v693 = vunpack.c.h.b16 %v165
  %v694 = vunpack.c.l.b16 %v166
  %v695 = vunpack.c.h.b16 %v166
  %v696 = vunpack.c.l.b16 %v167
  %v697 = vunpack.c.h.b16 %v167
  %v698 = vunpack.c.l.b16 %v168
  %v699 = vunpack.c.h.b16 %v168
  %v700 = vunpack.c.l.b16 %v169
  %v701 = vunpack.c.h.b16 %v169
  %v702 = vunpack.c.l.b16 %v170
  %v703 = vunpack.c.h.b16 %v170
  %v704 = vunpack.c.l.b16 %v171
  %v705 = vunpack.c.h.b16 %v171
  %v706 = vunpack.c.l.b16 %v172
  %v707 = vunpack.c.h.b16 %v172
  %v708 = vunpack.c.l.b16 %v173
  %v709 = vunpack.c.h.b16 %v173
  %v710 = vunpack.c.l.b16 %v174
  %v711 = vunpack.c.h.b16 %v174
  %v712 = vunpack.c.l.b16 %v175
  %v713 = vunpack.c.h.b16 %v175
  %v714 = vunpack.c.l.b16 %v176
  %v715 = vunpack.c.h.b16 %v176
  %v716 = vunpack.c.l.b16 %v177
  %v717 = vunpack.c.h.b16 %v177
  %v718 = vunpack.c.l.b16 %v178
  %v719 = vunpack.c.h.b16 %v178
  %v720 = vunpack.c.l.b16 %v179
  %v721 = vunpack.c.h.b16 %v179
  %v722 = vunpack.c.l.b16 %v180
  %v723 = vunpack.c.h.b16 %v180
  %v724 = vunpack.c.l.b16 %v181
  %v725 = vunpack.c.h.b16 %v181
  %v726 = vunpack.c.l.b16 %v182
  %v727 = vunpack.c.h.b16 %v182
  %v728 = vunpack.c.l.b16 %v183
  %v729 = vunpack.c.h.b16 %v183
  %v730 = vpack.c.b16 %v414, %v410
  %v731 = vpack.c.b16 %v415, %v411
  %v732 = vpack.c.b16 %v416, %v412
  %v733 = vpack.c.b16 %v417, %v413
  %v734 = vpack.c.b16 %v422, %v418
  %v735 = vpack.c.b16 %v423, %v419
  %v736 = vpack.c.b16 %v424, %v420
  %v737 = vpack.c.b16 %v425, %v421
  %v738 = vpack.c.b16 %v430, %v426
  %v739 = vpack.c.b16 %v431, %v427
  %v740 = vpack.c.b16 %v432, %v428
  %v741 = vpack.c.b16 %v433, %v429
  %v742 = vpack.c.b16 %v438, %v434
  %v743 = vpack.c.b16 %v439, %v435
  %v744 = vpack.c.b16 %v440, %v436
  %v745 = vpack.c.b16 %v441, %v437
  %v746 = vpack.c.b16 %v446, %v442
  %v747 = vpack.c.b16 %v447, %v443
  %v748 = vpack.c.b16 %v448, %v444
  %v749 = vpack.c.b16 %v449, %v445
  %v750 = vpack.c.b16 %v454, %v450
  %v751 = vpack.c.b16 %v455, %v451
  %v752 = vpack.c.b16 %v456, %v452
  %v753 = vpack.c.b16 %v457, %v453
  %v754 = vpack.c.b16 %v462, %v458
  %v755 = vpack.c.b16 %v463, %v459
  %v756 = vpack.c.b16 %v464, %v460
  %v757 = vpack.c.b16 %v465, %v461
  %v758 = vpack.c.b16 %v470, %v466
  %v759 = vpack.c.b16 %v471, %v467
  %v760 = vpack.c.b16 %v472, %v468
  %v761 = vpack.c.b16 %v473, %v469
  %v762 = vpack.c.b16 %v478, %v474
  %v763 = vpack.c.b16 %v479, %v475
  %v764 = vpack.c.b16 %v480, %v476
  %v765 = vpack.c.b16 %v481, %v477
  %v766 = vpack.c.b16 %v486, %v482
  %v767 = vpack.c.b16 %v487, %v483
  %v768 = vpack.c.b16 %v488, %v484
  %v769 = vpack.c.b16 %v489, %v485
  %v770 = vpack.c.b16 %v494, %v490
  %v771 = vpack.c.b16 %v495, %v491
  %v772 = vpack.c.b16 %v496, %v492
  %v773 = vpack.c.b16 %v497, %v493
  %v774 = vpack.c.b16 %v502, %v498
  %v775 = vpack.c.b16 %v503, %v499
  %v776 = vpack.c.b16 %v504, %v500
  %v777 = vpack.c.b16 %v505, %v501
  %v778 = vpack.c.b16 %v510, %v506
  %v779 = vpack.c.b16 %v511, %v507
  %v780 = vpack.c.b16 %v512, %v508
  %v781 = vpack.c.b16 %v513, %v509
  %v782 = vpack.c.b16 %v518, %v514
  %v783 = vpack.c.b16 %v519, %v515
  %v784 = vpack.c.b16 %v520, %v516
  %v785 = vpack.c.b16 %v521, %v517
  %v786 = vpack.c.b16 %v526, %v522
  %v787 = vpack.c.b16 %v527, %v523
  %v788 = vpack.c.b16 %v528, %v524
  %v789 = vpack.c.b16 %v529, %v525
  %v790 = vpack.c.b16 %v534, %v530
  %v791 = vpack.c.b16 %v535, %v531
  %v792 = vpack.c.b16 %v536, %v532
  %v793 = vpack.c.b16 %v537, %v533
  %v794 = vpack.c.b16 %v542, %v538
  %v795 = vpack.c.b16 %v543, %v539
  %v796 = vpack.c.b16 %v544, %v540
  %v797 = vpack.c.b16 %v545, %v541
  %v798 = vpack.c.b16 %v550, %v546
  %v799 = vpack.c.b16 %v551, %v547
  %v800 = vpack.c.b16 %v552, %v548
  %v801 = vpack.c.b16 %v553, %v549
  %v802 = vpack.c.b16 %v558, %v554
  %v803 = vpack.c.b16 %v559, %v555
  %v804 = vpack.c.b16 %v560, %v556
  %v805 = vpack.c.b16 %v561, %v557
  %v806 = vpack.c.b16 %v566, %v562
  %v807 = vpack.c.b16 %v567, %v563
  %v808 = vpack.c.b16 %v568, %v564
  %v809 = vpack.c.b16 %v569, %v565
  %v810 = vpack.c.b16 %v574, %v570
  %v811 = vpack.c.b16 %v575, %v571
  %v812 = vpack.c.b16 %v576, %v572
  %v813 = vpack.c.b16 %v577, %v573
  %v814 = vpack.c.b16 %v582, %v578
  %v815 = vpack.c.b16 %v583, %v579
  %v816 = vpack.c.b16 %v584, %v580
  %v817 = vpack.c.b16 %v585, %v581
  %v818 = vpack.c.b16 %v590, %v586
  %v819 = vpack.c.b16 %v591, %v587
  %v820 = vpack.c.b16 %v592, %v588
  %v821 = vpack.c.b16 %v593, %v589
  %v822 = vpack.c.b16 %v598, %v594
  %v823 = vpack.c.b16 %v599, %v595
  %v824 = vpack.c.b16 %v600, %v596
  %v825 = vpack.c.b16 %v601, %v597
  %v826 = vpack.c.b16 %v606, %v602
  %v827 = vpack.c.b16 %v607, %v603
  %v828 = vpack.c.b16 %v608, %v604
  %v829 = vpack.c.b16 %v609, %v605
  %v830 = vpack.c.b16 %v614, %v610
  %v831 = vpack.c.b16 %v615, %v611
  %v832 = vpack.c.b16 %v616, %v612
  %v833 = vpack.c.b16 %v617, %v613
  %v834 = vpack.c.b16 %v622, %v618
  %v835 = vpack.c.b16 %v623, %v619
  %v836 = vpack.c.b16 %v624, %v620
  %v837 = vpack.c.b16 %v625, %v621
  %v838 = vpack.c.b16 %v630, %v626
  %v839 = vpack.c.b16 %v631, %v627
  %v840 = vpack.c.b16 %v632, %v628
  %v841 = vpack.c.b16 %v633, %v629
  %v842 = vpack.c.b16 %v638, %v634
  %v843 = vpack.c.b16 %v639, %v635
  %v844 = vpack.c.b16 %v640, %v636
  %v845 = vpack.c.b16 %v641, %v637
  %v846 = vpack.c.b16 %v646, %v642
  %v847 = vpack.c.b16 %v647, %v643
  %v848 = vpack.c.b16 %v648, %v644
  %v849 = vpack.c.b16 %v649, %v645
  %v850 = vpack.c.b16 %v654, %v650
  %v851 = vpack.c.b16 %v655, %v651
  %v852 = vpack.c.b16 %v656, %v652
  %v853 = vpack.c.b16 %v657, %v653
  %v854 = vpack.c.b16 %v662, %v658
  %v855 = vpack.c.b16 %v663, %v659
  %v856 = vpack.c.b16 %v664, %v660
  %v857 = vpack.c.b16 %v665, %v661
  %v858 = vpack.c.b16 %v670, %v666
  %v859 = vpack.c.b16 %v671, %v667
  %v860 = vpack.c.b16 %v672, %v668
  %v861 = vpack.c.b16 %v673, %v669
  %v862 = vpack.c.b16 %v678, %v674
  %v863 = vpack.c.b16 %v679, %v675
  %v864 = vpack.c.b16 %v680, %v676
  %v865 = vpack.c.b16 %v681, %v677
  %v866 = vpack.c.b16 %v686, %v682
  %v867 = vpack.c.b16 %v687, %v683
  %v868 = vpack.c.b16 %v688, %v684
  %v869 = vpack.c.b16 %v689, %v685
  %v870 = vpack.c.b16 %v694, %v690
  %v871 = vpack.c.b16 %v695, %v691
  %v872 = vpack.c.b16 %v696, %v692
  %v873 = vpack.c.b16 %v697, %v693
  %v874 = vpack.c.b16 %v702, %v698
  %v875 = vpack.c.b16 %v703, %v699
  %v876 = vpack.c.b16 %v704, %v700
  %v877 = vpack.c.b16 %v705, %v701
  %v878 = vpack.c.b16 %v710, %v706
  %v879 = vpack.c.b16 %v711, %v707
  %v880 = vpack.c.b16 %v712, %v708
  %v881 = vpack.c.b16 %v713, %v709
  %v882 = vpack.c.b16 %v718, %v714
  %v883 = vpack.c.b16 %v719, %v715
  %v884 = vpack.c.b16 %v720, %v716
  %v885 = vpack.c.b16 %v721, %v717
  %v886 = vpack.c.b16 %v726, %v722
  %v887 = vpack.c.b16 %v727, %v723
  %v888 = vpack.c.b16 %v728, %v724
  %v889 = vpack.c.b16 %v729, %v725
  %1050 = vmatprep.subr.bf16.mxu0 %v759
  %1051 = vmatpush1.bf16.msra.mxu0 %v758
  %1052 = vmatprep.subr.bf16.mxu0 %v755
  %1053 = vmatpush1.bf16.msra.mxu0 %v754
  %1054 = vmatprep.subr.bf16.mxu0 %v751
  %1055 = vmatpush1.bf16.msra.mxu0 %v750
  %1056 = vmatprep.subr.bf16.mxu0 %v747
  %1057 = vmatpush1.bf16.msra.mxu0 %v746
  %1058 = vmatprep.subr.bf16.mxu0 %v743
  %1059 = vmatpush1.bf16.msra.mxu0 %v742
  %1060 = vmatprep.subr.bf16.mxu0 %v739
  %1061 = vmatpush1.bf16.msra.mxu0 %v738
  %1062 = vmatprep.subr.bf16.mxu0 %v735
  %1063 = vmatpush1.bf16.msra.mxu0 %v734
  %1064 = vmatprep.subr.bf16.mxu0 %v731
  %1065 = vmatpush1.bf16.msra.mxu0 %v730
  %1066 = vmatprep.subr.bf16.mxu0 %v791
  %1067 = vmatpush2.bf16.msra.mxu0 %v790
  %1068 = vmatprep.subr.bf16.mxu0 %v787
  %1069 = vmatpush2.bf16.msra.mxu0 %v786
  %1070 = vmatprep.subr.bf16.mxu0 %v783
  %1071 = vmatpush2.bf16.msra.mxu0 %v782
  %1072 = vmatprep.subr.bf16.mxu0 %v779
  %1073 = vmatpush2.bf16.msra.mxu0 %v778
  %1074 = vmatprep.subr.bf16.mxu0 %v775
  %1075 = vmatpush2.bf16.msra.mxu0 %v774
  %1076 = vmatprep.subr.bf16.mxu0 %v771
  %1077 = vmatpush2.bf16.msra.mxu0 %v770
  %1078 = vmatprep.subr.bf16.mxu0 %v767
  %1079 = vmatpush2.bf16.msra.mxu0 %v766
  %1080 = vmatprep.subr.bf16.mxu0 %v763
  %1081 = vmatpush2.bf16.msra.mxu0 %v762
  %1082 = vmatprep.mubr.bf16.mxu0 %v231
  %1083 = vmatmul.mubr.bf16.gmra.mxu0 %v230
  %v1084 = vpop.f32.mrf.mxu0
  %v1085 = vadd.f32 %v189, %v1084
  %v1086 = vpop.f32.mrf.mxu0
  %v1087 = vadd.f32 %v193, %v1086
  %v1088 = vpop.f32.mrf.mxu0
  %v1089 = vadd.f32 %v189, %v1088
  %v1090 = vpop.f32.mrf.mxu0
  %v1091 = vadd.f32 %v193, %v1090
  %1092 = vmatprep.mubr.bf16.mxu0 %v236
  %1093 = vmatmul.mubr.bf16.gmra.mxu0 %v235
  %v1094 = vpop.f32.mrf.mxu0
  %v1095 = vadd.f32 %v189, %v1094
  %v1096 = vpop.f32.mrf.mxu0
  %v1097 = vadd.f32 %v193, %v1096
  %v1098 = vpop.f32.mrf.mxu0
  %v1099 = vpop.f32.mrf.mxu0
  %1100 = vdwg.mxu0
  %1101 = vmatprep.subr.bf16.mxu0 %v823
  %1102 = vmatpush1.bf16.msra.mxu0 %v822
  %1103 = vmatprep.subr.bf16.mxu0 %v819
  %1104 = vmatpush1.bf16.msra.mxu0 %v818
  %1105 = vmatprep.subr.bf16.mxu0 %v815
  %1106 = vmatpush1.bf16.msra.mxu0 %v814
  %1107 = vmatprep.subr.bf16.mxu0 %v811
  %1108 = vmatpush1.bf16.msra.mxu0 %v810
  %1109 = vmatprep.subr.bf16.mxu0 %v807
  %1110 = vmatpush1.bf16.msra.mxu0 %v806
  %1111 = vmatprep.subr.bf16.mxu0 %v803
  %1112 = vmatpush1.bf16.msra.mxu0 %v802
  %1113 = vmatprep.subr.bf16.mxu0 %v799
  %1114 = vmatpush1.bf16.msra.mxu0 %v798
  %1115 = vmatprep.subr.bf16.mxu0 %v795
  %1116 = vmatpush1.bf16.msra.mxu0 %v794
  %1117 = vmatprep.subr.bf16.mxu0 %v855
  %1118 = vmatpush2.bf16.msra.mxu0 %v854
  %1119 = vmatprep.subr.bf16.mxu0 %v851
  %1120 = vmatpush2.bf16.msra.mxu0 %v850
  %1121 = vmatprep.subr.bf16.mxu0 %v847
  %1122 = vmatpush2.bf16.msra.mxu0 %v846
  %1123 = vmatprep.subr.bf16.mxu0 %v843
  %1124 = vmatpush2.bf16.msra.mxu0 %v842
  %1125 = vmatprep.subr.bf16.mxu0 %v839
  %1126 = vmatpush2.bf16.msra.mxu0 %v838
  %1127 = vmatprep.subr.bf16.mxu0 %v835
  %1128 = vmatpush2.bf16.msra.mxu0 %v834
  %1129 = vmatprep.subr.bf16.mxu0 %v831
  %1130 = vmatpush2.bf16.msra.mxu0 %v830
  %1131 = vmatprep.subr.bf16.mxu0 %v827
  %1132 = vmatpush2.bf16.msra.mxu0 %v826
  %1133 = vmatprep.mubr.bf16.mxu0 %v233
  %1134 = vmatmul.mubr.bf16.gmra.mxu0 %v232
  %v1135 = vpop.f32.mrf.mxu0
  %v1136 = vadd.f32 %v1085, %v1135
  %v1137 = vpop.f32.mrf.mxu0
  %v1138 = vadd.f32 %v1087, %v1137
  %v1139 = vpop.f32.mrf.mxu0
  %v1140 = vadd.f32 %v1089, %v1139
  %v1141 = vpop.f32.mrf.mxu0
  %v1142 = vadd.f32 %v1091, %v1141
  %1143 = vmatprep.mubr.bf16.mxu0 %v238
  %1144 = vmatmul.mubr.bf16.gmra.mxu0 %v237
  %v1145 = vpop.f32.mrf.mxu0
  %v1146 = vadd.f32 %v1095, %v1145
  %v1147 = vpop.f32.mrf.mxu0
  %v1148 = vadd.f32 %v1097, %v1147
  %v1149 = vpop.f32.mrf.mxu0
  %v1150 = vpop.f32.mrf.mxu0
  %1151 = vdwg.mxu0
  %1152 = vmatprep.subr.bf16.mxu0 %v887
  %1153 = vmatpush1.bf16.msra.mxu0 %v886
  %1154 = vmatprep.subr.bf16.mxu0 %v883
  %1155 = vmatpush1.bf16.msra.mxu0 %v882
  %1156 = vmatprep.subr.bf16.mxu0 %v879
  %1157 = vmatpush1.bf16.msra.mxu0 %v878
  %1158 = vmatprep.subr.bf16.mxu0 %v875
  %1159 = vmatpush1.bf16.msra.mxu0 %v874
  %1160 = vmatprep.subr.bf16.mxu0 %v871
  %1161 = vmatpush1.bf16.msra.mxu0 %v870
  %1162 = vmatprep.subr.bf16.mxu0 %v867
  %1163 = vmatpush1.bf16.msra.mxu0 %v866
  %1164 = vmatprep.subr.bf16.mxu0 %v863
  %1165 = vmatpush1.bf16.msra.mxu0 %v862
  %1166 = vmatprep.subr.bf16.mxu0 %v859
  %1167 = vmatpush1.bf16.msra.mxu0 %v858
  %1168 = vmatprep.subr.bf16.mxu0 0
  %1169 = vmatpush2.bf16.msra.mxu0 0
  %1170 = vmatprep.subr.bf16.mxu0 0
  %1171 = vmatpush2.bf16.msra.mxu0 0
  %1172 = vmatprep.subr.bf16.mxu0 0
  %1173 = vmatpush2.bf16.msra.mxu0 0
  %1174 = vmatprep.subr.bf16.mxu0 0
  %1175 = vmatpush2.bf16.msra.mxu0 0
  %1176 = vmatprep.subr.bf16.mxu0 0
  %1177 = vmatpush2.bf16.msra.mxu0 0
  %1178 = vmatprep.subr.bf16.mxu0 0
  %1179 = vmatpush2.bf16.msra.mxu0 0
  %1180 = vmatprep.subr.bf16.mxu0 0
  %1181 = vmatpush2.bf16.msra.mxu0 0
  %1182 = vmatprep.subr.bf16.mxu0 0
  %1183 = vmatpush2.bf16.msra.mxu0 0
  %1184 = vmatprep.mubr.bf16.mxu0 0
  %1185 = vmatmul.mubr.bf16.gmra.mxu0 %v234
  %v1186 = vpop.f32.mrf.mxu0
  %v1187 = vadd.f32 %v1136, %v1186
  %v1188 = vpop.f32.mrf.mxu0
  %v1189 = vadd.f32 %v1138, %v1188
  %v1190 = vpop.f32.mrf.mxu0
  %v1191 = vadd.f32 %v1140, %v1190
  %v1192 = vpop.f32.mrf.mxu0
  %v1193 = vadd.f32 %v1142, %v1192
  %1194 = vmatprep.mubr.bf16.mxu0 0
  %1195 = vmatmul.mubr.bf16.gmra.mxu0 %v239
  %v1196 = vpop.f32.mrf.mxu0
  %v1197 = vadd.f32 %v1146, %v1196
  %v1198 = vpop.f32.mrf.mxu0
  %v1199 = vadd.f32 %v1148, %v1198
  %v1200 = vpop.f32.mrf.mxu0
  %v1201 = vpop.f32.mrf.mxu0
  %1202 = vdwg.mxu0
  %1203 = vmatprep.subr.bf16.mxu0 %v761
  %1204 = vmatpush1.bf16.msra.mxu0 %v760
  %1205 = vmatprep.subr.bf16.mxu0 %v757
  %1206 = vmatpush1.bf16.msra.mxu0 %v756
  %1207 = vmatprep.subr.bf16.mxu0 %v753
  %1208 = vmatpush1.bf16.msra.mxu0 %v752
  %1209 = vmatprep.subr.bf16.mxu0 %v749
  %1210 = vmatpush1.bf16.msra.mxu0 %v748
  %1211 = vmatprep.subr.bf16.mxu0 %v745
  %1212 = vmatpush1.bf16.msra.mxu0 %v744
  %1213 = vmatprep.subr.bf16.mxu0 %v741
  %1214 = vmatpush1.bf16.msra.mxu0 %v740
  %1215 = vmatprep.subr.bf16.mxu0 %v737
  %1216 = vmatpush1.bf16.msra.mxu0 %v736
  %1217 = vmatprep.subr.bf16.mxu0 %v733
  %1218 = vmatpush1.bf16.msra.mxu0 %v732
  %1219 = vmatprep.subr.bf16.mxu0 %v793
  %1220 = vmatpush2.bf16.msra.mxu0 %v792
  %1221 = vmatprep.subr.bf16.mxu0 %v789
  %1222 = vmatpush2.bf16.msra.mxu0 %v788
  %1223 = vmatprep.subr.bf16.mxu0 %v785
  %1224 = vmatpush2.bf16.msra.mxu0 %v784
  %1225 = vmatprep.subr.bf16.mxu0 %v781
  %1226 = vmatpush2.bf16.msra.mxu0 %v780
  %1227 = vmatprep.subr.bf16.mxu0 %v777
  %1228 = vmatpush2.bf16.msra.mxu0 %v776
  %1229 = vmatprep.subr.bf16.mxu0 %v773
  %1230 = vmatpush2.bf16.msra.mxu0 %v772
  %1231 = vmatprep.subr.bf16.mxu0 %v769
  %1232 = vmatpush2.bf16.msra.mxu0 %v768
  %1233 = vmatprep.subr.bf16.mxu0 %v765
  %1234 = vmatpush2.bf16.msra.mxu0 %v764
  %1235 = vmatprep.mubr.bf16.mxu0 %v231
  %1236 = vmatmul.mubr.bf16.gmra.mxu0 %v230
  %v1237 = vpop.f32.mrf.mxu0
  %v1238 = vadd.f32 %v197, %v1237
  %v1239 = vpop.f32.mrf.mxu0
  %v1240 = vadd.f32 %v201, %v1239
  %v1241 = vpop.f32.mrf.mxu0
  %v1242 = vadd.f32 %v197, %v1241
  %v1243 = vpop.f32.mrf.mxu0
  %v1244 = vadd.f32 %v201, %v1243
  %1245 = vmatprep.mubr.bf16.mxu0 %v236
  %1246 = vmatmul.mubr.bf16.gmra.mxu0 %v235
  %v1247 = vpop.f32.mrf.mxu0
  %v1248 = vadd.f32 %v197, %v1247
  %v1249 = vpop.f32.mrf.mxu0
  %v1250 = vadd.f32 %v201, %v1249
  %v1251 = vpop.f32.mrf.mxu0
  %v1252 = vpop.f32.mrf.mxu0
  %1253 = vdwg.mxu0
  %1254 = vmatprep.subr.bf16.mxu0 %v825
  %1255 = vmatpush1.bf16.msra.mxu0 %v824
  %1256 = vmatprep.subr.bf16.mxu0 %v821
  %1257 = vmatpush1.bf16.msra.mxu0 %v820
  %1258 = vmatprep.subr.bf16.mxu0 %v817
  %1259 = vmatpush1.bf16.msra.mxu0 %v816
  %1260 = vmatprep.subr.bf16.mxu0 %v813
  %1261 = vmatpush1.bf16.msra.mxu0 %v812
  %1262 = vmatprep.subr.bf16.mxu0 %v809
  %1263 = vmatpush1.bf16.msra.mxu0 %v808
  %1264 = vmatprep.subr.bf16.mxu0 %v805
  %1265 = vmatpush1.bf16.msra.mxu0 %v804
  %1266 = vmatprep.subr.bf16.mxu0 %v801
  %1267 = vmatpush1.bf16.msra.mxu0 %v800
  %1268 = vmatprep.subr.bf16.mxu0 %v797
  %1269 = vmatpush1.bf16.msra.mxu0 %v796
  %1270 = vmatprep.subr.bf16.mxu0 %v857
  %1271 = vmatpush2.bf16.msra.mxu0 %v856
  %1272 = vmatprep.subr.bf16.mxu0 %v853
  %1273 = vmatpush2.bf16.msra.mxu0 %v852
  %1274 = vmatprep.subr.bf16.mxu0 %v849
  %1275 = vmatpush2.bf16.msra.mxu0 %v848
  %1276 = vmatprep.subr.bf16.mxu0 %v845
  %1277 = vmatpush2.bf16.msra.mxu0 %v844
  %1278 = vmatprep.subr.bf16.mxu0 %v841
  %1279 = vmatpush2.bf16.msra.mxu0 %v840
  %1280 = vmatprep.subr.bf16.mxu0 %v837
  %1281 = vmatpush2.bf16.msra.mxu0 %v836
  %1282 = vmatprep.subr.bf16.mxu0 %v833
  %1283 = vmatpush2.bf16.msra.mxu0 %v832
  %1284 = vmatprep.subr.bf16.mxu0 %v829
  %1285 = vmatpush2.bf16.msra.mxu0 %v828
  %1286 = vmatprep.mubr.bf16.mxu0 %v233
  %1287 = vmatmul.mubr.bf16.gmra.mxu0 %v232
  %v1288 = vpop.f32.mrf.mxu0
  %v1289 = vadd.f32 %v1238, %v1288
  %v1290 = vpop.f32.mrf.mxu0
  %v1291 = vadd.f32 %v1240, %v1290
  %v1292 = vpop.f32.mrf.mxu0
  %v1293 = vadd.f32 %v1242, %v1292
  %v1294 = vpop.f32.mrf.mxu0
  %v1295 = vadd.f32 %v1244, %v1294
  %1296 = vmatprep.mubr.bf16.mxu0 %v238
  %1297 = vmatmul.mubr.bf16.gmra.mxu0 %v237
  %v1298 = vpop.f32.mrf.mxu0
  %v1299 = vadd.f32 %v1248, %v1298
  %v1300 = vpop.f32.mrf.mxu0
  %v1301 = vadd.f32 %v1250, %v1300
  %v1302 = vpop.f32.mrf.mxu0
  %v1303 = vpop.f32.mrf.mxu0
  %1304 = vdwg.mxu0
  %1305 = vmatprep.subr.bf16.mxu0 %v889
  %1306 = vmatpush1.bf16.msra.mxu0 %v888
  %1307 = vmatprep.subr.bf16.mxu0 %v885
  %1308 = vmatpush1.bf16.msra.mxu0 %v884
  %1309 = vmatprep.subr.bf16.mxu0 %v881
  %1310 = vmatpush1.bf16.msra.mxu0 %v880
  %1311 = vmatprep.subr.bf16.mxu0 %v877
  %1312 = vmatpush1.bf16.msra.mxu0 %v876
  %1313 = vmatprep.subr.bf16.mxu0 %v873
  %1314 = vmatpush1.bf16.msra.mxu0 %v872
  %1315 = vmatprep.subr.bf16.mxu0 %v869
  %1316 = vmatpush1.bf16.msra.mxu0 %v868
  %1317 = vmatprep.subr.bf16.mxu0 %v865
  %1318 = vmatpush1.bf16.msra.mxu0 %v864
  %1319 = vmatprep.subr.bf16.mxu0 %v861
  %1320 = vmatpush1.bf16.msra.mxu0 %v860
  %1321 = vmatprep.subr.bf16.mxu0 0
  %1322 = vmatpush2.bf16.msra.mxu0 0
  %1323 = vmatprep.subr.bf16.mxu0 0
  %1324 = vmatpush2.bf16.msra.mxu0 0
  %1325 = vmatprep.subr.bf16.mxu0 0
  %1326 = vmatpush2.bf16.msra.mxu0 0
  %1327 = vmatprep.subr.bf16.mxu0 0
  %1328 = vmatpush2.bf16.msra.mxu0 0
  %1329 = vmatprep.subr.bf16.mxu0 0
  %1330 = vmatpush2.bf16.msra.mxu0 0
  %1331 = vmatprep.subr.bf16.mxu0 0
  %1332 = vmatpush2.bf16.msra.mxu0 0
  %1333 = vmatprep.subr.bf16.mxu0 0
  %1334 = vmatpush2.bf16.msra.mxu0 0
  %1335 = vmatprep.subr.bf16.mxu0 0
  %1336 = vmatpush2.bf16.msra.mxu0 0
  %1337 = vmatprep.mubr.bf16.mxu0 0
  %1338 = vmatmul.mubr.bf16.gmra.mxu0 %v234
  %v1339 = vpop.f32.mrf.mxu0
  %v1340 = vadd.f32 %v1289, %v1339
  %v1341 = vpop.f32.mrf.mxu0
  %v1342 = vadd.f32 %v1291, %v1341
  %v1343 = vpop.f32.mrf.mxu0
  %v1344 = vadd.f32 %v1293, %v1343
  %v1345 = vpop.f32.mrf.mxu0
  %v1346 = vadd.f32 %v1295, %v1345
  %1347 = vmatprep.mubr.bf16.mxu0 0
  %1348 = vmatmul.mubr.bf16.gmra.mxu0 %v239
  %v1349 = vpop.f32.mrf.mxu0
  %v1350 = vadd.f32 %v1299, %v1349
  %v1351 = vpop.f32.mrf.mxu0
  %v1352 = vadd.f32 %v1301, %v1351
  %v1353 = vpop.f32.mrf.mxu0
  %v1354 = vpop.f32.mrf.mxu0
  %1355 = vdwg.mxu0
  %v1356 = vmax.f32 %v1187, 0.0
  %v1357 = vmax.f32 %v1189, 0.0
  %v1358 = vmax.f32 %v1340, 0.0
  %v1359 = vmax.f32 %v1342, 0.0
  %v1360 = vmax.f32 %v1191, 0.0
  %v1361 = vmax.f32 %v1193, 0.0
  %v1362 = vmax.f32 %v1344, 0.0
  %v1363 = vmax.f32 %v1346, 0.0
  %v1364 = vmax.f32 %v1197, 0.0
  %v1365 = vmax.f32 %v1199, 0.0
  %v1366 = vmax.f32 %v1350, 0.0
  %v1367 = vmax.f32 %v1352, 0.0
  %1368 = vst [vmem:[%s3] sm:$0xff] %v1356
  %1369 = vst [vmem:[%s3 + $0x8] sm:$0xff] %v1357
  %1370 = vst [vmem:[%s3 + $0x10] sm:$0xff] %v1358
  %1371 = vst [vmem:[%s3 + $0x18] sm:$0xff] %v1359
  %1372 = vst [vmem:[%s3 + $0x20] sm:$0xff] %v1360
  %1373 = vst [vmem:[%s3 + $0x28] sm:$0xff] %v1361
  %1374 = vst [vmem:[%s3 + $0x30] sm:$0xff] %v1362
  %1375 = vst [vmem:[%s3 + $0x38] sm:$0xff] %v1363
  %1376 = vst [vmem:[%s3 + $0x40] sm:$0xff] %v1364
  %1377 = vst [vmem:[%s3 + $0x48] sm:$0xff] %v1365
  %1378 = vst [vmem:[%s3 + $0x50] sm:$0xff] %v1366
  %1379 = vst [vmem:[%s3 + $0x58] sm:$0xff] %v1367
  // Predicated region
  $region14: #{squeezenet_forward.37} parent=0 // pred_check
    _
  $region15: #{squeezenet_forward.37} parent=0 // pred_check_branch
    %1381 = sbr.rel (0) target = $region17
  $region16: #{squeezenet_forward.37} parent=0 // pred_region
    _
  $region17: #{squeezenet_forward.37} parent=0 // pred_fallthru
    _
  // Predicated region
  $region18: #{squeezenet_forward.37} parent=0 // pred_check
    _
  $region19: #{squeezenet_forward.37} parent=0 // pred_check_branch
    %1383 = sbr.rel (0) target = $region21
  $region20: #{squeezenet_forward.37} parent=0 // pred_region
    _
  $region21: #{squeezenet_forward.37} parent=0 // pred_fallthru
    _

// kernel: squeezenet_forward.39
$region0: #{squeezenet_forward.39}
  #allocation0 [shape = 'u32[]', space=smem, size = 0x4, offset = 0x4, fixed_abs, tag = 'smem constant byte address 0x4 - core index']
  #allocation1 [shape = 'u32[144,128]{1,0:T(1,128)}', space=vmem, size = 0x12000, scoped, tag = 'internal scratch']
  %s0 = inlined_call_operand.vmem [shape: bf16[8,512], index: 0, kind: input, shape index: {}]
  %s1 = inlined_call_operand.vmem [shape: bf16[512,128], index: 1, kind: input, shape index: {}]
  %s2 = inlined_call_operand.vmem [shape: f32[1,128], index: 2, kind: input, shape index: {}]
  %s3 = inlined_call_operand.vmem [shape: f32[8,128], index: 3, kind: output, shape index: {}]
  %s4 = sld [smem:[#allocation0]]
  $region22: #{squeezenet_forward.39} parent=0
    _
  %s6 = ssub.s32 1, %s4
  %s7 = scalar_select 0, %s6, %s4
  // Predicated region
  $region2: #{squeezenet_forward.39} parent=0 // pred_check
    _
  $region3: #{squeezenet_forward.39} parent=0 // pred_check_branch
    %9 = sbr.rel (0) target = $region5
  $region4: #{squeezenet_forward.39} parent=0 // pred_region
    _
  $region5: #{squeezenet_forward.39} parent=0 // pred_fallthru
    _
  // Predicated region
  $region6: #{squeezenet_forward.39} parent=0 // pred_check
    _
  $region7: #{squeezenet_forward.39} parent=0 // pred_check_branch
    %11 = sbr.rel (0) target = $region9
  $region8: #{squeezenet_forward.39} parent=0 // pred_region
    _
  $region9: #{squeezenet_forward.39} parent=0 // pred_fallthru
    _
  // Predicated region
  $region10: #{squeezenet_forward.39} parent=0 // pred_check
    _
  $region11: #{squeezenet_forward.39} parent=0 // pred_check_branch
    %13 = sbr.rel (0) target = $region13
  $region12: #{squeezenet_forward.39} parent=0 // pred_region
    _
  $region13: #{squeezenet_forward.39} parent=0 // pred_fallthru
    _
  %v15 = vld [vmem:[%s0] sm:$0xff]
  %v16 = vld [vmem:[%s0 + $0x8] sm:$0xff]
  %v17 = vld [vmem:[%s1] sm:$0xf]
  %v18 = vld [vmem:[%s1 + $0x4] sm:$0xf]
  %v19 = vld [vmem:[%s1 + $0x8] sm:$0xf]
  %v20 = vld [vmem:[%s1 + $0xc] sm:$0xf]
  %v21 = vld [vmem:[%s1 + $0x10] sm:$0xf]
  %v22 = vld [vmem:[%s1 + $0x14] sm:$0xf]
  %v23 = vld [vmem:[%s1 + $0x18] sm:$0xf]
  %v24 = vld [vmem:[%s1 + $0x1c] sm:$0xf]
  %v25 = vld [vmem:[%s1 + $0x20] sm:$0xf]
  %v26 = vld [vmem:[%s1 + $0x24] sm:$0xf]
  %v27 = vld [vmem:[%s1 + $0x28] sm:$0xf]
  %v28 = vld [vmem:[%s1 + $0x2c] sm:$0xf]
  %v29 = vld [vmem:[%s1 + $0x30] sm:$0xf]
  %v30 = vld [vmem:[%s1 + $0x34] sm:$0xf]
  %v31 = vld [vmem:[%s1 + $0x38] sm:$0xf]
  %v32 = vld [vmem:[%s1 + $0x3c] sm:$0xf]
  %v33 = vld [vmem:[%s1 + $0x40] sm:$0xf]
  %v34 = vld [vmem:[%s1 + $0x44] sm:$0xf]
  %v35 = vld [vmem:[%s1 + $0x48] sm:$0xf]
  %v36 = vld [vmem:[%s1 + $0x4c] sm:$0xf]
  %v37 = vld [vmem:[%s1 + $0x50] sm:$0xf]
  %v38 = vld [vmem:[%s1 + $0x54] sm:$0xf]
  %v39 = vld [vmem:[%s1 + $0x58] sm:$0xf]
  %v40 = vld [vmem:[%s1 + $0x5c] sm:$0xf]
  %v41 = vld [vmem:[%s1 + $0x60] sm:$0xf]
  %v42 = vld [vmem:[%s1 + $0x64] sm:$0xf]
  %v43 = vld [vmem:[%s1 + $0x68] sm:$0xf]
  %v44 = vld [vmem:[%s1 + $0x6c] sm:$0xf]
  %v45 = vld [vmem:[%s1 + $0x70] sm:$0xf]
  %v46 = vld [vmem:[%s1 + $0x74] sm:$0xf]
  %v47 = vld [vmem:[%s1 + $0x78] sm:$0xf]
  %v48 = vld [vmem:[%s1 + $0x7c] sm:$0xf]
  %v49 = vld [vmem:[%s1 + $0x80] sm:$0xf]
  %v50 = vld [vmem:[%s1 + $0x84] sm:$0xf]
  %v51 = vld [vmem:[%s1 + $0x88] sm:$0xf]
  %v52 = vld [vmem:[%s1 + $0x8c] sm:$0xf]
  %v53 = vld [vmem:[%s1 + $0x90] sm:$0xf]
  %v54 = vld [vmem:[%s1 + $0x94] sm:$0xf]
  %v55 = vld [vmem:[%s1 + $0x98] sm:$0xf]
  %v56 = vld [vmem:[%s1 + $0x9c] sm:$0xf]
  %v57 = vld [vmem:[%s1 + $0xa0] sm:$0xf]
  %v58 = vld [vmem:[%s1 + $0xa4] sm:$0xf]
  %v59 = vld [vmem:[%s1 + $0xa8] sm:$0xf]
  %v60 = vld [vmem:[%s1 + $0xac] sm:$0xf]
  %v61 = vld [vmem:[%s1 + $0xb0] sm:$0xf]
  %v62 = vld [vmem:[%s1 + $0xb4] sm:$0xf]
  %v63 = vld [vmem:[%s1 + $0xb8] sm:$0xf]
  %v64 = vld [vmem:[%s1 + $0xbc] sm:$0xf]
  %v65 = vld [vmem:[%s1 + $0xc0] sm:$0xf]
  %v66 = vld [vmem:[%s1 + $0xc4] sm:$0xf]
  %v67 = vld [vmem:[%s1 + $0xc8] sm:$0xf]
  %v68 = vld [vmem:[%s1 + $0xcc] sm:$0xf]
  %v69 = vld [vmem:[%s1 + $0xd0] sm:$0xf]
  %v70 = vld [vmem:[%s1 + $0xd4] sm:$0xf]
  %v71 = vld [vmem:[%s1 + $0xd8] sm:$0xf]
  %v72 = vld [vmem:[%s1 + $0xdc] sm:$0xf]
  %v73 = vld [vmem:[%s1 + $0xe0] sm:$0xf]
  %v74 = vld [vmem:[%s1 + $0xe4] sm:$0xf]
  %v75 = vld [vmem:[%s1 + $0xe8] sm:$0xf]
  %v76 = vld [vmem:[%s1 + $0xec] sm:$0xf]
  %v77 = vld [vmem:[%s1 + $0xf0] sm:$0xf]
  %v78 = vld [vmem:[%s1 + $0xf4] sm:$0xf]
  %v79 = vld [vmem:[%s1 + $0xf8] sm:$0xf]
  %v80 = vld [vmem:[%s1 + $0xfc] sm:$0xf]
  %v81 = vld [vmem:[%s2] sm:$0x1]
  %v83 = vlaneseq
  %v84 = vshrl.u32 %v83, 7
  %v85 = vsub.s32 0, %v84
  %v86 = vrot.slane %v81, %v85
  %v90 = vunpack.c.l.b16 %v15
  %v91 = vunpack.c.h.b16 %v15
  %v92 = vunpack.c.l.b16 %v16
  %v93 = vunpack.c.h.b16 %v16
  %v94 = vpack.c.b16 %v90, %v90
  %v95 = vpack.c.b16 %v91, %v91
  %v96 = vpack.c.b16 %v92, %v92
  %v97 = vpack.c.b16 %v93, %v93
  %v166 = vunpack.c.l.b16 %v17
  %v167 = vunpack.c.l.b16 %v18
  %v168 = vunpack.c.l.b16 %v19
  %v169 = vunpack.c.l.b16 %v20
  %v170 = vunpack.c.l.b16 %v21
  %v171 = vunpack.c.l.b16 %v22
  %v172 = vunpack.c.l.b16 %v23
  %v173 = vunpack.c.l.b16 %v24
  %v174 = vunpack.c.l.b16 %v25
  %v175 = vunpack.c.l.b16 %v26
  %v176 = vunpack.c.l.b16 %v27
  %v177 = vunpack.c.l.b16 %v28
  %v178 = vunpack.c.l.b16 %v29
  %v179 = vunpack.c.l.b16 %v30
  %v180 = vunpack.c.l.b16 %v31
  %v181 = vunpack.c.l.b16 %v32
  %v182 = vunpack.c.l.b16 %v33
  %v183 = vunpack.c.l.b16 %v34
  %v184 = vunpack.c.l.b16 %v35
  %v185 = vunpack.c.l.b16 %v36
  %v186 = vunpack.c.l.b16 %v37
  %v187 = vunpack.c.l.b16 %v38
  %v188 = vunpack.c.l.b16 %v39
  %v189 = vunpack.c.l.b16 %v40
  %v190 = vunpack.c.l.b16 %v41
  %v191 = vunpack.c.l.b16 %v42
  %v192 = vunpack.c.l.b16 %v43
  %v193 = vunpack.c.l.b16 %v44
  %v194 = vunpack.c.l.b16 %v45
  %v195 = vunpack.c.l.b16 %v46
  %v196 = vunpack.c.l.b16 %v47
  %v197 = vunpack.c.l.b16 %v48
  %v198 = vunpack.c.l.b16 %v49
  %v199 = vunpack.c.l.b16 %v50
  %v200 = vunpack.c.l.b16 %v51
  %v201 = vunpack.c.l.b16 %v52
  %v202 = vunpack.c.l.b16 %v53
  %v203 = vunpack.c.l.b16 %v54
  %v204 = vunpack.c.l.b16 %v55
  %v205 = vunpack.c.l.b16 %v56
  %v206 = vunpack.c.l.b16 %v57
  %v207 = vunpack.c.l.b16 %v58
  %v208 = vunpack.c.l.b16 %v59
  %v209 = vunpack.c.l.b16 %v60
  %v210 = vunpack.c.l.b16 %v61
  %v211 = vunpack.c.l.b16 %v62
  %v212 = vunpack.c.l.b16 %v63
  %v213 = vunpack.c.l.b16 %v64
  %v214 = vunpack.c.l.b16 %v65
  %v215 = vunpack.c.l.b16 %v66
  %v216 = vunpack.c.l.b16 %v67
  %v217 = vunpack.c.l.b16 %v68
  %v218 = vunpack.c.l.b16 %v69
  %v219 = vunpack.c.l.b16 %v70
  %v220 = vunpack.c.l.b16 %v71
  %v221 = vunpack.c.l.b16 %v72
  %v222 = vunpack.c.l.b16 %v73
  %v223 = vunpack.c.l.b16 %v74
  %v224 = vunpack.c.l.b16 %v75
  %v225 = vunpack.c.l.b16 %v76
  %v226 = vunpack.c.l.b16 %v77
  %v227 = vunpack.c.l.b16 %v78
  %v228 = vunpack.c.l.b16 %v79
  %v229 = vunpack.c.l.b16 %v80
  %v230 = vpack.c.b16 %v167, %v166
  %v231 = vpack.c.b16 %v169, %v168
  %v232 = vpack.c.b16 %v171, %v170
  %v233 = vpack.c.b16 %v173, %v172
  %v234 = vpack.c.b16 %v175, %v174
  %v235 = vpack.c.b16 %v177, %v176
  %v236 = vpack.c.b16 %v179, %v178
  %v237 = vpack.c.b16 %v181, %v180
  %v238 = vpack.c.b16 %v183, %v182
  %v239 = vpack.c.b16 %v185, %v184
  %v240 = vpack.c.b16 %v187, %v186
  %v241 = vpack.c.b16 %v189, %v188
  %v242 = vpack.c.b16 %v191, %v190
  %v243 = vpack.c.b16 %v193, %v192
  %v244 = vpack.c.b16 %v195, %v194
  %v245 = vpack.c.b16 %v197, %v196
  %v246 = vpack.c.b16 %v199, %v198
  %v247 = vpack.c.b16 %v201, %v200
  %v248 = vpack.c.b16 %v203, %v202
  %v249 = vpack.c.b16 %v205, %v204
  %v250 = vpack.c.b16 %v207, %v206
  %v251 = vpack.c.b16 %v209, %v208
  %v252 = vpack.c.b16 %v211, %v210
  %v253 = vpack.c.b16 %v213, %v212
  %v254 = vpack.c.b16 %v215, %v214
  %v255 = vpack.c.b16 %v217, %v216
  %v256 = vpack.c.b16 %v219, %v218
  %v257 = vpack.c.b16 %v221, %v220
  %v258 = vpack.c.b16 %v223, %v222
  %v259 = vpack.c.b16 %v225, %v224
  %v260 = vpack.c.b16 %v227, %v226
  %v261 = vpack.c.b16 %v229, %v228
  %294 = vmatprep.subr.bf16.mxu0 0
  %295 = vmatpush1.bf16.msra.mxu0 %v237
  %296 = vmatprep.subr.bf16.mxu0 0
  %297 = vmatpush1.bf16.msra.mxu0 %v236
  %298 = vmatprep.subr.bf16.mxu0 0
  %299 = vmatpush1.bf16.msra.mxu0 %v235
  %300 = vmatprep.subr.bf16.mxu0 0
  %301 = vmatpush1.bf16.msra.mxu0 %v234
  %302 = vmatprep.subr.bf16.mxu0 0
  %303 = vmatpush1.bf16.msra.mxu0 %v233
  %304 = vmatprep.subr.bf16.mxu0 0
  %305 = vmatpush1.bf16.msra.mxu0 %v232
  %306 = vmatprep.subr.bf16.mxu0 0
  %307 = vmatpush1.bf16.msra.mxu0 %v231
  %308 = vmatprep.subr.bf16.mxu0 0
  %309 = vmatpush1.bf16.msra.mxu0 %v230
  %310 = vmatprep.subr.bf16.mxu0 0
  %311 = vmatpush2.bf16.msra.mxu0 %v245
  %312 = vmatprep.subr.bf16.mxu0 0
  %313 = vmatpush2.bf16.msra.mxu0 %v244
  %314 = vmatprep.subr.bf16.mxu0 0
  %315 = vmatpush2.bf16.msra.mxu0 %v243
  %316 = vmatprep.subr.bf16.mxu0 0
  %317 = vmatpush2.bf16.msra.mxu0 %v242
  %318 = vmatprep.subr.bf16.mxu0 0
  %319 = vmatpush2.bf16.msra.mxu0 %v241
  %320 = vmatprep.subr.bf16.mxu0 0
  %321 = vmatpush2.bf16.msra.mxu0 %v240
  %322 = vmatprep.subr.bf16.mxu0 0
  %323 = vmatpush2.bf16.msra.mxu0 %v239
  %324 = vmatprep.subr.bf16.mxu0 0
  %325 = vmatpush2.bf16.msra.mxu0 %v238
  %326 = vmatprep.mubr.bf16.mxu0 %v95
  %327 = vmatmul.mubr.bf16.gmra.mxu0 %v94
  %v328 = vpop.f32.mrf.mxu0
  %v329 = vadd.f32 %v86, %v328
  %v330 = vpop.f32.mrf.mxu0
  %v331 = vpop.f32.mrf.mxu0
  %v332 = vpop.f32.mrf.mxu0
  %333 = vdwg.mxu0
  %334 = vmatprep.subr.bf16.mxu0 0
  %335 = vmatpush1.bf16.msra.mxu0 %v253
  %336 = vmatprep.subr.bf16.mxu0 0
  %337 = vmatpush1.bf16.msra.mxu0 %v252
  %338 = vmatprep.subr.bf16.mxu0 0
  %339 = vmatpush1.bf16.msra.mxu0 %v251
  %340 = vmatprep.subr.bf16.mxu0 0
  %341 = vmatpush1.bf16.msra.mxu0 %v250
  %342 = vmatprep.subr.bf16.mxu0 0
  %343 = vmatpush1.bf16.msra.mxu0 %v249
  %344 = vmatprep.subr.bf16.mxu0 0
  %345 = vmatpush1.bf16.msra.mxu0 %v248
  %346 = vmatprep.subr.bf16.mxu0 0
  %347 = vmatpush1.bf16.msra.mxu0 %v247
  %348 = vmatprep.subr.bf16.mxu0 0
  %349 = vmatpush1.bf16.msra.mxu0 %v246
  %350 = vmatprep.subr.bf16.mxu0 0
  %351 = vmatpush2.bf16.msra.mxu0 %v261
  %352 = vmatprep.subr.bf16.mxu0 0
  %353 = vmatpush2.bf16.msra.mxu0 %v260
  %354 = vmatprep.subr.bf16.mxu0 0
  %355 = vmatpush2.bf16.msra.mxu0 %v259
  %356 = vmatprep.subr.bf16.mxu0 0
  %357 = vmatpush2.bf16.msra.mxu0 %v258
  %358 = vmatprep.subr.bf16.mxu0 0
  %359 = vmatpush2.bf16.msra.mxu0 %v257
  %360 = vmatprep.subr.bf16.mxu0 0
  %361 = vmatpush2.bf16.msra.mxu0 %v256
  %362 = vmatprep.subr.bf16.mxu0 0
  %363 = vmatpush2.bf16.msra.mxu0 %v255
  %364 = vmatprep.subr.bf16.mxu0 0
  %365 = vmatpush2.bf16.msra.mxu0 %v254
  %366 = vmatprep.mubr.bf16.mxu0 %v97
  %367 = vmatmul.mubr.bf16.gmra.mxu0 %v96
  %v368 = vpop.f32.mrf.mxu0
  %v369 = vadd.f32 %v329, %v368
  %v370 = vpop.f32.mrf.mxu0
  %v371 = vpop.f32.mrf.mxu0
  %v372 = vpop.f32.mrf.mxu0
  %373 = vdwg.mxu0
  %v374 = vmax.f32 %v369, 0.0
  %375 = vst [vmem:[%s3] sm:$0xff] %v374
  // Predicated region
  $region14: #{squeezenet_forward.39} parent=0 // pred_check
    _
  $region15: #{squeezenet_forward.39} parent=0 // pred_check_branch
    %377 = sbr.rel (0) target = $region17
  $region16: #{squeezenet_forward.39} parent=0 // pred_region
    _
  $region17: #{squeezenet_forward.39} parent=0 // pred_fallthru
    _
  // Predicated region
  $region18: #{squeezenet_forward.39} parent=0 // pred_check
    _
  $region19: #{squeezenet_forward.39} parent=0 // pred_check_branch
    %379 = sbr.rel (0) target = $region21
  $region20: #{squeezenet_forward.39} parent=0 // pred_region
    _
  $region21: #{squeezenet_forward.39} parent=0 // pred_fallthru
    _

// kernel: squeezenet_forward.40
$region0: #{squeezenet_forward.40}
  #allocation0 [shape = 'u32[]', space=smem, size = 0x4, offset = 0x4, fixed_abs, tag = 'smem constant byte address 0x4 - core index']
  #allocation1 [shape = 'u32[144,128]{1,0:T(1,128)}', space=vmem, size = 0x12000, scoped, tag = 'internal scratch']
  %s0 = inlined_call_operand.vmem [shape: bf16[8,640], index: 0, kind: input, shape index: {}]
  %s1 = inlined_call_operand.vmem [shape: bf16[640,512], index: 1, kind: input, shape index: {}]
  %s2 = inlined_call_operand.vmem [shape: f32[1,512], index: 2, kind: input, shape index: {}]
  %s3 = inlined_call_operand.vmem [shape: f32[8,512], index: 3, kind: output, shape index: {}]
  %s4 = sld [smem:[#allocation0]]
  $region22: #{squeezenet_forward.40} parent=0
    _
  %s6 = ssub.s32 1, %s4
  %s7 = scalar_select 0, %s6, %s4
  // Predicated region
  $region2: #{squeezenet_forward.40} parent=0 // pred_check
    _
  $region3: #{squeezenet_forward.40} parent=0 // pred_check_branch
    %9 = sbr.rel (0) target = $region5
  $region4: #{squeezenet_forward.40} parent=0 // pred_region
    _
  $region5: #{squeezenet_forward.40} parent=0 // pred_fallthru
    _
  // Predicated region
  $region6: #{squeezenet_forward.40} parent=0 // pred_check
    _
  $region7: #{squeezenet_forward.40} parent=0 // pred_check_branch
    %11 = sbr.rel (0) target = $region9
  $region8: #{squeezenet_forward.40} parent=0 // pred_region
    _
  $region9: #{squeezenet_forward.40} parent=0 // pred_fallthru
    _
  // Predicated region
  $region10: #{squeezenet_forward.40} parent=0 // pred_check
    _
  $region11: #{squeezenet_forward.40} parent=0 // pred_check_branch
    %13 = sbr.rel (0) target = $region13
  $region12: #{squeezenet_forward.40} parent=0 // pred_region
    _
  $region13: #{squeezenet_forward.40} parent=0 // pred_fallthru
    _
  %v15 = vld [vmem:[%s0] sm:$0xff]
  %v16 = vld [vmem:[%s0 + $0x8] sm:$0xff]
  %v17 = vld [vmem:[%s0 + $0x10] sm:$0xf]
  %v18 = vld [vmem:[%s1] sm:$0xff]
  %v19 = vld [vmem:[%s1 + $0x8] sm:$0xff]
  %v20 = vld [vmem:[%s1 + $0x10] sm:$0xff]
  %v21 = vld [vmem:[%s1 + $0x18] sm:$0xff]
  %v22 = vld [vmem:[%s1 + $0x20] sm:$0xff]
  %v23 = vld [vmem:[%s1 + $0x28] sm:$0xff]
  %v24 = vld [vmem:[%s1 + $0x30] sm:$0xff]
  %v25 = vld [vmem:[%s1 + $0x38] sm:$0xff]
  %v26 = vld [vmem:[%s1 + $0x40] sm:$0xff]
  %v27 = vld [vmem:[%s1 + $0x48] sm:$0xff]
  %v28 = vld [vmem:[%s1 + $0x50] sm:$0xff]
  %v29 = vld [vmem:[%s1 + $0x58] sm:$0xff]
  %v30 = vld [vmem:[%s1 + $0x60] sm:$0xff]
  %v31 = vld [vmem:[%s1 + $0x68] sm:$0xff]
  %v32 = vld [vmem:[%s1 + $0x70] sm:$0xff]
  %v33 = vld [vmem:[%s1 + $0x78] sm:$0xff]
  %v34 = vld [vmem:[%s1 + $0x80] sm:$0xff]
  %v35 = vld [vmem:[%s1 + $0x88] sm:$0xff]
  %v36 = vld [vmem:[%s1 + $0x90] sm:$0xff]
  %v37 = vld [vmem:[%s1 + $0x98] sm:$0xff]
  %v38 = vld [vmem:[%s1 + $0xa0] sm:$0xff]
  %v39 = vld [vmem:[%s1 + $0xa8] sm:$0xff]
  %v40 = vld [vmem:[%s1 + $0xb0] sm:$0xff]
  %v41 = vld [vmem:[%s1 + $0xb8] sm:$0xff]
  %v42 = vld [vmem:[%s1 + $0xc0] sm:$0xff]
  %v43 = vld [vmem:[%s1 + $0xc8] sm:$0xff]
  %v44 = vld [vmem:[%s1 + $0xd0] sm:$0xff]
  %v45 = vld [vmem:[%s1 + $0xd8] sm:$0xff]
  %v46 = vld [vmem:[%s1 + $0xe0] sm:$0xff]
  %v47 = vld [vmem:[%s1 + $0xe8] sm:$0xff]
  %v48 = vld [vmem:[%s1 + $0xf0] sm:$0xff]
  %v49 = vld [vmem:[%s1 + $0xf8] sm:$0xff]
  %v50 = vld [vmem:[%s1 + $0x100] sm:$0xff]
  %v51 = vld [vmem:[%s1 + $0x108] sm:$0xff]
  %v52 = vld [vmem:[%s1 + $0x110] sm:$0xff]
  %v53 = vld [vmem:[%s1 + $0x118] sm:$0xff]
  %v54 = vld [vmem:[%s1 + $0x120] sm:$0xff]
  %v55 = vld [vmem:[%s1 + $0x128] sm:$0xff]
  %v56 = vld [vmem:[%s1 + $0x130] sm:$0xff]
  %v57 = vld [vmem:[%s1 + $0x138] sm:$0xff]
  %v58 = vld [vmem:[%s1 + $0x140] sm:$0xff]
  %v59 = vld [vmem:[%s1 + $0x148] sm:$0xff]
  %v60 = vld [vmem:[%s1 + $0x150] sm:$0xff]
  %v61 = vld [vmem:[%s1 + $0x158] sm:$0xff]
  %v62 = vld [vmem:[%s1 + $0x160] sm:$0xff]
  %v63 = vld [vmem:[%s1 + $0x168] sm:$0xff]
  %v64 = vld [vmem:[%s1 + $0x170] sm:$0xff]
  %v65 = vld [vmem:[%s1 + $0x178] sm:$0xff]
  %v66 = vld [vmem:[%s1 + $0x180] sm:$0xff]
  %v67 = vld [vmem:[%s1 + $0x188] sm:$0xff]
  %v68 = vld [vmem:[%s1 + $0x190] sm:$0xff]
  %v69 = vld [vmem:[%s1 + $0x198] sm:$0xff]
  %v70 = vld [vmem:[%s1 + $0x1a0] sm:$0xff]
  %v71 = vld [vmem:[%s1 + $0x1a8] sm:$0xff]
  %v72 = vld [vmem:[%s1 + $0x1b0] sm:$0xff]
  %v73 = vld [vmem:[%s1 + $0x1b8] sm:$0xff]
  %v74 = vld [vmem:[%s1 + $0x1c0] sm:$0xff]
  %v75 = vld [vmem:[%s1 + $0x1c8] sm:$0xff]
  %v76 = vld [vmem:[%s1 + $0x1d0] sm:$0xff]
  %v77 = vld [vmem:[%s1 + $0x1d8] sm:$0xff]
  %v78 = vld [vmem:[%s1 + $0x1e0] sm:$0xff]
  %v79 = vld [vmem:[%s1 + $0x1e8] sm:$0xff]
  %v80 = vld [vmem:[%s1 + $0x1f0] sm:$0xff]
  %v81 = vld [vmem:[%s1 + $0x1f8] sm:$0xff]
  %v82 = vld [vmem:[%s1 + $0x200] sm:$0xff]
  %v83 = vld [vmem:[%s1 + $0x208] sm:$0xff]
  %v84 = vld [vmem:[%s1 + $0x210] sm:$0xff]
  %v85 = vld [vmem:[%s1 + $0x218] sm:$0xff]
  %v86 = vld [vmem:[%s1 + $0x220] sm:$0xff]
  %v87 = vld [vmem:[%s1 + $0x228] sm:$0xff]
  %v88 = vld [vmem:[%s1 + $0x230] sm:$0xff]
  %v89 = vld [vmem:[%s1 + $0x238] sm:$0xff]
  %v90 = vld [vmem:[%s1 + $0x240] sm:$0xff]
  %v91 = vld [vmem:[%s1 + $0x248] sm:$0xff]
  %v92 = vld [vmem:[%s1 + $0x250] sm:$0xff]
  %v93 = vld [vmem:[%s1 + $0x258] sm:$0xff]
  %v94 = vld [vmem:[%s1 + $0x260] sm:$0xff]
  %v95 = vld [vmem:[%s1 + $0x268] sm:$0xff]
  %v96 = vld [vmem:[%s1 + $0x270] sm:$0xff]
  %v97 = vld [vmem:[%s1 + $0x278] sm:$0xff]
  %v98 = vld [vmem:[%s1 + $0x280] sm:$0xff]
  %v99 = vld [vmem:[%s1 + $0x288] sm:$0xff]
  %v100 = vld [vmem:[%s1 + $0x290] sm:$0xff]
  %v101 = vld [vmem:[%s1 + $0x298] sm:$0xff]
  %v102 = vld [vmem:[%s1 + $0x2a0] sm:$0xff]
  %v103 = vld [vmem:[%s1 + $0x2a8] sm:$0xff]
  %v104 = vld [vmem:[%s1 + $0x2b0] sm:$0xff]
  %v105 = vld [vmem:[%s1 + $0x2b8] sm:$0xff]
  %v106 = vld [vmem:[%s1 + $0x2c0] sm:$0xff]
  %v107 = vld [vmem:[%s1 + $0x2c8] sm:$0xff]
  %v108 = vld [vmem:[%s1 + $0x2d0] sm:$0xff]
  %v109 = vld [vmem:[%s1 + $0x2d8] sm:$0xff]
  %v110 = vld [vmem:[%s1 + $0x2e0] sm:$0xff]
  %v111 = vld [vmem:[%s1 + $0x2e8] sm:$0xff]
  %v112 = vld [vmem:[%s1 + $0x2f0] sm:$0xff]
  %v113 = vld [vmem:[%s1 + $0x2f8] sm:$0xff]
  %v114 = vld [vmem:[%s1 + $0x300] sm:$0xff]
  %v115 = vld [vmem:[%s1 + $0x308] sm:$0xff]
  %v116 = vld [vmem:[%s1 + $0x310] sm:$0xff]
  %v117 = vld [vmem:[%s1 + $0x318] sm:$0xff]
  %v118 = vld [vmem:[%s1 + $0x320] sm:$0xff]
  %v119 = vld [vmem:[%s1 + $0x328] sm:$0xff]
  %v120 = vld [vmem:[%s1 + $0x330] sm:$0xff]
  %v121 = vld [vmem:[%s1 + $0x338] sm:$0xff]
  %v122 = vld [vmem:[%s1 + $0x340] sm:$0xff]
  %v123 = vld [vmem:[%s1 + $0x348] sm:$0xff]
  %v124 = vld [vmem:[%s1 + $0x350] sm:$0xff]
  %v125 = vld [vmem:[%s1 + $0x358] sm:$0xff]
  %v126 = vld [vmem:[%s1 + $0x360] sm:$0xff]
  %v127 = vld [vmem:[%s1 + $0x368] sm:$0xff]
  %v128 = vld [vmem:[%s1 + $0x370] sm:$0xff]
  %v129 = vld [vmem:[%s1 + $0x378] sm:$0xff]
  %v130 = vld [vmem:[%s1 + $0x380] sm:$0xff]
  %v131 = vld [vmem:[%s1 + $0x388] sm:$0xff]
  %v132 = vld [vmem:[%s1 + $0x390] sm:$0xff]
  %v133 = vld [vmem:[%s1 + $0x398] sm:$0xff]
  %v134 = vld [vmem:[%s1 + $0x3a0] sm:$0xff]
  %v135 = vld [vmem:[%s1 + $0x3a8] sm:$0xff]
  %v136 = vld [vmem:[%s1 + $0x3b0] sm:$0xff]
  %v137 = vld [vmem:[%s1 + $0x3b8] sm:$0xff]
  %v138 = vld [vmem:[%s1 + $0x3c0] sm:$0xff]
  %v139 = vld [vmem:[%s1 + $0x3c8] sm:$0xff]
  %v140 = vld [vmem:[%s1 + $0x3d0] sm:$0xff]
  %v141 = vld [vmem:[%s1 + $0x3d8] sm:$0xff]
  %v142 = vld [vmem:[%s1 + $0x3e0] sm:$0xff]
  %v143 = vld [vmem:[%s1 + $0x3e8] sm:$0xff]
  %v144 = vld [vmem:[%s1 + $0x3f0] sm:$0xff]
  %v145 = vld [vmem:[%s1 + $0x3f8] sm:$0xff]
  %v146 = vld [vmem:[%s1 + $0x400] sm:$0xff]
  %v147 = vld [vmem:[%s1 + $0x408] sm:$0xff]
  %v148 = vld [vmem:[%s1 + $0x410] sm:$0xff]
  %v149 = vld [vmem:[%s1 + $0x418] sm:$0xff]
  %v150 = vld [vmem:[%s1 + $0x420] sm:$0xff]
  %v151 = vld [vmem:[%s1 + $0x428] sm:$0xff]
  %v152 = vld [vmem:[%s1 + $0x430] sm:$0xff]
  %v153 = vld [vmem:[%s1 + $0x438] sm:$0xff]
  %v154 = vld [vmem:[%s1 + $0x440] sm:$0xff]
  %v155 = vld [vmem:[%s1 + $0x448] sm:$0xff]
  %v156 = vld [vmem:[%s1 + $0x450] sm:$0xff]
  %v157 = vld [vmem:[%s1 + $0x458] sm:$0xff]
  %v158 = vld [vmem:[%s1 + $0x460] sm:$0xff]
  %v159 = vld [vmem:[%s1 + $0x468] sm:$0xff]
  %v160 = vld [vmem:[%s1 + $0x470] sm:$0xff]
  %v161 = vld [vmem:[%s1 + $0x478] sm:$0xff]
  %v162 = vld [vmem:[%s1 + $0x480] sm:$0xff]
  %v163 = vld [vmem:[%s1 + $0x488] sm:$0xff]
  %v164 = vld [vmem:[%s1 + $0x490] sm:$0xff]
  %v165 = vld [vmem:[%s1 + $0x498] sm:$0xff]
  %v166 = vld [vmem:[%s1 + $0x4a0] sm:$0xff]
  %v167 = vld [vmem:[%s1 + $0x4a8] sm:$0xff]
  %v168 = vld [vmem:[%s1 + $0x4b0] sm:$0xff]
  %v169 = vld [vmem:[%s1 + $0x4b8] sm:$0xff]
  %v170 = vld [vmem:[%s1 + $0x4c0] sm:$0xff]
  %v171 = vld [vmem:[%s1 + $0x4c8] sm:$0xff]
  %v172 = vld [vmem:[%s1 + $0x4d0] sm:$0xff]
  %v173 = vld [vmem:[%s1 + $0x4d8] sm:$0xff]
  %v174 = vld [vmem:[%s1 + $0x4e0] sm:$0xff]
  %v175 = vld [vmem:[%s1 + $0x4e8] sm:$0xff]
  %v176 = vld [vmem:[%s1 + $0x4f0] sm:$0xff]
  %v177 = vld [vmem:[%s1 + $0x4f8] sm:$0xff]
  %v178 = vld [vmem:[%s2] sm:$0xf]
  %v180 = vlaneseq
  %v181 = vshrl.u32 %v180, 7
  %v182 = vsub.s32 0, %v181
  %v183 = vrot.slane %v178, %v182
  %v184 = vlaneseq
  %v185 = vshrl.u32 %v184, 7
  %v186 = vsub.s32 1, %v185
  %v187 = vrot.slane %v178, %v186
  %v188 = vlaneseq
  %v189 = vshrl.u32 %v188, 7
  %v190 = vsub.s32 2, %v189
  %v191 = vrot.slane %v178, %v190
  %v192 = vlaneseq
  %v193 = vshrl.u32 %v192, 7
  %v194 = vsub.s32 3, %v193
  %v195 = vrot.slane %v178, %v194
  %v203 = vunpack.c.l.b16 %v15
  %v204 = vunpack.c.h.b16 %v15
  %v205 = vunpack.c.l.b16 %v16
  %v206 = vunpack.c.h.b16 %v16
  %v207 = vunpack.c.l.b16 %v17
  %v208 = vpack.c.b16 %v203, %v203
  %v209 = vpack.c.b16 %v204, %v204
  %v210 = vpack.c.b16 %v205, %v205
  %v211 = vpack.c.b16 %v206, %v206
  %v212 = vpack.c.b16 %v207, %v207
  %v378 = vunpack.c.l.b16 %v18
  %v379 = vunpack.c.h.b16 %v18
  %v380 = vunpack.c.l.b16 %v19
  %v381 = vunpack.c.h.b16 %v19
  %v382 = vunpack.c.l.b16 %v20
  %v383 = vunpack.c.h.b16 %v20
  %v384 = vunpack.c.l.b16 %v21
  %v385 = vunpack.c.h.b16 %v21
  %v386 = vunpack.c.l.b16 %v22
  %v387 = vunpack.c.h.b16 %v22
  %v388 = vunpack.c.l.b16 %v23
  %v389 = vunpack.c.h.b16 %v23
  %v390 = vunpack.c.l.b16 %v24
  %v391 = vunpack.c.h.b16 %v24
  %v392 = vunpack.c.l.b16 %v25
  %v393 = vunpack.c.h.b16 %v25
  %v394 = vunpack.c.l.b16 %v26
  %v395 = vunpack.c.h.b16 %v26
  %v396 = vunpack.c.l.b16 %v27
  %v397 = vunpack.c.h.b16 %v27
  %v398 = vunpack.c.l.b16 %v28
  %v399 = vunpack.c.h.b16 %v28
  %v400 = vunpack.c.l.b16 %v29
  %v401 = vunpack.c.h.b16 %v29
  %v402 = vunpack.c.l.b16 %v30
  %v403 = vunpack.c.h.b16 %v30
  %v404 = vunpack.c.l.b16 %v31
  %v405 = vunpack.c.h.b16 %v31
  %v406 = vunpack.c.l.b16 %v32
  %v407 = vunpack.c.h.b16 %v32
  %v408 = vunpack.c.l.b16 %v33
  %v409 = vunpack.c.h.b16 %v33
  %v410 = vunpack.c.l.b16 %v34
  %v411 = vunpack.c.h.b16 %v34
  %v412 = vunpack.c.l.b16 %v35
  %v413 = vunpack.c.h.b16 %v35
  %v414 = vunpack.c.l.b16 %v36
  %v415 = vunpack.c.h.b16 %v36
  %v416 = vunpack.c.l.b16 %v37
  %v417 = vunpack.c.h.b16 %v37
  %v418 = vunpack.c.l.b16 %v38
  %v419 = vunpack.c.h.b16 %v38
  %v420 = vunpack.c.l.b16 %v39
  %v421 = vunpack.c.h.b16 %v39
  %v422 = vunpack.c.l.b16 %v40
  %v423 = vunpack.c.h.b16 %v40
  %v424 = vunpack.c.l.b16 %v41
  %v425 = vunpack.c.h.b16 %v41
  %v426 = vunpack.c.l.b16 %v42
  %v427 = vunpack.c.h.b16 %v42
  %v428 = vunpack.c.l.b16 %v43
  %v429 = vunpack.c.h.b16 %v43
  %v430 = vunpack.c.l.b16 %v44
  %v431 = vunpack.c.h.b16 %v44
  %v432 = vunpack.c.l.b16 %v45
  %v433 = vunpack.c.h.b16 %v45
  %v434 = vunpack.c.l.b16 %v46
  %v435 = vunpack.c.h.b16 %v46
  %v436 = vunpack.c.l.b16 %v47
  %v437 = vunpack.c.h.b16 %v47
  %v438 = vunpack.c.l.b16 %v48
  %v439 = vunpack.c.h.b16 %v48
  %v440 = vunpack.c.l.b16 %v49
  %v441 = vunpack.c.h.b16 %v49
  %v442 = vunpack.c.l.b16 %v50
  %v443 = vunpack.c.h.b16 %v50
  %v444 = vunpack.c.l.b16 %v51
  %v445 = vunpack.c.h.b16 %v51
  %v446 = vunpack.c.l.b16 %v52
  %v447 = vunpack.c.h.b16 %v52
  %v448 = vunpack.c.l.b16 %v53
  %v449 = vunpack.c.h.b16 %v53
  %v450 = vunpack.c.l.b16 %v54
  %v451 = vunpack.c.h.b16 %v54
  %v452 = vunpack.c.l.b16 %v55
  %v453 = vunpack.c.h.b16 %v55
  %v454 = vunpack.c.l.b16 %v56
  %v455 = vunpack.c.h.b16 %v56
  %v456 = vunpack.c.l.b16 %v57
  %v457 = vunpack.c.h.b16 %v57
  %v458 = vunpack.c.l.b16 %v58
  %v459 = vunpack.c.h.b16 %v58
  %v460 = vunpack.c.l.b16 %v59
  %v461 = vunpack.c.h.b16 %v59
  %v462 = vunpack.c.l.b16 %v60
  %v463 = vunpack.c.h.b16 %v60
  %v464 = vunpack.c.l.b16 %v61
  %v465 = vunpack.c.h.b16 %v61
  %v466 = vunpack.c.l.b16 %v62
  %v467 = vunpack.c.h.b16 %v62
  %v468 = vunpack.c.l.b16 %v63
  %v469 = vunpack.c.h.b16 %v63
  %v470 = vunpack.c.l.b16 %v64
  %v471 = vunpack.c.h.b16 %v64
  %v472 = vunpack.c.l.b16 %v65
  %v473 = vunpack.c.h.b16 %v65
  %v474 = vunpack.c.l.b16 %v66
  %v475 = vunpack.c.h.b16 %v66
  %v476 = vunpack.c.l.b16 %v67
  %v477 = vunpack.c.h.b16 %v67
  %v478 = vunpack.c.l.b16 %v68
  %v479 = vunpack.c.h.b16 %v68
  %v480 = vunpack.c.l.b16 %v69
  %v481 = vunpack.c.h.b16 %v69
  %v482 = vunpack.c.l.b16 %v70
  %v483 = vunpack.c.h.b16 %v70
  %v484 = vunpack.c.l.b16 %v71
  %v485 = vunpack.c.h.b16 %v71
  %v486 = vunpack.c.l.b16 %v72
  %v487 = vunpack.c.h.b16 %v72
  %v488 = vunpack.c.l.b16 %v73
  %v489 = vunpack.c.h.b16 %v73
  %v490 = vunpack.c.l.b16 %v74
  %v491 = vunpack.c.h.b16 %v74
  %v492 = vunpack.c.l.b16 %v75
  %v493 = vunpack.c.h.b16 %v75
  %v494 = vunpack.c.l.b16 %v76
  %v495 = vunpack.c.h.b16 %v76
  %v496 = vunpack.c.l.b16 %v77
  %v497 = vunpack.c.h.b16 %v77
  %v498 = vunpack.c.l.b16 %v78
  %v499 = vunpack.c.h.b16 %v78
  %v500 = vunpack.c.l.b16 %v79
  %v501 = vunpack.c.h.b16 %v79
  %v502 = vunpack.c.l.b16 %v80
  %v503 = vunpack.c.h.b16 %v80
  %v504 = vunpack.c.l.b16 %v81
  %v505 = vunpack.c.h.b16 %v81
  %v506 = vunpack.c.l.b16 %v82
  %v507 = vunpack.c.h.b16 %v82
  %v508 = vunpack.c.l.b16 %v83
  %v509 = vunpack.c.h.b16 %v83
  %v510 = vunpack.c.l.b16 %v84
  %v511 = vunpack.c.h.b16 %v84
  %v512 = vunpack.c.l.b16 %v85
  %v513 = vunpack.c.h.b16 %v85
  %v514 = vunpack.c.l.b16 %v86
  %v515 = vunpack.c.h.b16 %v86
  %v516 = vunpack.c.l.b16 %v87
  %v517 = vunpack.c.h.b16 %v87
  %v518 = vunpack.c.l.b16 %v88
  %v519 = vunpack.c.h.b16 %v88
  %v520 = vunpack.c.l.b16 %v89
  %v521 = vunpack.c.h.b16 %v89
  %v522 = vunpack.c.l.b16 %v90
  %v523 = vunpack.c.h.b16 %v90
  %v524 = vunpack.c.l.b16 %v91
  %v525 = vunpack.c.h.b16 %v91
  %v526 = vunpack.c.l.b16 %v92
  %v527 = vunpack.c.h.b16 %v92
  %v528 = vunpack.c.l.b16 %v93
  %v529 = vunpack.c.h.b16 %v93
  %v530 = vunpack.c.l.b16 %v94
  %v531 = vunpack.c.h.b16 %v94
  %v532 = vunpack.c.l.b16 %v95
  %v533 = vunpack.c.h.b16 %v95
  %v534 = vunpack.c.l.b16 %v96
  %v535 = vunpack.c.h.b16 %v96
  %v536 = vunpack.c.l.b16 %v97
  %v537 = vunpack.c.h.b16 %v97
  %v538 = vunpack.c.l.b16 %v98
  %v539 = vunpack.c.h.b16 %v98
  %v540 = vunpack.c.l.b16 %v99
  %v541 = vunpack.c.h.b16 %v99
  %v542 = vunpack.c.l.b16 %v100
  %v543 = vunpack.c.h.b16 %v100
  %v544 = vunpack.c.l.b16 %v101
  %v545 = vunpack.c.h.b16 %v101
  %v546 = vunpack.c.l.b16 %v102
  %v547 = vunpack.c.h.b16 %v102
  %v548 = vunpack.c.l.b16 %v103
  %v549 = vunpack.c.h.b16 %v103
  %v550 = vunpack.c.l.b16 %v104
  %v551 = vunpack.c.h.b16 %v104
  %v552 = vunpack.c.l.b16 %v105
  %v553 = vunpack.c.h.b16 %v105
  %v554 = vunpack.c.l.b16 %v106
  %v555 = vunpack.c.h.b16 %v106
  %v556 = vunpack.c.l.b16 %v107
  %v557 = vunpack.c.h.b16 %v107
  %v558 = vunpack.c.l.b16 %v108
  %v559 = vunpack.c.h.b16 %v108
  %v560 = vunpack.c.l.b16 %v109
  %v561 = vunpack.c.h.b16 %v109
  %v562 = vunpack.c.l.b16 %v110
  %v563 = vunpack.c.h.b16 %v110
  %v564 = vunpack.c.l.b16 %v111
  %v565 = vunpack.c.h.b16 %v111
  %v566 = vunpack.c.l.b16 %v112
  %v567 = vunpack.c.h.b16 %v112
  %v568 = vunpack.c.l.b16 %v113
  %v569 = vunpack.c.h.b16 %v113
  %v570 = vunpack.c.l.b16 %v114
  %v571 = vunpack.c.h.b16 %v114
  %v572 = vunpack.c.l.b16 %v115
  %v573 = vunpack.c.h.b16 %v115
  %v574 = vunpack.c.l.b16 %v116
  %v575 = vunpack.c.h.b16 %v116
  %v576 = vunpack.c.l.b16 %v117
  %v577 = vunpack.c.h.b16 %v117
  %v578 = vunpack.c.l.b16 %v118
  %v579 = vunpack.c.h.b16 %v118
  %v580 = vunpack.c.l.b16 %v119
  %v581 = vunpack.c.h.b16 %v119
  %v582 = vunpack.c.l.b16 %v120
  %v583 = vunpack.c.h.b16 %v120
  %v584 = vunpack.c.l.b16 %v121
  %v585 = vunpack.c.h.b16 %v121
  %v586 = vunpack.c.l.b16 %v122
  %v587 = vunpack.c.h.b16 %v122
  %v588 = vunpack.c.l.b16 %v123
  %v589 = vunpack.c.h.b16 %v123
  %v590 = vunpack.c.l.b16 %v124
  %v591 = vunpack.c.h.b16 %v124
  %v592 = vunpack.c.l.b16 %v125
  %v593 = vunpack.c.h.b16 %v125
  %v594 = vunpack.c.l.b16 %v126
  %v595 = vunpack.c.h.b16 %v126
  %v596 = vunpack.c.l.b16 %v127
  %v597 = vunpack.c.h.b16 %v127
  %v598 = vunpack.c.l.b16 %v128
  %v599 = vunpack.c.h.b16 %v128
  %v600 = vunpack.c.l.b16 %v129
  %v601 = vunpack.c.h.b16 %v129
  %v602 = vunpack.c.l.b16 %v130
  %v603 = vunpack.c.h.b16 %v130
  %v604 = vunpack.c.l.b16 %v131
  %v605 = vunpack.c.h.b16 %v131
  %v606 = vunpack.c.l.b16 %v132
  %v607 = vunpack.c.h.b16 %v132
  %v608 = vunpack.c.l.b16 %v133
  %v609 = vunpack.c.h.b16 %v133
  %v610 = vunpack.c.l.b16 %v134
  %v611 = vunpack.c.h.b16 %v134
  %v612 = vunpack.c.l.b16 %v135
  %v613 = vunpack.c.h.b16 %v135
  %v614 = vunpack.c.l.b16 %v136
  %v615 = vunpack.c.h.b16 %v136
  %v616 = vunpack.c.l.b16 %v137
  %v617 = vunpack.c.h.b16 %v137
  %v618 = vunpack.c.l.b16 %v138
  %v619 = vunpack.c.h.b16 %v138
  %v620 = vunpack.c.l.b16 %v139
  %v621 = vunpack.c.h.b16 %v139
  %v622 = vunpack.c.l.b16 %v140
  %v623 = vunpack.c.h.b16 %v140
  %v624 = vunpack.c.l.b16 %v141
  %v625 = vunpack.c.h.b16 %v141
  %v626 = vunpack.c.l.b16 %v142
  %v627 = vunpack.c.h.b16 %v142
  %v628 = vunpack.c.l.b16 %v143
  %v629 = vunpack.c.h.b16 %v143
  %v630 = vunpack.c.l.b16 %v144
  %v631 = vunpack.c.h.b16 %v144
  %v632 = vunpack.c.l.b16 %v145
  %v633 = vunpack.c.h.b16 %v145
  %v634 = vunpack.c.l.b16 %v146
  %v635 = vunpack.c.h.b16 %v146
  %v636 = vunpack.c.l.b16 %v147
  %v637 = vunpack.c.h.b16 %v147
  %v638 = vunpack.c.l.b16 %v148
  %v639 = vunpack.c.h.b16 %v148
  %v640 = vunpack.c.l.b16 %v149
  %v641 = vunpack.c.h.b16 %v149
  %v642 = vunpack.c.l.b16 %v150
  %v643 = vunpack.c.h.b16 %v150
  %v644 = vunpack.c.l.b16 %v151
  %v645 = vunpack.c.h.b16 %v151
  %v646 = vunpack.c.l.b16 %v152
  %v647 = vunpack.c.h.b16 %v152
  %v648 = vunpack.c.l.b16 %v153
  %v649 = vunpack.c.h.b16 %v153
  %v650 = vunpack.c.l.b16 %v154
  %v651 = vunpack.c.h.b16 %v154
  %v652 = vunpack.c.l.b16 %v155
  %v653 = vunpack.c.h.b16 %v155
  %v654 = vunpack.c.l.b16 %v156
  %v655 = vunpack.c.h.b16 %v156
  %v656 = vunpack.c.l.b16 %v157
  %v657 = vunpack.c.h.b16 %v157
  %v658 = vunpack.c.l.b16 %v158
  %v659 = vunpack.c.h.b16 %v158
  %v660 = vunpack.c.l.b16 %v159
  %v661 = vunpack.c.h.b16 %v159
  %v662 = vunpack.c.l.b16 %v160
  %v663 = vunpack.c.h.b16 %v160
  %v664 = vunpack.c.l.b16 %v161
  %v665 = vunpack.c.h.b16 %v161
  %v666 = vunpack.c.l.b16 %v162
  %v667 = vunpack.c.h.b16 %v162
  %v668 = vunpack.c.l.b16 %v163
  %v669 = vunpack.c.h.b16 %v163
  %v670 = vunpack.c.l.b16 %v164
  %v671 = vunpack.c.h.b16 %v164
  %v672 = vunpack.c.l.b16 %v165
  %v673 = vunpack.c.h.b16 %v165
  %v674 = vunpack.c.l.b16 %v166
  %v675 = vunpack.c.h.b16 %v166
  %v676 = vunpack.c.l.b16 %v167
  %v677 = vunpack.c.h.b16 %v167
  %v678 = vunpack.c.l.b16 %v168
  %v679 = vunpack.c.h.b16 %v168
  %v680 = vunpack.c.l.b16 %v169
  %v681 = vunpack.c.h.b16 %v169
  %v682 = vunpack.c.l.b16 %v170
  %v683 = vunpack.c.h.b16 %v170
  %v684 = vunpack.c.l.b16 %v171
  %v685 = vunpack.c.h.b16 %v171
  %v686 = vunpack.c.l.b16 %v172
  %v687 = vunpack.c.h.b16 %v172
  %v688 = vunpack.c.l.b16 %v173
  %v689 = vunpack.c.h.b16 %v173
  %v690 = vunpack.c.l.b16 %v174
  %v691 = vunpack.c.h.b16 %v174
  %v692 = vunpack.c.l.b16 %v175
  %v693 = vunpack.c.h.b16 %v175
  %v694 = vunpack.c.l.b16 %v176
  %v695 = vunpack.c.h.b16 %v176
  %v696 = vunpack.c.l.b16 %v177
  %v697 = vunpack.c.h.b16 %v177
  %v698 = vpack.c.b16 %v382, %v378
  %v699 = vpack.c.b16 %v383, %v379
  %v700 = vpack.c.b16 %v384, %v380
  %v701 = vpack.c.b16 %v385, %v381
  %v702 = vpack.c.b16 %v390, %v386
  %v703 = vpack.c.b16 %v391, %v387
  %v704 = vpack.c.b16 %v392, %v388
  %v705 = vpack.c.b16 %v393, %v389
  %v706 = vpack.c.b16 %v398, %v394
  %v707 = vpack.c.b16 %v399, %v395
  %v708 = vpack.c.b16 %v400, %v396
  %v709 = vpack.c.b16 %v401, %v397
  %v710 = vpack.c.b16 %v406, %v402
  %v711 = vpack.c.b16 %v407, %v403
  %v712 = vpack.c.b16 %v408, %v404
  %v713 = vpack.c.b16 %v409, %v405
  %v714 = vpack.c.b16 %v414, %v410
  %v715 = vpack.c.b16 %v415, %v411
  %v716 = vpack.c.b16 %v416, %v412
  %v717 = vpack.c.b16 %v417, %v413
  %v718 = vpack.c.b16 %v422, %v418
  %v719 = vpack.c.b16 %v423, %v419
  %v720 = vpack.c.b16 %v424, %v420
  %v721 = vpack.c.b16 %v425, %v421
  %v722 = vpack.c.b16 %v430, %v426
  %v723 = vpack.c.b16 %v431, %v427
  %v724 = vpack.c.b16 %v432, %v428
  %v725 = vpack.c.b16 %v433, %v429
  %v726 = vpack.c.b16 %v438, %v434
  %v727 = vpack.c.b16 %v439, %v435
  %v728 = vpack.c.b16 %v440, %v436
  %v729 = vpack.c.b16 %v441, %v437
  %v730 = vpack.c.b16 %v446, %v442
  %v731 = vpack.c.b16 %v447, %v443
  %v732 = vpack.c.b16 %v448, %v444
  %v733 = vpack.c.b16 %v449, %v445
  %v734 = vpack.c.b16 %v454, %v450
  %v735 = vpack.c.b16 %v455, %v451
  %v736 = vpack.c.b16 %v456, %v452
  %v737 = vpack.c.b16 %v457, %v453
  %v738 = vpack.c.b16 %v462, %v458
  %v739 = vpack.c.b16 %v463, %v459
  %v740 = vpack.c.b16 %v464, %v460
  %v741 = vpack.c.b16 %v465, %v461
  %v742 = vpack.c.b16 %v470, %v466
  %v743 = vpack.c.b16 %v471, %v467
  %v744 = vpack.c.b16 %v472, %v468
  %v745 = vpack.c.b16 %v473, %v469
  %v746 = vpack.c.b16 %v478, %v474
  %v747 = vpack.c.b16 %v479, %v475
  %v748 = vpack.c.b16 %v480, %v476
  %v749 = vpack.c.b16 %v481, %v477
  %v750 = vpack.c.b16 %v486, %v482
  %v751 = vpack.c.b16 %v487, %v483
  %v752 = vpack.c.b16 %v488, %v484
  %v753 = vpack.c.b16 %v489, %v485
  %v754 = vpack.c.b16 %v494, %v490
  %v755 = vpack.c.b16 %v495, %v491
  %v756 = vpack.c.b16 %v496, %v492
  %v757 = vpack.c.b16 %v497, %v493
  %v758 = vpack.c.b16 %v502, %v498
  %v759 = vpack.c.b16 %v503, %v499
  %v760 = vpack.c.b16 %v504, %v500
  %v761 = vpack.c.b16 %v505, %v501
  %v762 = vpack.c.b16 %v510, %v506
  %v763 = vpack.c.b16 %v511, %v507
  %v764 = vpack.c.b16 %v512, %v508
  %v765 = vpack.c.b16 %v513, %v509
  %v766 = vpack.c.b16 %v518, %v514
  %v767 = vpack.c.b16 %v519, %v515
  %v768 = vpack.c.b16 %v520, %v516
  %v769 = vpack.c.b16 %v521, %v517
  %v770 = vpack.c.b16 %v526, %v522
  %v771 = vpack.c.b16 %v527, %v523
  %v772 = vpack.c.b16 %v528, %v524
  %v773 = vpack.c.b16 %v529, %v525
  %v774 = vpack.c.b16 %v534, %v530
  %v775 = vpack.c.b16 %v535, %v531
  %v776 = vpack.c.b16 %v536, %v532
  %v777 = vpack.c.b16 %v537, %v533
  %v778 = vpack.c.b16 %v542, %v538
  %v779 = vpack.c.b16 %v543, %v539
  %v780 = vpack.c.b16 %v544, %v540
  %v781 = vpack.c.b16 %v545, %v541
  %v782 = vpack.c.b16 %v550, %v546
  %v783 = vpack.c.b16 %v551, %v547
  %v784 = vpack.c.b16 %v552, %v548
  %v785 = vpack.c.b16 %v553, %v549
  %v786 = vpack.c.b16 %v558, %v554
  %v787 = vpack.c.b16 %v559, %v555
  %v788 = vpack.c.b16 %v560, %v556
  %v789 = vpack.c.b16 %v561, %v557
  %v790 = vpack.c.b16 %v566, %v562
  %v791 = vpack.c.b16 %v567, %v563
  %v792 = vpack.c.b16 %v568, %v564
  %v793 = vpack.c.b16 %v569, %v565
  %v794 = vpack.c.b16 %v574, %v570
  %v795 = vpack.c.b16 %v575, %v571
  %v796 = vpack.c.b16 %v576, %v572
  %v797 = vpack.c.b16 %v577, %v573
  %v798 = vpack.c.b16 %v582, %v578
  %v799 = vpack.c.b16 %v583, %v579
  %v800 = vpack.c.b16 %v584, %v580
  %v801 = vpack.c.b16 %v585, %v581
  %v802 = vpack.c.b16 %v590, %v586
  %v803 = vpack.c.b16 %v591, %v587
  %v804 = vpack.c.b16 %v592, %v588
  %v805 = vpack.c.b16 %v593, %v589
  %v806 = vpack.c.b16 %v598, %v594
  %v807 = vpack.c.b16 %v599, %v595
  %v808 = vpack.c.b16 %v600, %v596
  %v809 = vpack.c.b16 %v601, %v597
  %v810 = vpack.c.b16 %v606, %v602
  %v811 = vpack.c.b16 %v607, %v603
  %v812 = vpack.c.b16 %v608, %v604
  %v813 = vpack.c.b16 %v609, %v605
  %v814 = vpack.c.b16 %v614, %v610
  %v815 = vpack.c.b16 %v615, %v611
  %v816 = vpack.c.b16 %v616, %v612
  %v817 = vpack.c.b16 %v617, %v613
  %v818 = vpack.c.b16 %v622, %v618
  %v819 = vpack.c.b16 %v623, %v619
  %v820 = vpack.c.b16 %v624, %v620
  %v821 = vpack.c.b16 %v625, %v621
  %v822 = vpack.c.b16 %v630, %v626
  %v823 = vpack.c.b16 %v631, %v627
  %v824 = vpack.c.b16 %v632, %v628
  %v825 = vpack.c.b16 %v633, %v629
  %v826 = vpack.c.b16 %v638, %v634
  %v827 = vpack.c.b16 %v639, %v635
  %v828 = vpack.c.b16 %v640, %v636
  %v829 = vpack.c.b16 %v641, %v637
  %v830 = vpack.c.b16 %v646, %v642
  %v831 = vpack.c.b16 %v647, %v643
  %v832 = vpack.c.b16 %v648, %v644
  %v833 = vpack.c.b16 %v649, %v645
  %v834 = vpack.c.b16 %v654, %v650
  %v835 = vpack.c.b16 %v655, %v651
  %v836 = vpack.c.b16 %v656, %v652
  %v837 = vpack.c.b16 %v657, %v653
  %v838 = vpack.c.b16 %v662, %v658
  %v839 = vpack.c.b16 %v663, %v659
  %v840 = vpack.c.b16 %v664, %v660
  %v841 = vpack.c.b16 %v665, %v661
  %v842 = vpack.c.b16 %v670, %v666
  %v843 = vpack.c.b16 %v671, %v667
  %v844 = vpack.c.b16 %v672, %v668
  %v845 = vpack.c.b16 %v673, %v669
  %v846 = vpack.c.b16 %v678, %v674
  %v847 = vpack.c.b16 %v679, %v675
  %v848 = vpack.c.b16 %v680, %v676
  %v849 = vpack.c.b16 %v681, %v677
  %v850 = vpack.c.b16 %v686, %v682
  %v851 = vpack.c.b16 %v687, %v683
  %v852 = vpack.c.b16 %v688, %v684
  %v853 = vpack.c.b16 %v689, %v685
  %v854 = vpack.c.b16 %v694, %v690
  %v855 = vpack.c.b16 %v695, %v691
  %v856 = vpack.c.b16 %v696, %v692
  %v857 = vpack.c.b16 %v697, %v693
  %1018 = vmatprep.subr.bf16.mxu0 %v727
  %1019 = vmatpush1.bf16.msra.mxu0 %v726
  %1020 = vmatprep.subr.bf16.mxu0 %v723
  %1021 = vmatpush1.bf16.msra.mxu0 %v722
  %1022 = vmatprep.subr.bf16.mxu0 %v719
  %1023 = vmatpush1.bf16.msra.mxu0 %v718
  %1024 = vmatprep.subr.bf16.mxu0 %v715
  %1025 = vmatpush1.bf16.msra.mxu0 %v714
  %1026 = vmatprep.subr.bf16.mxu0 %v711
  %1027 = vmatpush1.bf16.msra.mxu0 %v710
  %1028 = vmatprep.subr.bf16.mxu0 %v707
  %1029 = vmatpush1.bf16.msra.mxu0 %v706
  %1030 = vmatprep.subr.bf16.mxu0 %v703
  %1031 = vmatpush1.bf16.msra.mxu0 %v702
  %1032 = vmatprep.subr.bf16.mxu0 %v699
  %1033 = vmatpush1.bf16.msra.mxu0 %v698
  %1034 = vmatprep.subr.bf16.mxu0 %v759
  %1035 = vmatpush2.bf16.msra.mxu0 %v758
  %1036 = vmatprep.subr.bf16.mxu0 %v755
  %1037 = vmatpush2.bf16.msra.mxu0 %v754
  %1038 = vmatprep.subr.bf16.mxu0 %v751
  %1039 = vmatpush2.bf16.msra.mxu0 %v750
  %1040 = vmatprep.subr.bf16.mxu0 %v747
  %1041 = vmatpush2.bf16.msra.mxu0 %v746
  %1042 = vmatprep.subr.bf16.mxu0 %v743
  %1043 = vmatpush2.bf16.msra.mxu0 %v742
  %1044 = vmatprep.subr.bf16.mxu0 %v739
  %1045 = vmatpush2.bf16.msra.mxu0 %v738
  %1046 = vmatprep.subr.bf16.mxu0 %v735
  %1047 = vmatpush2.bf16.msra.mxu0 %v734
  %1048 = vmatprep.subr.bf16.mxu0 %v731
  %1049 = vmatpush2.bf16.msra.mxu0 %v730
  %1050 = vmatprep.mubr.bf16.mxu0 %v209
  %1051 = vmatmul.mubr.bf16.gmra.mxu0 %v208
  %v1052 = vpop.f32.mrf.mxu0
  %v1053 = vadd.f32 %v183, %v1052
  %v1054 = vpop.f32.mrf.mxu0
  %v1055 = vadd.f32 %v187, %v1054
  %v1056 = vpop.f32.mrf.mxu0
  %v1057 = vpop.f32.mrf.mxu0
  %1058 = vdwg.mxu0
  %1059 = vmatprep.subr.bf16.mxu0 %v791
  %1060 = vmatpush1.bf16.msra.mxu0 %v790
  %1061 = vmatprep.subr.bf16.mxu0 %v787
  %1062 = vmatpush1.bf16.msra.mxu0 %v786
  %1063 = vmatprep.subr.bf16.mxu0 %v783
  %1064 = vmatpush1.bf16.msra.mxu0 %v782
  %1065 = vmatprep.subr.bf16.mxu0 %v779
  %1066 = vmatpush1.bf16.msra.mxu0 %v778
  %1067 = vmatprep.subr.bf16.mxu0 %v775
  %1068 = vmatpush1.bf16.msra.mxu0 %v774
  %1069 = vmatprep.subr.bf16.mxu0 %v771
  %1070 = vmatpush1.bf16.msra.mxu0 %v770
  %1071 = vmatprep.subr.bf16.mxu0 %v767
  %1072 = vmatpush1.bf16.msra.mxu0 %v766
  %1073 = vmatprep.subr.bf16.mxu0 %v763
  %1074 = vmatpush1.bf16.msra.mxu0 %v762
  %1075 = vmatprep.subr.bf16.mxu0 %v823
  %1076 = vmatpush2.bf16.msra.mxu0 %v822
  %1077 = vmatprep.subr.bf16.mxu0 %v819
  %1078 = vmatpush2.bf16.msra.mxu0 %v818
  %1079 = vmatprep.subr.bf16.mxu0 %v815
  %1080 = vmatpush2.bf16.msra.mxu0 %v814
  %1081 = vmatprep.subr.bf16.mxu0 %v811
  %1082 = vmatpush2.bf16.msra.mxu0 %v810
  %1083 = vmatprep.subr.bf16.mxu0 %v807
  %1084 = vmatpush2.bf16.msra.mxu0 %v806
  %1085 = vmatprep.subr.bf16.mxu0 %v803
  %1086 = vmatpush2.bf16.msra.mxu0 %v802
  %1087 = vmatprep.subr.bf16.mxu0 %v799
  %1088 = vmatpush2.bf16.msra.mxu0 %v798
  %1089 = vmatprep.subr.bf16.mxu0 %v795
  %1090 = vmatpush2.bf16.msra.mxu0 %v794
  %1091 = vmatprep.mubr.bf16.mxu0 %v211
  %1092 = vmatmul.mubr.bf16.gmra.mxu0 %v210
  %v1093 = vpop.f32.mrf.mxu0
  %v1094 = vadd.f32 %v1053, %v1093
  %v1095 = vpop.f32.mrf.mxu0
  %v1096 = vadd.f32 %v1055, %v1095
  %v1097 = vpop.f32.mrf.mxu0
  %v1098 = vpop.f32.mrf.mxu0
  %1099 = vdwg.mxu0
  %1100 = vmatprep.subr.bf16.mxu0 %v855
  %1101 = vmatpush1.bf16.msra.mxu0 %v854
  %1102 = vmatprep.subr.bf16.mxu0 %v851
  %1103 = vmatpush1.bf16.msra.mxu0 %v850
  %1104 = vmatprep.subr.bf16.mxu0 %v847
  %1105 = vmatpush1.bf16.msra.mxu0 %v846
  %1106 = vmatprep.subr.bf16.mxu0 %v843
  %1107 = vmatpush1.bf16.msra.mxu0 %v842
  %1108 = vmatprep.subr.bf16.mxu0 %v839
  %1109 = vmatpush1.bf16.msra.mxu0 %v838
  %1110 = vmatprep.subr.bf16.mxu0 %v835
  %1111 = vmatpush1.bf16.msra.mxu0 %v834
  %1112 = vmatprep.subr.bf16.mxu0 %v831
  %1113 = vmatpush1.bf16.msra.mxu0 %v830
  %1114 = vmatprep.subr.bf16.mxu0 %v827
  %1115 = vmatpush1.bf16.msra.mxu0 %v826
  %1116 = vmatprep.subr.bf16.mxu0 0
  %1117 = vmatpush2.bf16.msra.mxu0 0
  %1118 = vmatprep.subr.bf16.mxu0 0
  %1119 = vmatpush2.bf16.msra.mxu0 0
  %1120 = vmatprep.subr.bf16.mxu0 0
  %1121 = vmatpush2.bf16.msra.mxu0 0
  %1122 = vmatprep.subr.bf16.mxu0 0
  %1123 = vmatpush2.bf16.msra.mxu0 0
  %1124 = vmatprep.subr.bf16.mxu0 0
  %1125 = vmatpush2.bf16.msra.mxu0 0
  %1126 = vmatprep.subr.bf16.mxu0 0
  %1127 = vmatpush2.bf16.msra.mxu0 0
  %1128 = vmatprep.subr.bf16.mxu0 0
  %1129 = vmatpush2.bf16.msra.mxu0 0
  %1130 = vmatprep.subr.bf16.mxu0 0
  %1131 = vmatpush2.bf16.msra.mxu0 0
  %1132 = vmatprep.mubr.bf16.mxu0 0
  %1133 = vmatmul.mubr.bf16.gmra.mxu0 %v212
  %v1134 = vpop.f32.mrf.mxu0
  %v1135 = vadd.f32 %v1094, %v1134
  %v1136 = vpop.f32.mrf.mxu0
  %v1137 = vadd.f32 %v1096, %v1136
  %v1138 = vpop.f32.mrf.mxu0
  %v1139 = vpop.f32.mrf.mxu0
  %1140 = vdwg.mxu0
  %1141 = vmatprep.subr.bf16.mxu0 %v729
  %1142 = vmatpush1.bf16.msra.mxu0 %v728
  %1143 = vmatprep.subr.bf16.mxu0 %v725
  %1144 = vmatpush1.bf16.msra.mxu0 %v724
  %1145 = vmatprep.subr.bf16.mxu0 %v721
  %1146 = vmatpush1.bf16.msra.mxu0 %v720
  %1147 = vmatprep.subr.bf16.mxu0 %v717
  %1148 = vmatpush1.bf16.msra.mxu0 %v716
  %1149 = vmatprep.subr.bf16.mxu0 %v713
  %1150 = vmatpush1.bf16.msra.mxu0 %v712
  %1151 = vmatprep.subr.bf16.mxu0 %v709
  %1152 = vmatpush1.bf16.msra.mxu0 %v708
  %1153 = vmatprep.subr.bf16.mxu0 %v705
  %1154 = vmatpush1.bf16.msra.mxu0 %v704
  %1155 = vmatprep.subr.bf16.mxu0 %v701
  %1156 = vmatpush1.bf16.msra.mxu0 %v700
  %1157 = vmatprep.subr.bf16.mxu0 %v761
  %1158 = vmatpush2.bf16.msra.mxu0 %v760
  %1159 = vmatprep.subr.bf16.mxu0 %v757
  %1160 = vmatpush2.bf16.msra.mxu0 %v756
  %1161 = vmatprep.subr.bf16.mxu0 %v753
  %1162 = vmatpush2.bf16.msra.mxu0 %v752
  %1163 = vmatprep.subr.bf16.mxu0 %v749
  %1164 = vmatpush2.bf16.msra.mxu0 %v748
  %1165 = vmatprep.subr.bf16.mxu0 %v745
  %1166 = vmatpush2.bf16.msra.mxu0 %v744
  %1167 = vmatprep.subr.bf16.mxu0 %v741
  %1168 = vmatpush2.bf16.msra.mxu0 %v740
  %1169 = vmatprep.subr.bf16.mxu0 %v737
  %1170 = vmatpush2.bf16.msra.mxu0 %v736
  %1171 = vmatprep.subr.bf16.mxu0 %v733
  %1172 = vmatpush2.bf16.msra.mxu0 %v732
  %1173 = vmatprep.mubr.bf16.mxu0 %v209
  %1174 = vmatmul.mubr.bf16.gmra.mxu0 %v208
  %v1175 = vpop.f32.mrf.mxu0
  %v1176 = vadd.f32 %v191, %v1175
  %v1177 = vpop.f32.mrf.mxu0
  %v1178 = vadd.f32 %v195, %v1177
  %v1179 = vpop.f32.mrf.mxu0
  %v1180 = vpop.f32.mrf.mxu0
  %1181 = vdwg.mxu0
  %1182 = vmatprep.subr.bf16.mxu0 %v793
  %1183 = vmatpush1.bf16.msra.mxu0 %v792
  %1184 = vmatprep.subr.bf16.mxu0 %v789
  %1185 = vmatpush1.bf16.msra.mxu0 %v788
  %1186 = vmatprep.subr.bf16.mxu0 %v785
  %1187 = vmatpush1.bf16.msra.mxu0 %v784
  %1188 = vmatprep.subr.bf16.mxu0 %v781
  %1189 = vmatpush1.bf16.msra.mxu0 %v780
  %1190 = vmatprep.subr.bf16.mxu0 %v777
  %1191 = vmatpush1.bf16.msra.mxu0 %v776
  %1192 = vmatprep.subr.bf16.mxu0 %v773
  %1193 = vmatpush1.bf16.msra.mxu0 %v772
  %1194 = vmatprep.subr.bf16.mxu0 %v769
  %1195 = vmatpush1.bf16.msra.mxu0 %v768
  %1196 = vmatprep.subr.bf16.mxu0 %v765
  %1197 = vmatpush1.bf16.msra.mxu0 %v764
  %1198 = vmatprep.subr.bf16.mxu0 %v825
  %1199 = vmatpush2.bf16.msra.mxu0 %v824
  %1200 = vmatprep.subr.bf16.mxu0 %v821
  %1201 = vmatpush2.bf16.msra.mxu0 %v820
  %1202 = vmatprep.subr.bf16.mxu0 %v817
  %1203 = vmatpush2.bf16.msra.mxu0 %v816
  %1204 = vmatprep.subr.bf16.mxu0 %v813
  %1205 = vmatpush2.bf16.msra.mxu0 %v812
  %1206 = vmatprep.subr.bf16.mxu0 %v809
  %1207 = vmatpush2.bf16.msra.mxu0 %v808
  %1208 = vmatprep.subr.bf16.mxu0 %v805
  %1209 = vmatpush2.bf16.msra.mxu0 %v804
  %1210 = vmatprep.subr.bf16.mxu0 %v801
  %1211 = vmatpush2.bf16.msra.mxu0 %v800
  %1212 = vmatprep.subr.bf16.mxu0 %v797
  %1213 = vmatpush2.bf16.msra.mxu0 %v796
  %1214 = vmatprep.mubr.bf16.mxu0 %v211
  %1215 = vmatmul.mubr.bf16.gmra.mxu0 %v210
  %v1216 = vpop.f32.mrf.mxu0
  %v1217 = vadd.f32 %v1176, %v1216
  %v1218 = vpop.f32.mrf.mxu0
  %v1219 = vadd.f32 %v1178, %v1218
  %v1220 = vpop.f32.mrf.mxu0
  %v1221 = vpop.f32.mrf.mxu0
  %1222 = vdwg.mxu0
  %1223 = vmatprep.subr.bf16.mxu0 %v857
  %1224 = vmatpush1.bf16.msra.mxu0 %v856
  %1225 = vmatprep.subr.bf16.mxu0 %v853
  %1226 = vmatpush1.bf16.msra.mxu0 %v852
  %1227 = vmatprep.subr.bf16.mxu0 %v849
  %1228 = vmatpush1.bf16.msra.mxu0 %v848
  %1229 = vmatprep.subr.bf16.mxu0 %v845
  %1230 = vmatpush1.bf16.msra.mxu0 %v844
  %1231 = vmatprep.subr.bf16.mxu0 %v841
  %1232 = vmatpush1.bf16.msra.mxu0 %v840
  %1233 = vmatprep.subr.bf16.mxu0 %v837
  %1234 = vmatpush1.bf16.msra.mxu0 %v836
  %1235 = vmatprep.subr.bf16.mxu0 %v833
  %1236 = vmatpush1.bf16.msra.mxu0 %v832
  %1237 = vmatprep.subr.bf16.mxu0 %v829
  %1238 = vmatpush1.bf16.msra.mxu0 %v828
  %1239 = vmatprep.subr.bf16.mxu0 0
  %1240 = vmatpush2.bf16.msra.mxu0 0
  %1241 = vmatprep.subr.bf16.mxu0 0
  %1242 = vmatpush2.bf16.msra.mxu0 0
  %1243 = vmatprep.subr.bf16.mxu0 0
  %1244 = vmatpush2.bf16.msra.mxu0 0
  %1245 = vmatprep.subr.bf16.mxu0 0
  %1246 = vmatpush2.bf16.msra.mxu0 0
  %1247 = vmatprep.subr.bf16.mxu0 0
  %1248 = vmatpush2.bf16.msra.mxu0 0
  %1249 = vmatprep.subr.bf16.mxu0 0
  %1250 = vmatpush2.bf16.msra.mxu0 0
  %1251 = vmatprep.subr.bf16.mxu0 0
  %1252 = vmatpush2.bf16.msra.mxu0 0
  %1253 = vmatprep.subr.bf16.mxu0 0
  %1254 = vmatpush2.bf16.msra.mxu0 0
  %1255 = vmatprep.mubr.bf16.mxu0 0
  %1256 = vmatmul.mubr.bf16.gmra.mxu0 %v212
  %v1257 = vpop.f32.mrf.mxu0
  %v1258 = vadd.f32 %v1217, %v1257
  %v1259 = vpop.f32.mrf.mxu0
  %v1260 = vadd.f32 %v1219, %v1259
  %v1261 = vpop.f32.mrf.mxu0
  %v1262 = vpop.f32.mrf.mxu0
  %1263 = vdwg.mxu0
  %v1264 = vmax.f32 %v1135, 0.0
  %v1265 = vmax.f32 %v1137, 0.0
  %v1266 = vmax.f32 %v1258, 0.0
  %v1267 = vmax.f32 %v1260, 0.0
  %1268 = vst [vmem:[%s3] sm:$0xff] %v1264
  %1269 = vst [vmem:[%s3 + $0x8] sm:$0xff] %v1265
  %1270 = vst [vmem:[%s3 + $0x10] sm:$0xff] %v1266
  %1271 = vst [vmem:[%s3 + $0x18] sm:$0xff] %v1267
  // Predicated region
  $region14: #{squeezenet_forward.40} parent=0 // pred_check
    _
  $region15: #{squeezenet_forward.40} parent=0 // pred_check_branch
    %1273 = sbr.rel (0) target = $region17
  $region16: #{squeezenet_forward.40} parent=0 // pred_region
    _
  $region17: #{squeezenet_forward.40} parent=0 // pred_fallthru
    _
  // Predicated region
  $region18: #{squeezenet_forward.40} parent=0 // pred_check
    _
  $region19: #{squeezenet_forward.40} parent=0 // pred_check_branch
    %1275 = sbr.rel (0) target = $region21
  $region20: #{squeezenet_forward.40} parent=0 // pred_region
    _
  $region21: #{squeezenet_forward.40} parent=0 // pred_fallthru
    _

</llo_original>
